<compile_context>
chip_gen: v7x
topology: tpu7x:2x2x1
jax: 0.10.0
libtpu: 0.0.40
codegen_flags: <defaults>
</compile_context>

<pallas_src>
import jax
import jax.numpy as jnp
import numpy as np
from jax.experimental import pallas as pl
from jax.experimental.pallas import tpu as pltpu


# ----------------------------- Pallas kernels ------------------------------ #

def _conv_relu_pool_kernel(p_ref, w_ref, b_ref, o_ref):
    """Fused 3x3 conv (as GEMM) + bias + ReLU + 2x2 maxpool.

    p_ref: (4, M, K)  im2col patches; axis 0 enumerates the 4 pool positions.
    w_ref: (K, Cout)  b_ref: (1, Cout)  o_ref: (M, Cout)
    Since the bias is shared by the 4 positions and relu is monotone:
      max_a relu(P_a@W + b) == relu(max_a(P_a@W) + b).
    """
    w = w_ref[...]
    acc = jnp.dot(p_ref[0], w, preferred_element_type=jnp.float32)
    for a in range(1, 4):
        acc = jnp.maximum(
            acc, jnp.dot(p_ref[a], w, preferred_element_type=jnp.float32))
    o_ref[...] = jnp.maximum(acc + b_ref[...], 0.0).astype(o_ref.dtype)


def _gemm_bias_kernel(x_ref, w_ref, b_ref, o_ref):
    o_ref[...] = (jnp.dot(x_ref[...], w_ref[...],
                          preferred_element_type=jnp.float32)
                  + b_ref[...]).astype(o_ref.dtype)


def conv_relu_pool(patches, w, b, *, out_dtype=jnp.bfloat16):
    """patches: (4, M, K) bf16;  w: (K, Cout) bf16;  b: (Cout,).  -> (M, Cout)."""
    _, M, K = patches.shape
    Cout = w.shape[1]
    b2 = b.reshape(1, Cout).astype(jnp.float32)
    return pl.pallas_call(
        _conv_relu_pool_kernel,
        out_shape=jax.ShapeDtypeStruct((M, Cout), out_dtype),
        grid_spec=pltpu.PrefetchScalarGridSpec(
            num_scalar_prefetch=0,
            grid=(1,),
            in_specs=[
                pl.BlockSpec((4, M, K), lambda i: (0, 0, 0)),
                pl.BlockSpec((K, Cout), lambda i: (0, 0)),
                pl.BlockSpec((1, Cout), lambda i: (0, 0)),
            ],
            out_specs=pl.BlockSpec((M, Cout), lambda i: (0, 0)),
        ),
        compiler_params=pltpu.CompilerParams(
            dimension_semantics=("arbitrary",)),
    )(patches, w, b2)


def gemm_bias(x, w, b, *, out_dtype=jnp.float32):
    """y = x @ w + b.  Single VMEM-resident block (weights are small)."""
    M, K = x.shape
    K2, N = w.shape
    assert K == K2
    b2 = b.reshape(1, N).astype(jnp.float32)
    return pl.pallas_call(
        _gemm_bias_kernel,
        out_shape=jax.ShapeDtypeStruct((M, N), out_dtype),
        grid_spec=pltpu.PrefetchScalarGridSpec(
            num_scalar_prefetch=0,
            grid=(1,),
            in_specs=[
                pl.BlockSpec((M, K), lambda i: (0, 0)),
                pl.BlockSpec((K, N), lambda i: (0, 0)),
                pl.BlockSpec((1, N), lambda i: (0, 0)),
            ],
            out_specs=pl.BlockSpec((M, N), lambda i: (0, 0)),
        ),
        compiler_params=pltpu.CompilerParams(
            dimension_semantics=("arbitrary",)),
    )(x, w, b2)


# ------------------------------- conv glue --------------------------------- #

def im2col_pool_stacked(x):
    """x: (N,H,W,C) channels-last -> (4, N*(H//2)*(W//2), 9*C) patches for a
    3x3/pad-1 conv followed by a 2x2 maxpool.
    Axis 0 = pool position (di*2 + dj); rows ordered (n, ho, wo);
    columns ordered (kh, kw, c) — matching the prepared conv weight layout."""
    n, h, w, c = x.shape
    ho, wo = h // 2, w // 2
    xp = jnp.pad(x, ((0, 0), (1, 1), (1, 1), (0, 0)))
    cols = [xp[:, kh:kh + h, kw:kw + w, :] for kh in range(3) for kw in range(3)]
    p = jnp.stack(cols, axis=3)                     # (N, H, W, 9, C)
    p = p.reshape(n, ho, 2, wo, 2, 9, c)            # split H, W into pool pairs
    p = p.transpose(2, 4, 0, 1, 3, 5, 6)            # (2, 2, N, Ho, Wo, 9, C)
    return p.reshape(4, n * ho * wo, 9 * c)


# ------------------------- parameter preparation --------------------------- #

def init_params(key):
    """PyTorch-layout f32 parameters (same as the nn.Module state)."""
    ks = jax.random.split(key, 8)

    def rnd(k, shape, scale):
        return jax.random.normal(k, shape, jnp.float32) * scale

    return dict(
        w1=rnd(ks[0], (50, 1, 3, 3), 0.1),    b1=rnd(ks[1], (50,), 0.1),
        w2=rnd(ks[2], (256, 50, 3, 3), 0.05), b2=rnd(ks[3], (256,), 0.05),
        wf1=rnd(ks[4], (4608, 9216), 0.01),   bf1=rnd(ks[5], (4608,), 0.01),
        wf2=rnd(ks[6], (18, 4608), 0.01),     bf2=rnd(ks[7], (18,), 0.01),
    )


def prepare_params(p, dtype=jnp.bfloat16):
    """One-time conversion into kernel layout: GEMM-shaped, channel-padded,
    pre-transposed, NHWC-permuted fc rows, fc1 x fc2 folded (eval-mode only),
    bf16 weights / f32 biases."""
    C1P = 128   # conv1 Cout padded 50 -> 128 lanes
    NOUT = 128  # fc output padded 18 -> 128 lanes
    hi = jax.lax.Precision.HIGHEST
    # conv1: (50,1,3,3) -> (9, 128), zero-padded output channels
    w1 = p["w1"].transpose(2, 3, 1, 0).reshape(9, 50)
    w1 = jnp.pad(w1, ((0, 0), (0, C1P - 50)))
    b1 = jnp.pad(p["b1"], (0, C1P - 50))
    # conv2: pad Cin 50->128, (256,128,3,3) -> (9*128, 256)
    w2 = jnp.pad(p["w2"], ((0, 0), (0, C1P - 50), (0, 0), (0, 0)))
    w2 = w2.transpose(2, 3, 1, 0).reshape(9 * C1P, 256)
    b2 = p["b2"]
    # fc1 x fc2 fold (eval mode: dropout is identity, no nonlinearity between).
    # fc1 rows permuted from NCHW flatten order to the NHWC flatten order that
    # the conv stage produces; fc2 output channels zero-padded to 128 lanes.
    wf1 = p["wf1"].reshape(4608, 256, 6, 6).transpose(2, 3, 1, 0).reshape(9216, 4608)
    wf2 = jnp.pad(p["wf2"], ((0, NOUT - 18), (0, 0))).T              # (4608, 128)
    wf = jnp.dot(wf1, wf2, precision=hi)                             # (9216, 128)
    bf = jnp.dot(p["bf1"], wf2, precision=hi) + jnp.pad(p["bf2"], (0, NOUT - 18))
    return dict(
        w1=w1.astype(dtype), b1=b1.astype(jnp.float32),
        w2=w2.astype(dtype), b2=b2.astype(jnp.float32),
        wf=wf.astype(dtype), bf=bf.astype(jnp.float32),
    )


# ----------------------------- BLEcnn forward ------------------------------ #

def ble_cnn_forward(x, kp):
    """Eval-mode forward.  x: (N,1,H,W) NCHW like PyTorch; kp: prepared params."""
    n, _, h, w = x.shape
    x = x.transpose(0, 2, 3, 1).astype(jnp.bfloat16)          # NHWC (Cin=1)
    # conv1 + relu + pool
    p1 = im2col_pool_stacked(x)                               # (4, N*144, 9)
    h1 = conv_relu_pool(p1, kp["w1"], kp["b1"])               # (N*144, 128)
    h1 = h1.reshape(n, h // 2, w // 2, 128)                   # contiguous reshape
    # conv2 + relu + pool
    p2 = im2col_pool_stacked(h1)                              # (4, N*36, 1152)
    h2 = conv_relu_pool(p2, kp["w2"], kp["b2"])               # (N*36, 256)
    h2 = h2.reshape(n, (h // 4) * (w // 4) * 256)             # (N, 9216) NHWC flatten
    # fc1 -> dropout(eval: identity) -> fc2, folded into one GEMM at init time.
    # TODO(synk): training mode needs the unfused fc1/fc2 path with a
    # pltpu.prng_random_bits dropout mask between them.
    y = gemm_bias(h2, kp["wf"], kp["bf"], out_dtype=jnp.float32)   # (N, 128)
    return y[:, :18]


# ------------------------------ pure-JAX ref -------------------------------- #

def _ref_forward(x, p):
    def conv(x, w, b):
        y = jax.lax.conv_general_dilated(
            x, w, window_strides=(1, 1), padding=((1, 1), (1, 1)),
            dimension_numbers=("NCHW", "OIHW", "NCHW"),
            precision=jax.lax.Precision.HIGHEST)
        return jax.nn.relu(y + b[None, :, None, None])

    def pool(x):
        n, c, h, w = x.shape
        return x.reshape(n, c, h // 2, 2, w // 2, 2).max(axis=(3, 5))

    x = pool(conv(x, p["w1"], p["b1"]))
    x = pool(conv(x, p["w2"], p["b2"]))
    x = x.reshape(x.shape[0], -1)
    x = jnp.dot(x, p["wf1"].T, precision=jax.lax.Precision.HIGHEST) + p["bf1"]
    x = jnp.dot(x, p["wf2"].T, precision=jax.lax.Precision.HIGHEST) + p["bf2"]
    return x


if __name__ == "__main__":
    key = jax.random.PRNGKey(0)
    kx, kp = jax.random.split(key)
    # fc1 expects 9216 = 256 * 6 * 6 features -> input spatial size 24x24, 1 channel.
    x = jax.random.normal(kx, (2, 1, 24, 24), jnp.float32)
    params = init_params(kp)              # PyTorch-layout f32 params
    kparams = prepare_params(params)      # one-time layout / padding / fc-fold / bf16

    fwd = jax.jit(ble_cnn_forward)
    out = jax.block_until_ready(fwd(x, kparams))
    assert out.shape == (2, 18), out.shape

    ref = _ref_forward(x, params)
    # bf16 operands with f32 accumulation -> validated at 5e-2 tolerance.
    np.testing.assert_allclose(np.asarray(out, dtype=np.float32),
                               np.asarray(ref), rtol=5e-2, atol=5e-2)

    print("KERNEL_OK")
</pallas_src>

<mosaic_0001>
module attributes {stable_mosaic.version = 11 : i64} {
  func.func @_conv_relu_pool_kernel(%arg0: i32, %arg1: memref<4x288x9xbf16, #tpu.memory_space<vmem>>, %arg2: memref<9x128xbf16, #tpu.memory_space<vmem>>, %arg3: memref<1x128xf32, #tpu.memory_space<vmem>>, %arg4: memref<288x128xbf16, #tpu.memory_space<vmem>>) attributes {dimension_semantics = [#tpu.dimension_semantics<arbitrary>], iteration_bounds = array<i64: 1>, scalar_prefetch = 0 : i64, scratch_operands = 0 : i64, tpu.core_type = #tpu.core_type<tc>, window_params = [{pipeline_mode = #tpu.pipeline_mode<synchronous>, transform_indices = @transform_0, window_bounds = array<i64: 4, 288, 9>}, {pipeline_mode = #tpu.pipeline_mode<synchronous>, transform_indices = @transform_1, window_bounds = array<i64: 9, 128>}, {pipeline_mode = #tpu.pipeline_mode<synchronous>, transform_indices = @transform_2, window_bounds = array<i64: 1, 128>}, {pipeline_mode = #tpu.pipeline_mode<synchronous>, transform_indices = @transform_3, window_bounds = array<i64: 288, 128>}]} {
    %c0 = arith.constant 0 : index
    %c0_0 = arith.constant 0 : index
    %0 = vector.load %arg2[%c0, %c0_0] : memref<9x128xbf16, #tpu.memory_space<vmem>>, vector<9x128xbf16>
    %c0_1 = arith.constant 0 : index
    %c0_2 = arith.constant 0 : index
    %c0_3 = arith.constant 0 : index
    %1 = vector.load %arg1[%c0_1, %c0_2, %c0_3] : memref<4x288x9xbf16, #tpu.memory_space<vmem>>, vector<1x288x9xbf16>
    %2 = vector.shape_cast %1 : vector<1x288x9xbf16> to vector<288x9xbf16>
    %cst = arith.constant dense<0.000000e+00> : vector<288x128xf32>
    %3 = tpu.matmul %2, %0, %cst {dimension_numbers = #tpu.dot_dimension_numbers<[1], [0], [0], [1], [0, 0, 1, 1], [], []>} : vector<288x9xbf16>, vector<9x128xbf16>, vector<288x128xf32> -> vector<288x128xf32>
    %c1 = arith.constant 1 : index
    %c0_4 = arith.constant 0 : index
    %c0_5 = arith.constant 0 : index
    %4 = vector.load %arg1[%c1, %c0_4, %c0_5] : memref<4x288x9xbf16, #tpu.memory_space<vmem>>, vector<1x288x9xbf16>
    %5 = vector.shape_cast %4 : vector<1x288x9xbf16> to vector<288x9xbf16>
    %cst_6 = arith.constant dense<0.000000e+00> : vector<288x128xf32>
    %6 = tpu.matmul %5, %0, %cst_6 {dimension_numbers = #tpu.dot_dimension_numbers<[1], [0], [0], [1], [0, 0, 1, 1], [], []>} : vector<288x9xbf16>, vector<9x128xbf16>, vector<288x128xf32> -> vector<288x128xf32>
    %7 = arith.maximumf %3, %6 : vector<288x128xf32>
    %c2 = arith.constant 2 : index
    %c0_7 = arith.constant 0 : index
    %c0_8 = arith.constant 0 : index
    %8 = vector.load %arg1[%c2, %c0_7, %c0_8] : memref<4x288x9xbf16, #tpu.memory_space<vmem>>, vector<1x288x9xbf16>
    %9 = vector.shape_cast %8 : vector<1x288x9xbf16> to vector<288x9xbf16>
    %cst_9 = arith.constant dense<0.000000e+00> : vector<288x128xf32>
    %10 = tpu.matmul %9, %0, %cst_9 {dimension_numbers = #tpu.dot_dimension_numbers<[1], [0], [0], [1], [0, 0, 1, 1], [], []>} : vector<288x9xbf16>, vector<9x128xbf16>, vector<288x128xf32> -> vector<288x128xf32>
    %11 = arith.maximumf %7, %10 : vector<288x128xf32>
    %c3 = arith.constant 3 : index
    %c0_10 = arith.constant 0 : index
    %c0_11 = arith.constant 0 : index
    %12 = vector.load %arg1[%c3, %c0_10, %c0_11] : memref<4x288x9xbf16, #tpu.memory_space<vmem>>, vector<1x288x9xbf16>
    %13 = vector.shape_cast %12 : vector<1x288x9xbf16> to vector<288x9xbf16>
    %cst_12 = arith.constant dense<0.000000e+00> : vector<288x128xf32>
    %14 = tpu.matmul %13, %0, %cst_12 {dimension_numbers = #tpu.dot_dimension_numbers<[1], [0], [0], [1], [0, 0, 1, 1], [], []>} : vector<288x9xbf16>, vector<9x128xbf16>, vector<288x128xf32> -> vector<288x128xf32>
    %15 = arith.maximumf %11, %14 : vector<288x128xf32>
    %c0_13 = arith.constant 0 : index
    %c0_14 = arith.constant 0 : index
    %16 = vector.load %arg3[%c0_13, %c0_14] : memref<1x128xf32, #tpu.memory_space<vmem>>, vector<1x128xf32>
    %17 = vector.broadcast %16 : vector<1x128xf32> to vector<288x128xf32>
    %18 = arith.addf %15, %17 : vector<288x128xf32>
    %cst_15 = arith.constant 0.000000e+00 : f32
    %19 = vector.broadcast %cst_15 : f32 to vector<288x128xf32>
    %20 = arith.maximumf %18, %19 : vector<288x128xf32>
    %21 = arith.truncf %20 : vector<288x128xf32> to vector<288x128xbf16>
    %c0_16 = arith.constant 0 : index
    %c0_17 = arith.constant 0 : index
    %22 = vector.load %arg4[%c0_16, %c0_17] : memref<288x128xbf16, #tpu.memory_space<vmem>>, vector<288x128xbf16>
    tpu.vector_store %arg4[%c0_16, %c0_17], %21 {strides = array<i32>} : memref<288x128xbf16, #tpu.memory_space<vmem>>, vector<288x128xbf16>,
    return
  }
  func.func @transform_0(%arg0: i32) -> (i32, i32, i32) {
    %c0_i32 = arith.constant 0 : i32
    %c0_i32_0 = arith.constant 0 : i32
    %c0_i32_1 = arith.constant 0 : i32
    %c0_i32_2 = arith.constant 0 : i32
    return %c0_i32, %c0_i32_0, %c0_i32_1 : i32, i32, i32
  }
  func.func @transform_1(%arg0: i32) -> (i32, i32) {
    %c0_i32 = arith.constant 0 : i32
    %c0_i32_0 = arith.constant 0 : i32
    %c0_i32_1 = arith.constant 0 : i32
    return %c0_i32, %c0_i32_0 : i32, i32
  }
  func.func @transform_2(%arg0: i32) -> (i32, i32) {
    %c0_i32 = arith.constant 0 : i32
    %c0_i32_0 = arith.constant 0 : i32
    %c0_i32_1 = arith.constant 0 : i32
    return %c0_i32, %c0_i32_0 : i32, i32
  }
  func.func @transform_3(%arg0: i32) -> (i32, i32) {
    %c0_i32 = arith.constant 0 : i32
    %c0_i32_0 = arith.constant 0 : i32
    %c0_i32_1 = arith.constant 0 : i32
    return %c0_i32, %c0_i32_0 : i32, i32
  }
}

module attributes {stable_mosaic.version = 11 : i64} {
  func.func @_conv_relu_pool_kernel(%arg0: i32, %arg1: memref<4x72x1152xbf16, #tpu.memory_space<vmem>>, %arg2: memref<1152x256xbf16, #tpu.memory_space<vmem>>, %arg3: memref<1x256xf32, #tpu.memory_space<vmem>>, %arg4: memref<72x256xbf16, #tpu.memory_space<vmem>>) attributes {dimension_semantics = [#tpu.dimension_semantics<arbitrary>], iteration_bounds = array<i64: 1>, scalar_prefetch = 0 : i64, scratch_operands = 0 : i64, tpu.core_type = #tpu.core_type<tc>, window_params = [{pipeline_mode = #tpu.pipeline_mode<synchronous>, transform_indices = @transform_0, window_bounds = array<i64: 4, 72, 1152>}, {pipeline_mode = #tpu.pipeline_mode<synchronous>, transform_indices = @transform_1, window_bounds = array<i64: 1152, 256>}, {pipeline_mode = #tpu.pipeline_mode<synchronous>, transform_indices = @transform_2, window_bounds = array<i64: 1, 256>}, {pipeline_mode = #tpu.pipeline_mode<synchronous>, transform_indices = @transform_3, window_bounds = array<i64: 72, 256>}]} {
    %c0 = arith.constant 0 : index
    %c0_0 = arith.constant 0 : index
    %0 = vector.load %arg2[%c0, %c0_0] : memref<1152x256xbf16, #tpu.memory_space<vmem>>, vector<1152x256xbf16>
    %c0_1 = arith.constant 0 : index
    %c0_2 = arith.constant 0 : index
    %c0_3 = arith.constant 0 : index
    %1 = vector.load %arg1[%c0_1, %c0_2, %c0_3] : memref<4x72x1152xbf16, #tpu.memory_space<vmem>>, vector<1x72x1152xbf16>
    %2 = vector.shape_cast %1 : vector<1x72x1152xbf16> to vector<72x1152xbf16>
    %cst = arith.constant dense<0.000000e+00> : vector<72x256xf32>
    %3 = tpu.matmul %2, %0, %cst {dimension_numbers = #tpu.dot_dimension_numbers<[1], [0], [0], [1], [0, 0, 1, 1], [], []>} : vector<72x1152xbf16>, vector<1152x256xbf16>, vector<72x256xf32> -> vector<72x256xf32>
    %c1 = arith.constant 1 : index
    %c0_4 = arith.constant 0 : index
    %c0_5 = arith.constant 0 : index
    %4 = vector.load %arg1[%c1, %c0_4, %c0_5] : memref<4x72x1152xbf16, #tpu.memory_space<vmem>>, vector<1x72x1152xbf16>
    %5 = vector.shape_cast %4 : vector<1x72x1152xbf16> to vector<72x1152xbf16>
    %cst_6 = arith.constant dense<0.000000e+00> : vector<72x256xf32>
    %6 = tpu.matmul %5, %0, %cst_6 {dimension_numbers = #tpu.dot_dimension_numbers<[1], [0], [0], [1], [0, 0, 1, 1], [], []>} : vector<72x1152xbf16>, vector<1152x256xbf16>, vector<72x256xf32> -> vector<72x256xf32>
    %7 = arith.maximumf %3, %6 : vector<72x256xf32>
    %c2 = arith.constant 2 : index
    %c0_7 = arith.constant 0 : index
    %c0_8 = arith.constant 0 : index
    %8 = vector.load %arg1[%c2, %c0_7, %c0_8] : memref<4x72x1152xbf16, #tpu.memory_space<vmem>>, vector<1x72x1152xbf16>
    %9 = vector.shape_cast %8 : vector<1x72x1152xbf16> to vector<72x1152xbf16>
    %cst_9 = arith.constant dense<0.000000e+00> : vector<72x256xf32>
    %10 = tpu.matmul %9, %0, %cst_9 {dimension_numbers = #tpu.dot_dimension_numbers<[1], [0], [0], [1], [0, 0, 1, 1], [], []>} : vector<72x1152xbf16>, vector<1152x256xbf16>, vector<72x256xf32> -> vector<72x256xf32>
    %11 = arith.maximumf %7, %10 : vector<72x256xf32>
    %c3 = arith.constant 3 : index
    %c0_10 = arith.constant 0 : index
    %c0_11 = arith.constant 0 : index
    %12 = vector.load %arg1[%c3, %c0_10, %c0_11] : memref<4x72x1152xbf16, #tpu.memory_space<vmem>>, vector<1x72x1152xbf16>
    %13 = vector.shape_cast %12 : vector<1x72x1152xbf16> to vector<72x1152xbf16>
    %cst_12 = arith.constant dense<0.000000e+00> : vector<72x256xf32>
    %14 = tpu.matmul %13, %0, %cst_12 {dimension_numbers = #tpu.dot_dimension_numbers<[1], [0], [0], [1], [0, 0, 1, 1], [], []>} : vector<72x1152xbf16>, vector<1152x256xbf16>, vector<72x256xf32> -> vector<72x256xf32>
    %15 = arith.maximumf %11, %14 : vector<72x256xf32>
    %c0_13 = arith.constant 0 : index
    %c0_14 = arith.constant 0 : index
    %16 = vector.load %arg3[%c0_13, %c0_14] : memref<1x256xf32, #tpu.memory_space<vmem>>, vector<1x256xf32>
    %17 = vector.broadcast %16 : vector<1x256xf32> to vector<72x256xf32>
    %18 = arith.addf %15, %17 : vector<72x256xf32>
    %cst_15 = arith.constant 0.000000e+00 : f32
    %19 = vector.broadcast %cst_15 : f32 to vector<72x256xf32>
    %20 = arith.maximumf %18, %19 : vector<72x256xf32>
    %21 = arith.truncf %20 : vector<72x256xf32> to vector<72x256xbf16>
    %c0_16 = arith.constant 0 : index
    %c0_17 = arith.constant 0 : index
    %22 = vector.load %arg4[%c0_16, %c0_17] : memref<72x256xbf16, #tpu.memory_space<vmem>>, vector<72x256xbf16>
    tpu.vector_store %arg4[%c0_16, %c0_17], %21 {strides = array<i32>} : memref<72x256xbf16, #tpu.memory_space<vmem>>, vector<72x256xbf16>,
    return
  }
  func.func @transform_0(%arg0: i32) -> (i32, i32, i32) {
    %c0_i32 = arith.constant 0 : i32
    %c0_i32_0 = arith.constant 0 : i32
    %c0_i32_1 = arith.constant 0 : i32
    %c0_i32_2 = arith.constant 0 : i32
    return %c0_i32, %c0_i32_0, %c0_i32_1 : i32, i32, i32
  }
  func.func @transform_1(%arg0: i32) -> (i32, i32) {
    %c0_i32 = arith.constant 0 : i32
    %c0_i32_0 = arith.constant 0 : i32
    %c0_i32_1 = arith.constant 0 : i32
    return %c0_i32, %c0_i32_0 : i32, i32
  }
  func.func @transform_2(%arg0: i32) -> (i32, i32) {
    %c0_i32 = arith.constant 0 : i32
    %c0_i32_0 = arith.constant 0 : i32
    %c0_i32_1 = arith.constant 0 : i32
    return %c0_i32, %c0_i32_0 : i32, i32
  }
  func.func @transform_3(%arg0: i32) -> (i32, i32) {
    %c0_i32 = arith.constant 0 : i32
    %c0_i32_0 = arith.constant 0 : i32
    %c0_i32_1 = arith.constant 0 : i32
    return %c0_i32, %c0_i32_0 : i32, i32
  }
}

module attributes {stable_mosaic.version = 11 : i64} {
  func.func @_gemm_bias_kernel(%arg0: i32, %arg1: memref<2x9216xbf16, #tpu.memory_space<vmem>>, %arg2: memref<9216x128xbf16, #tpu.memory_space<vmem>>, %arg3: memref<1x128xf32, #tpu.memory_space<vmem>>, %arg4: memref<2x128xf32, #tpu.memory_space<vmem>>) attributes {dimension_semantics = [#tpu.dimension_semantics<arbitrary>], iteration_bounds = array<i64: 1>, scalar_prefetch = 0 : i64, scratch_operands = 0 : i64, tpu.core_type = #tpu.core_type<tc>, window_params = [{pipeline_mode = #tpu.pipeline_mode<synchronous>, transform_indices = @transform_0, window_bounds = array<i64: 2, 9216>}, {pipeline_mode = #tpu.pipeline_mode<synchronous>, transform_indices = @transform_1, window_bounds = array<i64: 9216, 128>}, {pipeline_mode = #tpu.pipeline_mode<synchronous>, transform_indices = @transform_2, window_bounds = array<i64: 1, 128>}, {pipeline_mode = #tpu.pipeline_mode<synchronous>, transform_indices = @transform_3, window_bounds = array<i64: 2, 128>}]} {
    %c0 = arith.constant 0 : index
    %c0_0 = arith.constant 0 : index
    %0 = vector.load %arg1[%c0, %c0_0] : memref<2x9216xbf16, #tpu.memory_space<vmem>>, vector<2x9216xbf16>
    %c0_1 = arith.constant 0 : index
    %c0_2 = arith.constant 0 : index
    %1 = vector.load %arg2[%c0_1, %c0_2] : memref<9216x128xbf16, #tpu.memory_space<vmem>>, vector<9216x128xbf16>
    %cst = arith.constant dense<0.000000e+00> : vector<2x128xf32>
    %2 = tpu.matmul %0, %1, %cst {dimension_numbers = #tpu.dot_dimension_numbers<[1], [0], [0], [1], [0, 0, 1, 1], [], []>} : vector<2x9216xbf16>, vector<9216x128xbf16>, vector<2x128xf32> -> vector<2x128xf32>
    %c0_3 = arith.constant 0 : index
    %c0_4 = arith.constant 0 : index
    %3 = vector.load %arg3[%c0_3, %c0_4] : memref<1x128xf32, #tpu.memory_space<vmem>>, vector<1x128xf32>
    %4 = vector.broadcast %3 : vector<1x128xf32> to vector<2x128xf32>
    %5 = arith.addf %2, %4 : vector<2x128xf32>
    %c0_5 = arith.constant 0 : index
    %c0_6 = arith.constant 0 : index
    %6 = vector.load %arg4[%c0_5, %c0_6] : memref<2x128xf32, #tpu.memory_space<vmem>>, vector<2x128xf32>
    tpu.vector_store %arg4[%c0_5, %c0_6], %5 {strides = array<i32>} : memref<2x128xf32, #tpu.memory_space<vmem>>, vector<2x128xf32>,
    return
  }
  func.func @transform_0(%arg0: i32) -> (i32, i32) {
    %c0_i32 = arith.constant 0 : i32
    %c0_i32_0 = arith.constant 0 : i32
    %c0_i32_1 = arith.constant 0 : i32
    return %c0_i32, %c0_i32_0 : i32, i32
  }
  func.func @transform_1(%arg0: i32) -> (i32, i32) {
    %c0_i32 = arith.constant 0 : i32
    %c0_i32_0 = arith.constant 0 : i32
    %c0_i32_1 = arith.constant 0 : i32
    return %c0_i32, %c0_i32_0 : i32, i32
  }
  func.func @transform_2(%arg0: i32) -> (i32, i32) {
    %c0_i32 = arith.constant 0 : i32
    %c0_i32_0 = arith.constant 0 : i32
    %c0_i32_1 = arith.constant 0 : i32
    return %c0_i32, %c0_i32_0 : i32, i32
  }
  func.func @transform_3(%arg0: i32) -> (i32, i32) {
    %c0_i32 = arith.constant 0 : i32
    %c0_i32_0 = arith.constant 0 : i32
    %c0_i32_1 = arith.constant 0 : i32
    return %c0_i32, %c0_i32_0 : i32, i32
  }
}

</mosaic_0001>

<llo_original>
// kernel: ble_cnn_forward.3
$region0: #{ble_cnn_forward.3}
  #allocation0 [shape = 'u32[]', space=smem, size = 0x4, offset = 0x4, fixed_abs, tag = 'smem constant byte address 0x4 - core index']
  #allocation1 [shape = 'u32[144,128]{1,0:T(1,128)}', space=vmem, size = 0x12000, scoped, tag = 'internal scratch']
  %s0 = inlined_call_operand.vmem [shape: bf16[4,288,9], index: 0, kind: input, shape index: {}]
  %s1 = inlined_call_operand.vmem [shape: bf16[9,128], index: 1, kind: input, shape index: {}]
  %s2 = inlined_call_operand.vmem [shape: f32[1,128], index: 2, kind: input, shape index: {}]
  %s3 = inlined_call_operand.vmem [shape: bf16[288,128], index: 3, kind: output, shape index: {}]
  %s4 = sld [smem:[#allocation0]]
  $region22: #{ble_cnn_forward.3} parent=0
    _
  %s6 = ssub.s32 1, %s4
  %s7 = scalar_select 0, %s6, %s4
  // Predicated region
  $region2: #{ble_cnn_forward.3} parent=0 // pred_check
    _
  $region3: #{ble_cnn_forward.3} parent=0 // pred_check_branch
    %9 = sbr.rel (0) target = $region5
  $region4: #{ble_cnn_forward.3} parent=0 // pred_region
    _
  $region5: #{ble_cnn_forward.3} parent=0 // pred_fallthru
    _
  // Predicated region
  $region6: #{ble_cnn_forward.3} parent=0 // pred_check
    _
  $region7: #{ble_cnn_forward.3} parent=0 // pred_check_branch
    %11 = sbr.rel (0) target = $region9
  $region8: #{ble_cnn_forward.3} parent=0 // pred_region
    _
  $region9: #{ble_cnn_forward.3} parent=0 // pred_fallthru
    _
  // Predicated region
  $region10: #{ble_cnn_forward.3} parent=0 // pred_check
    _
  $region11: #{ble_cnn_forward.3} parent=0 // pred_check_branch
    %13 = sbr.rel (0) target = $region13
  $region12: #{ble_cnn_forward.3} parent=0 // pred_region
    _
  $region13: #{ble_cnn_forward.3} parent=0 // pred_fallthru
    _
  %v15 = vld [vmem:[%s1] sm:$0xf]
  %v16 = vld [vmem:[%s1 + $0x4] sm:$0x1]
  %v17 = vld [vmem:[%s0] sm:$0xf]
  %v18 = vld [vmem:[%s0 + $0x4] sm:$0xf]
  %v19 = vld [vmem:[%s0 + $0x8] sm:$0xf]
  %v20 = vld [vmem:[%s0 + $0xc] sm:$0xf]
  %v21 = vld [vmem:[%s0 + $0x10] sm:$0xf]
  %v22 = vld [vmem:[%s0 + $0x14] sm:$0xf]
  %v23 = vld [vmem:[%s0 + $0x18] sm:$0xf]
  %v24 = vld [vmem:[%s0 + $0x1c] sm:$0xf]
  %v25 = vld [vmem:[%s0 + $0x20] sm:$0xf]
  %v26 = vld [vmem:[%s0 + $0x24] sm:$0xf]
  %v27 = vld [vmem:[%s0 + $0x28] sm:$0xf]
  %v28 = vld [vmem:[%s0 + $0x2c] sm:$0xf]
  %v29 = vld [vmem:[%s0 + $0x30] sm:$0xf]
  %v30 = vld [vmem:[%s0 + $0x34] sm:$0xf]
  %v31 = vld [vmem:[%s0 + $0x38] sm:$0xf]
  %v32 = vld [vmem:[%s0 + $0x3c] sm:$0xf]
  %v33 = vld [vmem:[%s0 + $0x40] sm:$0xf]
  %v34 = vld [vmem:[%s0 + $0x44] sm:$0xf]
  %v35 = vld [vmem:[%s0 + $0x48] sm:$0xf]
  %v36 = vld [vmem:[%s0 + $0x4c] sm:$0xf]
  %v37 = vld [vmem:[%s0 + $0x50] sm:$0xf]
  %v38 = vld [vmem:[%s0 + $0x54] sm:$0xf]
  %v39 = vld [vmem:[%s0 + $0x58] sm:$0xf]
  %v40 = vld [vmem:[%s0 + $0x5c] sm:$0xf]
  %v41 = vld [vmem:[%s0 + $0x60] sm:$0xf]
  %v42 = vld [vmem:[%s0 + $0x64] sm:$0xf]
  %v43 = vld [vmem:[%s0 + $0x68] sm:$0xf]
  %v44 = vld [vmem:[%s0 + $0x6c] sm:$0xf]
  %v45 = vld [vmem:[%s0 + $0x70] sm:$0xf]
  %v46 = vld [vmem:[%s0 + $0x74] sm:$0xf]
  %v47 = vld [vmem:[%s0 + $0x78] sm:$0xf]
  %v48 = vld [vmem:[%s0 + $0x7c] sm:$0xf]
  %v49 = vld [vmem:[%s0 + $0x80] sm:$0xf]
  %v50 = vld [vmem:[%s0 + $0x84] sm:$0xf]
  %v51 = vld [vmem:[%s0 + $0x88] sm:$0xf]
  %v52 = vld [vmem:[%s0 + $0x8c] sm:$0xf]
  %v89 = vunpack.c.l.b16 %v17
  %v90 = vunpack.c.l.b16 %v18
  %v91 = vunpack.c.l.b16 %v19
  %v92 = vunpack.c.l.b16 %v20
  %v93 = vunpack.c.l.b16 %v21
  %v94 = vunpack.c.l.b16 %v22
  %v95 = vunpack.c.l.b16 %v23
  %v96 = vunpack.c.l.b16 %v24
  %v97 = vunpack.c.l.b16 %v25
  %v98 = vunpack.c.l.b16 %v26
  %v99 = vunpack.c.l.b16 %v27
  %v100 = vunpack.c.l.b16 %v28
  %v101 = vunpack.c.l.b16 %v29
  %v102 = vunpack.c.l.b16 %v30
  %v103 = vunpack.c.l.b16 %v31
  %v104 = vunpack.c.l.b16 %v32
  %v105 = vunpack.c.l.b16 %v33
  %v106 = vunpack.c.l.b16 %v34
  %v107 = vunpack.c.l.b16 %v35
  %v108 = vunpack.c.l.b16 %v36
  %v109 = vunpack.c.l.b16 %v37
  %v110 = vunpack.c.l.b16 %v38
  %v111 = vunpack.c.l.b16 %v39
  %v112 = vunpack.c.l.b16 %v40
  %v113 = vunpack.c.l.b16 %v41
  %v114 = vunpack.c.l.b16 %v42
  %v115 = vunpack.c.l.b16 %v43
  %v116 = vunpack.c.l.b16 %v44
  %v117 = vunpack.c.l.b16 %v45
  %v118 = vunpack.c.l.b16 %v46
  %v119 = vunpack.c.l.b16 %v47
  %v120 = vunpack.c.l.b16 %v48
  %v121 = vunpack.c.l.b16 %v49
  %v122 = vunpack.c.l.b16 %v50
  %v123 = vunpack.c.l.b16 %v51
  %v124 = vunpack.c.l.b16 %v52
  %v125 = vpack.c.b16 %v90, %v89
  %v126 = vpack.c.b16 %v92, %v91
  %v127 = vpack.c.b16 %v94, %v93
  %v128 = vpack.c.b16 %v96, %v95
  %v129 = vpack.c.b16 %v98, %v97
  %v130 = vpack.c.b16 %v100, %v99
  %v131 = vpack.c.b16 %v102, %v101
  %v132 = vpack.c.b16 %v104, %v103
  %v133 = vpack.c.b16 %v106, %v105
  %v134 = vpack.c.b16 %v108, %v107
  %v135 = vpack.c.b16 %v110, %v109
  %v136 = vpack.c.b16 %v112, %v111
  %v137 = vpack.c.b16 %v114, %v113
  %v138 = vpack.c.b16 %v116, %v115
  %v139 = vpack.c.b16 %v118, %v117
  %v140 = vpack.c.b16 %v120, %v119
  %v141 = vpack.c.b16 %v122, %v121
  %v142 = vpack.c.b16 %v124, %v123
  %v145 = vunpack.c.l.b16 %v15
  %v146 = vunpack.c.l.b16 %v16
  %v147 = vpack.c.b16 %v146, %v145
  %vm148 = vcmask 72704
  %v150 = vsel %vm148, %v125, 0
  %v153 = vsel %vm148, %v126, 0
  %v156 = vsel %vm148, %v127, 0
  %v159 = vsel %vm148, %v128, 0
  %v162 = vsel %vm148, %v129, 0
  %v165 = vsel %vm148, %v130, 0
  %v168 = vsel %vm148, %v131, 0
  %v171 = vsel %vm148, %v132, 0
  %v174 = vsel %vm148, %v133, 0
  %v177 = vsel %vm148, %v134, 0
  %v180 = vsel %vm148, %v135, 0
  %v183 = vsel %vm148, %v136, 0
  %v186 = vsel %vm148, %v137, 0
  %v189 = vsel %vm148, %v138, 0
  %v192 = vsel %vm148, %v139, 0
  %v195 = vsel %vm148, %v140, 0
  %v198 = vsel %vm148, %v141, 0
  %v201 = vsel %vm148, %v142, 0
  %vm203 = vcmask 1043456
  %vm204 = vcmask 1044480
  %v205 = vsel %vm203, 4294967295, 65535
  %v206 = vsel %vm204, %v205, 0
  %v208 = vand.u32 %v147, %v206
  %210 = vmatprep.subr.bf16.mxu0 0
  %211 = vmatpush1.bf16.msra.mxu0 %v208
  %212 = vmatprep.subr.bf16.mxu0 0
  %213 = vmatpush1.bf16.msra.mxu0 0
  %214 = vmatprep.subr.bf16.mxu0 0
  %215 = vmatpush1.bf16.msra.mxu0 0
  %216 = vmatprep.subr.bf16.mxu0 0
  %217 = vmatpush1.bf16.msra.mxu0 0
  %218 = vmatprep.subr.bf16.mxu0 0
  %219 = vmatpush1.bf16.msra.mxu0 0
  %220 = vmatprep.subr.bf16.mxu0 0
  %221 = vmatpush1.bf16.msra.mxu0 0
  %222 = vmatprep.subr.bf16.mxu0 0
  %223 = vmatpush1.bf16.msra.mxu0 0
  %224 = vmatprep.subr.bf16.mxu0 0
  %225 = vmatpush1.bf16.msra.mxu0 0
  %226 = vmatprep.subr.bf16.mxu0 0
  %227 = vmatpush1.bf16.msra.mxu0 0
  %228 = vmatprep.subr.bf16.mxu0 0
  %229 = vmatpush1.bf16.msra.mxu0 0
  %230 = vmatprep.subr.bf16.mxu0 0
  %231 = vmatpush1.bf16.msra.mxu0 0
  %232 = vmatprep.subr.bf16.mxu0 0
  %233 = vmatpush1.bf16.msra.mxu0 0
  %234 = vmatprep.subr.bf16.mxu0 0
  %235 = vmatpush1.bf16.msra.mxu0 0
  %236 = vmatprep.subr.bf16.mxu0 0
  %237 = vmatpush1.bf16.msra.mxu0 0
  %238 = vmatprep.subr.bf16.mxu0 0
  %239 = vmatpush1.bf16.msra.mxu0 0
  %240 = vmatprep.subr.bf16.mxu0 0
  %241 = vmatpush1.bf16.msra.mxu0 0
  %242 = vmatprep.mubr.bf16.mxu0 0
  %243 = vmatmul.mubr.bf16.gmra.mrb[0].mxu0 %v150
  %v244 = vpop.f32.mrb[0].mxu0
  %v245 = vadd.f32 0.0, %v244
  %v246 = vpop.f32.mrb[0].mxu0
  %v247 = vpop.f32.mrb[0].mxu0
  %v248 = vadd.f32 0.0, %v247
  %v249 = vpop.f32.mrb[0].mxu0
  %250 = vmatprep.mubr.bf16.mxu0 0
  %251 = vmatmul.mubr.bf16.gmra.mrb[0].mxu0 %v153
  %v252 = vpop.f32.mrb[0].mxu0
  %v253 = vadd.f32 0.0, %v252
  %v254 = vpop.f32.mrb[0].mxu0
  %v255 = vpop.f32.mrb[0].mxu0
  %v256 = vadd.f32 0.0, %v255
  %v257 = vpop.f32.mrb[0].mxu0
  %258 = vmatprep.mubr.bf16.mxu0 0
  %259 = vmatmul.mubr.bf16.gmra.mrb[0].mxu0 %v156
  %v260 = vpop.f32.mrb[0].mxu0
  %v261 = vadd.f32 0.0, %v260
  %v262 = vpop.f32.mrb[0].mxu0
  %v263 = vpop.f32.mrb[0].mxu0
  %v264 = vadd.f32 0.0, %v263
  %v265 = vpop.f32.mrb[0].mxu0
  %266 = vmatprep.mubr.bf16.mxu0 0
  %267 = vmatmul.mubr.bf16.gmra.mrb[0].mxu0 %v159
  %v268 = vpop.f32.mrb[0].mxu0
  %v269 = vadd.f32 0.0, %v268
  %v270 = vpop.f32.mrb[0].mxu0
  %v271 = vpop.f32.mrb[0].mxu0
  %v272 = vadd.f32 0.0, %v271
  %v273 = vpop.f32.mrb[0].mxu0
  %274 = vmatprep.mubr.bf16.mxu0 0
  %275 = vmatmul.mubr.bf16.gmra.mrb[0].mxu0 %v162
  %v276 = vpop.f32.mrb[0].mxu0
  %v277 = vadd.f32 0.0, %v276
  %v278 = vpop.f32.mrb[0].mxu0
  %v279 = vpop.f32.mrb[0].mxu0
  %v280 = vadd.f32 0.0, %v279
  %v281 = vpop.f32.mrb[0].mxu0
  %282 = vmatprep.mubr.bf16.mxu0 0
  %283 = vmatmul.mubr.bf16.gmra.mrb[0].mxu0 %v165
  %v284 = vpop.f32.mrb[0].mxu0
  %v285 = vadd.f32 0.0, %v284
  %v286 = vpop.f32.mrb[0].mxu0
  %v287 = vpop.f32.mrb[0].mxu0
  %v288 = vadd.f32 0.0, %v287
  %v289 = vpop.f32.mrb[0].mxu0
  %290 = vmatprep.mubr.bf16.mxu0 0
  %291 = vmatmul.mubr.bf16.gmra.mrb[0].mxu0 %v168
  %v292 = vpop.f32.mrb[0].mxu0
  %v293 = vadd.f32 0.0, %v292
  %v294 = vpop.f32.mrb[0].mxu0
  %v295 = vpop.f32.mrb[0].mxu0
  %v296 = vadd.f32 0.0, %v295
  %v297 = vpop.f32.mrb[0].mxu0
  %298 = vmatprep.mubr.bf16.mxu0 0
  %299 = vmatmul.mubr.bf16.gmra.mrb[0].mxu0 %v171
  %v300 = vpop.f32.mrb[0].mxu0
  %v301 = vadd.f32 0.0, %v300
  %v302 = vpop.f32.mrb[0].mxu0
  %v303 = vpop.f32.mrb[0].mxu0
  %v304 = vadd.f32 0.0, %v303
  %v305 = vpop.f32.mrb[0].mxu0
  %306 = vmatprep.mubr.bf16.mxu0 0
  %307 = vmatmul.mubr.bf16.gmra.mrb[0].mxu0 %v174
  %v308 = vpop.f32.mrb[0].mxu0
  %v309 = vadd.f32 0.0, %v308
  %v310 = vpop.f32.mrb[0].mxu0
  %v311 = vpop.f32.mrb[0].mxu0
  %v312 = vadd.f32 0.0, %v311
  %v313 = vpop.f32.mrb[0].mxu0
  %314 = vmatprep.mubr.bf16.mxu0 0
  %315 = vmatmul.mubr.bf16.gmra.mrb[0].mxu0 %v177
  %v316 = vpop.f32.mrb[0].mxu0
  %v317 = vadd.f32 0.0, %v316
  %v318 = vpop.f32.mrb[0].mxu0
  %v319 = vpop.f32.mrb[0].mxu0
  %v320 = vadd.f32 0.0, %v319
  %v321 = vpop.f32.mrb[0].mxu0
  %322 = vmatprep.mubr.bf16.mxu0 0
  %323 = vmatmul.mubr.bf16.gmra.mrb[0].mxu0 %v180
  %v324 = vpop.f32.mrb[0].mxu0
  %v325 = vadd.f32 0.0, %v324
  %v326 = vpop.f32.mrb[0].mxu0
  %v327 = vpop.f32.mrb[0].mxu0
  %v328 = vadd.f32 0.0, %v327
  %v329 = vpop.f32.mrb[0].mxu0
  %330 = vmatprep.mubr.bf16.mxu0 0
  %331 = vmatmul.mubr.bf16.gmra.mrb[0].mxu0 %v183
  %v332 = vpop.f32.mrb[0].mxu0
  %v333 = vadd.f32 0.0, %v332
  %v334 = vpop.f32.mrb[0].mxu0
  %v335 = vpop.f32.mrb[0].mxu0
  %v336 = vadd.f32 0.0, %v335
  %v337 = vpop.f32.mrb[0].mxu0
  %338 = vmatprep.mubr.bf16.mxu0 0
  %339 = vmatmul.mubr.bf16.gmra.mrb[0].mxu0 %v186
  %v340 = vpop.f32.mrb[0].mxu0
  %v341 = vadd.f32 0.0, %v340
  %v342 = vpop.f32.mrb[0].mxu0
  %v343 = vpop.f32.mrb[0].mxu0
  %v344 = vadd.f32 0.0, %v343
  %v345 = vpop.f32.mrb[0].mxu0
  %346 = vmatprep.mubr.bf16.mxu0 0
  %347 = vmatmul.mubr.bf16.gmra.mrb[0].mxu0 %v189
  %v348 = vpop.f32.mrb[0].mxu0
  %v349 = vadd.f32 0.0, %v348
  %v350 = vpop.f32.mrb[0].mxu0
  %v351 = vpop.f32.mrb[0].mxu0
  %v352 = vadd.f32 0.0, %v351
  %v353 = vpop.f32.mrb[0].mxu0
  %354 = vmatprep.mubr.bf16.mxu0 0
  %355 = vmatmul.mubr.bf16.gmra.mrb[0].mxu0 %v192
  %v356 = vpop.f32.mrb[0].mxu0
  %v357 = vadd.f32 0.0, %v356
  %v358 = vpop.f32.mrb[0].mxu0
  %v359 = vpop.f32.mrb[0].mxu0
  %v360 = vadd.f32 0.0, %v359
  %v361 = vpop.f32.mrb[0].mxu0
  %362 = vmatprep.mubr.bf16.mxu0 0
  %363 = vmatmul.mubr.bf16.gmra.mrb[0].mxu0 %v195
  %v364 = vpop.f32.mrb[0].mxu0
  %v365 = vadd.f32 0.0, %v364
  %v366 = vpop.f32.mrb[0].mxu0
  %v367 = vpop.f32.mrb[0].mxu0
  %v368 = vadd.f32 0.0, %v367
  %v369 = vpop.f32.mrb[0].mxu0
  %370 = vmatprep.mubr.bf16.mxu0 0
  %371 = vmatmul.mubr.bf16.gmra.mrb[0].mxu0 %v198
  %v372 = vpop.f32.mrb[0].mxu0
  %v373 = vadd.f32 0.0, %v372
  %v374 = vpop.f32.mrb[0].mxu0
  %v375 = vpop.f32.mrb[0].mxu0
  %v376 = vadd.f32 0.0, %v375
  %v377 = vpop.f32.mrb[0].mxu0
  %378 = vmatprep.mubr.bf16.mxu0 0
  %379 = vmatmul.mubr.bf16.gmra.mrb[0].mxu0 %v201
  %v380 = vpop.f32.mrb[0].mxu0
  %v381 = vadd.f32 0.0, %v380
  %v382 = vpop.f32.mrb[0].mxu0
  %v383 = vpop.f32.mrb[0].mxu0
  %v384 = vadd.f32 0.0, %v383
  %v385 = vpop.f32.mrb[0].mxu0
  %386 = vdwg.mxu0
  %s387 = scalar_lea.vmem %s0, 144
  %v388 = vld [vmem:[%s387] sm:$0xf]
  %v389 = vld [vmem:[%s387 + $0x4] sm:$0xf]
  %v390 = vld [vmem:[%s387 + $0x8] sm:$0xf]
  %v391 = vld [vmem:[%s387 + $0xc] sm:$0xf]
  %v392 = vld [vmem:[%s387 + $0x10] sm:$0xf]
  %v393 = vld [vmem:[%s387 + $0x14] sm:$0xf]
  %v394 = vld [vmem:[%s387 + $0x18] sm:$0xf]
  %v395 = vld [vmem:[%s387 + $0x1c] sm:$0xf]
  %v396 = vld [vmem:[%s387 + $0x20] sm:$0xf]
  %v397 = vld [vmem:[%s387 + $0x24] sm:$0xf]
  %v398 = vld [vmem:[%s387 + $0x28] sm:$0xf]
  %v399 = vld [vmem:[%s387 + $0x2c] sm:$0xf]
  %v400 = vld [vmem:[%s387 + $0x30] sm:$0xf]
  %v401 = vld [vmem:[%s387 + $0x34] sm:$0xf]
  %v402 = vld [vmem:[%s387 + $0x38] sm:$0xf]
  %v403 = vld [vmem:[%s387 + $0x3c] sm:$0xf]
  %v404 = vld [vmem:[%s387 + $0x40] sm:$0xf]
  %v405 = vld [vmem:[%s387 + $0x44] sm:$0xf]
  %v406 = vld [vmem:[%s387 + $0x48] sm:$0xf]
  %v407 = vld [vmem:[%s387 + $0x4c] sm:$0xf]
  %v408 = vld [vmem:[%s387 + $0x50] sm:$0xf]
  %v409 = vld [vmem:[%s387 + $0x54] sm:$0xf]
  %v410 = vld [vmem:[%s387 + $0x58] sm:$0xf]
  %v411 = vld [vmem:[%s387 + $0x5c] sm:$0xf]
  %v412 = vld [vmem:[%s387 + $0x60] sm:$0xf]
  %v413 = vld [vmem:[%s387 + $0x64] sm:$0xf]
  %v414 = vld [vmem:[%s387 + $0x68] sm:$0xf]
  %v415 = vld [vmem:[%s387 + $0x6c] sm:$0xf]
  %v416 = vld [vmem:[%s387 + $0x70] sm:$0xf]
  %v417 = vld [vmem:[%s387 + $0x74] sm:$0xf]
  %v418 = vld [vmem:[%s387 + $0x78] sm:$0xf]
  %v419 = vld [vmem:[%s387 + $0x7c] sm:$0xf]
  %v420 = vld [vmem:[%s387 + $0x80] sm:$0xf]
  %v421 = vld [vmem:[%s387 + $0x84] sm:$0xf]
  %v422 = vld [vmem:[%s387 + $0x88] sm:$0xf]
  %v423 = vld [vmem:[%s387 + $0x8c] sm:$0xf]
  %v460 = vunpack.c.l.b16 %v388
  %v461 = vunpack.c.l.b16 %v389
  %v462 = vunpack.c.l.b16 %v390
  %v463 = vunpack.c.l.b16 %v391
  %v464 = vunpack.c.l.b16 %v392
  %v465 = vunpack.c.l.b16 %v393
  %v466 = vunpack.c.l.b16 %v394
  %v467 = vunpack.c.l.b16 %v395
  %v468 = vunpack.c.l.b16 %v396
  %v469 = vunpack.c.l.b16 %v397
  %v470 = vunpack.c.l.b16 %v398
  %v471 = vunpack.c.l.b16 %v399
  %v472 = vunpack.c.l.b16 %v400
  %v473 = vunpack.c.l.b16 %v401
  %v474 = vunpack.c.l.b16 %v402
  %v475 = vunpack.c.l.b16 %v403
  %v476 = vunpack.c.l.b16 %v404
  %v477 = vunpack.c.l.b16 %v405
  %v478 = vunpack.c.l.b16 %v406
  %v479 = vunpack.c.l.b16 %v407
  %v480 = vunpack.c.l.b16 %v408
  %v481 = vunpack.c.l.b16 %v409
  %v482 = vunpack.c.l.b16 %v410
  %v483 = vunpack.c.l.b16 %v411
  %v484 = vunpack.c.l.b16 %v412
  %v485 = vunpack.c.l.b16 %v413
  %v486 = vunpack.c.l.b16 %v414
  %v487 = vunpack.c.l.b16 %v415
  %v488 = vunpack.c.l.b16 %v416
  %v489 = vunpack.c.l.b16 %v417
  %v490 = vunpack.c.l.b16 %v418
  %v491 = vunpack.c.l.b16 %v419
  %v492 = vunpack.c.l.b16 %v420
  %v493 = vunpack.c.l.b16 %v421
  %v494 = vunpack.c.l.b16 %v422
  %v495 = vunpack.c.l.b16 %v423
  %v496 = vpack.c.b16 %v461, %v460
  %v497 = vpack.c.b16 %v463, %v462
  %v498 = vpack.c.b16 %v465, %v464
  %v499 = vpack.c.b16 %v467, %v466
  %v500 = vpack.c.b16 %v469, %v468
  %v501 = vpack.c.b16 %v471, %v470
  %v502 = vpack.c.b16 %v473, %v472
  %v503 = vpack.c.b16 %v475, %v474
  %v504 = vpack.c.b16 %v477, %v476
  %v505 = vpack.c.b16 %v479, %v478
  %v506 = vpack.c.b16 %v481, %v480
  %v507 = vpack.c.b16 %v483, %v482
  %v508 = vpack.c.b16 %v485, %v484
  %v509 = vpack.c.b16 %v487, %v486
  %v510 = vpack.c.b16 %v489, %v488
  %v511 = vpack.c.b16 %v491, %v490
  %v512 = vpack.c.b16 %v493, %v492
  %v513 = vpack.c.b16 %v495, %v494
  %v515 = vsel %vm148, %v496, 0
  %v518 = vsel %vm148, %v497, 0
  %v521 = vsel %vm148, %v498, 0
  %v524 = vsel %vm148, %v499, 0
  %v527 = vsel %vm148, %v500, 0
  %v530 = vsel %vm148, %v501, 0
  %v533 = vsel %vm148, %v502, 0
  %v536 = vsel %vm148, %v503, 0
  %v539 = vsel %vm148, %v504, 0
  %v542 = vsel %vm148, %v505, 0
  %v545 = vsel %vm148, %v506, 0
  %v548 = vsel %vm148, %v507, 0
  %v551 = vsel %vm148, %v508, 0
  %v554 = vsel %vm148, %v509, 0
  %v557 = vsel %vm148, %v510, 0
  %v560 = vsel %vm148, %v511, 0
  %v563 = vsel %vm148, %v512, 0
  %v566 = vsel %vm148, %v513, 0
  %568 = vmatprep.subr.bf16.mxu0 0
  %569 = vmatpush1.bf16.msra.mxu0 %v208
  %570 = vmatprep.subr.bf16.mxu0 0
  %571 = vmatpush1.bf16.msra.mxu0 0
  %572 = vmatprep.subr.bf16.mxu0 0
  %573 = vmatpush1.bf16.msra.mxu0 0
  %574 = vmatprep.subr.bf16.mxu0 0
  %575 = vmatpush1.bf16.msra.mxu0 0
  %576 = vmatprep.subr.bf16.mxu0 0
  %577 = vmatpush1.bf16.msra.mxu0 0
  %578 = vmatprep.subr.bf16.mxu0 0
  %579 = vmatpush1.bf16.msra.mxu0 0
  %580 = vmatprep.subr.bf16.mxu0 0
  %581 = vmatpush1.bf16.msra.mxu0 0
  %582 = vmatprep.subr.bf16.mxu0 0
  %583 = vmatpush1.bf16.msra.mxu0 0
  %584 = vmatprep.subr.bf16.mxu0 0
  %585 = vmatpush1.bf16.msra.mxu0 0
  %586 = vmatprep.subr.bf16.mxu0 0
  %587 = vmatpush1.bf16.msra.mxu0 0
  %588 = vmatprep.subr.bf16.mxu0 0
  %589 = vmatpush1.bf16.msra.mxu0 0
  %590 = vmatprep.subr.bf16.mxu0 0
  %591 = vmatpush1.bf16.msra.mxu0 0
  %592 = vmatprep.subr.bf16.mxu0 0
  %593 = vmatpush1.bf16.msra.mxu0 0
  %594 = vmatprep.subr.bf16.mxu0 0
  %595 = vmatpush1.bf16.msra.mxu0 0
  %596 = vmatprep.subr.bf16.mxu0 0
  %597 = vmatpush1.bf16.msra.mxu0 0
  %598 = vmatprep.subr.bf16.mxu0 0
  %599 = vmatpush1.bf16.msra.mxu0 0
  %600 = vmatprep.mubr.bf16.mxu0 0
  %601 = vmatmul.mubr.bf16.gmra.mrb[0].mxu0 %v515
  %v602 = vpop.f32.mrb[0].mxu0
  %v603 = vadd.f32 0.0, %v602
  %v604 = vpop.f32.mrb[0].mxu0
  %v605 = vpop.f32.mrb[0].mxu0
  %v606 = vadd.f32 0.0, %v605
  %v607 = vpop.f32.mrb[0].mxu0
  %608 = vmatprep.mubr.bf16.mxu0 0
  %609 = vmatmul.mubr.bf16.gmra.mrb[0].mxu0 %v518
  %v610 = vpop.f32.mrb[0].mxu0
  %v611 = vadd.f32 0.0, %v610
  %v612 = vpop.f32.mrb[0].mxu0
  %v613 = vpop.f32.mrb[0].mxu0
  %v614 = vadd.f32 0.0, %v613
  %v615 = vpop.f32.mrb[0].mxu0
  %616 = vmatprep.mubr.bf16.mxu0 0
  %617 = vmatmul.mubr.bf16.gmra.mrb[0].mxu0 %v521
  %v618 = vpop.f32.mrb[0].mxu0
  %v619 = vadd.f32 0.0, %v618
  %v620 = vpop.f32.mrb[0].mxu0
  %v621 = vpop.f32.mrb[0].mxu0
  %v622 = vadd.f32 0.0, %v621
  %v623 = vpop.f32.mrb[0].mxu0
  %624 = vmatprep.mubr.bf16.mxu0 0
  %625 = vmatmul.mubr.bf16.gmra.mrb[0].mxu0 %v524
  %v626 = vpop.f32.mrb[0].mxu0
  %v627 = vadd.f32 0.0, %v626
  %v628 = vpop.f32.mrb[0].mxu0
  %v629 = vpop.f32.mrb[0].mxu0
  %v630 = vadd.f32 0.0, %v629
  %v631 = vpop.f32.mrb[0].mxu0
  %632 = vmatprep.mubr.bf16.mxu0 0
  %633 = vmatmul.mubr.bf16.gmra.mrb[0].mxu0 %v527
  %v634 = vpop.f32.mrb[0].mxu0
  %v635 = vadd.f32 0.0, %v634
  %v636 = vpop.f32.mrb[0].mxu0
  %v637 = vpop.f32.mrb[0].mxu0
  %v638 = vadd.f32 0.0, %v637
  %v639 = vpop.f32.mrb[0].mxu0
  %640 = vmatprep.mubr.bf16.mxu0 0
  %641 = vmatmul.mubr.bf16.gmra.mrb[0].mxu0 %v530
  %v642 = vpop.f32.mrb[0].mxu0
  %v643 = vadd.f32 0.0, %v642
  %v644 = vpop.f32.mrb[0].mxu0
  %v645 = vpop.f32.mrb[0].mxu0
  %v646 = vadd.f32 0.0, %v645
  %v647 = vpop.f32.mrb[0].mxu0
  %648 = vmatprep.mubr.bf16.mxu0 0
  %649 = vmatmul.mubr.bf16.gmra.mrb[0].mxu0 %v533
  %v650 = vpop.f32.mrb[0].mxu0
  %v651 = vadd.f32 0.0, %v650
  %v652 = vpop.f32.mrb[0].mxu0
  %v653 = vpop.f32.mrb[0].mxu0
  %v654 = vadd.f32 0.0, %v653
  %v655 = vpop.f32.mrb[0].mxu0
  %656 = vmatprep.mubr.bf16.mxu0 0
  %657 = vmatmul.mubr.bf16.gmra.mrb[0].mxu0 %v536
  %v658 = vpop.f32.mrb[0].mxu0
  %v659 = vadd.f32 0.0, %v658
  %v660 = vpop.f32.mrb[0].mxu0
  %v661 = vpop.f32.mrb[0].mxu0
  %v662 = vadd.f32 0.0, %v661
  %v663 = vpop.f32.mrb[0].mxu0
  %664 = vmatprep.mubr.bf16.mxu0 0
  %665 = vmatmul.mubr.bf16.gmra.mrb[0].mxu0 %v539
  %v666 = vpop.f32.mrb[0].mxu0
  %v667 = vadd.f32 0.0, %v666
  %v668 = vpop.f32.mrb[0].mxu0
  %v669 = vpop.f32.mrb[0].mxu0
  %v670 = vadd.f32 0.0, %v669
  %v671 = vpop.f32.mrb[0].mxu0
  %672 = vmatprep.mubr.bf16.mxu0 0
  %673 = vmatmul.mubr.bf16.gmra.mrb[0].mxu0 %v542
  %v674 = vpop.f32.mrb[0].mxu0
  %v675 = vadd.f32 0.0, %v674
  %v676 = vpop.f32.mrb[0].mxu0
  %v677 = vpop.f32.mrb[0].mxu0
  %v678 = vadd.f32 0.0, %v677
  %v679 = vpop.f32.mrb[0].mxu0
  %680 = vmatprep.mubr.bf16.mxu0 0
  %681 = vmatmul.mubr.bf16.gmra.mrb[0].mxu0 %v545
  %v682 = vpop.f32.mrb[0].mxu0
  %v683 = vadd.f32 0.0, %v682
  %v684 = vpop.f32.mrb[0].mxu0
  %v685 = vpop.f32.mrb[0].mxu0
  %v686 = vadd.f32 0.0, %v685
  %v687 = vpop.f32.mrb[0].mxu0
  %688 = vmatprep.mubr.bf16.mxu0 0
  %689 = vmatmul.mubr.bf16.gmra.mrb[0].mxu0 %v548
  %v690 = vpop.f32.mrb[0].mxu0
  %v691 = vadd.f32 0.0, %v690
  %v692 = vpop.f32.mrb[0].mxu0
  %v693 = vpop.f32.mrb[0].mxu0
  %v694 = vadd.f32 0.0, %v693
  %v695 = vpop.f32.mrb[0].mxu0
  %696 = vmatprep.mubr.bf16.mxu0 0
  %697 = vmatmul.mubr.bf16.gmra.mrb[0].mxu0 %v551
  %v698 = vpop.f32.mrb[0].mxu0
  %v699 = vadd.f32 0.0, %v698
  %v700 = vpop.f32.mrb[0].mxu0
  %v701 = vpop.f32.mrb[0].mxu0
  %v702 = vadd.f32 0.0, %v701
  %v703 = vpop.f32.mrb[0].mxu0
  %704 = vmatprep.mubr.bf16.mxu0 0
  %705 = vmatmul.mubr.bf16.gmra.mrb[0].mxu0 %v554
  %v706 = vpop.f32.mrb[0].mxu0
  %v707 = vadd.f32 0.0, %v706
  %v708 = vpop.f32.mrb[0].mxu0
  %v709 = vpop.f32.mrb[0].mxu0
  %v710 = vadd.f32 0.0, %v709
  %v711 = vpop.f32.mrb[0].mxu0
  %712 = vmatprep.mubr.bf16.mxu0 0
  %713 = vmatmul.mubr.bf16.gmra.mrb[0].mxu0 %v557
  %v714 = vpop.f32.mrb[0].mxu0
  %v715 = vadd.f32 0.0, %v714
  %v716 = vpop.f32.mrb[0].mxu0
  %v717 = vpop.f32.mrb[0].mxu0
  %v718 = vadd.f32 0.0, %v717
  %v719 = vpop.f32.mrb[0].mxu0
  %720 = vmatprep.mubr.bf16.mxu0 0
  %721 = vmatmul.mubr.bf16.gmra.mrb[0].mxu0 %v560
  %v722 = vpop.f32.mrb[0].mxu0
  %v723 = vadd.f32 0.0, %v722
  %v724 = vpop.f32.mrb[0].mxu0
  %v725 = vpop.f32.mrb[0].mxu0
  %v726 = vadd.f32 0.0, %v725
  %v727 = vpop.f32.mrb[0].mxu0
  %728 = vmatprep.mubr.bf16.mxu0 0
  %729 = vmatmul.mubr.bf16.gmra.mrb[0].mxu0 %v563
  %v730 = vpop.f32.mrb[0].mxu0
  %v731 = vadd.f32 0.0, %v730
  %v732 = vpop.f32.mrb[0].mxu0
  %v733 = vpop.f32.mrb[0].mxu0
  %v734 = vadd.f32 0.0, %v733
  %v735 = vpop.f32.mrb[0].mxu0
  %736 = vmatprep.mubr.bf16.mxu0 0
  %737 = vmatmul.mubr.bf16.gmra.mrb[0].mxu0 %v566
  %v738 = vpop.f32.mrb[0].mxu0
  %v739 = vadd.f32 0.0, %v738
  %v740 = vpop.f32.mrb[0].mxu0
  %v741 = vpop.f32.mrb[0].mxu0
  %v742 = vadd.f32 0.0, %v741
  %v743 = vpop.f32.mrb[0].mxu0
  %744 = vdwg.mxu0
  %v745 = vmax.f32 %v245, %v603
  %v746 = vmax.f32 %v248, %v606
  %v747 = vmax.f32 %v253, %v611
  %v748 = vmax.f32 %v256, %v614
  %v749 = vmax.f32 %v261, %v619
  %v750 = vmax.f32 %v264, %v622
  %v751 = vmax.f32 %v269, %v627
  %v752 = vmax.f32 %v272, %v630
  %v753 = vmax.f32 %v277, %v635
  %v754 = vmax.f32 %v280, %v638
  %v755 = vmax.f32 %v285, %v643
  %v756 = vmax.f32 %v288, %v646
  %v757 = vmax.f32 %v293, %v651
  %v758 = vmax.f32 %v296, %v654
  %v759 = vmax.f32 %v301, %v659
  %v760 = vmax.f32 %v304, %v662
  %v761 = vmax.f32 %v309, %v667
  %v762 = vmax.f32 %v312, %v670
  %v763 = vmax.f32 %v317, %v675
  %v764 = vmax.f32 %v320, %v678
  %v765 = vmax.f32 %v325, %v683
  %v766 = vmax.f32 %v328, %v686
  %v767 = vmax.f32 %v333, %v691
  %v768 = vmax.f32 %v336, %v694
  %v769 = vmax.f32 %v341, %v699
  %v770 = vmax.f32 %v344, %v702
  %v771 = vmax.f32 %v349, %v707
  %v772 = vmax.f32 %v352, %v710
  %v773 = vmax.f32 %v357, %v715
  %v774 = vmax.f32 %v360, %v718
  %v775 = vmax.f32 %v365, %v723
  %v776 = vmax.f32 %v368, %v726
  %v777 = vmax.f32 %v373, %v731
  %v778 = vmax.f32 %v376, %v734
  %v779 = vmax.f32 %v381, %v739
  %v780 = vmax.f32 %v384, %v742
  %s781 = scalar_lea.vmem %s0, 288
  %v782 = vld [vmem:[%s781] sm:$0xf]
  %v783 = vld [vmem:[%s781 + $0x4] sm:$0xf]
  %v784 = vld [vmem:[%s781 + $0x8] sm:$0xf]
  %v785 = vld [vmem:[%s781 + $0xc] sm:$0xf]
  %v786 = vld [vmem:[%s781 + $0x10] sm:$0xf]
  %v787 = vld [vmem:[%s781 + $0x14] sm:$0xf]
  %v788 = vld [vmem:[%s781 + $0x18] sm:$0xf]
  %v789 = vld [vmem:[%s781 + $0x1c] sm:$0xf]
  %v790 = vld [vmem:[%s781 + $0x20] sm:$0xf]
  %v791 = vld [vmem:[%s781 + $0x24] sm:$0xf]
  %v792 = vld [vmem:[%s781 + $0x28] sm:$0xf]
  %v793 = vld [vmem:[%s781 + $0x2c] sm:$0xf]
  %v794 = vld [vmem:[%s781 + $0x30] sm:$0xf]
  %v795 = vld [vmem:[%s781 + $0x34] sm:$0xf]
  %v796 = vld [vmem:[%s781 + $0x38] sm:$0xf]
  %v797 = vld [vmem:[%s781 + $0x3c] sm:$0xf]
  %v798 = vld [vmem:[%s781 + $0x40] sm:$0xf]
  %v799 = vld [vmem:[%s781 + $0x44] sm:$0xf]
  %v800 = vld [vmem:[%s781 + $0x48] sm:$0xf]
  %v801 = vld [vmem:[%s781 + $0x4c] sm:$0xf]
  %v802 = vld [vmem:[%s781 + $0x50] sm:$0xf]
  %v803 = vld [vmem:[%s781 + $0x54] sm:$0xf]
  %v804 = vld [vmem:[%s781 + $0x58] sm:$0xf]
  %v805 = vld [vmem:[%s781 + $0x5c] sm:$0xf]
  %v806 = vld [vmem:[%s781 + $0x60] sm:$0xf]
  %v807 = vld [vmem:[%s781 + $0x64] sm:$0xf]
  %v808 = vld [vmem:[%s781 + $0x68] sm:$0xf]
  %v809 = vld [vmem:[%s781 + $0x6c] sm:$0xf]
  %v810 = vld [vmem:[%s781 + $0x70] sm:$0xf]
  %v811 = vld [vmem:[%s781 + $0x74] sm:$0xf]
  %v812 = vld [vmem:[%s781 + $0x78] sm:$0xf]
  %v813 = vld [vmem:[%s781 + $0x7c] sm:$0xf]
  %v814 = vld [vmem:[%s781 + $0x80] sm:$0xf]
  %v815 = vld [vmem:[%s781 + $0x84] sm:$0xf]
  %v816 = vld [vmem:[%s781 + $0x88] sm:$0xf]
  %v817 = vld [vmem:[%s781 + $0x8c] sm:$0xf]
  %v854 = vunpack.c.l.b16 %v782
  %v855 = vunpack.c.l.b16 %v783
  %v856 = vunpack.c.l.b16 %v784
  %v857 = vunpack.c.l.b16 %v785
  %v858 = vunpack.c.l.b16 %v786
  %v859 = vunpack.c.l.b16 %v787
  %v860 = vunpack.c.l.b16 %v788
  %v861 = vunpack.c.l.b16 %v789
  %v862 = vunpack.c.l.b16 %v790
  %v863 = vunpack.c.l.b16 %v791
  %v864 = vunpack.c.l.b16 %v792
  %v865 = vunpack.c.l.b16 %v793
  %v866 = vunpack.c.l.b16 %v794
  %v867 = vunpack.c.l.b16 %v795
  %v868 = vunpack.c.l.b16 %v796
  %v869 = vunpack.c.l.b16 %v797
  %v870 = vunpack.c.l.b16 %v798
  %v871 = vunpack.c.l.b16 %v799
  %v872 = vunpack.c.l.b16 %v800
  %v873 = vunpack.c.l.b16 %v801
  %v874 = vunpack.c.l.b16 %v802
  %v875 = vunpack.c.l.b16 %v803
  %v876 = vunpack.c.l.b16 %v804
  %v877 = vunpack.c.l.b16 %v805
  %v878 = vunpack.c.l.b16 %v806
  %v879 = vunpack.c.l.b16 %v807
  %v880 = vunpack.c.l.b16 %v808
  %v881 = vunpack.c.l.b16 %v809
  %v882 = vunpack.c.l.b16 %v810
  %v883 = vunpack.c.l.b16 %v811
  %v884 = vunpack.c.l.b16 %v812
  %v885 = vunpack.c.l.b16 %v813
  %v886 = vunpack.c.l.b16 %v814
  %v887 = vunpack.c.l.b16 %v815
  %v888 = vunpack.c.l.b16 %v816
  %v889 = vunpack.c.l.b16 %v817
  %v890 = vpack.c.b16 %v855, %v854
  %v891 = vpack.c.b16 %v857, %v856
  %v892 = vpack.c.b16 %v859, %v858
  %v893 = vpack.c.b16 %v861, %v860
  %v894 = vpack.c.b16 %v863, %v862
  %v895 = vpack.c.b16 %v865, %v864
  %v896 = vpack.c.b16 %v867, %v866
  %v897 = vpack.c.b16 %v869, %v868
  %v898 = vpack.c.b16 %v871, %v870
  %v899 = vpack.c.b16 %v873, %v872
  %v900 = vpack.c.b16 %v875, %v874
  %v901 = vpack.c.b16 %v877, %v876
  %v902 = vpack.c.b16 %v879, %v878
  %v903 = vpack.c.b16 %v881, %v880
  %v904 = vpack.c.b16 %v883, %v882
  %v905 = vpack.c.b16 %v885, %v884
  %v906 = vpack.c.b16 %v887, %v886
  %v907 = vpack.c.b16 %v889, %v888
  %v909 = vsel %vm148, %v890, 0
  %v912 = vsel %vm148, %v891, 0
  %v915 = vsel %vm148, %v892, 0
  %v918 = vsel %vm148, %v893, 0
  %v921 = vsel %vm148, %v894, 0
  %v924 = vsel %vm148, %v895, 0
  %v927 = vsel %vm148, %v896, 0
  %v930 = vsel %vm148, %v897, 0
  %v933 = vsel %vm148, %v898, 0
  %v936 = vsel %vm148, %v899, 0
  %v939 = vsel %vm148, %v900, 0
  %v942 = vsel %vm148, %v901, 0
  %v945 = vsel %vm148, %v902, 0
  %v948 = vsel %vm148, %v903, 0
  %v951 = vsel %vm148, %v904, 0
  %v954 = vsel %vm148, %v905, 0
  %v957 = vsel %vm148, %v906, 0
  %v960 = vsel %vm148, %v907, 0
  %962 = vmatprep.subr.bf16.mxu0 0
  %963 = vmatpush1.bf16.msra.mxu0 %v208
  %964 = vmatprep.subr.bf16.mxu0 0
  %965 = vmatpush1.bf16.msra.mxu0 0
  %966 = vmatprep.subr.bf16.mxu0 0
  %967 = vmatpush1.bf16.msra.mxu0 0
  %968 = vmatprep.subr.bf16.mxu0 0
  %969 = vmatpush1.bf16.msra.mxu0 0
  %970 = vmatprep.subr.bf16.mxu0 0
  %971 = vmatpush1.bf16.msra.mxu0 0
  %972 = vmatprep.subr.bf16.mxu0 0
  %973 = vmatpush1.bf16.msra.mxu0 0
  %974 = vmatprep.subr.bf16.mxu0 0
  %975 = vmatpush1.bf16.msra.mxu0 0
  %976 = vmatprep.subr.bf16.mxu0 0
  %977 = vmatpush1.bf16.msra.mxu0 0
  %978 = vmatprep.subr.bf16.mxu0 0
  %979 = vmatpush1.bf16.msra.mxu0 0
  %980 = vmatprep.subr.bf16.mxu0 0
  %981 = vmatpush1.bf16.msra.mxu0 0
  %982 = vmatprep.subr.bf16.mxu0 0
  %983 = vmatpush1.bf16.msra.mxu0 0
  %984 = vmatprep.subr.bf16.mxu0 0
  %985 = vmatpush1.bf16.msra.mxu0 0
  %986 = vmatprep.subr.bf16.mxu0 0
  %987 = vmatpush1.bf16.msra.mxu0 0
  %988 = vmatprep.subr.bf16.mxu0 0
  %989 = vmatpush1.bf16.msra.mxu0 0
  %990 = vmatprep.subr.bf16.mxu0 0
  %991 = vmatpush1.bf16.msra.mxu0 0
  %992 = vmatprep.subr.bf16.mxu0 0
  %993 = vmatpush1.bf16.msra.mxu0 0
  %994 = vmatprep.mubr.bf16.mxu0 0
  %995 = vmatmul.mubr.bf16.gmra.mrb[0].mxu0 %v909
  %v996 = vpop.f32.mrb[0].mxu0
  %v997 = vadd.f32 0.0, %v996
  %v998 = vpop.f32.mrb[0].mxu0
  %v999 = vpop.f32.mrb[0].mxu0
  %v1000 = vadd.f32 0.0, %v999
  %v1001 = vpop.f32.mrb[0].mxu0
  %1002 = vmatprep.mubr.bf16.mxu0 0
  %1003 = vmatmul.mubr.bf16.gmra.mrb[0].mxu0 %v912
  %v1004 = vpop.f32.mrb[0].mxu0
  %v1005 = vadd.f32 0.0, %v1004
  %v1006 = vpop.f32.mrb[0].mxu0
  %v1007 = vpop.f32.mrb[0].mxu0
  %v1008 = vadd.f32 0.0, %v1007
  %v1009 = vpop.f32.mrb[0].mxu0
  %1010 = vmatprep.mubr.bf16.mxu0 0
  %1011 = vmatmul.mubr.bf16.gmra.mrb[0].mxu0 %v915
  %v1012 = vpop.f32.mrb[0].mxu0
  %v1013 = vadd.f32 0.0, %v1012
  %v1014 = vpop.f32.mrb[0].mxu0
  %v1015 = vpop.f32.mrb[0].mxu0
  %v1016 = vadd.f32 0.0, %v1015
  %v1017 = vpop.f32.mrb[0].mxu0
  %1018 = vmatprep.mubr.bf16.mxu0 0
  %1019 = vmatmul.mubr.bf16.gmra.mrb[0].mxu0 %v918
  %v1020 = vpop.f32.mrb[0].mxu0
  %v1021 = vadd.f32 0.0, %v1020
  %v1022 = vpop.f32.mrb[0].mxu0
  %v1023 = vpop.f32.mrb[0].mxu0
  %v1024 = vadd.f32 0.0, %v1023
  %v1025 = vpop.f32.mrb[0].mxu0
  %1026 = vmatprep.mubr.bf16.mxu0 0
  %1027 = vmatmul.mubr.bf16.gmra.mrb[0].mxu0 %v921
  %v1028 = vpop.f32.mrb[0].mxu0
  %v1029 = vadd.f32 0.0, %v1028
  %v1030 = vpop.f32.mrb[0].mxu0
  %v1031 = vpop.f32.mrb[0].mxu0
  %v1032 = vadd.f32 0.0, %v1031
  %v1033 = vpop.f32.mrb[0].mxu0
  %1034 = vmatprep.mubr.bf16.mxu0 0
  %1035 = vmatmul.mubr.bf16.gmra.mrb[0].mxu0 %v924
  %v1036 = vpop.f32.mrb[0].mxu0
  %v1037 = vadd.f32 0.0, %v1036
  %v1038 = vpop.f32.mrb[0].mxu0
  %v1039 = vpop.f32.mrb[0].mxu0
  %v1040 = vadd.f32 0.0, %v1039
  %v1041 = vpop.f32.mrb[0].mxu0
  %1042 = vmatprep.mubr.bf16.mxu0 0
  %1043 = vmatmul.mubr.bf16.gmra.mrb[0].mxu0 %v927
  %v1044 = vpop.f32.mrb[0].mxu0
  %v1045 = vadd.f32 0.0, %v1044
  %v1046 = vpop.f32.mrb[0].mxu0
  %v1047 = vpop.f32.mrb[0].mxu0
  %v1048 = vadd.f32 0.0, %v1047
  %v1049 = vpop.f32.mrb[0].mxu0
  %1050 = vmatprep.mubr.bf16.mxu0 0
  %1051 = vmatmul.mubr.bf16.gmra.mrb[0].mxu0 %v930
  %v1052 = vpop.f32.mrb[0].mxu0
  %v1053 = vadd.f32 0.0, %v1052
  %v1054 = vpop.f32.mrb[0].mxu0
  %v1055 = vpop.f32.mrb[0].mxu0
  %v1056 = vadd.f32 0.0, %v1055
  %v1057 = vpop.f32.mrb[0].mxu0
  %1058 = vmatprep.mubr.bf16.mxu0 0
  %1059 = vmatmul.mubr.bf16.gmra.mrb[0].mxu0 %v933
  %v1060 = vpop.f32.mrb[0].mxu0
  %v1061 = vadd.f32 0.0, %v1060
  %v1062 = vpop.f32.mrb[0].mxu0
  %v1063 = vpop.f32.mrb[0].mxu0
  %v1064 = vadd.f32 0.0, %v1063
  %v1065 = vpop.f32.mrb[0].mxu0
  %1066 = vmatprep.mubr.bf16.mxu0 0
  %1067 = vmatmul.mubr.bf16.gmra.mrb[0].mxu0 %v936
  %v1068 = vpop.f32.mrb[0].mxu0
  %v1069 = vadd.f32 0.0, %v1068
  %v1070 = vpop.f32.mrb[0].mxu0
  %v1071 = vpop.f32.mrb[0].mxu0
  %v1072 = vadd.f32 0.0, %v1071
  %v1073 = vpop.f32.mrb[0].mxu0
  %1074 = vmatprep.mubr.bf16.mxu0 0
  %1075 = vmatmul.mubr.bf16.gmra.mrb[0].mxu0 %v939
  %v1076 = vpop.f32.mrb[0].mxu0
  %v1077 = vadd.f32 0.0, %v1076
  %v1078 = vpop.f32.mrb[0].mxu0
  %v1079 = vpop.f32.mrb[0].mxu0
  %v1080 = vadd.f32 0.0, %v1079
  %v1081 = vpop.f32.mrb[0].mxu0
  %1082 = vmatprep.mubr.bf16.mxu0 0
  %1083 = vmatmul.mubr.bf16.gmra.mrb[0].mxu0 %v942
  %v1084 = vpop.f32.mrb[0].mxu0
  %v1085 = vadd.f32 0.0, %v1084
  %v1086 = vpop.f32.mrb[0].mxu0
  %v1087 = vpop.f32.mrb[0].mxu0
  %v1088 = vadd.f32 0.0, %v1087
  %v1089 = vpop.f32.mrb[0].mxu0
  %1090 = vmatprep.mubr.bf16.mxu0 0
  %1091 = vmatmul.mubr.bf16.gmra.mrb[0].mxu0 %v945
  %v1092 = vpop.f32.mrb[0].mxu0
  %v1093 = vadd.f32 0.0, %v1092
  %v1094 = vpop.f32.mrb[0].mxu0
  %v1095 = vpop.f32.mrb[0].mxu0
  %v1096 = vadd.f32 0.0, %v1095
  %v1097 = vpop.f32.mrb[0].mxu0
  %1098 = vmatprep.mubr.bf16.mxu0 0
  %1099 = vmatmul.mubr.bf16.gmra.mrb[0].mxu0 %v948
  %v1100 = vpop.f32.mrb[0].mxu0
  %v1101 = vadd.f32 0.0, %v1100
  %v1102 = vpop.f32.mrb[0].mxu0
  %v1103 = vpop.f32.mrb[0].mxu0
  %v1104 = vadd.f32 0.0, %v1103
  %v1105 = vpop.f32.mrb[0].mxu0
  %1106 = vmatprep.mubr.bf16.mxu0 0
  %1107 = vmatmul.mubr.bf16.gmra.mrb[0].mxu0 %v951
  %v1108 = vpop.f32.mrb[0].mxu0
  %v1109 = vadd.f32 0.0, %v1108
  %v1110 = vpop.f32.mrb[0].mxu0
  %v1111 = vpop.f32.mrb[0].mxu0
  %v1112 = vadd.f32 0.0, %v1111
  %v1113 = vpop.f32.mrb[0].mxu0
  %1114 = vmatprep.mubr.bf16.mxu0 0
  %1115 = vmatmul.mubr.bf16.gmra.mrb[0].mxu0 %v954
  %v1116 = vpop.f32.mrb[0].mxu0
  %v1117 = vadd.f32 0.0, %v1116
  %v1118 = vpop.f32.mrb[0].mxu0
  %v1119 = vpop.f32.mrb[0].mxu0
  %v1120 = vadd.f32 0.0, %v1119
  %v1121 = vpop.f32.mrb[0].mxu0
  %1122 = vmatprep.mubr.bf16.mxu0 0
  %1123 = vmatmul.mubr.bf16.gmra.mrb[0].mxu0 %v957
  %v1124 = vpop.f32.mrb[0].mxu0
  %v1125 = vadd.f32 0.0, %v1124
  %v1126 = vpop.f32.mrb[0].mxu0
  %v1127 = vpop.f32.mrb[0].mxu0
  %v1128 = vadd.f32 0.0, %v1127
  %v1129 = vpop.f32.mrb[0].mxu0
  %1130 = vmatprep.mubr.bf16.mxu0 0
  %1131 = vmatmul.mubr.bf16.gmra.mrb[0].mxu0 %v960
  %v1132 = vpop.f32.mrb[0].mxu0
  %v1133 = vadd.f32 0.0, %v1132
  %v1134 = vpop.f32.mrb[0].mxu0
  %v1135 = vpop.f32.mrb[0].mxu0
  %v1136 = vadd.f32 0.0, %v1135
  %v1137 = vpop.f32.mrb[0].mxu0
  %1138 = vdwg.mxu0
  %v1139 = vmax.f32 %v745, %v997
  %v1140 = vmax.f32 %v746, %v1000
  %v1141 = vmax.f32 %v747, %v1005
  %v1142 = vmax.f32 %v748, %v1008
  %v1143 = vmax.f32 %v749, %v1013
  %v1144 = vmax.f32 %v750, %v1016
  %v1145 = vmax.f32 %v751, %v1021
  %v1146 = vmax.f32 %v752, %v1024
  %v1147 = vmax.f32 %v753, %v1029
  %v1148 = vmax.f32 %v754, %v1032
  %v1149 = vmax.f32 %v755, %v1037
  %v1150 = vmax.f32 %v756, %v1040
  %v1151 = vmax.f32 %v757, %v1045
  %v1152 = vmax.f32 %v758, %v1048
  %v1153 = vmax.f32 %v759, %v1053
  %v1154 = vmax.f32 %v760, %v1056
  %v1155 = vmax.f32 %v761, %v1061
  %v1156 = vmax.f32 %v762, %v1064
  %v1157 = vmax.f32 %v763, %v1069
  %v1158 = vmax.f32 %v764, %v1072
  %v1159 = vmax.f32 %v765, %v1077
  %v1160 = vmax.f32 %v766, %v1080
  %v1161 = vmax.f32 %v767, %v1085
  %v1162 = vmax.f32 %v768, %v1088
  %v1163 = vmax.f32 %v769, %v1093
  %v1164 = vmax.f32 %v770, %v1096
  %v1165 = vmax.f32 %v771, %v1101
  %v1166 = vmax.f32 %v772, %v1104
  %v1167 = vmax.f32 %v773, %v1109
  %v1168 = vmax.f32 %v774, %v1112
  %v1169 = vmax.f32 %v775, %v1117
  %v1170 = vmax.f32 %v776, %v1120
  %v1171 = vmax.f32 %v777, %v1125
  %v1172 = vmax.f32 %v778, %v1128
  %v1173 = vmax.f32 %v779, %v1133
  %v1174 = vmax.f32 %v780, %v1136
  %s1175 = scalar_lea.vmem %s0, 432
  %v1176 = vld [vmem:[%s1175] sm:$0xf]
  %v1177 = vld [vmem:[%s1175 + $0x4] sm:$0xf]
  %v1178 = vld [vmem:[%s1175 + $0x8] sm:$0xf]
  %v1179 = vld [vmem:[%s1175 + $0xc] sm:$0xf]
  %v1180 = vld [vmem:[%s1175 + $0x10] sm:$0xf]
  %v1181 = vld [vmem:[%s1175 + $0x14] sm:$0xf]
  %v1182 = vld [vmem:[%s1175 + $0x18] sm:$0xf]
  %v1183 = vld [vmem:[%s1175 + $0x1c] sm:$0xf]
  %v1184 = vld [vmem:[%s1175 + $0x20] sm:$0xf]
  %v1185 = vld [vmem:[%s1175 + $0x24] sm:$0xf]
  %v1186 = vld [vmem:[%s1175 + $0x28] sm:$0xf]
  %v1187 = vld [vmem:[%s1175 + $0x2c] sm:$0xf]
  %v1188 = vld [vmem:[%s1175 + $0x30] sm:$0xf]
  %v1189 = vld [vmem:[%s1175 + $0x34] sm:$0xf]
  %v1190 = vld [vmem:[%s1175 + $0x38] sm:$0xf]
  %v1191 = vld [vmem:[%s1175 + $0x3c] sm:$0xf]
  %v1192 = vld [vmem:[%s1175 + $0x40] sm:$0xf]
  %v1193 = vld [vmem:[%s1175 + $0x44] sm:$0xf]
  %v1194 = vld [vmem:[%s1175 + $0x48] sm:$0xf]
  %v1195 = vld [vmem:[%s1175 + $0x4c] sm:$0xf]
  %v1196 = vld [vmem:[%s1175 + $0x50] sm:$0xf]
  %v1197 = vld [vmem:[%s1175 + $0x54] sm:$0xf]
  %v1198 = vld [vmem:[%s1175 + $0x58] sm:$0xf]
  %v1199 = vld [vmem:[%s1175 + $0x5c] sm:$0xf]
  %v1200 = vld [vmem:[%s1175 + $0x60] sm:$0xf]
  %v1201 = vld [vmem:[%s1175 + $0x64] sm:$0xf]
  %v1202 = vld [vmem:[%s1175 + $0x68] sm:$0xf]
  %v1203 = vld [vmem:[%s1175 + $0x6c] sm:$0xf]
  %v1204 = vld [vmem:[%s1175 + $0x70] sm:$0xf]
  %v1205 = vld [vmem:[%s1175 + $0x74] sm:$0xf]
  %v1206 = vld [vmem:[%s1175 + $0x78] sm:$0xf]
  %v1207 = vld [vmem:[%s1175 + $0x7c] sm:$0xf]
  %v1208 = vld [vmem:[%s1175 + $0x80] sm:$0xf]
  %v1209 = vld [vmem:[%s1175 + $0x84] sm:$0xf]
  %v1210 = vld [vmem:[%s1175 + $0x88] sm:$0xf]
  %v1211 = vld [vmem:[%s1175 + $0x8c] sm:$0xf]
  %v1248 = vunpack.c.l.b16 %v1176
  %v1249 = vunpack.c.l.b16 %v1177
  %v1250 = vunpack.c.l.b16 %v1178
  %v1251 = vunpack.c.l.b16 %v1179
  %v1252 = vunpack.c.l.b16 %v1180
  %v1253 = vunpack.c.l.b16 %v1181
  %v1254 = vunpack.c.l.b16 %v1182
  %v1255 = vunpack.c.l.b16 %v1183
  %v1256 = vunpack.c.l.b16 %v1184
  %v1257 = vunpack.c.l.b16 %v1185
  %v1258 = vunpack.c.l.b16 %v1186
  %v1259 = vunpack.c.l.b16 %v1187
  %v1260 = vunpack.c.l.b16 %v1188
  %v1261 = vunpack.c.l.b16 %v1189
  %v1262 = vunpack.c.l.b16 %v1190
  %v1263 = vunpack.c.l.b16 %v1191
  %v1264 = vunpack.c.l.b16 %v1192
  %v1265 = vunpack.c.l.b16 %v1193
  %v1266 = vunpack.c.l.b16 %v1194
  %v1267 = vunpack.c.l.b16 %v1195
  %v1268 = vunpack.c.l.b16 %v1196
  %v1269 = vunpack.c.l.b16 %v1197
  %v1270 = vunpack.c.l.b16 %v1198
  %v1271 = vunpack.c.l.b16 %v1199
  %v1272 = vunpack.c.l.b16 %v1200
  %v1273 = vunpack.c.l.b16 %v1201
  %v1274 = vunpack.c.l.b16 %v1202
  %v1275 = vunpack.c.l.b16 %v1203
  %v1276 = vunpack.c.l.b16 %v1204
  %v1277 = vunpack.c.l.b16 %v1205
  %v1278 = vunpack.c.l.b16 %v1206
  %v1279 = vunpack.c.l.b16 %v1207
  %v1280 = vunpack.c.l.b16 %v1208
  %v1281 = vunpack.c.l.b16 %v1209
  %v1282 = vunpack.c.l.b16 %v1210
  %v1283 = vunpack.c.l.b16 %v1211
  %v1284 = vpack.c.b16 %v1249, %v1248
  %v1285 = vpack.c.b16 %v1251, %v1250
  %v1286 = vpack.c.b16 %v1253, %v1252
  %v1287 = vpack.c.b16 %v1255, %v1254
  %v1288 = vpack.c.b16 %v1257, %v1256
  %v1289 = vpack.c.b16 %v1259, %v1258
  %v1290 = vpack.c.b16 %v1261, %v1260
  %v1291 = vpack.c.b16 %v1263, %v1262
  %v1292 = vpack.c.b16 %v1265, %v1264
  %v1293 = vpack.c.b16 %v1267, %v1266
  %v1294 = vpack.c.b16 %v1269, %v1268
  %v1295 = vpack.c.b16 %v1271, %v1270
  %v1296 = vpack.c.b16 %v1273, %v1272
  %v1297 = vpack.c.b16 %v1275, %v1274
  %v1298 = vpack.c.b16 %v1277, %v1276
  %v1299 = vpack.c.b16 %v1279, %v1278
  %v1300 = vpack.c.b16 %v1281, %v1280
  %v1301 = vpack.c.b16 %v1283, %v1282
  %v1303 = vsel %vm148, %v1284, 0
  %v1306 = vsel %vm148, %v1285, 0
  %v1309 = vsel %vm148, %v1286, 0
  %v1312 = vsel %vm148, %v1287, 0
  %v1315 = vsel %vm148, %v1288, 0
  %v1318 = vsel %vm148, %v1289, 0
  %v1321 = vsel %vm148, %v1290, 0
  %v1324 = vsel %vm148, %v1291, 0
  %v1327 = vsel %vm148, %v1292, 0
  %v1330 = vsel %vm148, %v1293, 0
  %v1333 = vsel %vm148, %v1294, 0
  %v1336 = vsel %vm148, %v1295, 0
  %v1339 = vsel %vm148, %v1296, 0
  %v1342 = vsel %vm148, %v1297, 0
  %v1345 = vsel %vm148, %v1298, 0
  %v1348 = vsel %vm148, %v1299, 0
  %v1351 = vsel %vm148, %v1300, 0
  %v1354 = vsel %vm148, %v1301, 0
  %1356 = vmatprep.subr.bf16.mxu0 0
  %1357 = vmatpush1.bf16.msra.mxu0 %v208
  %1358 = vmatprep.subr.bf16.mxu0 0
  %1359 = vmatpush1.bf16.msra.mxu0 0
  %1360 = vmatprep.subr.bf16.mxu0 0
  %1361 = vmatpush1.bf16.msra.mxu0 0
  %1362 = vmatprep.subr.bf16.mxu0 0
  %1363 = vmatpush1.bf16.msra.mxu0 0
  %1364 = vmatprep.subr.bf16.mxu0 0
  %1365 = vmatpush1.bf16.msra.mxu0 0
  %1366 = vmatprep.subr.bf16.mxu0 0
  %1367 = vmatpush1.bf16.msra.mxu0 0
  %1368 = vmatprep.subr.bf16.mxu0 0
  %1369 = vmatpush1.bf16.msra.mxu0 0
  %1370 = vmatprep.subr.bf16.mxu0 0
  %1371 = vmatpush1.bf16.msra.mxu0 0
  %1372 = vmatprep.subr.bf16.mxu0 0
  %1373 = vmatpush1.bf16.msra.mxu0 0
  %1374 = vmatprep.subr.bf16.mxu0 0
  %1375 = vmatpush1.bf16.msra.mxu0 0
  %1376 = vmatprep.subr.bf16.mxu0 0
  %1377 = vmatpush1.bf16.msra.mxu0 0
  %1378 = vmatprep.subr.bf16.mxu0 0
  %1379 = vmatpush1.bf16.msra.mxu0 0
  %1380 = vmatprep.subr.bf16.mxu0 0
  %1381 = vmatpush1.bf16.msra.mxu0 0
  %1382 = vmatprep.subr.bf16.mxu0 0
  %1383 = vmatpush1.bf16.msra.mxu0 0
  %1384 = vmatprep.subr.bf16.mxu0 0
  %1385 = vmatpush1.bf16.msra.mxu0 0
  %1386 = vmatprep.subr.bf16.mxu0 0
  %1387 = vmatpush1.bf16.msra.mxu0 0
  %1388 = vmatprep.mubr.bf16.mxu0 0
  %1389 = vmatmul.mubr.bf16.gmra.mrb[0].mxu0 %v1303
  %v1390 = vpop.f32.mrb[0].mxu0
  %v1391 = vadd.f32 0.0, %v1390
  %v1392 = vpop.f32.mrb[0].mxu0
  %v1393 = vpop.f32.mrb[0].mxu0
  %v1394 = vadd.f32 0.0, %v1393
  %v1395 = vpop.f32.mrb[0].mxu0
  %1396 = vmatprep.mubr.bf16.mxu0 0
  %1397 = vmatmul.mubr.bf16.gmra.mrb[0].mxu0 %v1306
  %v1398 = vpop.f32.mrb[0].mxu0
  %v1399 = vadd.f32 0.0, %v1398
  %v1400 = vpop.f32.mrb[0].mxu0
  %v1401 = vpop.f32.mrb[0].mxu0
  %v1402 = vadd.f32 0.0, %v1401
  %v1403 = vpop.f32.mrb[0].mxu0
  %1404 = vmatprep.mubr.bf16.mxu0 0
  %1405 = vmatmul.mubr.bf16.gmra.mrb[0].mxu0 %v1309
  %v1406 = vpop.f32.mrb[0].mxu0
  %v1407 = vadd.f32 0.0, %v1406
  %v1408 = vpop.f32.mrb[0].mxu0
  %v1409 = vpop.f32.mrb[0].mxu0
  %v1410 = vadd.f32 0.0, %v1409
  %v1411 = vpop.f32.mrb[0].mxu0
  %1412 = vmatprep.mubr.bf16.mxu0 0
  %1413 = vmatmul.mubr.bf16.gmra.mrb[0].mxu0 %v1312
  %v1414 = vpop.f32.mrb[0].mxu0
  %v1415 = vadd.f32 0.0, %v1414
  %v1416 = vpop.f32.mrb[0].mxu0
  %v1417 = vpop.f32.mrb[0].mxu0
  %v1418 = vadd.f32 0.0, %v1417
  %v1419 = vpop.f32.mrb[0].mxu0
  %1420 = vmatprep.mubr.bf16.mxu0 0
  %1421 = vmatmul.mubr.bf16.gmra.mrb[0].mxu0 %v1315
  %v1422 = vpop.f32.mrb[0].mxu0
  %v1423 = vadd.f32 0.0, %v1422
  %v1424 = vpop.f32.mrb[0].mxu0
  %v1425 = vpop.f32.mrb[0].mxu0
  %v1426 = vadd.f32 0.0, %v1425
  %v1427 = vpop.f32.mrb[0].mxu0
  %1428 = vmatprep.mubr.bf16.mxu0 0
  %1429 = vmatmul.mubr.bf16.gmra.mrb[0].mxu0 %v1318
  %v1430 = vpop.f32.mrb[0].mxu0
  %v1431 = vadd.f32 0.0, %v1430
  %v1432 = vpop.f32.mrb[0].mxu0
  %v1433 = vpop.f32.mrb[0].mxu0
  %v1434 = vadd.f32 0.0, %v1433
  %v1435 = vpop.f32.mrb[0].mxu0
  %1436 = vmatprep.mubr.bf16.mxu0 0
  %1437 = vmatmul.mubr.bf16.gmra.mrb[0].mxu0 %v1321
  %v1438 = vpop.f32.mrb[0].mxu0
  %v1439 = vadd.f32 0.0, %v1438
  %v1440 = vpop.f32.mrb[0].mxu0
  %v1441 = vpop.f32.mrb[0].mxu0
  %v1442 = vadd.f32 0.0, %v1441
  %v1443 = vpop.f32.mrb[0].mxu0
  %1444 = vmatprep.mubr.bf16.mxu0 0
  %1445 = vmatmul.mubr.bf16.gmra.mrb[0].mxu0 %v1324
  %v1446 = vpop.f32.mrb[0].mxu0
  %v1447 = vadd.f32 0.0, %v1446
  %v1448 = vpop.f32.mrb[0].mxu0
  %v1449 = vpop.f32.mrb[0].mxu0
  %v1450 = vadd.f32 0.0, %v1449
  %v1451 = vpop.f32.mrb[0].mxu0
  %1452 = vmatprep.mubr.bf16.mxu0 0
  %1453 = vmatmul.mubr.bf16.gmra.mrb[0].mxu0 %v1327
  %v1454 = vpop.f32.mrb[0].mxu0
  %v1455 = vadd.f32 0.0, %v1454
  %v1456 = vpop.f32.mrb[0].mxu0
  %v1457 = vpop.f32.mrb[0].mxu0
  %v1458 = vadd.f32 0.0, %v1457
  %v1459 = vpop.f32.mrb[0].mxu0
  %1460 = vmatprep.mubr.bf16.mxu0 0
  %1461 = vmatmul.mubr.bf16.gmra.mrb[0].mxu0 %v1330
  %v1462 = vpop.f32.mrb[0].mxu0
  %v1463 = vadd.f32 0.0, %v1462
  %v1464 = vpop.f32.mrb[0].mxu0
  %v1465 = vpop.f32.mrb[0].mxu0
  %v1466 = vadd.f32 0.0, %v1465
  %v1467 = vpop.f32.mrb[0].mxu0
  %1468 = vmatprep.mubr.bf16.mxu0 0
  %1469 = vmatmul.mubr.bf16.gmra.mrb[0].mxu0 %v1333
  %v1470 = vpop.f32.mrb[0].mxu0
  %v1471 = vadd.f32 0.0, %v1470
  %v1472 = vpop.f32.mrb[0].mxu0
  %v1473 = vpop.f32.mrb[0].mxu0
  %v1474 = vadd.f32 0.0, %v1473
  %v1475 = vpop.f32.mrb[0].mxu0
  %1476 = vmatprep.mubr.bf16.mxu0 0
  %1477 = vmatmul.mubr.bf16.gmra.mrb[0].mxu0 %v1336
  %v1478 = vpop.f32.mrb[0].mxu0
  %v1479 = vadd.f32 0.0, %v1478
  %v1480 = vpop.f32.mrb[0].mxu0
  %v1481 = vpop.f32.mrb[0].mxu0
  %v1482 = vadd.f32 0.0, %v1481
  %v1483 = vpop.f32.mrb[0].mxu0
  %1484 = vmatprep.mubr.bf16.mxu0 0
  %1485 = vmatmul.mubr.bf16.gmra.mrb[0].mxu0 %v1339
  %v1486 = vpop.f32.mrb[0].mxu0
  %v1487 = vadd.f32 0.0, %v1486
  %v1488 = vpop.f32.mrb[0].mxu0
  %v1489 = vpop.f32.mrb[0].mxu0
  %v1490 = vadd.f32 0.0, %v1489
  %v1491 = vpop.f32.mrb[0].mxu0
  %1492 = vmatprep.mubr.bf16.mxu0 0
  %1493 = vmatmul.mubr.bf16.gmra.mrb[0].mxu0 %v1342
  %v1494 = vpop.f32.mrb[0].mxu0
  %v1495 = vadd.f32 0.0, %v1494
  %v1496 = vpop.f32.mrb[0].mxu0
  %v1497 = vpop.f32.mrb[0].mxu0
  %v1498 = vadd.f32 0.0, %v1497
  %v1499 = vpop.f32.mrb[0].mxu0
  %1500 = vmatprep.mubr.bf16.mxu0 0
  %1501 = vmatmul.mubr.bf16.gmra.mrb[0].mxu0 %v1345
  %v1502 = vpop.f32.mrb[0].mxu0
  %v1503 = vadd.f32 0.0, %v1502
  %v1504 = vpop.f32.mrb[0].mxu0
  %v1505 = vpop.f32.mrb[0].mxu0
  %v1506 = vadd.f32 0.0, %v1505
  %v1507 = vpop.f32.mrb[0].mxu0
  %1508 = vmatprep.mubr.bf16.mxu0 0
  %1509 = vmatmul.mubr.bf16.gmra.mrb[0].mxu0 %v1348
  %v1510 = vpop.f32.mrb[0].mxu0
  %v1511 = vadd.f32 0.0, %v1510
  %v1512 = vpop.f32.mrb[0].mxu0
  %v1513 = vpop.f32.mrb[0].mxu0
  %v1514 = vadd.f32 0.0, %v1513
  %v1515 = vpop.f32.mrb[0].mxu0
  %1516 = vmatprep.mubr.bf16.mxu0 0
  %1517 = vmatmul.mubr.bf16.gmra.mrb[0].mxu0 %v1351
  %v1518 = vpop.f32.mrb[0].mxu0
  %v1519 = vadd.f32 0.0, %v1518
  %v1520 = vpop.f32.mrb[0].mxu0
  %v1521 = vpop.f32.mrb[0].mxu0
  %v1522 = vadd.f32 0.0, %v1521
  %v1523 = vpop.f32.mrb[0].mxu0
  %1524 = vmatprep.mubr.bf16.mxu0 0
  %1525 = vmatmul.mubr.bf16.gmra.mrb[0].mxu0 %v1354
  %v1526 = vpop.f32.mrb[0].mxu0
  %v1527 = vadd.f32 0.0, %v1526
  %v1528 = vpop.f32.mrb[0].mxu0
  %v1529 = vpop.f32.mrb[0].mxu0
  %v1530 = vadd.f32 0.0, %v1529
  %v1531 = vpop.f32.mrb[0].mxu0
  %1532 = vdwg.mxu0
  %v1533 = vmax.f32 %v1139, %v1391
  %v1534 = vmax.f32 %v1140, %v1394
  %v1535 = vmax.f32 %v1141, %v1399
  %v1536 = vmax.f32 %v1142, %v1402
  %v1537 = vmax.f32 %v1143, %v1407
  %v1538 = vmax.f32 %v1144, %v1410
  %v1539 = vmax.f32 %v1145, %v1415
  %v1540 = vmax.f32 %v1146, %v1418
  %v1541 = vmax.f32 %v1147, %v1423
  %v1542 = vmax.f32 %v1148, %v1426
  %v1543 = vmax.f32 %v1149, %v1431
  %v1544 = vmax.f32 %v1150, %v1434
  %v1545 = vmax.f32 %v1151, %v1439
  %v1546 = vmax.f32 %v1152, %v1442
  %v1547 = vmax.f32 %v1153, %v1447
  %v1548 = vmax.f32 %v1154, %v1450
  %v1549 = vmax.f32 %v1155, %v1455
  %v1550 = vmax.f32 %v1156, %v1458
  %v1551 = vmax.f32 %v1157, %v1463
  %v1552 = vmax.f32 %v1158, %v1466
  %v1553 = vmax.f32 %v1159, %v1471
  %v1554 = vmax.f32 %v1160, %v1474
  %v1555 = vmax.f32 %v1161, %v1479
  %v1556 = vmax.f32 %v1162, %v1482
  %v1557 = vmax.f32 %v1163, %v1487
  %v1558 = vmax.f32 %v1164, %v1490
  %v1559 = vmax.f32 %v1165, %v1495
  %v1560 = vmax.f32 %v1166, %v1498
  %v1561 = vmax.f32 %v1167, %v1503
  %v1562 = vmax.f32 %v1168, %v1506
  %v1563 = vmax.f32 %v1169, %v1511
  %v1564 = vmax.f32 %v1170, %v1514
  %v1565 = vmax.f32 %v1171, %v1519
  %v1566 = vmax.f32 %v1172, %v1522
  %v1567 = vmax.f32 %v1173, %v1527
  %v1568 = vmax.f32 %v1174, %v1530
  %v1569 = vld [vmem:[%s2] sm:$0x1]
  %v1571 = vlaneseq
  %v1572 = vshrl.u32 %v1571, 7
  %v1573 = vsub.s32 0, %v1572
  %v1574 = vrot.slane %v1569, %v1573
  %v1576 = vadd.f32 %v1533, %v1574
  %v1577 = vadd.f32 %v1534, %v1574
  %v1578 = vadd.f32 %v1535, %v1574
  %v1579 = vadd.f32 %v1536, %v1574
  %v1580 = vadd.f32 %v1537, %v1574
  %v1581 = vadd.f32 %v1538, %v1574
  %v1582 = vadd.f32 %v1539, %v1574
  %v1583 = vadd.f32 %v1540, %v1574
  %v1584 = vadd.f32 %v1541, %v1574
  %v1585 = vadd.f32 %v1542, %v1574
  %v1586 = vadd.f32 %v1543, %v1574
  %v1587 = vadd.f32 %v1544, %v1574
  %v1588 = vadd.f32 %v1545, %v1574
  %v1589 = vadd.f32 %v1546, %v1574
  %v1590 = vadd.f32 %v1547, %v1574
  %v1591 = vadd.f32 %v1548, %v1574
  %v1592 = vadd.f32 %v1549, %v1574
  %v1593 = vadd.f32 %v1550, %v1574
  %v1594 = vadd.f32 %v1551, %v1574
  %v1595 = vadd.f32 %v1552, %v1574
  %v1596 = vadd.f32 %v1553, %v1574
  %v1597 = vadd.f32 %v1554, %v1574
  %v1598 = vadd.f32 %v1555, %v1574
  %v1599 = vadd.f32 %v1556, %v1574
  %v1600 = vadd.f32 %v1557, %v1574
  %v1601 = vadd.f32 %v1558, %v1574
  %v1602 = vadd.f32 %v1559, %v1574
  %v1603 = vadd.f32 %v1560, %v1574
  %v1604 = vadd.f32 %v1561, %v1574
  %v1605 = vadd.f32 %v1562, %v1574
  %v1606 = vadd.f32 %v1563, %v1574
  %v1607 = vadd.f32 %v1564, %v1574
  %v1608 = vadd.f32 %v1565, %v1574
  %v1609 = vadd.f32 %v1566, %v1574
  %v1610 = vadd.f32 %v1567, %v1574
  %v1611 = vadd.f32 %v1568, %v1574
  %v1612 = vmax.f32 %v1576, 0.0
  %v1613 = vmax.f32 %v1577, 0.0
  %v1614 = vmax.f32 %v1578, 0.0
  %v1615 = vmax.f32 %v1579, 0.0
  %v1616 = vmax.f32 %v1580, 0.0
  %v1617 = vmax.f32 %v1581, 0.0
  %v1618 = vmax.f32 %v1582, 0.0
  %v1619 = vmax.f32 %v1583, 0.0
  %v1620 = vmax.f32 %v1584, 0.0
  %v1621 = vmax.f32 %v1585, 0.0
  %v1622 = vmax.f32 %v1586, 0.0
  %v1623 = vmax.f32 %v1587, 0.0
  %v1624 = vmax.f32 %v1588, 0.0
  %v1625 = vmax.f32 %v1589, 0.0
  %v1626 = vmax.f32 %v1590, 0.0
  %v1627 = vmax.f32 %v1591, 0.0
  %v1628 = vmax.f32 %v1592, 0.0
  %v1629 = vmax.f32 %v1593, 0.0
  %v1630 = vmax.f32 %v1594, 0.0
  %v1631 = vmax.f32 %v1595, 0.0
  %v1632 = vmax.f32 %v1596, 0.0
  %v1633 = vmax.f32 %v1597, 0.0
  %v1634 = vmax.f32 %v1598, 0.0
  %v1635 = vmax.f32 %v1599, 0.0
  %v1636 = vmax.f32 %v1600, 0.0
  %v1637 = vmax.f32 %v1601, 0.0
  %v1638 = vmax.f32 %v1602, 0.0
  %v1639 = vmax.f32 %v1603, 0.0
  %v1640 = vmax.f32 %v1604, 0.0
  %v1641 = vmax.f32 %v1605, 0.0
  %v1642 = vmax.f32 %v1606, 0.0
  %v1643 = vmax.f32 %v1607, 0.0
  %v1644 = vmax.f32 %v1608, 0.0
  %v1645 = vmax.f32 %v1609, 0.0
  %v1646 = vmax.f32 %v1610, 0.0
  %v1647 = vmax.f32 %v1611, 0.0
  %v1648 = vpack.c.bf16 %v1613, %v1612
  %v1649 = vpack.c.bf16 %v1615, %v1614
  %v1650 = vpack.c.bf16 %v1617, %v1616
  %v1651 = vpack.c.bf16 %v1619, %v1618
  %v1652 = vpack.c.bf16 %v1621, %v1620
  %v1653 = vpack.c.bf16 %v1623, %v1622
  %v1654 = vpack.c.bf16 %v1625, %v1624
  %v1655 = vpack.c.bf16 %v1627, %v1626
  %v1656 = vpack.c.bf16 %v1629, %v1628
  %v1657 = vpack.c.bf16 %v1631, %v1630
  %v1658 = vpack.c.bf16 %v1633, %v1632
  %v1659 = vpack.c.bf16 %v1635, %v1634
  %v1660 = vpack.c.bf16 %v1637, %v1636
  %v1661 = vpack.c.bf16 %v1639, %v1638
  %v1662 = vpack.c.bf16 %v1641, %v1640
  %v1663 = vpack.c.bf16 %v1643, %v1642
  %v1664 = vpack.c.bf16 %v1645, %v1644
  %v1665 = vpack.c.bf16 %v1647, %v1646
  %v1684 = vunpack.c.l.b16 %v1648
  %v1685 = vunpack.c.h.b16 %v1648
  %v1686 = vunpack.c.l.b16 %v1649
  %v1687 = vunpack.c.h.b16 %v1649
  %v1688 = vunpack.c.l.b16 %v1650
  %v1689 = vunpack.c.h.b16 %v1650
  %v1690 = vunpack.c.l.b16 %v1651
  %v1691 = vunpack.c.h.b16 %v1651
  %v1692 = vunpack.c.l.b16 %v1652
  %v1693 = vunpack.c.h.b16 %v1652
  %v1694 = vunpack.c.l.b16 %v1653
  %v1695 = vunpack.c.h.b16 %v1653
  %v1696 = vunpack.c.l.b16 %v1654
  %v1697 = vunpack.c.h.b16 %v1654
  %v1698 = vunpack.c.l.b16 %v1655
  %v1699 = vunpack.c.h.b16 %v1655
  %v1700 = vunpack.c.l.b16 %v1656
  %v1701 = vunpack.c.h.b16 %v1656
  %v1702 = vunpack.c.l.b16 %v1657
  %v1703 = vunpack.c.h.b16 %v1657
  %v1704 = vunpack.c.l.b16 %v1658
  %v1705 = vunpack.c.h.b16 %v1658
  %v1706 = vunpack.c.l.b16 %v1659
  %v1707 = vunpack.c.h.b16 %v1659
  %v1708 = vunpack.c.l.b16 %v1660
  %v1709 = vunpack.c.h.b16 %v1660
  %v1710 = vunpack.c.l.b16 %v1661
  %v1711 = vunpack.c.h.b16 %v1661
  %v1712 = vunpack.c.l.b16 %v1662
  %v1713 = vunpack.c.h.b16 %v1662
  %v1714 = vunpack.c.l.b16 %v1663
  %v1715 = vunpack.c.h.b16 %v1663
  %v1716 = vunpack.c.l.b16 %v1664
  %v1717 = vunpack.c.h.b16 %v1664
  %v1718 = vunpack.c.l.b16 %v1665
  %v1719 = vunpack.c.h.b16 %v1665
  %v1720 = vpack.c.b16 %v1684, %v1684
  %v1721 = vpack.c.b16 %v1685, %v1685
  %v1722 = vpack.c.b16 %v1686, %v1686
  %v1723 = vpack.c.b16 %v1687, %v1687
  %v1724 = vpack.c.b16 %v1688, %v1688
  %v1725 = vpack.c.b16 %v1689, %v1689
  %v1726 = vpack.c.b16 %v1690, %v1690
  %v1727 = vpack.c.b16 %v1691, %v1691
  %v1728 = vpack.c.b16 %v1692, %v1692
  %v1729 = vpack.c.b16 %v1693, %v1693
  %v1730 = vpack.c.b16 %v1694, %v1694
  %v1731 = vpack.c.b16 %v1695, %v1695
  %v1732 = vpack.c.b16 %v1696, %v1696
  %v1733 = vpack.c.b16 %v1697, %v1697
  %v1734 = vpack.c.b16 %v1698, %v1698
  %v1735 = vpack.c.b16 %v1699, %v1699
  %v1736 = vpack.c.b16 %v1700, %v1700
  %v1737 = vpack.c.b16 %v1701, %v1701
  %v1738 = vpack.c.b16 %v1702, %v1702
  %v1739 = vpack.c.b16 %v1703, %v1703
  %v1740 = vpack.c.b16 %v1704, %v1704
  %v1741 = vpack.c.b16 %v1705, %v1705
  %v1742 = vpack.c.b16 %v1706, %v1706
  %v1743 = vpack.c.b16 %v1707, %v1707
  %v1744 = vpack.c.b16 %v1708, %v1708
  %v1745 = vpack.c.b16 %v1709, %v1709
  %v1746 = vpack.c.b16 %v1710, %v1710
  %v1747 = vpack.c.b16 %v1711, %v1711
  %v1748 = vpack.c.b16 %v1712, %v1712
  %v1749 = vpack.c.b16 %v1713, %v1713
  %v1750 = vpack.c.b16 %v1714, %v1714
  %v1751 = vpack.c.b16 %v1715, %v1715
  %v1752 = vpack.c.b16 %v1716, %v1716
  %v1753 = vpack.c.b16 %v1717, %v1717
  %v1754 = vpack.c.b16 %v1718, %v1718
  %v1755 = vpack.c.b16 %v1719, %v1719
  %1792 = vst [vmem:[%s3] sm:$0xf] %v1720
  %1793 = vst [vmem:[%s3 + $0x4] sm:$0xf] %v1721
  %1794 = vst [vmem:[%s3 + $0x8] sm:$0xf] %v1722
  %1795 = vst [vmem:[%s3 + $0xc] sm:$0xf] %v1723
  %1796 = vst [vmem:[%s3 + $0x10] sm:$0xf] %v1724
  %1797 = vst [vmem:[%s3 + $0x14] sm:$0xf] %v1725
  %1798 = vst [vmem:[%s3 + $0x18] sm:$0xf] %v1726
  %1799 = vst [vmem:[%s3 + $0x1c] sm:$0xf] %v1727
  %1800 = vst [vmem:[%s3 + $0x20] sm:$0xf] %v1728
  %1801 = vst [vmem:[%s3 + $0x24] sm:$0xf] %v1729
  %1802 = vst [vmem:[%s3 + $0x28] sm:$0xf] %v1730
  %1803 = vst [vmem:[%s3 + $0x2c] sm:$0xf] %v1731
  %1804 = vst [vmem:[%s3 + $0x30] sm:$0xf] %v1732
  %1805 = vst [vmem:[%s3 + $0x34] sm:$0xf] %v1733
  %1806 = vst [vmem:[%s3 + $0x38] sm:$0xf] %v1734
  %1807 = vst [vmem:[%s3 + $0x3c] sm:$0xf] %v1735
  %1808 = vst [vmem:[%s3 + $0x40] sm:$0xf] %v1736
  %1809 = vst [vmem:[%s3 + $0x44] sm:$0xf] %v1737
  %1810 = vst [vmem:[%s3 + $0x48] sm:$0xf] %v1738
  %1811 = vst [vmem:[%s3 + $0x4c] sm:$0xf] %v1739
  %1812 = vst [vmem:[%s3 + $0x50] sm:$0xf] %v1740
  %1813 = vst [vmem:[%s3 + $0x54] sm:$0xf] %v1741
  %1814 = vst [vmem:[%s3 + $0x58] sm:$0xf] %v1742
  %1815 = vst [vmem:[%s3 + $0x5c] sm:$0xf] %v1743
  %1816 = vst [vmem:[%s3 + $0x60] sm:$0xf] %v1744
  %1817 = vst [vmem:[%s3 + $0x64] sm:$0xf] %v1745
  %1818 = vst [vmem:[%s3 + $0x68] sm:$0xf] %v1746
  %1819 = vst [vmem:[%s3 + $0x6c] sm:$0xf] %v1747
  %1820 = vst [vmem:[%s3 + $0x70] sm:$0xf] %v1748
  %1821 = vst [vmem:[%s3 + $0x74] sm:$0xf] %v1749
  %1822 = vst [vmem:[%s3 + $0x78] sm:$0xf] %v1750
  %1823 = vst [vmem:[%s3 + $0x7c] sm:$0xf] %v1751
  %1824 = vst [vmem:[%s3 + $0x80] sm:$0xf] %v1752
  %1825 = vst [vmem:[%s3 + $0x84] sm:$0xf] %v1753
  %1826 = vst [vmem:[%s3 + $0x88] sm:$0xf] %v1754
  %1827 = vst [vmem:[%s3 + $0x8c] sm:$0xf] %v1755
  // Predicated region
  $region14: #{ble_cnn_forward.3} parent=0 // pred_check
    _
  $region15: #{ble_cnn_forward.3} parent=0 // pred_check_branch
    %1829 = sbr.rel (0) target = $region17
  $region16: #{ble_cnn_forward.3} parent=0 // pred_region
    _
  $region17: #{ble_cnn_forward.3} parent=0 // pred_fallthru
    _
  // Predicated region
  $region18: #{ble_cnn_forward.3} parent=0 // pred_check
    _
  $region19: #{ble_cnn_forward.3} parent=0 // pred_check_branch
    %1831 = sbr.rel (0) target = $region21
  $region20: #{ble_cnn_forward.3} parent=0 // pred_region
    _
  $region21: #{ble_cnn_forward.3} parent=0 // pred_fallthru
    _

// kernel: ble_cnn_forward.4
$region0: #{ble_cnn_forward.4}
  #allocation0 [shape = 'u32[]', space=smem, size = 0x4, offset = 0x4, fixed_abs, tag = 'smem constant byte address 0x4 - core index']
  #allocation1 [shape = 'u32[144,128]{1,0:T(1,128)}', space=vmem, size = 0x12000, scoped, tag = 'internal scratch']
  %s0 = inlined_call_operand.vmem [shape: bf16[4,72,1152], index: 0, kind: input, shape index: {}]
  %s1 = inlined_call_operand.vmem [shape: bf16[1152,256], index: 1, kind: input, shape index: {}]
  %s2 = inlined_call_operand.vmem [shape: f32[1,256], index: 2, kind: input, shape index: {}]
  %s3 = inlined_call_operand.vmem [shape: bf16[72,256], index: 3, kind: output, shape index: {}]
  %s4 = sld [smem:[#allocation0]]
  $region22: #{ble_cnn_forward.4} parent=0
    _
  %s6 = ssub.s32 1, %s4
  %s7 = scalar_select 0, %s6, %s4
  // Predicated region
  $region2: #{ble_cnn_forward.4} parent=0 // pred_check
    _
  $region3: #{ble_cnn_forward.4} parent=0 // pred_check_branch
    %9 = sbr.rel (0) target = $region5
  $region4: #{ble_cnn_forward.4} parent=0 // pred_region
    _
  $region5: #{ble_cnn_forward.4} parent=0 // pred_fallthru
    _
  // Predicated region
  $region6: #{ble_cnn_forward.4} parent=0 // pred_check
    _
  $region7: #{ble_cnn_forward.4} parent=0 // pred_check_branch
    %11 = sbr.rel (0) target = $region9
  $region8: #{ble_cnn_forward.4} parent=0 // pred_region
    _
  $region9: #{ble_cnn_forward.4} parent=0 // pred_fallthru
    _
  // Predicated region
  $region10: #{ble_cnn_forward.4} parent=0 // pred_check
    _
  $region11: #{ble_cnn_forward.4} parent=0 // pred_check_branch
    %13 = sbr.rel (0) target = $region13
  $region12: #{ble_cnn_forward.4} parent=0 // pred_region
    _
  $region13: #{ble_cnn_forward.4} parent=0 // pred_fallthru
    _
  %v15 = vld [vmem:[%s1] sm:$0xff]
  %v16 = vld [vmem:[%s1 + $0x8] sm:$0xff]
  %v17 = vld [vmem:[%s1 + $0x10] sm:$0xff]
  %v18 = vld [vmem:[%s1 + $0x18] sm:$0xff]
  %v19 = vld [vmem:[%s1 + $0x20] sm:$0xff]
  %v20 = vld [vmem:[%s1 + $0x28] sm:$0xff]
  %v21 = vld [vmem:[%s1 + $0x30] sm:$0xff]
  %v22 = vld [vmem:[%s1 + $0x38] sm:$0xff]
  %v23 = vld [vmem:[%s1 + $0x40] sm:$0xff]
  %v24 = vld [vmem:[%s1 + $0x48] sm:$0xff]
  %v25 = vld [vmem:[%s1 + $0x50] sm:$0xff]
  %v26 = vld [vmem:[%s1 + $0x58] sm:$0xff]
  %v27 = vld [vmem:[%s1 + $0x60] sm:$0xff]
  %v28 = vld [vmem:[%s1 + $0x68] sm:$0xff]
  %v29 = vld [vmem:[%s1 + $0x70] sm:$0xff]
  %v30 = vld [vmem:[%s1 + $0x78] sm:$0xff]
  %v31 = vld [vmem:[%s1 + $0x80] sm:$0xff]
  %v32 = vld [vmem:[%s1 + $0x88] sm:$0xff]
  %v33 = vld [vmem:[%s1 + $0x90] sm:$0xff]
  %v34 = vld [vmem:[%s1 + $0x98] sm:$0xff]
  %v35 = vld [vmem:[%s1 + $0xa0] sm:$0xff]
  %v36 = vld [vmem:[%s1 + $0xa8] sm:$0xff]
  %v37 = vld [vmem:[%s1 + $0xb0] sm:$0xff]
  %v38 = vld [vmem:[%s1 + $0xb8] sm:$0xff]
  %v39 = vld [vmem:[%s1 + $0xc0] sm:$0xff]
  %v40 = vld [vmem:[%s1 + $0xc8] sm:$0xff]
  %v41 = vld [vmem:[%s1 + $0xd0] sm:$0xff]
  %v42 = vld [vmem:[%s1 + $0xd8] sm:$0xff]
  %v43 = vld [vmem:[%s1 + $0xe0] sm:$0xff]
  %v44 = vld [vmem:[%s1 + $0xe8] sm:$0xff]
  %v45 = vld [vmem:[%s1 + $0xf0] sm:$0xff]
  %v46 = vld [vmem:[%s1 + $0xf8] sm:$0xff]
  %v47 = vld [vmem:[%s1 + $0x100] sm:$0xff]
  %v48 = vld [vmem:[%s1 + $0x108] sm:$0xff]
  %v49 = vld [vmem:[%s1 + $0x110] sm:$0xff]
  %v50 = vld [vmem:[%s1 + $0x118] sm:$0xff]
  %v51 = vld [vmem:[%s1 + $0x120] sm:$0xff]
  %v52 = vld [vmem:[%s1 + $0x128] sm:$0xff]
  %v53 = vld [vmem:[%s1 + $0x130] sm:$0xff]
  %v54 = vld [vmem:[%s1 + $0x138] sm:$0xff]
  %v55 = vld [vmem:[%s1 + $0x140] sm:$0xff]
  %v56 = vld [vmem:[%s1 + $0x148] sm:$0xff]
  %v57 = vld [vmem:[%s1 + $0x150] sm:$0xff]
  %v58 = vld [vmem:[%s1 + $0x158] sm:$0xff]
  %v59 = vld [vmem:[%s1 + $0x160] sm:$0xff]
  %v60 = vld [vmem:[%s1 + $0x168] sm:$0xff]
  %v61 = vld [vmem:[%s1 + $0x170] sm:$0xff]
  %v62 = vld [vmem:[%s1 + $0x178] sm:$0xff]
  %v63 = vld [vmem:[%s1 + $0x180] sm:$0xff]
  %v64 = vld [vmem:[%s1 + $0x188] sm:$0xff]
  %v65 = vld [vmem:[%s1 + $0x190] sm:$0xff]
  %v66 = vld [vmem:[%s1 + $0x198] sm:$0xff]
  %v67 = vld [vmem:[%s1 + $0x1a0] sm:$0xff]
  %v68 = vld [vmem:[%s1 + $0x1a8] sm:$0xff]
  %v69 = vld [vmem:[%s1 + $0x1b0] sm:$0xff]
  %v70 = vld [vmem:[%s1 + $0x1b8] sm:$0xff]
  %v71 = vld [vmem:[%s1 + $0x1c0] sm:$0xff]
  %v72 = vld [vmem:[%s1 + $0x1c8] sm:$0xff]
  %v73 = vld [vmem:[%s1 + $0x1d0] sm:$0xff]
  %v74 = vld [vmem:[%s1 + $0x1d8] sm:$0xff]
  %v75 = vld [vmem:[%s1 + $0x1e0] sm:$0xff]
  %v76 = vld [vmem:[%s1 + $0x1e8] sm:$0xff]
  %v77 = vld [vmem:[%s1 + $0x1f0] sm:$0xff]
  %v78 = vld [vmem:[%s1 + $0x1f8] sm:$0xff]
  %v79 = vld [vmem:[%s1 + $0x200] sm:$0xff]
  %v80 = vld [vmem:[%s1 + $0x208] sm:$0xff]
  %v81 = vld [vmem:[%s1 + $0x210] sm:$0xff]
  %v82 = vld [vmem:[%s1 + $0x218] sm:$0xff]
  %v83 = vld [vmem:[%s1 + $0x220] sm:$0xff]
  %v84 = vld [vmem:[%s1 + $0x228] sm:$0xff]
  %v85 = vld [vmem:[%s1 + $0x230] sm:$0xff]
  %v86 = vld [vmem:[%s1 + $0x238] sm:$0xff]
  %v87 = vld [vmem:[%s1 + $0x240] sm:$0xff]
  %v88 = vld [vmem:[%s1 + $0x248] sm:$0xff]
  %v89 = vld [vmem:[%s1 + $0x250] sm:$0xff]
  %v90 = vld [vmem:[%s1 + $0x258] sm:$0xff]
  %v91 = vld [vmem:[%s1 + $0x260] sm:$0xff]
  %v92 = vld [vmem:[%s1 + $0x268] sm:$0xff]
  %v93 = vld [vmem:[%s1 + $0x270] sm:$0xff]
  %v94 = vld [vmem:[%s1 + $0x278] sm:$0xff]
  %v95 = vld [vmem:[%s1 + $0x280] sm:$0xff]
  %v96 = vld [vmem:[%s1 + $0x288] sm:$0xff]
  %v97 = vld [vmem:[%s1 + $0x290] sm:$0xff]
  %v98 = vld [vmem:[%s1 + $0x298] sm:$0xff]
  %v99 = vld [vmem:[%s1 + $0x2a0] sm:$0xff]
  %v100 = vld [vmem:[%s1 + $0x2a8] sm:$0xff]
  %v101 = vld [vmem:[%s1 + $0x2b0] sm:$0xff]
  %v102 = vld [vmem:[%s1 + $0x2b8] sm:$0xff]
  %v103 = vld [vmem:[%s1 + $0x2c0] sm:$0xff]
  %v104 = vld [vmem:[%s1 + $0x2c8] sm:$0xff]
  %v105 = vld [vmem:[%s1 + $0x2d0] sm:$0xff]
  %v106 = vld [vmem:[%s1 + $0x2d8] sm:$0xff]
  %v107 = vld [vmem:[%s1 + $0x2e0] sm:$0xff]
  %v108 = vld [vmem:[%s1 + $0x2e8] sm:$0xff]
  %v109 = vld [vmem:[%s1 + $0x2f0] sm:$0xff]
  %v110 = vld [vmem:[%s1 + $0x2f8] sm:$0xff]
  %v111 = vld [vmem:[%s1 + $0x300] sm:$0xff]
  %v112 = vld [vmem:[%s1 + $0x308] sm:$0xff]
  %v113 = vld [vmem:[%s1 + $0x310] sm:$0xff]
  %v114 = vld [vmem:[%s1 + $0x318] sm:$0xff]
  %v115 = vld [vmem:[%s1 + $0x320] sm:$0xff]
  %v116 = vld [vmem:[%s1 + $0x328] sm:$0xff]
  %v117 = vld [vmem:[%s1 + $0x330] sm:$0xff]
  %v118 = vld [vmem:[%s1 + $0x338] sm:$0xff]
  %v119 = vld [vmem:[%s1 + $0x340] sm:$0xff]
  %v120 = vld [vmem:[%s1 + $0x348] sm:$0xff]
  %v121 = vld [vmem:[%s1 + $0x350] sm:$0xff]
  %v122 = vld [vmem:[%s1 + $0x358] sm:$0xff]
  %v123 = vld [vmem:[%s1 + $0x360] sm:$0xff]
  %v124 = vld [vmem:[%s1 + $0x368] sm:$0xff]
  %v125 = vld [vmem:[%s1 + $0x370] sm:$0xff]
  %v126 = vld [vmem:[%s1 + $0x378] sm:$0xff]
  %v127 = vld [vmem:[%s1 + $0x380] sm:$0xff]
  %v128 = vld [vmem:[%s1 + $0x388] sm:$0xff]
  %v129 = vld [vmem:[%s1 + $0x390] sm:$0xff]
  %v130 = vld [vmem:[%s1 + $0x398] sm:$0xff]
  %v131 = vld [vmem:[%s1 + $0x3a0] sm:$0xff]
  %v132 = vld [vmem:[%s1 + $0x3a8] sm:$0xff]
  %v133 = vld [vmem:[%s1 + $0x3b0] sm:$0xff]
  %v134 = vld [vmem:[%s1 + $0x3b8] sm:$0xff]
  %v135 = vld [vmem:[%s1 + $0x3c0] sm:$0xff]
  %v136 = vld [vmem:[%s1 + $0x3c8] sm:$0xff]
  %v137 = vld [vmem:[%s1 + $0x3d0] sm:$0xff]
  %v138 = vld [vmem:[%s1 + $0x3d8] sm:$0xff]
  %v139 = vld [vmem:[%s1 + $0x3e0] sm:$0xff]
  %v140 = vld [vmem:[%s1 + $0x3e8] sm:$0xff]
  %v141 = vld [vmem:[%s1 + $0x3f0] sm:$0xff]
  %v142 = vld [vmem:[%s1 + $0x3f8] sm:$0xff]
  %v143 = vld [vmem:[%s1 + $0x400] sm:$0xff]
  %v144 = vld [vmem:[%s1 + $0x408] sm:$0xff]
  %v145 = vld [vmem:[%s1 + $0x410] sm:$0xff]
  %v146 = vld [vmem:[%s1 + $0x418] sm:$0xff]
  %v147 = vld [vmem:[%s1 + $0x420] sm:$0xff]
  %v148 = vld [vmem:[%s1 + $0x428] sm:$0xff]
  %v149 = vld [vmem:[%s1 + $0x430] sm:$0xff]
  %v150 = vld [vmem:[%s1 + $0x438] sm:$0xff]
  %v151 = vld [vmem:[%s1 + $0x440] sm:$0xff]
  %v152 = vld [vmem:[%s1 + $0x448] sm:$0xff]
  %v153 = vld [vmem:[%s1 + $0x450] sm:$0xff]
  %v154 = vld [vmem:[%s1 + $0x458] sm:$0xff]
  %v155 = vld [vmem:[%s1 + $0x460] sm:$0xff]
  %v156 = vld [vmem:[%s1 + $0x468] sm:$0xff]
  %v157 = vld [vmem:[%s1 + $0x470] sm:$0xff]
  %v158 = vld [vmem:[%s1 + $0x478] sm:$0xff]
  %v159 = vld [vmem:[%s0] sm:$0xff]
  %v160 = vld [vmem:[%s0 + $0x8] sm:$0xff]
  %v161 = vld [vmem:[%s0 + $0x10] sm:$0xff]
  %v162 = vld [vmem:[%s0 + $0x18] sm:$0xff]
  %v163 = vld [vmem:[%s0 + $0x20] sm:$0xf]
  %v164 = vld [vmem:[%s0 + $0x24] sm:$0xff]
  %v165 = vld [vmem:[%s0 + $0x2c] sm:$0xff]
  %v166 = vld [vmem:[%s0 + $0x34] sm:$0xff]
  %v167 = vld [vmem:[%s0 + $0x3c] sm:$0xff]
  %v168 = vld [vmem:[%s0 + $0x44] sm:$0xf]
  %v169 = vld [vmem:[%s0 + $0x48] sm:$0xff]
  %v170 = vld [vmem:[%s0 + $0x50] sm:$0xff]
  %v171 = vld [vmem:[%s0 + $0x58] sm:$0xff]
  %v172 = vld [vmem:[%s0 + $0x60] sm:$0xff]
  %v173 = vld [vmem:[%s0 + $0x68] sm:$0xf]
  %v174 = vld [vmem:[%s0 + $0x6c] sm:$0xff]
  %v175 = vld [vmem:[%s0 + $0x74] sm:$0xff]
  %v176 = vld [vmem:[%s0 + $0x7c] sm:$0xff]
  %v177 = vld [vmem:[%s0 + $0x84] sm:$0xff]
  %v178 = vld [vmem:[%s0 + $0x8c] sm:$0xf]
  %v179 = vld [vmem:[%s0 + $0x90] sm:$0xff]
  %v180 = vld [vmem:[%s0 + $0x98] sm:$0xff]
  %v181 = vld [vmem:[%s0 + $0xa0] sm:$0xff]
  %v182 = vld [vmem:[%s0 + $0xa8] sm:$0xff]
  %v183 = vld [vmem:[%s0 + $0xb0] sm:$0xf]
  %v184 = vld [vmem:[%s0 + $0xb4] sm:$0xff]
  %v185 = vld [vmem:[%s0 + $0xbc] sm:$0xff]
  %v186 = vld [vmem:[%s0 + $0xc4] sm:$0xff]
  %v187 = vld [vmem:[%s0 + $0xcc] sm:$0xff]
  %v188 = vld [vmem:[%s0 + $0xd4] sm:$0xf]
  %v189 = vld [vmem:[%s0 + $0xd8] sm:$0xff]
  %v190 = vld [vmem:[%s0 + $0xe0] sm:$0xff]
  %v191 = vld [vmem:[%s0 + $0xe8] sm:$0xff]
  %v192 = vld [vmem:[%s0 + $0xf0] sm:$0xff]
  %v193 = vld [vmem:[%s0 + $0xf8] sm:$0xf]
  %v194 = vld [vmem:[%s0 + $0xfc] sm:$0xff]
  %v195 = vld [vmem:[%s0 + $0x104] sm:$0xff]
  %v196 = vld [vmem:[%s0 + $0x10c] sm:$0xff]
  %v197 = vld [vmem:[%s0 + $0x114] sm:$0xff]
  %v198 = vld [vmem:[%s0 + $0x11c] sm:$0xf]
  %v199 = vld [vmem:[%s0 + $0x120] sm:$0xff]
  %v200 = vld [vmem:[%s0 + $0x128] sm:$0xff]
  %v201 = vld [vmem:[%s0 + $0x130] sm:$0xff]
  %v202 = vld [vmem:[%s0 + $0x138] sm:$0xff]
  %v203 = vld [vmem:[%s0 + $0x140] sm:$0xf]
  %v249 = vunpack.c.l.b16 %v159
  %v250 = vunpack.c.h.b16 %v159
  %v251 = vunpack.c.l.b16 %v160
  %v252 = vunpack.c.h.b16 %v160
  %v253 = vunpack.c.l.b16 %v161
  %v254 = vunpack.c.h.b16 %v161
  %v255 = vunpack.c.l.b16 %v162
  %v256 = vunpack.c.h.b16 %v162
  %v257 = vunpack.c.l.b16 %v163
  %v258 = vunpack.c.l.b16 %v164
  %v259 = vunpack.c.h.b16 %v164
  %v260 = vunpack.c.l.b16 %v165
  %v261 = vunpack.c.h.b16 %v165
  %v262 = vunpack.c.l.b16 %v166
  %v263 = vunpack.c.h.b16 %v166
  %v264 = vunpack.c.l.b16 %v167
  %v265 = vunpack.c.h.b16 %v167
  %v266 = vunpack.c.l.b16 %v168
  %v267 = vunpack.c.l.b16 %v169
  %v268 = vunpack.c.h.b16 %v169
  %v269 = vunpack.c.l.b16 %v170
  %v270 = vunpack.c.h.b16 %v170
  %v271 = vunpack.c.l.b16 %v171
  %v272 = vunpack.c.h.b16 %v171
  %v273 = vunpack.c.l.b16 %v172
  %v274 = vunpack.c.h.b16 %v172
  %v275 = vunpack.c.l.b16 %v173
  %v276 = vunpack.c.l.b16 %v174
  %v277 = vunpack.c.h.b16 %v174
  %v278 = vunpack.c.l.b16 %v175
  %v279 = vunpack.c.h.b16 %v175
  %v280 = vunpack.c.l.b16 %v176
  %v281 = vunpack.c.h.b16 %v176
  %v282 = vunpack.c.l.b16 %v177
  %v283 = vunpack.c.h.b16 %v177
  %v284 = vunpack.c.l.b16 %v178
  %v285 = vunpack.c.l.b16 %v179
  %v286 = vunpack.c.h.b16 %v179
  %v287 = vunpack.c.l.b16 %v180
  %v288 = vunpack.c.h.b16 %v180
  %v289 = vunpack.c.l.b16 %v181
  %v290 = vunpack.c.h.b16 %v181
  %v291 = vunpack.c.l.b16 %v182
  %v292 = vunpack.c.h.b16 %v182
  %v293 = vunpack.c.l.b16 %v183
  %v294 = vunpack.c.l.b16 %v184
  %v295 = vunpack.c.h.b16 %v184
  %v296 = vunpack.c.l.b16 %v185
  %v297 = vunpack.c.h.b16 %v185
  %v298 = vunpack.c.l.b16 %v186
  %v299 = vunpack.c.h.b16 %v186
  %v300 = vunpack.c.l.b16 %v187
  %v301 = vunpack.c.h.b16 %v187
  %v302 = vunpack.c.l.b16 %v188
  %v303 = vunpack.c.l.b16 %v189
  %v304 = vunpack.c.h.b16 %v189
  %v305 = vunpack.c.l.b16 %v190
  %v306 = vunpack.c.h.b16 %v190
  %v307 = vunpack.c.l.b16 %v191
  %v308 = vunpack.c.h.b16 %v191
  %v309 = vunpack.c.l.b16 %v192
  %v310 = vunpack.c.h.b16 %v192
  %v311 = vunpack.c.l.b16 %v193
  %v312 = vunpack.c.l.b16 %v194
  %v313 = vunpack.c.h.b16 %v194
  %v314 = vunpack.c.l.b16 %v195
  %v315 = vunpack.c.h.b16 %v195
  %v316 = vunpack.c.l.b16 %v196
  %v317 = vunpack.c.h.b16 %v196
  %v318 = vunpack.c.l.b16 %v197
  %v319 = vunpack.c.h.b16 %v197
  %v320 = vunpack.c.l.b16 %v198
  %v321 = vunpack.c.l.b16 %v199
  %v322 = vunpack.c.h.b16 %v199
  %v323 = vunpack.c.l.b16 %v200
  %v324 = vunpack.c.h.b16 %v200
  %v325 = vunpack.c.l.b16 %v201
  %v326 = vunpack.c.h.b16 %v201
  %v327 = vunpack.c.l.b16 %v202
  %v328 = vunpack.c.h.b16 %v202
  %v329 = vunpack.c.l.b16 %v203
  %v330 = vpack.c.b16 %v258, %v249
  %v331 = vpack.c.b16 %v259, %v250
  %v332 = vpack.c.b16 %v260, %v251
  %v333 = vpack.c.b16 %v261, %v252
  %v334 = vpack.c.b16 %v262, %v253
  %v335 = vpack.c.b16 %v263, %v254
  %v336 = vpack.c.b16 %v264, %v255
  %v337 = vpack.c.b16 %v265, %v256
  %v338 = vpack.c.b16 %v266, %v257
  %v339 = vpack.c.b16 %v276, %v267
  %v340 = vpack.c.b16 %v277, %v268
  %v341 = vpack.c.b16 %v278, %v269
  %v342 = vpack.c.b16 %v279, %v270
  %v343 = vpack.c.b16 %v280, %v271
  %v344 = vpack.c.b16 %v281, %v272
  %v345 = vpack.c.b16 %v282, %v273
  %v346 = vpack.c.b16 %v283, %v274
  %v347 = vpack.c.b16 %v284, %v275
  %v348 = vpack.c.b16 %v294, %v285
  %v349 = vpack.c.b16 %v295, %v286
  %v350 = vpack.c.b16 %v296, %v287
  %v351 = vpack.c.b16 %v297, %v288
  %v352 = vpack.c.b16 %v298, %v289
  %v353 = vpack.c.b16 %v299, %v290
  %v354 = vpack.c.b16 %v300, %v291
  %v355 = vpack.c.b16 %v301, %v292
  %v356 = vpack.c.b16 %v302, %v293
  %v357 = vpack.c.b16 %v312, %v303
  %v358 = vpack.c.b16 %v313, %v304
  %v359 = vpack.c.b16 %v314, %v305
  %v360 = vpack.c.b16 %v315, %v306
  %v361 = vpack.c.b16 %v316, %v307
  %v362 = vpack.c.b16 %v317, %v308
  %v363 = vpack.c.b16 %v318, %v309
  %v364 = vpack.c.b16 %v319, %v310
  %v365 = vpack.c.b16 %v320, %v311
  %v366 = vpack.c.b16 %v321, %v321
  %v367 = vpack.c.b16 %v322, %v322
  %v368 = vpack.c.b16 %v323, %v323
  %v369 = vpack.c.b16 %v324, %v324
  %v370 = vpack.c.b16 %v325, %v325
  %v371 = vpack.c.b16 %v326, %v326
  %v372 = vpack.c.b16 %v327, %v327
  %v373 = vpack.c.b16 %v328, %v328
  %v374 = vpack.c.b16 %v329, %v329
  %v564 = vunpack.c.l.b16 %v15
  %v565 = vunpack.c.h.b16 %v15
  %v566 = vunpack.c.l.b16 %v16
  %v567 = vunpack.c.h.b16 %v16
  %v568 = vunpack.c.l.b16 %v17
  %v569 = vunpack.c.h.b16 %v17
  %v570 = vunpack.c.l.b16 %v18
  %v571 = vunpack.c.h.b16 %v18
  %v572 = vunpack.c.l.b16 %v19
  %v573 = vunpack.c.h.b16 %v19
  %v574 = vunpack.c.l.b16 %v20
  %v575 = vunpack.c.h.b16 %v20
  %v576 = vunpack.c.l.b16 %v21
  %v577 = vunpack.c.h.b16 %v21
  %v578 = vunpack.c.l.b16 %v22
  %v579 = vunpack.c.h.b16 %v22
  %v580 = vunpack.c.l.b16 %v23
  %v581 = vunpack.c.h.b16 %v23
  %v582 = vunpack.c.l.b16 %v24
  %v583 = vunpack.c.h.b16 %v24
  %v584 = vunpack.c.l.b16 %v25
  %v585 = vunpack.c.h.b16 %v25
  %v586 = vunpack.c.l.b16 %v26
  %v587 = vunpack.c.h.b16 %v26
  %v588 = vunpack.c.l.b16 %v27
  %v589 = vunpack.c.h.b16 %v27
  %v590 = vunpack.c.l.b16 %v28
  %v591 = vunpack.c.h.b16 %v28
  %v592 = vunpack.c.l.b16 %v29
  %v593 = vunpack.c.h.b16 %v29
  %v594 = vunpack.c.l.b16 %v30
  %v595 = vunpack.c.h.b16 %v30
  %v596 = vunpack.c.l.b16 %v31
  %v597 = vunpack.c.h.b16 %v31
  %v598 = vunpack.c.l.b16 %v32
  %v599 = vunpack.c.h.b16 %v32
  %v600 = vunpack.c.l.b16 %v33
  %v601 = vunpack.c.h.b16 %v33
  %v602 = vunpack.c.l.b16 %v34
  %v603 = vunpack.c.h.b16 %v34
  %v604 = vunpack.c.l.b16 %v35
  %v605 = vunpack.c.h.b16 %v35
  %v606 = vunpack.c.l.b16 %v36
  %v607 = vunpack.c.h.b16 %v36
  %v608 = vunpack.c.l.b16 %v37
  %v609 = vunpack.c.h.b16 %v37
  %v610 = vunpack.c.l.b16 %v38
  %v611 = vunpack.c.h.b16 %v38
  %v612 = vunpack.c.l.b16 %v39
  %v613 = vunpack.c.h.b16 %v39
  %v614 = vunpack.c.l.b16 %v40
  %v615 = vunpack.c.h.b16 %v40
  %v616 = vunpack.c.l.b16 %v41
  %v617 = vunpack.c.h.b16 %v41
  %v618 = vunpack.c.l.b16 %v42
  %v619 = vunpack.c.h.b16 %v42
  %v620 = vunpack.c.l.b16 %v43
  %v621 = vunpack.c.h.b16 %v43
  %v622 = vunpack.c.l.b16 %v44
  %v623 = vunpack.c.h.b16 %v44
  %v624 = vunpack.c.l.b16 %v45
  %v625 = vunpack.c.h.b16 %v45
  %v626 = vunpack.c.l.b16 %v46
  %v627 = vunpack.c.h.b16 %v46
  %v628 = vunpack.c.l.b16 %v47
  %v629 = vunpack.c.h.b16 %v47
  %v630 = vunpack.c.l.b16 %v48
  %v631 = vunpack.c.h.b16 %v48
  %v632 = vunpack.c.l.b16 %v49
  %v633 = vunpack.c.h.b16 %v49
  %v634 = vunpack.c.l.b16 %v50
  %v635 = vunpack.c.h.b16 %v50
  %v636 = vunpack.c.l.b16 %v51
  %v637 = vunpack.c.h.b16 %v51
  %v638 = vunpack.c.l.b16 %v52
  %v639 = vunpack.c.h.b16 %v52
  %v640 = vunpack.c.l.b16 %v53
  %v641 = vunpack.c.h.b16 %v53
  %v642 = vunpack.c.l.b16 %v54
  %v643 = vunpack.c.h.b16 %v54
  %v644 = vunpack.c.l.b16 %v55
  %v645 = vunpack.c.h.b16 %v55
  %v646 = vunpack.c.l.b16 %v56
  %v647 = vunpack.c.h.b16 %v56
  %v648 = vunpack.c.l.b16 %v57
  %v649 = vunpack.c.h.b16 %v57
  %v650 = vunpack.c.l.b16 %v58
  %v651 = vunpack.c.h.b16 %v58
  %v652 = vunpack.c.l.b16 %v59
  %v653 = vunpack.c.h.b16 %v59
  %v654 = vunpack.c.l.b16 %v60
  %v655 = vunpack.c.h.b16 %v60
  %v656 = vunpack.c.l.b16 %v61
  %v657 = vunpack.c.h.b16 %v61
  %v658 = vunpack.c.l.b16 %v62
  %v659 = vunpack.c.h.b16 %v62
  %v660 = vunpack.c.l.b16 %v63
  %v661 = vunpack.c.h.b16 %v63
  %v662 = vunpack.c.l.b16 %v64
  %v663 = vunpack.c.h.b16 %v64
  %v664 = vunpack.c.l.b16 %v65
  %v665 = vunpack.c.h.b16 %v65
  %v666 = vunpack.c.l.b16 %v66
  %v667 = vunpack.c.h.b16 %v66
  %v668 = vunpack.c.l.b16 %v67
  %v669 = vunpack.c.h.b16 %v67
  %v670 = vunpack.c.l.b16 %v68
  %v671 = vunpack.c.h.b16 %v68
  %v672 = vunpack.c.l.b16 %v69
  %v673 = vunpack.c.h.b16 %v69
  %v674 = vunpack.c.l.b16 %v70
  %v675 = vunpack.c.h.b16 %v70
  %v676 = vunpack.c.l.b16 %v71
  %v677 = vunpack.c.h.b16 %v71
  %v678 = vunpack.c.l.b16 %v72
  %v679 = vunpack.c.h.b16 %v72
  %v680 = vunpack.c.l.b16 %v73
  %v681 = vunpack.c.h.b16 %v73
  %v682 = vunpack.c.l.b16 %v74
  %v683 = vunpack.c.h.b16 %v74
  %v684 = vunpack.c.l.b16 %v75
  %v685 = vunpack.c.h.b16 %v75
  %v686 = vunpack.c.l.b16 %v76
  %v687 = vunpack.c.h.b16 %v76
  %v688 = vunpack.c.l.b16 %v77
  %v689 = vunpack.c.h.b16 %v77
  %v690 = vunpack.c.l.b16 %v78
  %v691 = vunpack.c.h.b16 %v78
  %v692 = vunpack.c.l.b16 %v79
  %v693 = vunpack.c.h.b16 %v79
  %v694 = vunpack.c.l.b16 %v80
  %v695 = vunpack.c.h.b16 %v80
  %v696 = vunpack.c.l.b16 %v81
  %v697 = vunpack.c.h.b16 %v81
  %v698 = vunpack.c.l.b16 %v82
  %v699 = vunpack.c.h.b16 %v82
  %v700 = vunpack.c.l.b16 %v83
  %v701 = vunpack.c.h.b16 %v83
  %v702 = vunpack.c.l.b16 %v84
  %v703 = vunpack.c.h.b16 %v84
  %v704 = vunpack.c.l.b16 %v85
  %v705 = vunpack.c.h.b16 %v85
  %v706 = vunpack.c.l.b16 %v86
  %v707 = vunpack.c.h.b16 %v86
  %v708 = vunpack.c.l.b16 %v87
  %v709 = vunpack.c.h.b16 %v87
  %v710 = vunpack.c.l.b16 %v88
  %v711 = vunpack.c.h.b16 %v88
  %v712 = vunpack.c.l.b16 %v89
  %v713 = vunpack.c.h.b16 %v89
  %v714 = vunpack.c.l.b16 %v90
  %v715 = vunpack.c.h.b16 %v90
  %v716 = vunpack.c.l.b16 %v91
  %v717 = vunpack.c.h.b16 %v91
  %v718 = vunpack.c.l.b16 %v92
  %v719 = vunpack.c.h.b16 %v92
  %v720 = vunpack.c.l.b16 %v93
  %v721 = vunpack.c.h.b16 %v93
  %v722 = vunpack.c.l.b16 %v94
  %v723 = vunpack.c.h.b16 %v94
  %v724 = vunpack.c.l.b16 %v95
  %v725 = vunpack.c.h.b16 %v95
  %v726 = vunpack.c.l.b16 %v96
  %v727 = vunpack.c.h.b16 %v96
  %v728 = vunpack.c.l.b16 %v97
  %v729 = vunpack.c.h.b16 %v97
  %v730 = vunpack.c.l.b16 %v98
  %v731 = vunpack.c.h.b16 %v98
  %v732 = vunpack.c.l.b16 %v99
  %v733 = vunpack.c.h.b16 %v99
  %v734 = vunpack.c.l.b16 %v100
  %v735 = vunpack.c.h.b16 %v100
  %v736 = vunpack.c.l.b16 %v101
  %v737 = vunpack.c.h.b16 %v101
  %v738 = vunpack.c.l.b16 %v102
  %v739 = vunpack.c.h.b16 %v102
  %v740 = vunpack.c.l.b16 %v103
  %v741 = vunpack.c.h.b16 %v103
  %v742 = vunpack.c.l.b16 %v104
  %v743 = vunpack.c.h.b16 %v104
  %v744 = vunpack.c.l.b16 %v105
  %v745 = vunpack.c.h.b16 %v105
  %v746 = vunpack.c.l.b16 %v106
  %v747 = vunpack.c.h.b16 %v106
  %v748 = vunpack.c.l.b16 %v107
  %v749 = vunpack.c.h.b16 %v107
  %v750 = vunpack.c.l.b16 %v108
  %v751 = vunpack.c.h.b16 %v108
  %v752 = vunpack.c.l.b16 %v109
  %v753 = vunpack.c.h.b16 %v109
  %v754 = vunpack.c.l.b16 %v110
  %v755 = vunpack.c.h.b16 %v110
  %v756 = vunpack.c.l.b16 %v111
  %v757 = vunpack.c.h.b16 %v111
  %v758 = vunpack.c.l.b16 %v112
  %v759 = vunpack.c.h.b16 %v112
  %v760 = vunpack.c.l.b16 %v113
  %v761 = vunpack.c.h.b16 %v113
  %v762 = vunpack.c.l.b16 %v114
  %v763 = vunpack.c.h.b16 %v114
  %v764 = vunpack.c.l.b16 %v115
  %v765 = vunpack.c.h.b16 %v115
  %v766 = vunpack.c.l.b16 %v116
  %v767 = vunpack.c.h.b16 %v116
  %v768 = vunpack.c.l.b16 %v117
  %v769 = vunpack.c.h.b16 %v117
  %v770 = vunpack.c.l.b16 %v118
  %v771 = vunpack.c.h.b16 %v118
  %v772 = vunpack.c.l.b16 %v119
  %v773 = vunpack.c.h.b16 %v119
  %v774 = vunpack.c.l.b16 %v120
  %v775 = vunpack.c.h.b16 %v120
  %v776 = vunpack.c.l.b16 %v121
  %v777 = vunpack.c.h.b16 %v121
  %v778 = vunpack.c.l.b16 %v122
  %v779 = vunpack.c.h.b16 %v122
  %v780 = vunpack.c.l.b16 %v123
  %v781 = vunpack.c.h.b16 %v123
  %v782 = vunpack.c.l.b16 %v124
  %v783 = vunpack.c.h.b16 %v124
  %v784 = vunpack.c.l.b16 %v125
  %v785 = vunpack.c.h.b16 %v125
  %v786 = vunpack.c.l.b16 %v126
  %v787 = vunpack.c.h.b16 %v126
  %v788 = vunpack.c.l.b16 %v127
  %v789 = vunpack.c.h.b16 %v127
  %v790 = vunpack.c.l.b16 %v128
  %v791 = vunpack.c.h.b16 %v128
  %v792 = vunpack.c.l.b16 %v129
  %v793 = vunpack.c.h.b16 %v129
  %v794 = vunpack.c.l.b16 %v130
  %v795 = vunpack.c.h.b16 %v130
  %v796 = vunpack.c.l.b16 %v131
  %v797 = vunpack.c.h.b16 %v131
  %v798 = vunpack.c.l.b16 %v132
  %v799 = vunpack.c.h.b16 %v132
  %v800 = vunpack.c.l.b16 %v133
  %v801 = vunpack.c.h.b16 %v133
  %v802 = vunpack.c.l.b16 %v134
  %v803 = vunpack.c.h.b16 %v134
  %v804 = vunpack.c.l.b16 %v135
  %v805 = vunpack.c.h.b16 %v135
  %v806 = vunpack.c.l.b16 %v136
  %v807 = vunpack.c.h.b16 %v136
  %v808 = vunpack.c.l.b16 %v137
  %v809 = vunpack.c.h.b16 %v137
  %v810 = vunpack.c.l.b16 %v138
  %v811 = vunpack.c.h.b16 %v138
  %v812 = vunpack.c.l.b16 %v139
  %v813 = vunpack.c.h.b16 %v139
  %v814 = vunpack.c.l.b16 %v140
  %v815 = vunpack.c.h.b16 %v140
  %v816 = vunpack.c.l.b16 %v141
  %v817 = vunpack.c.h.b16 %v141
  %v818 = vunpack.c.l.b16 %v142
  %v819 = vunpack.c.h.b16 %v142
  %v820 = vunpack.c.l.b16 %v143
  %v821 = vunpack.c.h.b16 %v143
  %v822 = vunpack.c.l.b16 %v144
  %v823 = vunpack.c.h.b16 %v144
  %v824 = vunpack.c.l.b16 %v145
  %v825 = vunpack.c.h.b16 %v145
  %v826 = vunpack.c.l.b16 %v146
  %v827 = vunpack.c.h.b16 %v146
  %v828 = vunpack.c.l.b16 %v147
  %v829 = vunpack.c.h.b16 %v147
  %v830 = vunpack.c.l.b16 %v148
  %v831 = vunpack.c.h.b16 %v148
  %v832 = vunpack.c.l.b16 %v149
  %v833 = vunpack.c.h.b16 %v149
  %v834 = vunpack.c.l.b16 %v150
  %v835 = vunpack.c.h.b16 %v150
  %v836 = vunpack.c.l.b16 %v151
  %v837 = vunpack.c.h.b16 %v151
  %v838 = vunpack.c.l.b16 %v152
  %v839 = vunpack.c.h.b16 %v152
  %v840 = vunpack.c.l.b16 %v153
  %v841 = vunpack.c.h.b16 %v153
  %v842 = vunpack.c.l.b16 %v154
  %v843 = vunpack.c.h.b16 %v154
  %v844 = vunpack.c.l.b16 %v155
  %v845 = vunpack.c.h.b16 %v155
  %v846 = vunpack.c.l.b16 %v156
  %v847 = vunpack.c.h.b16 %v156
  %v848 = vunpack.c.l.b16 %v157
  %v849 = vunpack.c.h.b16 %v157
  %v850 = vunpack.c.l.b16 %v158
  %v851 = vunpack.c.h.b16 %v158
  %v852 = vpack.c.b16 %v566, %v564
  %v853 = vpack.c.b16 %v567, %v565
  %v854 = vpack.c.b16 %v570, %v568
  %v855 = vpack.c.b16 %v571, %v569
  %v856 = vpack.c.b16 %v574, %v572
  %v857 = vpack.c.b16 %v575, %v573
  %v858 = vpack.c.b16 %v578, %v576
  %v859 = vpack.c.b16 %v579, %v577
  %v860 = vpack.c.b16 %v582, %v580
  %v861 = vpack.c.b16 %v583, %v581
  %v862 = vpack.c.b16 %v586, %v584
  %v863 = vpack.c.b16 %v587, %v585
  %v864 = vpack.c.b16 %v590, %v588
  %v865 = vpack.c.b16 %v591, %v589
  %v866 = vpack.c.b16 %v594, %v592
  %v867 = vpack.c.b16 %v595, %v593
  %v868 = vpack.c.b16 %v598, %v596
  %v869 = vpack.c.b16 %v599, %v597
  %v870 = vpack.c.b16 %v602, %v600
  %v871 = vpack.c.b16 %v603, %v601
  %v872 = vpack.c.b16 %v606, %v604
  %v873 = vpack.c.b16 %v607, %v605
  %v874 = vpack.c.b16 %v610, %v608
  %v875 = vpack.c.b16 %v611, %v609
  %v876 = vpack.c.b16 %v614, %v612
  %v877 = vpack.c.b16 %v615, %v613
  %v878 = vpack.c.b16 %v618, %v616
  %v879 = vpack.c.b16 %v619, %v617
  %v880 = vpack.c.b16 %v622, %v620
  %v881 = vpack.c.b16 %v623, %v621
  %v882 = vpack.c.b16 %v626, %v624
  %v883 = vpack.c.b16 %v627, %v625
  %v884 = vpack.c.b16 %v630, %v628
  %v885 = vpack.c.b16 %v631, %v629
  %v886 = vpack.c.b16 %v634, %v632
  %v887 = vpack.c.b16 %v635, %v633
  %v888 = vpack.c.b16 %v638, %v636
  %v889 = vpack.c.b16 %v639, %v637
  %v890 = vpack.c.b16 %v642, %v640
  %v891 = vpack.c.b16 %v643, %v641
  %v892 = vpack.c.b16 %v646, %v644
  %v893 = vpack.c.b16 %v647, %v645
  %v894 = vpack.c.b16 %v650, %v648
  %v895 = vpack.c.b16 %v651, %v649
  %v896 = vpack.c.b16 %v654, %v652
  %v897 = vpack.c.b16 %v655, %v653
  %v898 = vpack.c.b16 %v658, %v656
  %v899 = vpack.c.b16 %v659, %v657
  %v900 = vpack.c.b16 %v662, %v660
  %v901 = vpack.c.b16 %v663, %v661
  %v902 = vpack.c.b16 %v666, %v664
  %v903 = vpack.c.b16 %v667, %v665
  %v904 = vpack.c.b16 %v670, %v668
  %v905 = vpack.c.b16 %v671, %v669
  %v906 = vpack.c.b16 %v674, %v672
  %v907 = vpack.c.b16 %v675, %v673
  %v908 = vpack.c.b16 %v678, %v676
  %v909 = vpack.c.b16 %v679, %v677
  %v910 = vpack.c.b16 %v682, %v680
  %v911 = vpack.c.b16 %v683, %v681
  %v912 = vpack.c.b16 %v686, %v684
  %v913 = vpack.c.b16 %v687, %v685
  %v914 = vpack.c.b16 %v690, %v688
  %v915 = vpack.c.b16 %v691, %v689
  %v916 = vpack.c.b16 %v694, %v692
  %v917 = vpack.c.b16 %v695, %v693
  %v918 = vpack.c.b16 %v698, %v696
  %v919 = vpack.c.b16 %v699, %v697
  %v920 = vpack.c.b16 %v702, %v700
  %v921 = vpack.c.b16 %v703, %v701
  %v922 = vpack.c.b16 %v706, %v704
  %v923 = vpack.c.b16 %v707, %v705
  %v924 = vpack.c.b16 %v710, %v708
  %v925 = vpack.c.b16 %v711, %v709
  %v926 = vpack.c.b16 %v714, %v712
  %v927 = vpack.c.b16 %v715, %v713
  %v928 = vpack.c.b16 %v718, %v716
  %v929 = vpack.c.b16 %v719, %v717
  %v930 = vpack.c.b16 %v722, %v720
  %v931 = vpack.c.b16 %v723, %v721
  %v932 = vpack.c.b16 %v726, %v724
  %v933 = vpack.c.b16 %v727, %v725
  %v934 = vpack.c.b16 %v730, %v728
  %v935 = vpack.c.b16 %v731, %v729
  %v936 = vpack.c.b16 %v734, %v732
  %v937 = vpack.c.b16 %v735, %v733
  %v938 = vpack.c.b16 %v738, %v736
  %v939 = vpack.c.b16 %v739, %v737
  %v940 = vpack.c.b16 %v742, %v740
  %v941 = vpack.c.b16 %v743, %v741
  %v942 = vpack.c.b16 %v746, %v744
  %v943 = vpack.c.b16 %v747, %v745
  %v944 = vpack.c.b16 %v750, %v748
  %v945 = vpack.c.b16 %v751, %v749
  %v946 = vpack.c.b16 %v754, %v752
  %v947 = vpack.c.b16 %v755, %v753
  %v948 = vpack.c.b16 %v758, %v756
  %v949 = vpack.c.b16 %v759, %v757
  %v950 = vpack.c.b16 %v762, %v760
  %v951 = vpack.c.b16 %v763, %v761
  %v952 = vpack.c.b16 %v766, %v764
  %v953 = vpack.c.b16 %v767, %v765
  %v954 = vpack.c.b16 %v770, %v768
  %v955 = vpack.c.b16 %v771, %v769
  %v956 = vpack.c.b16 %v774, %v772
  %v957 = vpack.c.b16 %v775, %v773
  %v958 = vpack.c.b16 %v778, %v776
  %v959 = vpack.c.b16 %v779, %v777
  %v960 = vpack.c.b16 %v782, %v780
  %v961 = vpack.c.b16 %v783, %v781
  %v962 = vpack.c.b16 %v786, %v784
  %v963 = vpack.c.b16 %v787, %v785
  %v964 = vpack.c.b16 %v790, %v788
  %v965 = vpack.c.b16 %v791, %v789
  %v966 = vpack.c.b16 %v794, %v792
  %v967 = vpack.c.b16 %v795, %v793
  %v968 = vpack.c.b16 %v798, %v796
  %v969 = vpack.c.b16 %v799, %v797
  %v970 = vpack.c.b16 %v802, %v800
  %v971 = vpack.c.b16 %v803, %v801
  %v972 = vpack.c.b16 %v806, %v804
  %v973 = vpack.c.b16 %v807, %v805
  %v974 = vpack.c.b16 %v810, %v808
  %v975 = vpack.c.b16 %v811, %v809
  %v976 = vpack.c.b16 %v814, %v812
  %v977 = vpack.c.b16 %v815, %v813
  %v978 = vpack.c.b16 %v818, %v816
  %v979 = vpack.c.b16 %v819, %v817
  %v980 = vpack.c.b16 %v822, %v820
  %v981 = vpack.c.b16 %v823, %v821
  %v982 = vpack.c.b16 %v826, %v824
  %v983 = vpack.c.b16 %v827, %v825
  %v984 = vpack.c.b16 %v830, %v828
  %v985 = vpack.c.b16 %v831, %v829
  %v986 = vpack.c.b16 %v834, %v832
  %v987 = vpack.c.b16 %v835, %v833
  %v988 = vpack.c.b16 %v838, %v836
  %v989 = vpack.c.b16 %v839, %v837
  %v990 = vpack.c.b16 %v842, %v840
  %v991 = vpack.c.b16 %v843, %v841
  %v992 = vpack.c.b16 %v846, %v844
  %v993 = vpack.c.b16 %v847, %v845
  %v994 = vpack.c.b16 %v850, %v848
  %v995 = vpack.c.b16 %v851, %v849
  %1140 = vmatprep.subr.bf16.mxu0 %v853
  %1141 = vmatpush1.bf16.msra.mxu0 %v852
  %1142 = vmatprep.subr.bf16.mxu0 %v855
  %1143 = vmatpush1.bf16.msra.mxu0 %v854
  %1144 = vmatprep.subr.bf16.mxu0 %v857
  %1145 = vmatpush1.bf16.msra.mxu0 %v856
  %1146 = vmatprep.subr.bf16.mxu0 %v859
  %1147 = vmatpush1.bf16.msra.mxu0 %v858
  %1148 = vmatprep.subr.bf16.mxu0 %v861
  %1149 = vmatpush1.bf16.msra.mxu0 %v860
  %1150 = vmatprep.subr.bf16.mxu0 %v863
  %1151 = vmatpush1.bf16.msra.mxu0 %v862
  %1152 = vmatprep.subr.bf16.mxu0 %v865
  %1153 = vmatpush1.bf16.msra.mxu0 %v864
  %1154 = vmatprep.subr.bf16.mxu0 %v867
  %1155 = vmatpush1.bf16.msra.mxu0 %v866
  %1156 = vmatprep.subr.bf16.mxu0 %v869
  %1157 = vmatpush1.bf16.msra.mxu0 %v868
  %1158 = vmatprep.subr.bf16.mxu0 %v871
  %1159 = vmatpush1.bf16.msra.mxu0 %v870
  %1160 = vmatprep.subr.bf16.mxu0 %v873
  %1161 = vmatpush1.bf16.msra.mxu0 %v872
  %1162 = vmatprep.subr.bf16.mxu0 %v875
  %1163 = vmatpush1.bf16.msra.mxu0 %v874
  %1164 = vmatprep.subr.bf16.mxu0 %v877
  %1165 = vmatpush1.bf16.msra.mxu0 %v876
  %1166 = vmatprep.subr.bf16.mxu0 %v879
  %1167 = vmatpush1.bf16.msra.mxu0 %v878
  %1168 = vmatprep.subr.bf16.mxu0 %v881
  %1169 = vmatpush1.bf16.msra.mxu0 %v880
  %1170 = vmatprep.subr.bf16.mxu0 %v883
  %1171 = vmatpush1.bf16.msra.mxu0 %v882
  %1172 = vmatprep.mubr.bf16.mxu0 %v331
  %1173 = vmatmul.mubr.bf16.gmra.mrb[0].mxu0 %v330
  %v1174 = vpop.f32.mrb[0].mxu0
  %v1175 = vadd.f32 0.0, %v1174
  %v1176 = vpop.f32.mrb[0].mxu0
  %v1177 = vadd.f32 0.0, %v1176
  %v1178 = vpop.f32.mrb[0].mxu0
  %v1179 = vadd.f32 0.0, %v1178
  %v1180 = vpop.f32.mrb[0].mxu0
  %v1181 = vadd.f32 0.0, %v1180
  %1182 = vmatprep.mubr.bf16.mxu0 %v340
  %1183 = vmatmul.mubr.bf16.gmra.mrb[0].mxu0 %v339
  %v1184 = vpop.f32.mrb[0].mxu0
  %v1185 = vadd.f32 0.0, %v1184
  %v1186 = vpop.f32.mrb[0].mxu0
  %v1187 = vadd.f32 0.0, %v1186
  %v1188 = vpop.f32.mrb[0].mxu0
  %v1189 = vadd.f32 0.0, %v1188
  %v1190 = vpop.f32.mrb[0].mxu0
  %v1191 = vadd.f32 0.0, %v1190
  %1192 = vmatprep.mubr.bf16.mxu0 %v349
  %1193 = vmatmul.mubr.bf16.gmra.mrb[0].mxu0 %v348
  %v1194 = vpop.f32.mrb[0].mxu0
  %v1195 = vadd.f32 0.0, %v1194
  %v1196 = vpop.f32.mrb[0].mxu0
  %v1197 = vadd.f32 0.0, %v1196
  %v1198 = vpop.f32.mrb[0].mxu0
  %v1199 = vadd.f32 0.0, %v1198
  %v1200 = vpop.f32.mrb[0].mxu0
  %v1201 = vadd.f32 0.0, %v1200
  %1202 = vmatprep.mubr.bf16.mxu0 %v358
  %1203 = vmatmul.mubr.bf16.gmra.mrb[0].mxu0 %v357
  %v1204 = vpop.f32.mrb[0].mxu0
  %v1205 = vadd.f32 0.0, %v1204
  %v1206 = vpop.f32.mrb[0].mxu0
  %v1207 = vadd.f32 0.0, %v1206
  %v1208 = vpop.f32.mrb[0].mxu0
  %v1209 = vadd.f32 0.0, %v1208
  %v1210 = vpop.f32.mrb[0].mxu0
  %v1211 = vadd.f32 0.0, %v1210
  %1212 = vmatprep.mubr.bf16.mxu0 %v367
  %1213 = vmatmul.mubr.bf16.gmra.mrb[0].mxu0 %v366
  %v1214 = vpop.f32.mrb[0].mxu0
  %v1215 = vadd.f32 0.0, %v1214
  %v1216 = vpop.f32.mrb[0].mxu0
  %v1217 = vadd.f32 0.0, %v1216
  %v1218 = vpop.f32.mrb[0].mxu0
  %v1219 = vpop.f32.mrb[0].mxu0
  %1220 = vdwg.mxu0
  %1221 = vmatprep.subr.bf16.mxu0 %v885
  %1222 = vmatpush1.bf16.msra.mxu0 %v884
  %1223 = vmatprep.subr.bf16.mxu0 %v887
  %1224 = vmatpush1.bf16.msra.mxu0 %v886
  %1225 = vmatprep.subr.bf16.mxu0 %v889
  %1226 = vmatpush1.bf16.msra.mxu0 %v888
  %1227 = vmatprep.subr.bf16.mxu0 %v891
  %1228 = vmatpush1.bf16.msra.mxu0 %v890
  %1229 = vmatprep.subr.bf16.mxu0 %v893
  %1230 = vmatpush1.bf16.msra.mxu0 %v892
  %1231 = vmatprep.subr.bf16.mxu0 %v895
  %1232 = vmatpush1.bf16.msra.mxu0 %v894
  %1233 = vmatprep.subr.bf16.mxu0 %v897
  %1234 = vmatpush1.bf16.msra.mxu0 %v896
  %1235 = vmatprep.subr.bf16.mxu0 %v899
  %1236 = vmatpush1.bf16.msra.mxu0 %v898
  %1237 = vmatprep.subr.bf16.mxu0 %v901
  %1238 = vmatpush1.bf16.msra.mxu0 %v900
  %1239 = vmatprep.subr.bf16.mxu0 %v903
  %1240 = vmatpush1.bf16.msra.mxu0 %v902
  %1241 = vmatprep.subr.bf16.mxu0 %v905
  %1242 = vmatpush1.bf16.msra.mxu0 %v904
  %1243 = vmatprep.subr.bf16.mxu0 %v907
  %1244 = vmatpush1.bf16.msra.mxu0 %v906
  %1245 = vmatprep.subr.bf16.mxu0 %v909
  %1246 = vmatpush1.bf16.msra.mxu0 %v908
  %1247 = vmatprep.subr.bf16.mxu0 %v911
  %1248 = vmatpush1.bf16.msra.mxu0 %v910
  %1249 = vmatprep.subr.bf16.mxu0 %v913
  %1250 = vmatpush1.bf16.msra.mxu0 %v912
  %1251 = vmatprep.subr.bf16.mxu0 %v915
  %1252 = vmatpush1.bf16.msra.mxu0 %v914
  %1253 = vmatprep.mubr.bf16.mxu0 %v333
  %1254 = vmatmul.mubr.bf16.gmra.mrb[0].mxu0 %v332
  %v1255 = vpop.f32.mrb[0].mxu0
  %v1256 = vadd.f32 %v1175, %v1255
  %v1257 = vpop.f32.mrb[0].mxu0
  %v1258 = vadd.f32 %v1177, %v1257
  %v1259 = vpop.f32.mrb[0].mxu0
  %v1260 = vadd.f32 %v1179, %v1259
  %v1261 = vpop.f32.mrb[0].mxu0
  %v1262 = vadd.f32 %v1181, %v1261
  %1263 = vmatprep.mubr.bf16.mxu0 %v342
  %1264 = vmatmul.mubr.bf16.gmra.mrb[0].mxu0 %v341
  %v1265 = vpop.f32.mrb[0].mxu0
  %v1266 = vadd.f32 %v1185, %v1265
  %v1267 = vpop.f32.mrb[0].mxu0
  %v1268 = vadd.f32 %v1187, %v1267
  %v1269 = vpop.f32.mrb[0].mxu0
  %v1270 = vadd.f32 %v1189, %v1269
  %v1271 = vpop.f32.mrb[0].mxu0
  %v1272 = vadd.f32 %v1191, %v1271
  %1273 = vmatprep.mubr.bf16.mxu0 %v351
  %1274 = vmatmul.mubr.bf16.gmra.mrb[0].mxu0 %v350
  %v1275 = vpop.f32.mrb[0].mxu0
  %v1276 = vadd.f32 %v1195, %v1275
  %v1277 = vpop.f32.mrb[0].mxu0
  %v1278 = vadd.f32 %v1197, %v1277
  %v1279 = vpop.f32.mrb[0].mxu0
  %v1280 = vadd.f32 %v1199, %v1279
  %v1281 = vpop.f32.mrb[0].mxu0
  %v1282 = vadd.f32 %v1201, %v1281
  %1283 = vmatprep.mubr.bf16.mxu0 %v360
  %1284 = vmatmul.mubr.bf16.gmra.mrb[0].mxu0 %v359
  %v1285 = vpop.f32.mrb[0].mxu0
  %v1286 = vadd.f32 %v1205, %v1285
  %v1287 = vpop.f32.mrb[0].mxu0
  %v1288 = vadd.f32 %v1207, %v1287
  %v1289 = vpop.f32.mrb[0].mxu0
  %v1290 = vadd.f32 %v1209, %v1289
  %v1291 = vpop.f32.mrb[0].mxu0
  %v1292 = vadd.f32 %v1211, %v1291
  %1293 = vmatprep.mubr.bf16.mxu0 %v369
  %1294 = vmatmul.mubr.bf16.gmra.mrb[0].mxu0 %v368
  %v1295 = vpop.f32.mrb[0].mxu0
  %v1296 = vadd.f32 %v1215, %v1295
  %v1297 = vpop.f32.mrb[0].mxu0
  %v1298 = vadd.f32 %v1217, %v1297
  %v1299 = vpop.f32.mrb[0].mxu0
  %v1300 = vpop.f32.mrb[0].mxu0
  %1301 = vdwg.mxu0
  %1302 = vmatprep.subr.bf16.mxu0 %v917
  %1303 = vmatpush1.bf16.msra.mxu0 %v916
  %1304 = vmatprep.subr.bf16.mxu0 %v919
  %1305 = vmatpush1.bf16.msra.mxu0 %v918
  %1306 = vmatprep.subr.bf16.mxu0 %v921
  %1307 = vmatpush1.bf16.msra.mxu0 %v920
  %1308 = vmatprep.subr.bf16.mxu0 %v923
  %1309 = vmatpush1.bf16.msra.mxu0 %v922
  %1310 = vmatprep.subr.bf16.mxu0 %v925
  %1311 = vmatpush1.bf16.msra.mxu0 %v924
  %1312 = vmatprep.subr.bf16.mxu0 %v927
  %1313 = vmatpush1.bf16.msra.mxu0 %v926
  %1314 = vmatprep.subr.bf16.mxu0 %v929
  %1315 = vmatpush1.bf16.msra.mxu0 %v928
  %1316 = vmatprep.subr.bf16.mxu0 %v931
  %1317 = vmatpush1.bf16.msra.mxu0 %v930
  %1318 = vmatprep.subr.bf16.mxu0 %v933
  %1319 = vmatpush1.bf16.msra.mxu0 %v932
  %1320 = vmatprep.subr.bf16.mxu0 %v935
  %1321 = vmatpush1.bf16.msra.mxu0 %v934
  %1322 = vmatprep.subr.bf16.mxu0 %v937
  %1323 = vmatpush1.bf16.msra.mxu0 %v936
  %1324 = vmatprep.subr.bf16.mxu0 %v939
  %1325 = vmatpush1.bf16.msra.mxu0 %v938
  %1326 = vmatprep.subr.bf16.mxu0 %v941
  %1327 = vmatpush1.bf16.msra.mxu0 %v940
  %1328 = vmatprep.subr.bf16.mxu0 %v943
  %1329 = vmatpush1.bf16.msra.mxu0 %v942
  %1330 = vmatprep.subr.bf16.mxu0 %v945
  %1331 = vmatpush1.bf16.msra.mxu0 %v944
  %1332 = vmatprep.subr.bf16.mxu0 %v947
  %1333 = vmatpush1.bf16.msra.mxu0 %v946
  %1334 = vmatprep.mubr.bf16.mxu0 %v335
  %1335 = vmatmul.mubr.bf16.gmra.mrb[0].mxu0 %v334
  %v1336 = vpop.f32.mrb[0].mxu0
  %v1337 = vadd.f32 %v1256, %v1336
  %v1338 = vpop.f32.mrb[0].mxu0
  %v1339 = vadd.f32 %v1258, %v1338
  %v1340 = vpop.f32.mrb[0].mxu0
  %v1341 = vadd.f32 %v1260, %v1340
  %v1342 = vpop.f32.mrb[0].mxu0
  %v1343 = vadd.f32 %v1262, %v1342
  %1344 = vmatprep.mubr.bf16.mxu0 %v344
  %1345 = vmatmul.mubr.bf16.gmra.mrb[0].mxu0 %v343
  %v1346 = vpop.f32.mrb[0].mxu0
  %v1347 = vadd.f32 %v1266, %v1346
  %v1348 = vpop.f32.mrb[0].mxu0
  %v1349 = vadd.f32 %v1268, %v1348
  %v1350 = vpop.f32.mrb[0].mxu0
  %v1351 = vadd.f32 %v1270, %v1350
  %v1352 = vpop.f32.mrb[0].mxu0
  %v1353 = vadd.f32 %v1272, %v1352
  %1354 = vmatprep.mubr.bf16.mxu0 %v353
  %1355 = vmatmul.mubr.bf16.gmra.mrb[0].mxu0 %v352
  %v1356 = vpop.f32.mrb[0].mxu0
  %v1357 = vadd.f32 %v1276, %v1356
  %v1358 = vpop.f32.mrb[0].mxu0
  %v1359 = vadd.f32 %v1278, %v1358
  %v1360 = vpop.f32.mrb[0].mxu0
  %v1361 = vadd.f32 %v1280, %v1360
  %v1362 = vpop.f32.mrb[0].mxu0
  %v1363 = vadd.f32 %v1282, %v1362
  %1364 = vmatprep.mubr.bf16.mxu0 %v362
  %1365 = vmatmul.mubr.bf16.gmra.mrb[0].mxu0 %v361
  %v1366 = vpop.f32.mrb[0].mxu0
  %v1367 = vadd.f32 %v1286, %v1366
  %v1368 = vpop.f32.mrb[0].mxu0
  %v1369 = vadd.f32 %v1288, %v1368
  %v1370 = vpop.f32.mrb[0].mxu0
  %v1371 = vadd.f32 %v1290, %v1370
  %v1372 = vpop.f32.mrb[0].mxu0
  %v1373 = vadd.f32 %v1292, %v1372
  %1374 = vmatprep.mubr.bf16.mxu0 %v371
  %1375 = vmatmul.mubr.bf16.gmra.mrb[0].mxu0 %v370
  %v1376 = vpop.f32.mrb[0].mxu0
  %v1377 = vadd.f32 %v1296, %v1376
  %v1378 = vpop.f32.mrb[0].mxu0
  %v1379 = vadd.f32 %v1298, %v1378
  %v1380 = vpop.f32.mrb[0].mxu0
  %v1381 = vpop.f32.mrb[0].mxu0
  %1382 = vdwg.mxu0
  %1383 = vmatprep.subr.bf16.mxu0 %v949
  %1384 = vmatpush1.bf16.msra.mxu0 %v948
  %1385 = vmatprep.subr.bf16.mxu0 %v951
  %1386 = vmatpush1.bf16.msra.mxu0 %v950
  %1387 = vmatprep.subr.bf16.mxu0 %v953
  %1388 = vmatpush1.bf16.msra.mxu0 %v952
  %1389 = vmatprep.subr.bf16.mxu0 %v955
  %1390 = vmatpush1.bf16.msra.mxu0 %v954
  %1391 = vmatprep.subr.bf16.mxu0 %v957
  %1392 = vmatpush1.bf16.msra.mxu0 %v956
  %1393 = vmatprep.subr.bf16.mxu0 %v959
  %1394 = vmatpush1.bf16.msra.mxu0 %v958
  %1395 = vmatprep.subr.bf16.mxu0 %v961
  %1396 = vmatpush1.bf16.msra.mxu0 %v960
  %1397 = vmatprep.subr.bf16.mxu0 %v963
  %1398 = vmatpush1.bf16.msra.mxu0 %v962
  %1399 = vmatprep.subr.bf16.mxu0 %v965
  %1400 = vmatpush1.bf16.msra.mxu0 %v964
  %1401 = vmatprep.subr.bf16.mxu0 %v967
  %1402 = vmatpush1.bf16.msra.mxu0 %v966
  %1403 = vmatprep.subr.bf16.mxu0 %v969
  %1404 = vmatpush1.bf16.msra.mxu0 %v968
  %1405 = vmatprep.subr.bf16.mxu0 %v971
  %1406 = vmatpush1.bf16.msra.mxu0 %v970
  %1407 = vmatprep.subr.bf16.mxu0 %v973
  %1408 = vmatpush1.bf16.msra.mxu0 %v972
  %1409 = vmatprep.subr.bf16.mxu0 %v975
  %1410 = vmatpush1.bf16.msra.mxu0 %v974
  %1411 = vmatprep.subr.bf16.mxu0 %v977
  %1412 = vmatpush1.bf16.msra.mxu0 %v976
  %1413 = vmatprep.subr.bf16.mxu0 %v979
  %1414 = vmatpush1.bf16.msra.mxu0 %v978
  %1415 = vmatprep.mubr.bf16.mxu0 %v337
  %1416 = vmatmul.mubr.bf16.gmra.mrb[0].mxu0 %v336
  %v1417 = vpop.f32.mrb[0].mxu0
  %v1418 = vadd.f32 %v1337, %v1417
  %v1419 = vpop.f32.mrb[0].mxu0
  %v1420 = vadd.f32 %v1339, %v1419
  %v1421 = vpop.f32.mrb[0].mxu0
  %v1422 = vadd.f32 %v1341, %v1421
  %v1423 = vpop.f32.mrb[0].mxu0
  %v1424 = vadd.f32 %v1343, %v1423
  %1425 = vmatprep.mubr.bf16.mxu0 %v346
  %1426 = vmatmul.mubr.bf16.gmra.mrb[0].mxu0 %v345
  %v1427 = vpop.f32.mrb[0].mxu0
  %v1428 = vadd.f32 %v1347, %v1427
  %v1429 = vpop.f32.mrb[0].mxu0
  %v1430 = vadd.f32 %v1349, %v1429
  %v1431 = vpop.f32.mrb[0].mxu0
  %v1432 = vadd.f32 %v1351, %v1431
  %v1433 = vpop.f32.mrb[0].mxu0
  %v1434 = vadd.f32 %v1353, %v1433
  %1435 = vmatprep.mubr.bf16.mxu0 %v355
  %1436 = vmatmul.mubr.bf16.gmra.mrb[0].mxu0 %v354
  %v1437 = vpop.f32.mrb[0].mxu0
  %v1438 = vadd.f32 %v1357, %v1437
  %v1439 = vpop.f32.mrb[0].mxu0
  %v1440 = vadd.f32 %v1359, %v1439
  %v1441 = vpop.f32.mrb[0].mxu0
  %v1442 = vadd.f32 %v1361, %v1441
  %v1443 = vpop.f32.mrb[0].mxu0
  %v1444 = vadd.f32 %v1363, %v1443
  %1445 = vmatprep.mubr.bf16.mxu0 %v364
  %1446 = vmatmul.mubr.bf16.gmra.mrb[0].mxu0 %v363
  %v1447 = vpop.f32.mrb[0].mxu0
  %v1448 = vadd.f32 %v1367, %v1447
  %v1449 = vpop.f32.mrb[0].mxu0
  %v1450 = vadd.f32 %v1369, %v1449
  %v1451 = vpop.f32.mrb[0].mxu0
  %v1452 = vadd.f32 %v1371, %v1451
  %v1453 = vpop.f32.mrb[0].mxu0
  %v1454 = vadd.f32 %v1373, %v1453
  %1455 = vmatprep.mubr.bf16.mxu0 %v373
  %1456 = vmatmul.mubr.bf16.gmra.mrb[0].mxu0 %v372
  %v1457 = vpop.f32.mrb[0].mxu0
  %v1458 = vadd.f32 %v1377, %v1457
  %v1459 = vpop.f32.mrb[0].mxu0
  %v1460 = vadd.f32 %v1379, %v1459
  %v1461 = vpop.f32.mrb[0].mxu0
  %v1462 = vpop.f32.mrb[0].mxu0
  %1463 = vdwg.mxu0
  %1464 = vmatprep.subr.bf16.mxu0 %v981
  %1465 = vmatpush1.bf16.msra.mxu0 %v980
  %1466 = vmatprep.subr.bf16.mxu0 %v983
  %1467 = vmatpush1.bf16.msra.mxu0 %v982
  %1468 = vmatprep.subr.bf16.mxu0 %v985
  %1469 = vmatpush1.bf16.msra.mxu0 %v984
  %1470 = vmatprep.subr.bf16.mxu0 %v987
  %1471 = vmatpush1.bf16.msra.mxu0 %v986
  %1472 = vmatprep.subr.bf16.mxu0 %v989
  %1473 = vmatpush1.bf16.msra.mxu0 %v988
  %1474 = vmatprep.subr.bf16.mxu0 %v991
  %1475 = vmatpush1.bf16.msra.mxu0 %v990
  %1476 = vmatprep.subr.bf16.mxu0 %v993
  %1477 = vmatpush1.bf16.msra.mxu0 %v992
  %1478 = vmatprep.subr.bf16.mxu0 %v995
  %1479 = vmatpush1.bf16.msra.mxu0 %v994
  %1480 = vmatprep.subr.bf16.mxu0 0
  %1481 = vmatpush1.bf16.msra.mxu0 0
  %1482 = vmatprep.subr.bf16.mxu0 0
  %1483 = vmatpush1.bf16.msra.mxu0 0
  %1484 = vmatprep.subr.bf16.mxu0 0
  %1485 = vmatpush1.bf16.msra.mxu0 0
  %1486 = vmatprep.subr.bf16.mxu0 0
  %1487 = vmatpush1.bf16.msra.mxu0 0
  %1488 = vmatprep.subr.bf16.mxu0 0
  %1489 = vmatpush1.bf16.msra.mxu0 0
  %1490 = vmatprep.subr.bf16.mxu0 0
  %1491 = vmatpush1.bf16.msra.mxu0 0
  %1492 = vmatprep.subr.bf16.mxu0 0
  %1493 = vmatpush1.bf16.msra.mxu0 0
  %1494 = vmatprep.subr.bf16.mxu0 0
  %1495 = vmatpush1.bf16.msra.mxu0 0
  %1496 = vmatprep.mubr.bf16.mxu0 0
  %1497 = vmatmul.mubr.bf16.gmra.mrb[0].mxu0 %v338
  %v1498 = vpop.f32.mrb[0].mxu0
  %v1499 = vadd.f32 %v1418, %v1498
  %v1500 = vpop.f32.mrb[0].mxu0
  %v1501 = vadd.f32 %v1420, %v1500
  %v1502 = vpop.f32.mrb[0].mxu0
  %v1503 = vadd.f32 %v1422, %v1502
  %v1504 = vpop.f32.mrb[0].mxu0
  %v1505 = vadd.f32 %v1424, %v1504
  %1506 = vmatprep.mubr.bf16.mxu0 0
  %1507 = vmatmul.mubr.bf16.gmra.mrb[0].mxu0 %v347
  %v1508 = vpop.f32.mrb[0].mxu0
  %v1509 = vadd.f32 %v1428, %v1508
  %v1510 = vpop.f32.mrb[0].mxu0
  %v1511 = vadd.f32 %v1430, %v1510
  %v1512 = vpop.f32.mrb[0].mxu0
  %v1513 = vadd.f32 %v1432, %v1512
  %v1514 = vpop.f32.mrb[0].mxu0
  %v1515 = vadd.f32 %v1434, %v1514
  %1516 = vmatprep.mubr.bf16.mxu0 0
  %1517 = vmatmul.mubr.bf16.gmra.mrb[0].mxu0 %v356
  %v1518 = vpop.f32.mrb[0].mxu0
  %v1519 = vadd.f32 %v1438, %v1518
  %v1520 = vpop.f32.mrb[0].mxu0
  %v1521 = vadd.f32 %v1440, %v1520
  %v1522 = vpop.f32.mrb[0].mxu0
  %v1523 = vadd.f32 %v1442, %v1522
  %v1524 = vpop.f32.mrb[0].mxu0
  %v1525 = vadd.f32 %v1444, %v1524
  %1526 = vmatprep.mubr.bf16.mxu0 0
  %1527 = vmatmul.mubr.bf16.gmra.mrb[0].mxu0 %v365
  %v1528 = vpop.f32.mrb[0].mxu0
  %v1529 = vadd.f32 %v1448, %v1528
  %v1530 = vpop.f32.mrb[0].mxu0
  %v1531 = vadd.f32 %v1450, %v1530
  %v1532 = vpop.f32.mrb[0].mxu0
  %v1533 = vadd.f32 %v1452, %v1532
  %v1534 = vpop.f32.mrb[0].mxu0
  %v1535 = vadd.f32 %v1454, %v1534
  %1536 = vmatprep.mubr.bf16.mxu0 0
  %1537 = vmatmul.mubr.bf16.gmra.mrb[0].mxu0 %v374
  %v1538 = vpop.f32.mrb[0].mxu0
  %v1539 = vadd.f32 %v1458, %v1538
  %v1540 = vpop.f32.mrb[0].mxu0
  %v1541 = vadd.f32 %v1460, %v1540
  %v1542 = vpop.f32.mrb[0].mxu0
  %v1543 = vpop.f32.mrb[0].mxu0
  %1544 = vdwg.mxu0
  %s1545 = scalar_lea.vmem %s0, 324
  %v1546 = vld [vmem:[%s1545] sm:$0xff]
  %v1547 = vld [vmem:[%s1545 + $0x8] sm:$0xff]
  %v1548 = vld [vmem:[%s1545 + $0x10] sm:$0xff]
  %v1549 = vld [vmem:[%s1545 + $0x18] sm:$0xff]
  %v1550 = vld [vmem:[%s1545 + $0x20] sm:$0xf]
  %v1551 = vld [vmem:[%s1545 + $0x24] sm:$0xff]
  %v1552 = vld [vmem:[%s1545 + $0x2c] sm:$0xff]
  %v1553 = vld [vmem:[%s1545 + $0x34] sm:$0xff]
  %v1554 = vld [vmem:[%s1545 + $0x3c] sm:$0xff]
  %v1555 = vld [vmem:[%s1545 + $0x44] sm:$0xf]
  %v1556 = vld [vmem:[%s1545 + $0x48] sm:$0xff]
  %v1557 = vld [vmem:[%s1545 + $0x50] sm:$0xff]
  %v1558 = vld [vmem:[%s1545 + $0x58] sm:$0xff]
  %v1559 = vld [vmem:[%s1545 + $0x60] sm:$0xff]
  %v1560 = vld [vmem:[%s1545 + $0x68] sm:$0xf]
  %v1561 = vld [vmem:[%s1545 + $0x6c] sm:$0xff]
  %v1562 = vld [vmem:[%s1545 + $0x74] sm:$0xff]
  %v1563 = vld [vmem:[%s1545 + $0x7c] sm:$0xff]
  %v1564 = vld [vmem:[%s1545 + $0x84] sm:$0xff]
  %v1565 = vld [vmem:[%s1545 + $0x8c] sm:$0xf]
  %v1566 = vld [vmem:[%s1545 + $0x90] sm:$0xff]
  %v1567 = vld [vmem:[%s1545 + $0x98] sm:$0xff]
  %v1568 = vld [vmem:[%s1545 + $0xa0] sm:$0xff]
  %v1569 = vld [vmem:[%s1545 + $0xa8] sm:$0xff]
  %v1570 = vld [vmem:[%s1545 + $0xb0] sm:$0xf]
  %v1571 = vld [vmem:[%s1545 + $0xb4] sm:$0xff]
  %v1572 = vld [vmem:[%s1545 + $0xbc] sm:$0xff]
  %v1573 = vld [vmem:[%s1545 + $0xc4] sm:$0xff]
  %v1574 = vld [vmem:[%s1545 + $0xcc] sm:$0xff]
  %v1575 = vld [vmem:[%s1545 + $0xd4] sm:$0xf]
  %v1576 = vld [vmem:[%s1545 + $0xd8] sm:$0xff]
  %v1577 = vld [vmem:[%s1545 + $0xe0] sm:$0xff]
  %v1578 = vld [vmem:[%s1545 + $0xe8] sm:$0xff]
  %v1579 = vld [vmem:[%s1545 + $0xf0] sm:$0xff]
  %v1580 = vld [vmem:[%s1545 + $0xf8] sm:$0xf]
  %v1581 = vld [vmem:[%s1545 + $0xfc] sm:$0xff]
  %v1582 = vld [vmem:[%s1545 + $0x104] sm:$0xff]
  %v1583 = vld [vmem:[%s1545 + $0x10c] sm:$0xff]
  %v1584 = vld [vmem:[%s1545 + $0x114] sm:$0xff]
  %v1585 = vld [vmem:[%s1545 + $0x11c] sm:$0xf]
  %v1586 = vld [vmem:[%s1545 + $0x120] sm:$0xff]
  %v1587 = vld [vmem:[%s1545 + $0x128] sm:$0xff]
  %v1588 = vld [vmem:[%s1545 + $0x130] sm:$0xff]
  %v1589 = vld [vmem:[%s1545 + $0x138] sm:$0xff]
  %v1590 = vld [vmem:[%s1545 + $0x140] sm:$0xf]
  %v1636 = vunpack.c.l.b16 %v1546
  %v1637 = vunpack.c.h.b16 %v1546
  %v1638 = vunpack.c.l.b16 %v1547
  %v1639 = vunpack.c.h.b16 %v1547
  %v1640 = vunpack.c.l.b16 %v1548
  %v1641 = vunpack.c.h.b16 %v1548
  %v1642 = vunpack.c.l.b16 %v1549
  %v1643 = vunpack.c.h.b16 %v1549
  %v1644 = vunpack.c.l.b16 %v1550
  %v1645 = vunpack.c.l.b16 %v1551
  %v1646 = vunpack.c.h.b16 %v1551
  %v1647 = vunpack.c.l.b16 %v1552
  %v1648 = vunpack.c.h.b16 %v1552
  %v1649 = vunpack.c.l.b16 %v1553
  %v1650 = vunpack.c.h.b16 %v1553
  %v1651 = vunpack.c.l.b16 %v1554
  %v1652 = vunpack.c.h.b16 %v1554
  %v1653 = vunpack.c.l.b16 %v1555
  %v1654 = vunpack.c.l.b16 %v1556
  %v1655 = vunpack.c.h.b16 %v1556
  %v1656 = vunpack.c.l.b16 %v1557
  %v1657 = vunpack.c.h.b16 %v1557
  %v1658 = vunpack.c.l.b16 %v1558
  %v1659 = vunpack.c.h.b16 %v1558
  %v1660 = vunpack.c.l.b16 %v1559
  %v1661 = vunpack.c.h.b16 %v1559
  %v1662 = vunpack.c.l.b16 %v1560
  %v1663 = vunpack.c.l.b16 %v1561
  %v1664 = vunpack.c.h.b16 %v1561
  %v1665 = vunpack.c.l.b16 %v1562
  %v1666 = vunpack.c.h.b16 %v1562
  %v1667 = vunpack.c.l.b16 %v1563
  %v1668 = vunpack.c.h.b16 %v1563
  %v1669 = vunpack.c.l.b16 %v1564
  %v1670 = vunpack.c.h.b16 %v1564
  %v1671 = vunpack.c.l.b16 %v1565
  %v1672 = vunpack.c.l.b16 %v1566
  %v1673 = vunpack.c.h.b16 %v1566
  %v1674 = vunpack.c.l.b16 %v1567
  %v1675 = vunpack.c.h.b16 %v1567
  %v1676 = vunpack.c.l.b16 %v1568
  %v1677 = vunpack.c.h.b16 %v1568
  %v1678 = vunpack.c.l.b16 %v1569
  %v1679 = vunpack.c.h.b16 %v1569
  %v1680 = vunpack.c.l.b16 %v1570
  %v1681 = vunpack.c.l.b16 %v1571
  %v1682 = vunpack.c.h.b16 %v1571
  %v1683 = vunpack.c.l.b16 %v1572
  %v1684 = vunpack.c.h.b16 %v1572
  %v1685 = vunpack.c.l.b16 %v1573
  %v1686 = vunpack.c.h.b16 %v1573
  %v1687 = vunpack.c.l.b16 %v1574
  %v1688 = vunpack.c.h.b16 %v1574
  %v1689 = vunpack.c.l.b16 %v1575
  %v1690 = vunpack.c.l.b16 %v1576
  %v1691 = vunpack.c.h.b16 %v1576
  %v1692 = vunpack.c.l.b16 %v1577
  %v1693 = vunpack.c.h.b16 %v1577
  %v1694 = vunpack.c.l.b16 %v1578
  %v1695 = vunpack.c.h.b16 %v1578
  %v1696 = vunpack.c.l.b16 %v1579
  %v1697 = vunpack.c.h.b16 %v1579
  %v1698 = vunpack.c.l.b16 %v1580
  %v1699 = vunpack.c.l.b16 %v1581
  %v1700 = vunpack.c.h.b16 %v1581
  %v1701 = vunpack.c.l.b16 %v1582
  %v1702 = vunpack.c.h.b16 %v1582
  %v1703 = vunpack.c.l.b16 %v1583
  %v1704 = vunpack.c.h.b16 %v1583
  %v1705 = vunpack.c.l.b16 %v1584
  %v1706 = vunpack.c.h.b16 %v1584
  %v1707 = vunpack.c.l.b16 %v1585
  %v1708 = vunpack.c.l.b16 %v1586
  %v1709 = vunpack.c.h.b16 %v1586
  %v1710 = vunpack.c.l.b16 %v1587
  %v1711 = vunpack.c.h.b16 %v1587
  %v1712 = vunpack.c.l.b16 %v1588
  %v1713 = vunpack.c.h.b16 %v1588
  %v1714 = vunpack.c.l.b16 %v1589
  %v1715 = vunpack.c.h.b16 %v1589
  %v1716 = vunpack.c.l.b16 %v1590
  %v1717 = vpack.c.b16 %v1645, %v1636
  %v1718 = vpack.c.b16 %v1646, %v1637
  %v1719 = vpack.c.b16 %v1647, %v1638
  %v1720 = vpack.c.b16 %v1648, %v1639
  %v1721 = vpack.c.b16 %v1649, %v1640
  %v1722 = vpack.c.b16 %v1650, %v1641
  %v1723 = vpack.c.b16 %v1651, %v1642
  %v1724 = vpack.c.b16 %v1652, %v1643
  %v1725 = vpack.c.b16 %v1653, %v1644
  %v1726 = vpack.c.b16 %v1663, %v1654
  %v1727 = vpack.c.b16 %v1664, %v1655
  %v1728 = vpack.c.b16 %v1665, %v1656
  %v1729 = vpack.c.b16 %v1666, %v1657
  %v1730 = vpack.c.b16 %v1667, %v1658
  %v1731 = vpack.c.b16 %v1668, %v1659
  %v1732 = vpack.c.b16 %v1669, %v1660
  %v1733 = vpack.c.b16 %v1670, %v1661
  %v1734 = vpack.c.b16 %v1671, %v1662
  %v1735 = vpack.c.b16 %v1681, %v1672
  %v1736 = vpack.c.b16 %v1682, %v1673
  %v1737 = vpack.c.b16 %v1683, %v1674
  %v1738 = vpack.c.b16 %v1684, %v1675
  %v1739 = vpack.c.b16 %v1685, %v1676
  %v1740 = vpack.c.b16 %v1686, %v1677
  %v1741 = vpack.c.b16 %v1687, %v1678
  %v1742 = vpack.c.b16 %v1688, %v1679
  %v1743 = vpack.c.b16 %v1689, %v1680
  %v1744 = vpack.c.b16 %v1699, %v1690
  %v1745 = vpack.c.b16 %v1700, %v1691
  %v1746 = vpack.c.b16 %v1701, %v1692
  %v1747 = vpack.c.b16 %v1702, %v1693
  %v1748 = vpack.c.b16 %v1703, %v1694
  %v1749 = vpack.c.b16 %v1704, %v1695
  %v1750 = vpack.c.b16 %v1705, %v1696
  %v1751 = vpack.c.b16 %v1706, %v1697
  %v1752 = vpack.c.b16 %v1707, %v1698
  %v1753 = vpack.c.b16 %v1708, %v1708
  %v1754 = vpack.c.b16 %v1709, %v1709
  %v1755 = vpack.c.b16 %v1710, %v1710
  %v1756 = vpack.c.b16 %v1711, %v1711
  %v1757 = vpack.c.b16 %v1712, %v1712
  %v1758 = vpack.c.b16 %v1713, %v1713
  %v1759 = vpack.c.b16 %v1714, %v1714
  %v1760 = vpack.c.b16 %v1715, %v1715
  %v1761 = vpack.c.b16 %v1716, %v1716
  %1807 = vmatprep.subr.bf16.mxu0 %v853
  %1808 = vmatpush1.bf16.msra.mxu0 %v852
  %1809 = vmatprep.subr.bf16.mxu0 %v855
  %1810 = vmatpush1.bf16.msra.mxu0 %v854
  %1811 = vmatprep.subr.bf16.mxu0 %v857
  %1812 = vmatpush1.bf16.msra.mxu0 %v856
  %1813 = vmatprep.subr.bf16.mxu0 %v859
  %1814 = vmatpush1.bf16.msra.mxu0 %v858
  %1815 = vmatprep.subr.bf16.mxu0 %v861
  %1816 = vmatpush1.bf16.msra.mxu0 %v860
  %1817 = vmatprep.subr.bf16.mxu0 %v863
  %1818 = vmatpush1.bf16.msra.mxu0 %v862
  %1819 = vmatprep.subr.bf16.mxu0 %v865
  %1820 = vmatpush1.bf16.msra.mxu0 %v864
  %1821 = vmatprep.subr.bf16.mxu0 %v867
  %1822 = vmatpush1.bf16.msra.mxu0 %v866
  %1823 = vmatprep.subr.bf16.mxu0 %v869
  %1824 = vmatpush1.bf16.msra.mxu0 %v868
  %1825 = vmatprep.subr.bf16.mxu0 %v871
  %1826 = vmatpush1.bf16.msra.mxu0 %v870
  %1827 = vmatprep.subr.bf16.mxu0 %v873
  %1828 = vmatpush1.bf16.msra.mxu0 %v872
  %1829 = vmatprep.subr.bf16.mxu0 %v875
  %1830 = vmatpush1.bf16.msra.mxu0 %v874
  %1831 = vmatprep.subr.bf16.mxu0 %v877
  %1832 = vmatpush1.bf16.msra.mxu0 %v876
  %1833 = vmatprep.subr.bf16.mxu0 %v879
  %1834 = vmatpush1.bf16.msra.mxu0 %v878
  %1835 = vmatprep.subr.bf16.mxu0 %v881
  %1836 = vmatpush1.bf16.msra.mxu0 %v880
  %1837 = vmatprep.subr.bf16.mxu0 %v883
  %1838 = vmatpush1.bf16.msra.mxu0 %v882
  %1839 = vmatprep.mubr.bf16.mxu0 %v1718
  %1840 = vmatmul.mubr.bf16.gmra.mrb[0].mxu0 %v1717
  %v1841 = vpop.f32.mrb[0].mxu0
  %v1842 = vadd.f32 0.0, %v1841
  %v1843 = vpop.f32.mrb[0].mxu0
  %v1844 = vadd.f32 0.0, %v1843
  %v1845 = vpop.f32.mrb[0].mxu0
  %v1846 = vadd.f32 0.0, %v1845
  %v1847 = vpop.f32.mrb[0].mxu0
  %v1848 = vadd.f32 0.0, %v1847
  %1849 = vmatprep.mubr.bf16.mxu0 %v1727
  %1850 = vmatmul.mubr.bf16.gmra.mrb[0].mxu0 %v1726
  %v1851 = vpop.f32.mrb[0].mxu0
  %v1852 = vadd.f32 0.0, %v1851
  %v1853 = vpop.f32.mrb[0].mxu0
  %v1854 = vadd.f32 0.0, %v1853
  %v1855 = vpop.f32.mrb[0].mxu0
  %v1856 = vadd.f32 0.0, %v1855
  %v1857 = vpop.f32.mrb[0].mxu0
  %v1858 = vadd.f32 0.0, %v1857
  %1859 = vmatprep.mubr.bf16.mxu0 %v1736
  %1860 = vmatmul.mubr.bf16.gmra.mrb[0].mxu0 %v1735
  %v1861 = vpop.f32.mrb[0].mxu0
  %v1862 = vadd.f32 0.0, %v1861
  %v1863 = vpop.f32.mrb[0].mxu0
  %v1864 = vadd.f32 0.0, %v1863
  %v1865 = vpop.f32.mrb[0].mxu0
  %v1866 = vadd.f32 0.0, %v1865
  %v1867 = vpop.f32.mrb[0].mxu0
  %v1868 = vadd.f32 0.0, %v1867
  %1869 = vmatprep.mubr.bf16.mxu0 %v1745
  %1870 = vmatmul.mubr.bf16.gmra.mrb[0].mxu0 %v1744
  %v1871 = vpop.f32.mrb[0].mxu0
  %v1872 = vadd.f32 0.0, %v1871
  %v1873 = vpop.f32.mrb[0].mxu0
  %v1874 = vadd.f32 0.0, %v1873
  %v1875 = vpop.f32.mrb[0].mxu0
  %v1876 = vadd.f32 0.0, %v1875
  %v1877 = vpop.f32.mrb[0].mxu0
  %v1878 = vadd.f32 0.0, %v1877
  %1879 = vmatprep.mubr.bf16.mxu0 %v1754
  %1880 = vmatmul.mubr.bf16.gmra.mrb[0].mxu0 %v1753
  %v1881 = vpop.f32.mrb[0].mxu0
  %v1882 = vadd.f32 0.0, %v1881
  %v1883 = vpop.f32.mrb[0].mxu0
  %v1884 = vadd.f32 0.0, %v1883
  %v1885 = vpop.f32.mrb[0].mxu0
  %v1886 = vpop.f32.mrb[0].mxu0
  %1887 = vdwg.mxu0
  %1888 = vmatprep.subr.bf16.mxu0 %v885
  %1889 = vmatpush1.bf16.msra.mxu0 %v884
  %1890 = vmatprep.subr.bf16.mxu0 %v887
  %1891 = vmatpush1.bf16.msra.mxu0 %v886
  %1892 = vmatprep.subr.bf16.mxu0 %v889
  %1893 = vmatpush1.bf16.msra.mxu0 %v888
  %1894 = vmatprep.subr.bf16.mxu0 %v891
  %1895 = vmatpush1.bf16.msra.mxu0 %v890
  %1896 = vmatprep.subr.bf16.mxu0 %v893
  %1897 = vmatpush1.bf16.msra.mxu0 %v892
  %1898 = vmatprep.subr.bf16.mxu0 %v895
  %1899 = vmatpush1.bf16.msra.mxu0 %v894
  %1900 = vmatprep.subr.bf16.mxu0 %v897
  %1901 = vmatpush1.bf16.msra.mxu0 %v896
  %1902 = vmatprep.subr.bf16.mxu0 %v899
  %1903 = vmatpush1.bf16.msra.mxu0 %v898
  %1904 = vmatprep.subr.bf16.mxu0 %v901
  %1905 = vmatpush1.bf16.msra.mxu0 %v900
  %1906 = vmatprep.subr.bf16.mxu0 %v903
  %1907 = vmatpush1.bf16.msra.mxu0 %v902
  %1908 = vmatprep.subr.bf16.mxu0 %v905
  %1909 = vmatpush1.bf16.msra.mxu0 %v904
  %1910 = vmatprep.subr.bf16.mxu0 %v907
  %1911 = vmatpush1.bf16.msra.mxu0 %v906
  %1912 = vmatprep.subr.bf16.mxu0 %v909
  %1913 = vmatpush1.bf16.msra.mxu0 %v908
  %1914 = vmatprep.subr.bf16.mxu0 %v911
  %1915 = vmatpush1.bf16.msra.mxu0 %v910
  %1916 = vmatprep.subr.bf16.mxu0 %v913
  %1917 = vmatpush1.bf16.msra.mxu0 %v912
  %1918 = vmatprep.subr.bf16.mxu0 %v915
  %1919 = vmatpush1.bf16.msra.mxu0 %v914
  %1920 = vmatprep.mubr.bf16.mxu0 %v1720
  %1921 = vmatmul.mubr.bf16.gmra.mrb[0].mxu0 %v1719
  %v1922 = vpop.f32.mrb[0].mxu0
  %v1923 = vadd.f32 %v1842, %v1922
  %v1924 = vpop.f32.mrb[0].mxu0
  %v1925 = vadd.f32 %v1844, %v1924
  %v1926 = vpop.f32.mrb[0].mxu0
  %v1927 = vadd.f32 %v1846, %v1926
  %v1928 = vpop.f32.mrb[0].mxu0
  %v1929 = vadd.f32 %v1848, %v1928
  %1930 = vmatprep.mubr.bf16.mxu0 %v1729
  %1931 = vmatmul.mubr.bf16.gmra.mrb[0].mxu0 %v1728
  %v1932 = vpop.f32.mrb[0].mxu0
  %v1933 = vadd.f32 %v1852, %v1932
  %v1934 = vpop.f32.mrb[0].mxu0
  %v1935 = vadd.f32 %v1854, %v1934
  %v1936 = vpop.f32.mrb[0].mxu0
  %v1937 = vadd.f32 %v1856, %v1936
  %v1938 = vpop.f32.mrb[0].mxu0
  %v1939 = vadd.f32 %v1858, %v1938
  %1940 = vmatprep.mubr.bf16.mxu0 %v1738
  %1941 = vmatmul.mubr.bf16.gmra.mrb[0].mxu0 %v1737
  %v1942 = vpop.f32.mrb[0].mxu0
  %v1943 = vadd.f32 %v1862, %v1942
  %v1944 = vpop.f32.mrb[0].mxu0
  %v1945 = vadd.f32 %v1864, %v1944
  %v1946 = vpop.f32.mrb[0].mxu0
  %v1947 = vadd.f32 %v1866, %v1946
  %v1948 = vpop.f32.mrb[0].mxu0
  %v1949 = vadd.f32 %v1868, %v1948
  %1950 = vmatprep.mubr.bf16.mxu0 %v1747
  %1951 = vmatmul.mubr.bf16.gmra.mrb[0].mxu0 %v1746
  %v1952 = vpop.f32.mrb[0].mxu0
  %v1953 = vadd.f32 %v1872, %v1952
  %v1954 = vpop.f32.mrb[0].mxu0
  %v1955 = vadd.f32 %v1874, %v1954
  %v1956 = vpop.f32.mrb[0].mxu0
  %v1957 = vadd.f32 %v1876, %v1956
  %v1958 = vpop.f32.mrb[0].mxu0
  %v1959 = vadd.f32 %v1878, %v1958
  %1960 = vmatprep.mubr.bf16.mxu0 %v1756
  %1961 = vmatmul.mubr.bf16.gmra.mrb[0].mxu0 %v1755
  %v1962 = vpop.f32.mrb[0].mxu0
  %v1963 = vadd.f32 %v1882, %v1962
  %v1964 = vpop.f32.mrb[0].mxu0
  %v1965 = vadd.f32 %v1884, %v1964
  %v1966 = vpop.f32.mrb[0].mxu0
  %v1967 = vpop.f32.mrb[0].mxu0
  %1968 = vdwg.mxu0
  %1969 = vmatprep.subr.bf16.mxu0 %v917
  %1970 = vmatpush1.bf16.msra.mxu0 %v916
  %1971 = vmatprep.subr.bf16.mxu0 %v919
  %1972 = vmatpush1.bf16.msra.mxu0 %v918
  %1973 = vmatprep.subr.bf16.mxu0 %v921
  %1974 = vmatpush1.bf16.msra.mxu0 %v920
  %1975 = vmatprep.subr.bf16.mxu0 %v923
  %1976 = vmatpush1.bf16.msra.mxu0 %v922
  %1977 = vmatprep.subr.bf16.mxu0 %v925
  %1978 = vmatpush1.bf16.msra.mxu0 %v924
  %1979 = vmatprep.subr.bf16.mxu0 %v927
  %1980 = vmatpush1.bf16.msra.mxu0 %v926
  %1981 = vmatprep.subr.bf16.mxu0 %v929
  %1982 = vmatpush1.bf16.msra.mxu0 %v928
  %1983 = vmatprep.subr.bf16.mxu0 %v931
  %1984 = vmatpush1.bf16.msra.mxu0 %v930
  %1985 = vmatprep.subr.bf16.mxu0 %v933
  %1986 = vmatpush1.bf16.msra.mxu0 %v932
  %1987 = vmatprep.subr.bf16.mxu0 %v935
  %1988 = vmatpush1.bf16.msra.mxu0 %v934
  %1989 = vmatprep.subr.bf16.mxu0 %v937
  %1990 = vmatpush1.bf16.msra.mxu0 %v936
  %1991 = vmatprep.subr.bf16.mxu0 %v939
  %1992 = vmatpush1.bf16.msra.mxu0 %v938
  %1993 = vmatprep.subr.bf16.mxu0 %v941
  %1994 = vmatpush1.bf16.msra.mxu0 %v940
  %1995 = vmatprep.subr.bf16.mxu0 %v943
  %1996 = vmatpush1.bf16.msra.mxu0 %v942
  %1997 = vmatprep.subr.bf16.mxu0 %v945
  %1998 = vmatpush1.bf16.msra.mxu0 %v944
  %1999 = vmatprep.subr.bf16.mxu0 %v947
  %2000 = vmatpush1.bf16.msra.mxu0 %v946
  %2001 = vmatprep.mubr.bf16.mxu0 %v1722
  %2002 = vmatmul.mubr.bf16.gmra.mrb[0].mxu0 %v1721
  %v2003 = vpop.f32.mrb[0].mxu0
  %v2004 = vadd.f32 %v1923, %v2003
  %v2005 = vpop.f32.mrb[0].mxu0
  %v2006 = vadd.f32 %v1925, %v2005
  %v2007 = vpop.f32.mrb[0].mxu0
  %v2008 = vadd.f32 %v1927, %v2007
  %v2009 = vpop.f32.mrb[0].mxu0
  %v2010 = vadd.f32 %v1929, %v2009
  %2011 = vmatprep.mubr.bf16.mxu0 %v1731
  %2012 = vmatmul.mubr.bf16.gmra.mrb[0].mxu0 %v1730
  %v2013 = vpop.f32.mrb[0].mxu0
  %v2014 = vadd.f32 %v1933, %v2013
  %v2015 = vpop.f32.mrb[0].mxu0
  %v2016 = vadd.f32 %v1935, %v2015
  %v2017 = vpop.f32.mrb[0].mxu0
  %v2018 = vadd.f32 %v1937, %v2017
  %v2019 = vpop.f32.mrb[0].mxu0
  %v2020 = vadd.f32 %v1939, %v2019
  %2021 = vmatprep.mubr.bf16.mxu0 %v1740
  %2022 = vmatmul.mubr.bf16.gmra.mrb[0].mxu0 %v1739
  %v2023 = vpop.f32.mrb[0].mxu0
  %v2024 = vadd.f32 %v1943, %v2023
  %v2025 = vpop.f32.mrb[0].mxu0
  %v2026 = vadd.f32 %v1945, %v2025
  %v2027 = vpop.f32.mrb[0].mxu0
  %v2028 = vadd.f32 %v1947, %v2027
  %v2029 = vpop.f32.mrb[0].mxu0
  %v2030 = vadd.f32 %v1949, %v2029
  %2031 = vmatprep.mubr.bf16.mxu0 %v1749
  %2032 = vmatmul.mubr.bf16.gmra.mrb[0].mxu0 %v1748
  %v2033 = vpop.f32.mrb[0].mxu0
  %v2034 = vadd.f32 %v1953, %v2033
  %v2035 = vpop.f32.mrb[0].mxu0
  %v2036 = vadd.f32 %v1955, %v2035
  %v2037 = vpop.f32.mrb[0].mxu0
  %v2038 = vadd.f32 %v1957, %v2037
  %v2039 = vpop.f32.mrb[0].mxu0
  %v2040 = vadd.f32 %v1959, %v2039
  %2041 = vmatprep.mubr.bf16.mxu0 %v1758
  %2042 = vmatmul.mubr.bf16.gmra.mrb[0].mxu0 %v1757
  %v2043 = vpop.f32.mrb[0].mxu0
  %v2044 = vadd.f32 %v1963, %v2043
  %v2045 = vpop.f32.mrb[0].mxu0
  %v2046 = vadd.f32 %v1965, %v2045
  %v2047 = vpop.f32.mrb[0].mxu0
  %v2048 = vpop.f32.mrb[0].mxu0
  %2049 = vdwg.mxu0
  %2050 = vmatprep.subr.bf16.mxu0 %v949
  %2051 = vmatpush1.bf16.msra.mxu0 %v948
  %2052 = vmatprep.subr.bf16.mxu0 %v951
  %2053 = vmatpush1.bf16.msra.mxu0 %v950
  %2054 = vmatprep.subr.bf16.mxu0 %v953
  %2055 = vmatpush1.bf16.msra.mxu0 %v952
  %2056 = vmatprep.subr.bf16.mxu0 %v955
  %2057 = vmatpush1.bf16.msra.mxu0 %v954
  %2058 = vmatprep.subr.bf16.mxu0 %v957
  %2059 = vmatpush1.bf16.msra.mxu0 %v956
  %2060 = vmatprep.subr.bf16.mxu0 %v959
  %2061 = vmatpush1.bf16.msra.mxu0 %v958
  %2062 = vmatprep.subr.bf16.mxu0 %v961
  %2063 = vmatpush1.bf16.msra.mxu0 %v960
  %2064 = vmatprep.subr.bf16.mxu0 %v963
  %2065 = vmatpush1.bf16.msra.mxu0 %v962
  %2066 = vmatprep.subr.bf16.mxu0 %v965
  %2067 = vmatpush1.bf16.msra.mxu0 %v964
  %2068 = vmatprep.subr.bf16.mxu0 %v967
  %2069 = vmatpush1.bf16.msra.mxu0 %v966
  %2070 = vmatprep.subr.bf16.mxu0 %v969
  %2071 = vmatpush1.bf16.msra.mxu0 %v968
  %2072 = vmatprep.subr.bf16.mxu0 %v971
  %2073 = vmatpush1.bf16.msra.mxu0 %v970
  %2074 = vmatprep.subr.bf16.mxu0 %v973
  %2075 = vmatpush1.bf16.msra.mxu0 %v972
  %2076 = vmatprep.subr.bf16.mxu0 %v975
  %2077 = vmatpush1.bf16.msra.mxu0 %v974
  %2078 = vmatprep.subr.bf16.mxu0 %v977
  %2079 = vmatpush1.bf16.msra.mxu0 %v976
  %2080 = vmatprep.subr.bf16.mxu0 %v979
  %2081 = vmatpush1.bf16.msra.mxu0 %v978
  %2082 = vmatprep.mubr.bf16.mxu0 %v1724
  %2083 = vmatmul.mubr.bf16.gmra.mrb[0].mxu0 %v1723
  %v2084 = vpop.f32.mrb[0].mxu0
  %v2085 = vadd.f32 %v2004, %v2084
  %v2086 = vpop.f32.mrb[0].mxu0
  %v2087 = vadd.f32 %v2006, %v2086
  %v2088 = vpop.f32.mrb[0].mxu0
  %v2089 = vadd.f32 %v2008, %v2088
  %v2090 = vpop.f32.mrb[0].mxu0
  %v2091 = vadd.f32 %v2010, %v2090
  %2092 = vmatprep.mubr.bf16.mxu0 %v1733
  %2093 = vmatmul.mubr.bf16.gmra.mrb[0].mxu0 %v1732
  %v2094 = vpop.f32.mrb[0].mxu0
  %v2095 = vadd.f32 %v2014, %v2094
  %v2096 = vpop.f32.mrb[0].mxu0
  %v2097 = vadd.f32 %v2016, %v2096
  %v2098 = vpop.f32.mrb[0].mxu0
  %v2099 = vadd.f32 %v2018, %v2098
  %v2100 = vpop.f32.mrb[0].mxu0
  %v2101 = vadd.f32 %v2020, %v2100
  %2102 = vmatprep.mubr.bf16.mxu0 %v1742
  %2103 = vmatmul.mubr.bf16.gmra.mrb[0].mxu0 %v1741
  %v2104 = vpop.f32.mrb[0].mxu0
  %v2105 = vadd.f32 %v2024, %v2104
  %v2106 = vpop.f32.mrb[0].mxu0
  %v2107 = vadd.f32 %v2026, %v2106
  %v2108 = vpop.f32.mrb[0].mxu0
  %v2109 = vadd.f32 %v2028, %v2108
  %v2110 = vpop.f32.mrb[0].mxu0
  %v2111 = vadd.f32 %v2030, %v2110
  %2112 = vmatprep.mubr.bf16.mxu0 %v1751
  %2113 = vmatmul.mubr.bf16.gmra.mrb[0].mxu0 %v1750
  %v2114 = vpop.f32.mrb[0].mxu0
  %v2115 = vadd.f32 %v2034, %v2114
  %v2116 = vpop.f32.mrb[0].mxu0
  %v2117 = vadd.f32 %v2036, %v2116
  %v2118 = vpop.f32.mrb[0].mxu0
  %v2119 = vadd.f32 %v2038, %v2118
  %v2120 = vpop.f32.mrb[0].mxu0
  %v2121 = vadd.f32 %v2040, %v2120
  %2122 = vmatprep.mubr.bf16.mxu0 %v1760
  %2123 = vmatmul.mubr.bf16.gmra.mrb[0].mxu0 %v1759
  %v2124 = vpop.f32.mrb[0].mxu0
  %v2125 = vadd.f32 %v2044, %v2124
  %v2126 = vpop.f32.mrb[0].mxu0
  %v2127 = vadd.f32 %v2046, %v2126
  %v2128 = vpop.f32.mrb[0].mxu0
  %v2129 = vpop.f32.mrb[0].mxu0
  %2130 = vdwg.mxu0
  %2131 = vmatprep.subr.bf16.mxu0 %v981
  %2132 = vmatpush1.bf16.msra.mxu0 %v980
  %2133 = vmatprep.subr.bf16.mxu0 %v983
  %2134 = vmatpush1.bf16.msra.mxu0 %v982
  %2135 = vmatprep.subr.bf16.mxu0 %v985
  %2136 = vmatpush1.bf16.msra.mxu0 %v984
  %2137 = vmatprep.subr.bf16.mxu0 %v987
  %2138 = vmatpush1.bf16.msra.mxu0 %v986
  %2139 = vmatprep.subr.bf16.mxu0 %v989
  %2140 = vmatpush1.bf16.msra.mxu0 %v988
  %2141 = vmatprep.subr.bf16.mxu0 %v991
  %2142 = vmatpush1.bf16.msra.mxu0 %v990
  %2143 = vmatprep.subr.bf16.mxu0 %v993
  %2144 = vmatpush1.bf16.msra.mxu0 %v992
  %2145 = vmatprep.subr.bf16.mxu0 %v995
  %2146 = vmatpush1.bf16.msra.mxu0 %v994
  %2147 = vmatprep.subr.bf16.mxu0 0
  %2148 = vmatpush1.bf16.msra.mxu0 0
  %2149 = vmatprep.subr.bf16.mxu0 0
  %2150 = vmatpush1.bf16.msra.mxu0 0
  %2151 = vmatprep.subr.bf16.mxu0 0
  %2152 = vmatpush1.bf16.msra.mxu0 0
  %2153 = vmatprep.subr.bf16.mxu0 0
  %2154 = vmatpush1.bf16.msra.mxu0 0
  %2155 = vmatprep.subr.bf16.mxu0 0
  %2156 = vmatpush1.bf16.msra.mxu0 0
  %2157 = vmatprep.subr.bf16.mxu0 0
  %2158 = vmatpush1.bf16.msra.mxu0 0
  %2159 = vmatprep.subr.bf16.mxu0 0
  %2160 = vmatpush1.bf16.msra.mxu0 0
  %2161 = vmatprep.subr.bf16.mxu0 0
  %2162 = vmatpush1.bf16.msra.mxu0 0
  %2163 = vmatprep.mubr.bf16.mxu0 0
  %2164 = vmatmul.mubr.bf16.gmra.mrb[0].mxu0 %v1725
  %v2165 = vpop.f32.mrb[0].mxu0
  %v2166 = vadd.f32 %v2085, %v2165
  %v2167 = vpop.f32.mrb[0].mxu0
  %v2168 = vadd.f32 %v2087, %v2167
  %v2169 = vpop.f32.mrb[0].mxu0
  %v2170 = vadd.f32 %v2089, %v2169
  %v2171 = vpop.f32.mrb[0].mxu0
  %v2172 = vadd.f32 %v2091, %v2171
  %2173 = vmatprep.mubr.bf16.mxu0 0
  %2174 = vmatmul.mubr.bf16.gmra.mrb[0].mxu0 %v1734
  %v2175 = vpop.f32.mrb[0].mxu0
  %v2176 = vadd.f32 %v2095, %v2175
  %v2177 = vpop.f32.mrb[0].mxu0
  %v2178 = vadd.f32 %v2097, %v2177
  %v2179 = vpop.f32.mrb[0].mxu0
  %v2180 = vadd.f32 %v2099, %v2179
  %v2181 = vpop.f32.mrb[0].mxu0
  %v2182 = vadd.f32 %v2101, %v2181
  %2183 = vmatprep.mubr.bf16.mxu0 0
  %2184 = vmatmul.mubr.bf16.gmra.mrb[0].mxu0 %v1743
  %v2185 = vpop.f32.mrb[0].mxu0
  %v2186 = vadd.f32 %v2105, %v2185
  %v2187 = vpop.f32.mrb[0].mxu0
  %v2188 = vadd.f32 %v2107, %v2187
  %v2189 = vpop.f32.mrb[0].mxu0
  %v2190 = vadd.f32 %v2109, %v2189
  %v2191 = vpop.f32.mrb[0].mxu0
  %v2192 = vadd.f32 %v2111, %v2191
  %2193 = vmatprep.mubr.bf16.mxu0 0
  %2194 = vmatmul.mubr.bf16.gmra.mrb[0].mxu0 %v1752
  %v2195 = vpop.f32.mrb[0].mxu0
  %v2196 = vadd.f32 %v2115, %v2195
  %v2197 = vpop.f32.mrb[0].mxu0
  %v2198 = vadd.f32 %v2117, %v2197
  %v2199 = vpop.f32.mrb[0].mxu0
  %v2200 = vadd.f32 %v2119, %v2199
  %v2201 = vpop.f32.mrb[0].mxu0
  %v2202 = vadd.f32 %v2121, %v2201
  %2203 = vmatprep.mubr.bf16.mxu0 0
  %2204 = vmatmul.mubr.bf16.gmra.mrb[0].mxu0 %v1761
  %v2205 = vpop.f32.mrb[0].mxu0
  %v2206 = vadd.f32 %v2125, %v2205
  %v2207 = vpop.f32.mrb[0].mxu0
  %v2208 = vadd.f32 %v2127, %v2207
  %v2209 = vpop.f32.mrb[0].mxu0
  %v2210 = vpop.f32.mrb[0].mxu0
  %2211 = vdwg.mxu0
  %v2212 = vmax.f32 %v1499, %v2166
  %v2213 = vmax.f32 %v1501, %v2168
  %v2214 = vmax.f32 %v1503, %v2170
  %v2215 = vmax.f32 %v1505, %v2172
  %v2216 = vmax.f32 %v1509, %v2176
  %v2217 = vmax.f32 %v1511, %v2178
  %v2218 = vmax.f32 %v1513, %v2180
  %v2219 = vmax.f32 %v1515, %v2182
  %v2220 = vmax.f32 %v1519, %v2186
  %v2221 = vmax.f32 %v1521, %v2188
  %v2222 = vmax.f32 %v1523, %v2190
  %v2223 = vmax.f32 %v1525, %v2192
  %v2224 = vmax.f32 %v1529, %v2196
  %v2225 = vmax.f32 %v1531, %v2198
  %v2226 = vmax.f32 %v1533, %v2200
  %v2227 = vmax.f32 %v1535, %v2202
  %v2228 = vmax.f32 %v1539, %v2206
  %v2229 = vmax.f32 %v1541, %v2208
  %s2230 = scalar_lea.vmem %s0, 648
  %v2231 = vld [vmem:[%s2230] sm:$0xff]
  %v2232 = vld [vmem:[%s2230 + $0x8] sm:$0xff]
  %v2233 = vld [vmem:[%s2230 + $0x10] sm:$0xff]
  %v2234 = vld [vmem:[%s2230 + $0x18] sm:$0xff]
  %v2235 = vld [vmem:[%s2230 + $0x20] sm:$0xf]
  %v2236 = vld [vmem:[%s2230 + $0x24] sm:$0xff]
  %v2237 = vld [vmem:[%s2230 + $0x2c] sm:$0xff]
  %v2238 = vld [vmem:[%s2230 + $0x34] sm:$0xff]
  %v2239 = vld [vmem:[%s2230 + $0x3c] sm:$0xff]
  %v2240 = vld [vmem:[%s2230 + $0x44] sm:$0xf]
  %v2241 = vld [vmem:[%s2230 + $0x48] sm:$0xff]
  %v2242 = vld [vmem:[%s2230 + $0x50] sm:$0xff]
  %v2243 = vld [vmem:[%s2230 + $0x58] sm:$0xff]
  %v2244 = vld [vmem:[%s2230 + $0x60] sm:$0xff]
  %v2245 = vld [vmem:[%s2230 + $0x68] sm:$0xf]
  %v2246 = vld [vmem:[%s2230 + $0x6c] sm:$0xff]
  %v2247 = vld [vmem:[%s2230 + $0x74] sm:$0xff]
  %v2248 = vld [vmem:[%s2230 + $0x7c] sm:$0xff]
  %v2249 = vld [vmem:[%s2230 + $0x84] sm:$0xff]
  %v2250 = vld [vmem:[%s2230 + $0x8c] sm:$0xf]
  %v2251 = vld [vmem:[%s2230 + $0x90] sm:$0xff]
  %v2252 = vld [vmem:[%s2230 + $0x98] sm:$0xff]
  %v2253 = vld [vmem:[%s2230 + $0xa0] sm:$0xff]
  %v2254 = vld [vmem:[%s2230 + $0xa8] sm:$0xff]
  %v2255 = vld [vmem:[%s2230 + $0xb0] sm:$0xf]
  %v2256 = vld [vmem:[%s2230 + $0xb4] sm:$0xff]
  %v2257 = vld [vmem:[%s2230 + $0xbc] sm:$0xff]
  %v2258 = vld [vmem:[%s2230 + $0xc4] sm:$0xff]
  %v2259 = vld [vmem:[%s2230 + $0xcc] sm:$0xff]
  %v2260 = vld [vmem:[%s2230 + $0xd4] sm:$0xf]
  %v2261 = vld [vmem:[%s2230 + $0xd8] sm:$0xff]
  %v2262 = vld [vmem:[%s2230 + $0xe0] sm:$0xff]
  %v2263 = vld [vmem:[%s2230 + $0xe8] sm:$0xff]
  %v2264 = vld [vmem:[%s2230 + $0xf0] sm:$0xff]
  %v2265 = vld [vmem:[%s2230 + $0xf8] sm:$0xf]
  %v2266 = vld [vmem:[%s2230 + $0xfc] sm:$0xff]
  %v2267 = vld [vmem:[%s2230 + $0x104] sm:$0xff]
  %v2268 = vld [vmem:[%s2230 + $0x10c] sm:$0xff]
  %v2269 = vld [vmem:[%s2230 + $0x114] sm:$0xff]
  %v2270 = vld [vmem:[%s2230 + $0x11c] sm:$0xf]
  %v2271 = vld [vmem:[%s2230 + $0x120] sm:$0xff]
  %v2272 = vld [vmem:[%s2230 + $0x128] sm:$0xff]
  %v2273 = vld [vmem:[%s2230 + $0x130] sm:$0xff]
  %v2274 = vld [vmem:[%s2230 + $0x138] sm:$0xff]
  %v2275 = vld [vmem:[%s2230 + $0x140] sm:$0xf]
  %v2321 = vunpack.c.l.b16 %v2231
  %v2322 = vunpack.c.h.b16 %v2231
  %v2323 = vunpack.c.l.b16 %v2232
  %v2324 = vunpack.c.h.b16 %v2232
  %v2325 = vunpack.c.l.b16 %v2233
  %v2326 = vunpack.c.h.b16 %v2233
  %v2327 = vunpack.c.l.b16 %v2234
  %v2328 = vunpack.c.h.b16 %v2234
  %v2329 = vunpack.c.l.b16 %v2235
  %v2330 = vunpack.c.l.b16 %v2236
  %v2331 = vunpack.c.h.b16 %v2236
  %v2332 = vunpack.c.l.b16 %v2237
  %v2333 = vunpack.c.h.b16 %v2237
  %v2334 = vunpack.c.l.b16 %v2238
  %v2335 = vunpack.c.h.b16 %v2238
  %v2336 = vunpack.c.l.b16 %v2239
  %v2337 = vunpack.c.h.b16 %v2239
  %v2338 = vunpack.c.l.b16 %v2240
  %v2339 = vunpack.c.l.b16 %v2241
  %v2340 = vunpack.c.h.b16 %v2241
  %v2341 = vunpack.c.l.b16 %v2242
  %v2342 = vunpack.c.h.b16 %v2242
  %v2343 = vunpack.c.l.b16 %v2243
  %v2344 = vunpack.c.h.b16 %v2243
  %v2345 = vunpack.c.l.b16 %v2244
  %v2346 = vunpack.c.h.b16 %v2244
  %v2347 = vunpack.c.l.b16 %v2245
  %v2348 = vunpack.c.l.b16 %v2246
  %v2349 = vunpack.c.h.b16 %v2246
  %v2350 = vunpack.c.l.b16 %v2247
  %v2351 = vunpack.c.h.b16 %v2247
  %v2352 = vunpack.c.l.b16 %v2248
  %v2353 = vunpack.c.h.b16 %v2248
  %v2354 = vunpack.c.l.b16 %v2249
  %v2355 = vunpack.c.h.b16 %v2249
  %v2356 = vunpack.c.l.b16 %v2250
  %v2357 = vunpack.c.l.b16 %v2251
  %v2358 = vunpack.c.h.b16 %v2251
  %v2359 = vunpack.c.l.b16 %v2252
  %v2360 = vunpack.c.h.b16 %v2252
  %v2361 = vunpack.c.l.b16 %v2253
  %v2362 = vunpack.c.h.b16 %v2253
  %v2363 = vunpack.c.l.b16 %v2254
  %v2364 = vunpack.c.h.b16 %v2254
  %v2365 = vunpack.c.l.b16 %v2255
  %v2366 = vunpack.c.l.b16 %v2256
  %v2367 = vunpack.c.h.b16 %v2256
  %v2368 = vunpack.c.l.b16 %v2257
  %v2369 = vunpack.c.h.b16 %v2257
  %v2370 = vunpack.c.l.b16 %v2258
  %v2371 = vunpack.c.h.b16 %v2258
  %v2372 = vunpack.c.l.b16 %v2259
  %v2373 = vunpack.c.h.b16 %v2259
  %v2374 = vunpack.c.l.b16 %v2260
  %v2375 = vunpack.c.l.b16 %v2261
  %v2376 = vunpack.c.h.b16 %v2261
  %v2377 = vunpack.c.l.b16 %v2262
  %v2378 = vunpack.c.h.b16 %v2262
  %v2379 = vunpack.c.l.b16 %v2263
  %v2380 = vunpack.c.h.b16 %v2263
  %v2381 = vunpack.c.l.b16 %v2264
  %v2382 = vunpack.c.h.b16 %v2264
  %v2383 = vunpack.c.l.b16 %v2265
  %v2384 = vunpack.c.l.b16 %v2266
  %v2385 = vunpack.c.h.b16 %v2266
  %v2386 = vunpack.c.l.b16 %v2267
  %v2387 = vunpack.c.h.b16 %v2267
  %v2388 = vunpack.c.l.b16 %v2268
  %v2389 = vunpack.c.h.b16 %v2268
  %v2390 = vunpack.c.l.b16 %v2269
  %v2391 = vunpack.c.h.b16 %v2269
  %v2392 = vunpack.c.l.b16 %v2270
  %v2393 = vunpack.c.l.b16 %v2271
  %v2394 = vunpack.c.h.b16 %v2271
  %v2395 = vunpack.c.l.b16 %v2272
  %v2396 = vunpack.c.h.b16 %v2272
  %v2397 = vunpack.c.l.b16 %v2273
  %v2398 = vunpack.c.h.b16 %v2273
  %v2399 = vunpack.c.l.b16 %v2274
  %v2400 = vunpack.c.h.b16 %v2274
  %v2401 = vunpack.c.l.b16 %v2275
  %v2402 = vpack.c.b16 %v2330, %v2321
  %v2403 = vpack.c.b16 %v2331, %v2322
  %v2404 = vpack.c.b16 %v2332, %v2323
  %v2405 = vpack.c.b16 %v2333, %v2324
  %v2406 = vpack.c.b16 %v2334, %v2325
  %v2407 = vpack.c.b16 %v2335, %v2326
  %v2408 = vpack.c.b16 %v2336, %v2327
  %v2409 = vpack.c.b16 %v2337, %v2328
  %v2410 = vpack.c.b16 %v2338, %v2329
  %v2411 = vpack.c.b16 %v2348, %v2339
  %v2412 = vpack.c.b16 %v2349, %v2340
  %v2413 = vpack.c.b16 %v2350, %v2341
  %v2414 = vpack.c.b16 %v2351, %v2342
  %v2415 = vpack.c.b16 %v2352, %v2343
  %v2416 = vpack.c.b16 %v2353, %v2344
  %v2417 = vpack.c.b16 %v2354, %v2345
  %v2418 = vpack.c.b16 %v2355, %v2346
  %v2419 = vpack.c.b16 %v2356, %v2347
  %v2420 = vpack.c.b16 %v2366, %v2357
  %v2421 = vpack.c.b16 %v2367, %v2358
  %v2422 = vpack.c.b16 %v2368, %v2359
  %v2423 = vpack.c.b16 %v2369, %v2360
  %v2424 = vpack.c.b16 %v2370, %v2361
  %v2425 = vpack.c.b16 %v2371, %v2362
  %v2426 = vpack.c.b16 %v2372, %v2363
  %v2427 = vpack.c.b16 %v2373, %v2364
  %v2428 = vpack.c.b16 %v2374, %v2365
  %v2429 = vpack.c.b16 %v2384, %v2375
  %v2430 = vpack.c.b16 %v2385, %v2376
  %v2431 = vpack.c.b16 %v2386, %v2377
  %v2432 = vpack.c.b16 %v2387, %v2378
  %v2433 = vpack.c.b16 %v2388, %v2379
  %v2434 = vpack.c.b16 %v2389, %v2380
  %v2435 = vpack.c.b16 %v2390, %v2381
  %v2436 = vpack.c.b16 %v2391, %v2382
  %v2437 = vpack.c.b16 %v2392, %v2383
  %v2438 = vpack.c.b16 %v2393, %v2393
  %v2439 = vpack.c.b16 %v2394, %v2394
  %v2440 = vpack.c.b16 %v2395, %v2395
  %v2441 = vpack.c.b16 %v2396, %v2396
  %v2442 = vpack.c.b16 %v2397, %v2397
  %v2443 = vpack.c.b16 %v2398, %v2398
  %v2444 = vpack.c.b16 %v2399, %v2399
  %v2445 = vpack.c.b16 %v2400, %v2400
  %v2446 = vpack.c.b16 %v2401, %v2401
  %2492 = vmatprep.subr.bf16.mxu0 %v853
  %2493 = vmatpush1.bf16.msra.mxu0 %v852
  %2494 = vmatprep.subr.bf16.mxu0 %v855
  %2495 = vmatpush1.bf16.msra.mxu0 %v854
  %2496 = vmatprep.subr.bf16.mxu0 %v857
  %2497 = vmatpush1.bf16.msra.mxu0 %v856
  %2498 = vmatprep.subr.bf16.mxu0 %v859
  %2499 = vmatpush1.bf16.msra.mxu0 %v858
  %2500 = vmatprep.subr.bf16.mxu0 %v861
  %2501 = vmatpush1.bf16.msra.mxu0 %v860
  %2502 = vmatprep.subr.bf16.mxu0 %v863
  %2503 = vmatpush1.bf16.msra.mxu0 %v862
  %2504 = vmatprep.subr.bf16.mxu0 %v865
  %2505 = vmatpush1.bf16.msra.mxu0 %v864
  %2506 = vmatprep.subr.bf16.mxu0 %v867
  %2507 = vmatpush1.bf16.msra.mxu0 %v866
  %2508 = vmatprep.subr.bf16.mxu0 %v869
  %2509 = vmatpush1.bf16.msra.mxu0 %v868
  %2510 = vmatprep.subr.bf16.mxu0 %v871
  %2511 = vmatpush1.bf16.msra.mxu0 %v870
  %2512 = vmatprep.subr.bf16.mxu0 %v873
  %2513 = vmatpush1.bf16.msra.mxu0 %v872
  %2514 = vmatprep.subr.bf16.mxu0 %v875
  %2515 = vmatpush1.bf16.msra.mxu0 %v874
  %2516 = vmatprep.subr.bf16.mxu0 %v877
  %2517 = vmatpush1.bf16.msra.mxu0 %v876
  %2518 = vmatprep.subr.bf16.mxu0 %v879
  %2519 = vmatpush1.bf16.msra.mxu0 %v878
  %2520 = vmatprep.subr.bf16.mxu0 %v881
  %2521 = vmatpush1.bf16.msra.mxu0 %v880
  %2522 = vmatprep.subr.bf16.mxu0 %v883
  %2523 = vmatpush1.bf16.msra.mxu0 %v882
  %2524 = vmatprep.mubr.bf16.mxu0 %v2403
  %2525 = vmatmul.mubr.bf16.gmra.mrb[0].mxu0 %v2402
  %v2526 = vpop.f32.mrb[0].mxu0
  %v2527 = vadd.f32 0.0, %v2526
  %v2528 = vpop.f32.mrb[0].mxu0
  %v2529 = vadd.f32 0.0, %v2528
  %v2530 = vpop.f32.mrb[0].mxu0
  %v2531 = vadd.f32 0.0, %v2530
  %v2532 = vpop.f32.mrb[0].mxu0
  %v2533 = vadd.f32 0.0, %v2532
  %2534 = vmatprep.mubr.bf16.mxu0 %v2412
  %2535 = vmatmul.mubr.bf16.gmra.mrb[0].mxu0 %v2411
  %v2536 = vpop.f32.mrb[0].mxu0
  %v2537 = vadd.f32 0.0, %v2536
  %v2538 = vpop.f32.mrb[0].mxu0
  %v2539 = vadd.f32 0.0, %v2538
  %v2540 = vpop.f32.mrb[0].mxu0
  %v2541 = vadd.f32 0.0, %v2540
  %v2542 = vpop.f32.mrb[0].mxu0
  %v2543 = vadd.f32 0.0, %v2542
  %2544 = vmatprep.mubr.bf16.mxu0 %v2421
  %2545 = vmatmul.mubr.bf16.gmra.mrb[0].mxu0 %v2420
  %v2546 = vpop.f32.mrb[0].mxu0
  %v2547 = vadd.f32 0.0, %v2546
  %v2548 = vpop.f32.mrb[0].mxu0
  %v2549 = vadd.f32 0.0, %v2548
  %v2550 = vpop.f32.mrb[0].mxu0
  %v2551 = vadd.f32 0.0, %v2550
  %v2552 = vpop.f32.mrb[0].mxu0
  %v2553 = vadd.f32 0.0, %v2552
  %2554 = vmatprep.mubr.bf16.mxu0 %v2430
  %2555 = vmatmul.mubr.bf16.gmra.mrb[0].mxu0 %v2429
  %v2556 = vpop.f32.mrb[0].mxu0
  %v2557 = vadd.f32 0.0, %v2556
  %v2558 = vpop.f32.mrb[0].mxu0
  %v2559 = vadd.f32 0.0, %v2558
  %v2560 = vpop.f32.mrb[0].mxu0
  %v2561 = vadd.f32 0.0, %v2560
  %v2562 = vpop.f32.mrb[0].mxu0
  %v2563 = vadd.f32 0.0, %v2562
  %2564 = vmatprep.mubr.bf16.mxu0 %v2439
  %2565 = vmatmul.mubr.bf16.gmra.mrb[0].mxu0 %v2438
  %v2566 = vpop.f32.mrb[0].mxu0
  %v2567 = vadd.f32 0.0, %v2566
  %v2568 = vpop.f32.mrb[0].mxu0
  %v2569 = vadd.f32 0.0, %v2568
  %v2570 = vpop.f32.mrb[0].mxu0
  %v2571 = vpop.f32.mrb[0].mxu0
  %2572 = vdwg.mxu0
  %2573 = vmatprep.subr.bf16.mxu0 %v885
  %2574 = vmatpush1.bf16.msra.mxu0 %v884
  %2575 = vmatprep.subr.bf16.mxu0 %v887
  %2576 = vmatpush1.bf16.msra.mxu0 %v886
  %2577 = vmatprep.subr.bf16.mxu0 %v889
  %2578 = vmatpush1.bf16.msra.mxu0 %v888
  %2579 = vmatprep.subr.bf16.mxu0 %v891
  %2580 = vmatpush1.bf16.msra.mxu0 %v890
  %2581 = vmatprep.subr.bf16.mxu0 %v893
  %2582 = vmatpush1.bf16.msra.mxu0 %v892
  %2583 = vmatprep.subr.bf16.mxu0 %v895
  %2584 = vmatpush1.bf16.msra.mxu0 %v894
  %2585 = vmatprep.subr.bf16.mxu0 %v897
  %2586 = vmatpush1.bf16.msra.mxu0 %v896
  %2587 = vmatprep.subr.bf16.mxu0 %v899
  %2588 = vmatpush1.bf16.msra.mxu0 %v898
  %2589 = vmatprep.subr.bf16.mxu0 %v901
  %2590 = vmatpush1.bf16.msra.mxu0 %v900
  %2591 = vmatprep.subr.bf16.mxu0 %v903
  %2592 = vmatpush1.bf16.msra.mxu0 %v902
  %2593 = vmatprep.subr.bf16.mxu0 %v905
  %2594 = vmatpush1.bf16.msra.mxu0 %v904
  %2595 = vmatprep.subr.bf16.mxu0 %v907
  %2596 = vmatpush1.bf16.msra.mxu0 %v906
  %2597 = vmatprep.subr.bf16.mxu0 %v909
  %2598 = vmatpush1.bf16.msra.mxu0 %v908
  %2599 = vmatprep.subr.bf16.mxu0 %v911
  %2600 = vmatpush1.bf16.msra.mxu0 %v910
  %2601 = vmatprep.subr.bf16.mxu0 %v913
  %2602 = vmatpush1.bf16.msra.mxu0 %v912
  %2603 = vmatprep.subr.bf16.mxu0 %v915
  %2604 = vmatpush1.bf16.msra.mxu0 %v914
  %2605 = vmatprep.mubr.bf16.mxu0 %v2405
  %2606 = vmatmul.mubr.bf16.gmra.mrb[0].mxu0 %v2404
  %v2607 = vpop.f32.mrb[0].mxu0
  %v2608 = vadd.f32 %v2527, %v2607
  %v2609 = vpop.f32.mrb[0].mxu0
  %v2610 = vadd.f32 %v2529, %v2609
  %v2611 = vpop.f32.mrb[0].mxu0
  %v2612 = vadd.f32 %v2531, %v2611
  %v2613 = vpop.f32.mrb[0].mxu0
  %v2614 = vadd.f32 %v2533, %v2613
  %2615 = vmatprep.mubr.bf16.mxu0 %v2414
  %2616 = vmatmul.mubr.bf16.gmra.mrb[0].mxu0 %v2413
  %v2617 = vpop.f32.mrb[0].mxu0
  %v2618 = vadd.f32 %v2537, %v2617
  %v2619 = vpop.f32.mrb[0].mxu0
  %v2620 = vadd.f32 %v2539, %v2619
  %v2621 = vpop.f32.mrb[0].mxu0
  %v2622 = vadd.f32 %v2541, %v2621
  %v2623 = vpop.f32.mrb[0].mxu0
  %v2624 = vadd.f32 %v2543, %v2623
  %2625 = vmatprep.mubr.bf16.mxu0 %v2423
  %2626 = vmatmul.mubr.bf16.gmra.mrb[0].mxu0 %v2422
  %v2627 = vpop.f32.mrb[0].mxu0
  %v2628 = vadd.f32 %v2547, %v2627
  %v2629 = vpop.f32.mrb[0].mxu0
  %v2630 = vadd.f32 %v2549, %v2629
  %v2631 = vpop.f32.mrb[0].mxu0
  %v2632 = vadd.f32 %v2551, %v2631
  %v2633 = vpop.f32.mrb[0].mxu0
  %v2634 = vadd.f32 %v2553, %v2633
  %2635 = vmatprep.mubr.bf16.mxu0 %v2432
  %2636 = vmatmul.mubr.bf16.gmra.mrb[0].mxu0 %v2431
  %v2637 = vpop.f32.mrb[0].mxu0
  %v2638 = vadd.f32 %v2557, %v2637
  %v2639 = vpop.f32.mrb[0].mxu0
  %v2640 = vadd.f32 %v2559, %v2639
  %v2641 = vpop.f32.mrb[0].mxu0
  %v2642 = vadd.f32 %v2561, %v2641
  %v2643 = vpop.f32.mrb[0].mxu0
  %v2644 = vadd.f32 %v2563, %v2643
  %2645 = vmatprep.mubr.bf16.mxu0 %v2441
  %2646 = vmatmul.mubr.bf16.gmra.mrb[0].mxu0 %v2440
  %v2647 = vpop.f32.mrb[0].mxu0
  %v2648 = vadd.f32 %v2567, %v2647
  %v2649 = vpop.f32.mrb[0].mxu0
  %v2650 = vadd.f32 %v2569, %v2649
  %v2651 = vpop.f32.mrb[0].mxu0
  %v2652 = vpop.f32.mrb[0].mxu0
  %2653 = vdwg.mxu0
  %2654 = vmatprep.subr.bf16.mxu0 %v917
  %2655 = vmatpush1.bf16.msra.mxu0 %v916
  %2656 = vmatprep.subr.bf16.mxu0 %v919
  %2657 = vmatpush1.bf16.msra.mxu0 %v918
  %2658 = vmatprep.subr.bf16.mxu0 %v921
  %2659 = vmatpush1.bf16.msra.mxu0 %v920
  %2660 = vmatprep.subr.bf16.mxu0 %v923
  %2661 = vmatpush1.bf16.msra.mxu0 %v922
  %2662 = vmatprep.subr.bf16.mxu0 %v925
  %2663 = vmatpush1.bf16.msra.mxu0 %v924
  %2664 = vmatprep.subr.bf16.mxu0 %v927
  %2665 = vmatpush1.bf16.msra.mxu0 %v926
  %2666 = vmatprep.subr.bf16.mxu0 %v929
  %2667 = vmatpush1.bf16.msra.mxu0 %v928
  %2668 = vmatprep.subr.bf16.mxu0 %v931
  %2669 = vmatpush1.bf16.msra.mxu0 %v930
  %2670 = vmatprep.subr.bf16.mxu0 %v933
  %2671 = vmatpush1.bf16.msra.mxu0 %v932
  %2672 = vmatprep.subr.bf16.mxu0 %v935
  %2673 = vmatpush1.bf16.msra.mxu0 %v934
  %2674 = vmatprep.subr.bf16.mxu0 %v937
  %2675 = vmatpush1.bf16.msra.mxu0 %v936
  %2676 = vmatprep.subr.bf16.mxu0 %v939
  %2677 = vmatpush1.bf16.msra.mxu0 %v938
  %2678 = vmatprep.subr.bf16.mxu0 %v941
  %2679 = vmatpush1.bf16.msra.mxu0 %v940
  %2680 = vmatprep.subr.bf16.mxu0 %v943
  %2681 = vmatpush1.bf16.msra.mxu0 %v942
  %2682 = vmatprep.subr.bf16.mxu0 %v945
  %2683 = vmatpush1.bf16.msra.mxu0 %v944
  %2684 = vmatprep.subr.bf16.mxu0 %v947
  %2685 = vmatpush1.bf16.msra.mxu0 %v946
  %2686 = vmatprep.mubr.bf16.mxu0 %v2407
  %2687 = vmatmul.mubr.bf16.gmra.mrb[0].mxu0 %v2406
  %v2688 = vpop.f32.mrb[0].mxu0
  %v2689 = vadd.f32 %v2608, %v2688
  %v2690 = vpop.f32.mrb[0].mxu0
  %v2691 = vadd.f32 %v2610, %v2690
  %v2692 = vpop.f32.mrb[0].mxu0
  %v2693 = vadd.f32 %v2612, %v2692
  %v2694 = vpop.f32.mrb[0].mxu0
  %v2695 = vadd.f32 %v2614, %v2694
  %2696 = vmatprep.mubr.bf16.mxu0 %v2416
  %2697 = vmatmul.mubr.bf16.gmra.mrb[0].mxu0 %v2415
  %v2698 = vpop.f32.mrb[0].mxu0
  %v2699 = vadd.f32 %v2618, %v2698
  %v2700 = vpop.f32.mrb[0].mxu0
  %v2701 = vadd.f32 %v2620, %v2700
  %v2702 = vpop.f32.mrb[0].mxu0
  %v2703 = vadd.f32 %v2622, %v2702
  %v2704 = vpop.f32.mrb[0].mxu0
  %v2705 = vadd.f32 %v2624, %v2704
  %2706 = vmatprep.mubr.bf16.mxu0 %v2425
  %2707 = vmatmul.mubr.bf16.gmra.mrb[0].mxu0 %v2424
  %v2708 = vpop.f32.mrb[0].mxu0
  %v2709 = vadd.f32 %v2628, %v2708
  %v2710 = vpop.f32.mrb[0].mxu0
  %v2711 = vadd.f32 %v2630, %v2710
  %v2712 = vpop.f32.mrb[0].mxu0
  %v2713 = vadd.f32 %v2632, %v2712
  %v2714 = vpop.f32.mrb[0].mxu0
  %v2715 = vadd.f32 %v2634, %v2714
  %2716 = vmatprep.mubr.bf16.mxu0 %v2434
  %2717 = vmatmul.mubr.bf16.gmra.mrb[0].mxu0 %v2433
  %v2718 = vpop.f32.mrb[0].mxu0
  %v2719 = vadd.f32 %v2638, %v2718
  %v2720 = vpop.f32.mrb[0].mxu0
  %v2721 = vadd.f32 %v2640, %v2720
  %v2722 = vpop.f32.mrb[0].mxu0
  %v2723 = vadd.f32 %v2642, %v2722
  %v2724 = vpop.f32.mrb[0].mxu0
  %v2725 = vadd.f32 %v2644, %v2724
  %2726 = vmatprep.mubr.bf16.mxu0 %v2443
  %2727 = vmatmul.mubr.bf16.gmra.mrb[0].mxu0 %v2442
  %v2728 = vpop.f32.mrb[0].mxu0
  %v2729 = vadd.f32 %v2648, %v2728
  %v2730 = vpop.f32.mrb[0].mxu0
  %v2731 = vadd.f32 %v2650, %v2730
  %v2732 = vpop.f32.mrb[0].mxu0
  %v2733 = vpop.f32.mrb[0].mxu0
  %2734 = vdwg.mxu0
  %2735 = vmatprep.subr.bf16.mxu0 %v949
  %2736 = vmatpush1.bf16.msra.mxu0 %v948
  %2737 = vmatprep.subr.bf16.mxu0 %v951
  %2738 = vmatpush1.bf16.msra.mxu0 %v950
  %2739 = vmatprep.subr.bf16.mxu0 %v953
  %2740 = vmatpush1.bf16.msra.mxu0 %v952
  %2741 = vmatprep.subr.bf16.mxu0 %v955
  %2742 = vmatpush1.bf16.msra.mxu0 %v954
  %2743 = vmatprep.subr.bf16.mxu0 %v957
  %2744 = vmatpush1.bf16.msra.mxu0 %v956
  %2745 = vmatprep.subr.bf16.mxu0 %v959
  %2746 = vmatpush1.bf16.msra.mxu0 %v958
  %2747 = vmatprep.subr.bf16.mxu0 %v961
  %2748 = vmatpush1.bf16.msra.mxu0 %v960
  %2749 = vmatprep.subr.bf16.mxu0 %v963
  %2750 = vmatpush1.bf16.msra.mxu0 %v962
  %2751 = vmatprep.subr.bf16.mxu0 %v965
  %2752 = vmatpush1.bf16.msra.mxu0 %v964
  %2753 = vmatprep.subr.bf16.mxu0 %v967
  %2754 = vmatpush1.bf16.msra.mxu0 %v966
  %2755 = vmatprep.subr.bf16.mxu0 %v969
  %2756 = vmatpush1.bf16.msra.mxu0 %v968
  %2757 = vmatprep.subr.bf16.mxu0 %v971
  %2758 = vmatpush1.bf16.msra.mxu0 %v970
  %2759 = vmatprep.subr.bf16.mxu0 %v973
  %2760 = vmatpush1.bf16.msra.mxu0 %v972
  %2761 = vmatprep.subr.bf16.mxu0 %v975
  %2762 = vmatpush1.bf16.msra.mxu0 %v974
  %2763 = vmatprep.subr.bf16.mxu0 %v977
  %2764 = vmatpush1.bf16.msra.mxu0 %v976
  %2765 = vmatprep.subr.bf16.mxu0 %v979
  %2766 = vmatpush1.bf16.msra.mxu0 %v978
  %2767 = vmatprep.mubr.bf16.mxu0 %v2409
  %2768 = vmatmul.mubr.bf16.gmra.mrb[0].mxu0 %v2408
  %v2769 = vpop.f32.mrb[0].mxu0
  %v2770 = vadd.f32 %v2689, %v2769
  %v2771 = vpop.f32.mrb[0].mxu0
  %v2772 = vadd.f32 %v2691, %v2771
  %v2773 = vpop.f32.mrb[0].mxu0
  %v2774 = vadd.f32 %v2693, %v2773
  %v2775 = vpop.f32.mrb[0].mxu0
  %v2776 = vadd.f32 %v2695, %v2775
  %2777 = vmatprep.mubr.bf16.mxu0 %v2418
  %2778 = vmatmul.mubr.bf16.gmra.mrb[0].mxu0 %v2417
  %v2779 = vpop.f32.mrb[0].mxu0
  %v2780 = vadd.f32 %v2699, %v2779
  %v2781 = vpop.f32.mrb[0].mxu0
  %v2782 = vadd.f32 %v2701, %v2781
  %v2783 = vpop.f32.mrb[0].mxu0
  %v2784 = vadd.f32 %v2703, %v2783
  %v2785 = vpop.f32.mrb[0].mxu0
  %v2786 = vadd.f32 %v2705, %v2785
  %2787 = vmatprep.mubr.bf16.mxu0 %v2427
  %2788 = vmatmul.mubr.bf16.gmra.mrb[0].mxu0 %v2426
  %v2789 = vpop.f32.mrb[0].mxu0
  %v2790 = vadd.f32 %v2709, %v2789
  %v2791 = vpop.f32.mrb[0].mxu0
  %v2792 = vadd.f32 %v2711, %v2791
  %v2793 = vpop.f32.mrb[0].mxu0
  %v2794 = vadd.f32 %v2713, %v2793
  %v2795 = vpop.f32.mrb[0].mxu0
  %v2796 = vadd.f32 %v2715, %v2795
  %2797 = vmatprep.mubr.bf16.mxu0 %v2436
  %2798 = vmatmul.mubr.bf16.gmra.mrb[0].mxu0 %v2435
  %v2799 = vpop.f32.mrb[0].mxu0
  %v2800 = vadd.f32 %v2719, %v2799
  %v2801 = vpop.f32.mrb[0].mxu0
  %v2802 = vadd.f32 %v2721, %v2801
  %v2803 = vpop.f32.mrb[0].mxu0
  %v2804 = vadd.f32 %v2723, %v2803
  %v2805 = vpop.f32.mrb[0].mxu0
  %v2806 = vadd.f32 %v2725, %v2805
  %2807 = vmatprep.mubr.bf16.mxu0 %v2445
  %2808 = vmatmul.mubr.bf16.gmra.mrb[0].mxu0 %v2444
  %v2809 = vpop.f32.mrb[0].mxu0
  %v2810 = vadd.f32 %v2729, %v2809
  %v2811 = vpop.f32.mrb[0].mxu0
  %v2812 = vadd.f32 %v2731, %v2811
  %v2813 = vpop.f32.mrb[0].mxu0
  %v2814 = vpop.f32.mrb[0].mxu0
  %2815 = vdwg.mxu0
  %2816 = vmatprep.subr.bf16.mxu0 %v981
  %2817 = vmatpush1.bf16.msra.mxu0 %v980
  %2818 = vmatprep.subr.bf16.mxu0 %v983
  %2819 = vmatpush1.bf16.msra.mxu0 %v982
  %2820 = vmatprep.subr.bf16.mxu0 %v985
  %2821 = vmatpush1.bf16.msra.mxu0 %v984
  %2822 = vmatprep.subr.bf16.mxu0 %v987
  %2823 = vmatpush1.bf16.msra.mxu0 %v986
  %2824 = vmatprep.subr.bf16.mxu0 %v989
  %2825 = vmatpush1.bf16.msra.mxu0 %v988
  %2826 = vmatprep.subr.bf16.mxu0 %v991
  %2827 = vmatpush1.bf16.msra.mxu0 %v990
  %2828 = vmatprep.subr.bf16.mxu0 %v993
  %2829 = vmatpush1.bf16.msra.mxu0 %v992
  %2830 = vmatprep.subr.bf16.mxu0 %v995
  %2831 = vmatpush1.bf16.msra.mxu0 %v994
  %2832 = vmatprep.subr.bf16.mxu0 0
  %2833 = vmatpush1.bf16.msra.mxu0 0
  %2834 = vmatprep.subr.bf16.mxu0 0
  %2835 = vmatpush1.bf16.msra.mxu0 0
  %2836 = vmatprep.subr.bf16.mxu0 0
  %2837 = vmatpush1.bf16.msra.mxu0 0
  %2838 = vmatprep.subr.bf16.mxu0 0
  %2839 = vmatpush1.bf16.msra.mxu0 0
  %2840 = vmatprep.subr.bf16.mxu0 0
  %2841 = vmatpush1.bf16.msra.mxu0 0
  %2842 = vmatprep.subr.bf16.mxu0 0
  %2843 = vmatpush1.bf16.msra.mxu0 0
  %2844 = vmatprep.subr.bf16.mxu0 0
  %2845 = vmatpush1.bf16.msra.mxu0 0
  %2846 = vmatprep.subr.bf16.mxu0 0
  %2847 = vmatpush1.bf16.msra.mxu0 0
  %2848 = vmatprep.mubr.bf16.mxu0 0
  %2849 = vmatmul.mubr.bf16.gmra.mrb[0].mxu0 %v2410
  %v2850 = vpop.f32.mrb[0].mxu0
  %v2851 = vadd.f32 %v2770, %v2850
  %v2852 = vpop.f32.mrb[0].mxu0
  %v2853 = vadd.f32 %v2772, %v2852
  %v2854 = vpop.f32.mrb[0].mxu0
  %v2855 = vadd.f32 %v2774, %v2854
  %v2856 = vpop.f32.mrb[0].mxu0
  %v2857 = vadd.f32 %v2776, %v2856
  %2858 = vmatprep.mubr.bf16.mxu0 0
  %2859 = vmatmul.mubr.bf16.gmra.mrb[0].mxu0 %v2419
  %v2860 = vpop.f32.mrb[0].mxu0
  %v2861 = vadd.f32 %v2780, %v2860
  %v2862 = vpop.f32.mrb[0].mxu0
  %v2863 = vadd.f32 %v2782, %v2862
  %v2864 = vpop.f32.mrb[0].mxu0
  %v2865 = vadd.f32 %v2784, %v2864
  %v2866 = vpop.f32.mrb[0].mxu0
  %v2867 = vadd.f32 %v2786, %v2866
  %2868 = vmatprep.mubr.bf16.mxu0 0
  %2869 = vmatmul.mubr.bf16.gmra.mrb[0].mxu0 %v2428
  %v2870 = vpop.f32.mrb[0].mxu0
  %v2871 = vadd.f32 %v2790, %v2870
  %v2872 = vpop.f32.mrb[0].mxu0
  %v2873 = vadd.f32 %v2792, %v2872
  %v2874 = vpop.f32.mrb[0].mxu0
  %v2875 = vadd.f32 %v2794, %v2874
  %v2876 = vpop.f32.mrb[0].mxu0
  %v2877 = vadd.f32 %v2796, %v2876
  %2878 = vmatprep.mubr.bf16.mxu0 0
  %2879 = vmatmul.mubr.bf16.gmra.mrb[0].mxu0 %v2437
  %v2880 = vpop.f32.mrb[0].mxu0
  %v2881 = vadd.f32 %v2800, %v2880
  %v2882 = vpop.f32.mrb[0].mxu0
  %v2883 = vadd.f32 %v2802, %v2882
  %v2884 = vpop.f32.mrb[0].mxu0
  %v2885 = vadd.f32 %v2804, %v2884
  %v2886 = vpop.f32.mrb[0].mxu0
  %v2887 = vadd.f32 %v2806, %v2886
  %2888 = vmatprep.mubr.bf16.mxu0 0
  %2889 = vmatmul.mubr.bf16.gmra.mrb[0].mxu0 %v2446
  %v2890 = vpop.f32.mrb[0].mxu0
  %v2891 = vadd.f32 %v2810, %v2890
  %v2892 = vpop.f32.mrb[0].mxu0
  %v2893 = vadd.f32 %v2812, %v2892
  %v2894 = vpop.f32.mrb[0].mxu0
  %v2895 = vpop.f32.mrb[0].mxu0
  %2896 = vdwg.mxu0
  %v2897 = vmax.f32 %v2212, %v2851
  %v2898 = vmax.f32 %v2213, %v2853
  %v2899 = vmax.f32 %v2214, %v2855
  %v2900 = vmax.f32 %v2215, %v2857
  %v2901 = vmax.f32 %v2216, %v2861
  %v2902 = vmax.f32 %v2217, %v2863
  %v2903 = vmax.f32 %v2218, %v2865
  %v2904 = vmax.f32 %v2219, %v2867
  %v2905 = vmax.f32 %v2220, %v2871
  %v2906 = vmax.f32 %v2221, %v2873
  %v2907 = vmax.f32 %v2222, %v2875
  %v2908 = vmax.f32 %v2223, %v2877
  %v2909 = vmax.f32 %v2224, %v2881
  %v2910 = vmax.f32 %v2225, %v2883
  %v2911 = vmax.f32 %v2226, %v2885
  %v2912 = vmax.f32 %v2227, %v2887
  %v2913 = vmax.f32 %v2228, %v2891
  %v2914 = vmax.f32 %v2229, %v2893
  %s2915 = scalar_lea.vmem %s0, 972
  %v2916 = vld [vmem:[%s2915] sm:$0xff]
  %v2917 = vld [vmem:[%s2915 + $0x8] sm:$0xff]
  %v2918 = vld [vmem:[%s2915 + $0x10] sm:$0xff]
  %v2919 = vld [vmem:[%s2915 + $0x18] sm:$0xff]
  %v2920 = vld [vmem:[%s2915 + $0x20] sm:$0xf]
  %v2921 = vld [vmem:[%s2915 + $0x24] sm:$0xff]
  %v2922 = vld [vmem:[%s2915 + $0x2c] sm:$0xff]
  %v2923 = vld [vmem:[%s2915 + $0x34] sm:$0xff]
  %v2924 = vld [vmem:[%s2915 + $0x3c] sm:$0xff]
  %v2925 = vld [vmem:[%s2915 + $0x44] sm:$0xf]
  %v2926 = vld [vmem:[%s2915 + $0x48] sm:$0xff]
  %v2927 = vld [vmem:[%s2915 + $0x50] sm:$0xff]
  %v2928 = vld [vmem:[%s2915 + $0x58] sm:$0xff]
  %v2929 = vld [vmem:[%s2915 + $0x60] sm:$0xff]
  %v2930 = vld [vmem:[%s2915 + $0x68] sm:$0xf]
  %v2931 = vld [vmem:[%s2915 + $0x6c] sm:$0xff]
  %v2932 = vld [vmem:[%s2915 + $0x74] sm:$0xff]
  %v2933 = vld [vmem:[%s2915 + $0x7c] sm:$0xff]
  %v2934 = vld [vmem:[%s2915 + $0x84] sm:$0xff]
  %v2935 = vld [vmem:[%s2915 + $0x8c] sm:$0xf]
  %v2936 = vld [vmem:[%s2915 + $0x90] sm:$0xff]
  %v2937 = vld [vmem:[%s2915 + $0x98] sm:$0xff]
  %v2938 = vld [vmem:[%s2915 + $0xa0] sm:$0xff]
  %v2939 = vld [vmem:[%s2915 + $0xa8] sm:$0xff]
  %v2940 = vld [vmem:[%s2915 + $0xb0] sm:$0xf]
  %v2941 = vld [vmem:[%s2915 + $0xb4] sm:$0xff]
  %v2942 = vld [vmem:[%s2915 + $0xbc] sm:$0xff]
  %v2943 = vld [vmem:[%s2915 + $0xc4] sm:$0xff]
  %v2944 = vld [vmem:[%s2915 + $0xcc] sm:$0xff]
  %v2945 = vld [vmem:[%s2915 + $0xd4] sm:$0xf]
  %v2946 = vld [vmem:[%s2915 + $0xd8] sm:$0xff]
  %v2947 = vld [vmem:[%s2915 + $0xe0] sm:$0xff]
  %v2948 = vld [vmem:[%s2915 + $0xe8] sm:$0xff]
  %v2949 = vld [vmem:[%s2915 + $0xf0] sm:$0xff]
  %v2950 = vld [vmem:[%s2915 + $0xf8] sm:$0xf]
  %v2951 = vld [vmem:[%s2915 + $0xfc] sm:$0xff]
  %v2952 = vld [vmem:[%s2915 + $0x104] sm:$0xff]
  %v2953 = vld [vmem:[%s2915 + $0x10c] sm:$0xff]
  %v2954 = vld [vmem:[%s2915 + $0x114] sm:$0xff]
  %v2955 = vld [vmem:[%s2915 + $0x11c] sm:$0xf]
  %v2956 = vld [vmem:[%s2915 + $0x120] sm:$0xff]
  %v2957 = vld [vmem:[%s2915 + $0x128] sm:$0xff]
  %v2958 = vld [vmem:[%s2915 + $0x130] sm:$0xff]
  %v2959 = vld [vmem:[%s2915 + $0x138] sm:$0xff]
  %v2960 = vld [vmem:[%s2915 + $0x140] sm:$0xf]
  %v3006 = vunpack.c.l.b16 %v2916
  %v3007 = vunpack.c.h.b16 %v2916
  %v3008 = vunpack.c.l.b16 %v2917
  %v3009 = vunpack.c.h.b16 %v2917
  %v3010 = vunpack.c.l.b16 %v2918
  %v3011 = vunpack.c.h.b16 %v2918
  %v3012 = vunpack.c.l.b16 %v2919
  %v3013 = vunpack.c.h.b16 %v2919
  %v3014 = vunpack.c.l.b16 %v2920
  %v3015 = vunpack.c.l.b16 %v2921
  %v3016 = vunpack.c.h.b16 %v2921
  %v3017 = vunpack.c.l.b16 %v2922
  %v3018 = vunpack.c.h.b16 %v2922
  %v3019 = vunpack.c.l.b16 %v2923
  %v3020 = vunpack.c.h.b16 %v2923
  %v3021 = vunpack.c.l.b16 %v2924
  %v3022 = vunpack.c.h.b16 %v2924
  %v3023 = vunpack.c.l.b16 %v2925
  %v3024 = vunpack.c.l.b16 %v2926
  %v3025 = vunpack.c.h.b16 %v2926
  %v3026 = vunpack.c.l.b16 %v2927
  %v3027 = vunpack.c.h.b16 %v2927
  %v3028 = vunpack.c.l.b16 %v2928
  %v3029 = vunpack.c.h.b16 %v2928
  %v3030 = vunpack.c.l.b16 %v2929
  %v3031 = vunpack.c.h.b16 %v2929
  %v3032 = vunpack.c.l.b16 %v2930
  %v3033 = vunpack.c.l.b16 %v2931
  %v3034 = vunpack.c.h.b16 %v2931
  %v3035 = vunpack.c.l.b16 %v2932
  %v3036 = vunpack.c.h.b16 %v2932
  %v3037 = vunpack.c.l.b16 %v2933
  %v3038 = vunpack.c.h.b16 %v2933
  %v3039 = vunpack.c.l.b16 %v2934
  %v3040 = vunpack.c.h.b16 %v2934
  %v3041 = vunpack.c.l.b16 %v2935
  %v3042 = vunpack.c.l.b16 %v2936
  %v3043 = vunpack.c.h.b16 %v2936
  %v3044 = vunpack.c.l.b16 %v2937
  %v3045 = vunpack.c.h.b16 %v2937
  %v3046 = vunpack.c.l.b16 %v2938
  %v3047 = vunpack.c.h.b16 %v2938
  %v3048 = vunpack.c.l.b16 %v2939
  %v3049 = vunpack.c.h.b16 %v2939
  %v3050 = vunpack.c.l.b16 %v2940
  %v3051 = vunpack.c.l.b16 %v2941
  %v3052 = vunpack.c.h.b16 %v2941
  %v3053 = vunpack.c.l.b16 %v2942
  %v3054 = vunpack.c.h.b16 %v2942
  %v3055 = vunpack.c.l.b16 %v2943
  %v3056 = vunpack.c.h.b16 %v2943
  %v3057 = vunpack.c.l.b16 %v2944
  %v3058 = vunpack.c.h.b16 %v2944
  %v3059 = vunpack.c.l.b16 %v2945
  %v3060 = vunpack.c.l.b16 %v2946
  %v3061 = vunpack.c.h.b16 %v2946
  %v3062 = vunpack.c.l.b16 %v2947
  %v3063 = vunpack.c.h.b16 %v2947
  %v3064 = vunpack.c.l.b16 %v2948
  %v3065 = vunpack.c.h.b16 %v2948
  %v3066 = vunpack.c.l.b16 %v2949
  %v3067 = vunpack.c.h.b16 %v2949
  %v3068 = vunpack.c.l.b16 %v2950
  %v3069 = vunpack.c.l.b16 %v2951
  %v3070 = vunpack.c.h.b16 %v2951
  %v3071 = vunpack.c.l.b16 %v2952
  %v3072 = vunpack.c.h.b16 %v2952
  %v3073 = vunpack.c.l.b16 %v2953
  %v3074 = vunpack.c.h.b16 %v2953
  %v3075 = vunpack.c.l.b16 %v2954
  %v3076 = vunpack.c.h.b16 %v2954
  %v3077 = vunpack.c.l.b16 %v2955
  %v3078 = vunpack.c.l.b16 %v2956
  %v3079 = vunpack.c.h.b16 %v2956
  %v3080 = vunpack.c.l.b16 %v2957
  %v3081 = vunpack.c.h.b16 %v2957
  %v3082 = vunpack.c.l.b16 %v2958
  %v3083 = vunpack.c.h.b16 %v2958
  %v3084 = vunpack.c.l.b16 %v2959
  %v3085 = vunpack.c.h.b16 %v2959
  %v3086 = vunpack.c.l.b16 %v2960
  %v3087 = vpack.c.b16 %v3015, %v3006
  %v3088 = vpack.c.b16 %v3016, %v3007
  %v3089 = vpack.c.b16 %v3017, %v3008
  %v3090 = vpack.c.b16 %v3018, %v3009
  %v3091 = vpack.c.b16 %v3019, %v3010
  %v3092 = vpack.c.b16 %v3020, %v3011
  %v3093 = vpack.c.b16 %v3021, %v3012
  %v3094 = vpack.c.b16 %v3022, %v3013
  %v3095 = vpack.c.b16 %v3023, %v3014
  %v3096 = vpack.c.b16 %v3033, %v3024
  %v3097 = vpack.c.b16 %v3034, %v3025
  %v3098 = vpack.c.b16 %v3035, %v3026
  %v3099 = vpack.c.b16 %v3036, %v3027
  %v3100 = vpack.c.b16 %v3037, %v3028
  %v3101 = vpack.c.b16 %v3038, %v3029
  %v3102 = vpack.c.b16 %v3039, %v3030
  %v3103 = vpack.c.b16 %v3040, %v3031
  %v3104 = vpack.c.b16 %v3041, %v3032
  %v3105 = vpack.c.b16 %v3051, %v3042
  %v3106 = vpack.c.b16 %v3052, %v3043
  %v3107 = vpack.c.b16 %v3053, %v3044
  %v3108 = vpack.c.b16 %v3054, %v3045
  %v3109 = vpack.c.b16 %v3055, %v3046
  %v3110 = vpack.c.b16 %v3056, %v3047
  %v3111 = vpack.c.b16 %v3057, %v3048
  %v3112 = vpack.c.b16 %v3058, %v3049
  %v3113 = vpack.c.b16 %v3059, %v3050
  %v3114 = vpack.c.b16 %v3069, %v3060
  %v3115 = vpack.c.b16 %v3070, %v3061
  %v3116 = vpack.c.b16 %v3071, %v3062
  %v3117 = vpack.c.b16 %v3072, %v3063
  %v3118 = vpack.c.b16 %v3073, %v3064
  %v3119 = vpack.c.b16 %v3074, %v3065
  %v3120 = vpack.c.b16 %v3075, %v3066
  %v3121 = vpack.c.b16 %v3076, %v3067
  %v3122 = vpack.c.b16 %v3077, %v3068
  %v3123 = vpack.c.b16 %v3078, %v3078
  %v3124 = vpack.c.b16 %v3079, %v3079
  %v3125 = vpack.c.b16 %v3080, %v3080
  %v3126 = vpack.c.b16 %v3081, %v3081
  %v3127 = vpack.c.b16 %v3082, %v3082
  %v3128 = vpack.c.b16 %v3083, %v3083
  %v3129 = vpack.c.b16 %v3084, %v3084
  %v3130 = vpack.c.b16 %v3085, %v3085
  %v3131 = vpack.c.b16 %v3086, %v3086
  %3177 = vmatprep.subr.bf16.mxu0 %v853
  %3178 = vmatpush1.bf16.msra.mxu0 %v852
  %3179 = vmatprep.subr.bf16.mxu0 %v855
  %3180 = vmatpush1.bf16.msra.mxu0 %v854
  %3181 = vmatprep.subr.bf16.mxu0 %v857
  %3182 = vmatpush1.bf16.msra.mxu0 %v856
  %3183 = vmatprep.subr.bf16.mxu0 %v859
  %3184 = vmatpush1.bf16.msra.mxu0 %v858
  %3185 = vmatprep.subr.bf16.mxu0 %v861
  %3186 = vmatpush1.bf16.msra.mxu0 %v860
  %3187 = vmatprep.subr.bf16.mxu0 %v863
  %3188 = vmatpush1.bf16.msra.mxu0 %v862
  %3189 = vmatprep.subr.bf16.mxu0 %v865
  %3190 = vmatpush1.bf16.msra.mxu0 %v864
  %3191 = vmatprep.subr.bf16.mxu0 %v867
  %3192 = vmatpush1.bf16.msra.mxu0 %v866
  %3193 = vmatprep.subr.bf16.mxu0 %v869
  %3194 = vmatpush1.bf16.msra.mxu0 %v868
  %3195 = vmatprep.subr.bf16.mxu0 %v871
  %3196 = vmatpush1.bf16.msra.mxu0 %v870
  %3197 = vmatprep.subr.bf16.mxu0 %v873
  %3198 = vmatpush1.bf16.msra.mxu0 %v872
  %3199 = vmatprep.subr.bf16.mxu0 %v875
  %3200 = vmatpush1.bf16.msra.mxu0 %v874
  %3201 = vmatprep.subr.bf16.mxu0 %v877
  %3202 = vmatpush1.bf16.msra.mxu0 %v876
  %3203 = vmatprep.subr.bf16.mxu0 %v879
  %3204 = vmatpush1.bf16.msra.mxu0 %v878
  %3205 = vmatprep.subr.bf16.mxu0 %v881
  %3206 = vmatpush1.bf16.msra.mxu0 %v880
  %3207 = vmatprep.subr.bf16.mxu0 %v883
  %3208 = vmatpush1.bf16.msra.mxu0 %v882
  %3209 = vmatprep.mubr.bf16.mxu0 %v3088
  %3210 = vmatmul.mubr.bf16.gmra.mrb[0].mxu0 %v3087
  %v3211 = vpop.f32.mrb[0].mxu0
  %v3212 = vadd.f32 0.0, %v3211
  %v3213 = vpop.f32.mrb[0].mxu0
  %v3214 = vadd.f32 0.0, %v3213
  %v3215 = vpop.f32.mrb[0].mxu0
  %v3216 = vadd.f32 0.0, %v3215
  %v3217 = vpop.f32.mrb[0].mxu0
  %v3218 = vadd.f32 0.0, %v3217
  %3219 = vmatprep.mubr.bf16.mxu0 %v3097
  %3220 = vmatmul.mubr.bf16.gmra.mrb[0].mxu0 %v3096
  %v3221 = vpop.f32.mrb[0].mxu0
  %v3222 = vadd.f32 0.0, %v3221
  %v3223 = vpop.f32.mrb[0].mxu0
  %v3224 = vadd.f32 0.0, %v3223
  %v3225 = vpop.f32.mrb[0].mxu0
  %v3226 = vadd.f32 0.0, %v3225
  %v3227 = vpop.f32.mrb[0].mxu0
  %v3228 = vadd.f32 0.0, %v3227
  %3229 = vmatprep.mubr.bf16.mxu0 %v3106
  %3230 = vmatmul.mubr.bf16.gmra.mrb[0].mxu0 %v3105
  %v3231 = vpop.f32.mrb[0].mxu0
  %v3232 = vadd.f32 0.0, %v3231
  %v3233 = vpop.f32.mrb[0].mxu0
  %v3234 = vadd.f32 0.0, %v3233
  %v3235 = vpop.f32.mrb[0].mxu0
  %v3236 = vadd.f32 0.0, %v3235
  %v3237 = vpop.f32.mrb[0].mxu0
  %v3238 = vadd.f32 0.0, %v3237
  %3239 = vmatprep.mubr.bf16.mxu0 %v3115
  %3240 = vmatmul.mubr.bf16.gmra.mrb[0].mxu0 %v3114
  %v3241 = vpop.f32.mrb[0].mxu0
  %v3242 = vadd.f32 0.0, %v3241
  %v3243 = vpop.f32.mrb[0].mxu0
  %v3244 = vadd.f32 0.0, %v3243
  %v3245 = vpop.f32.mrb[0].mxu0
  %v3246 = vadd.f32 0.0, %v3245
  %v3247 = vpop.f32.mrb[0].mxu0
  %v3248 = vadd.f32 0.0, %v3247
  %3249 = vmatprep.mubr.bf16.mxu0 %v3124
  %3250 = vmatmul.mubr.bf16.gmra.mrb[0].mxu0 %v3123
  %v3251 = vpop.f32.mrb[0].mxu0
  %v3252 = vadd.f32 0.0, %v3251
  %v3253 = vpop.f32.mrb[0].mxu0
  %v3254 = vadd.f32 0.0, %v3253
  %v3255 = vpop.f32.mrb[0].mxu0
  %v3256 = vpop.f32.mrb[0].mxu0
  %3257 = vdwg.mxu0
  %3258 = vmatprep.subr.bf16.mxu0 %v885
  %3259 = vmatpush1.bf16.msra.mxu0 %v884
  %3260 = vmatprep.subr.bf16.mxu0 %v887
  %3261 = vmatpush1.bf16.msra.mxu0 %v886
  %3262 = vmatprep.subr.bf16.mxu0 %v889
  %3263 = vmatpush1.bf16.msra.mxu0 %v888
  %3264 = vmatprep.subr.bf16.mxu0 %v891
  %3265 = vmatpush1.bf16.msra.mxu0 %v890
  %3266 = vmatprep.subr.bf16.mxu0 %v893
  %3267 = vmatpush1.bf16.msra.mxu0 %v892
  %3268 = vmatprep.subr.bf16.mxu0 %v895
  %3269 = vmatpush1.bf16.msra.mxu0 %v894
  %3270 = vmatprep.subr.bf16.mxu0 %v897
  %3271 = vmatpush1.bf16.msra.mxu0 %v896
  %3272 = vmatprep.subr.bf16.mxu0 %v899
  %3273 = vmatpush1.bf16.msra.mxu0 %v898
  %3274 = vmatprep.subr.bf16.mxu0 %v901
  %3275 = vmatpush1.bf16.msra.mxu0 %v900
  %3276 = vmatprep.subr.bf16.mxu0 %v903
  %3277 = vmatpush1.bf16.msra.mxu0 %v902
  %3278 = vmatprep.subr.bf16.mxu0 %v905
  %3279 = vmatpush1.bf16.msra.mxu0 %v904
  %3280 = vmatprep.subr.bf16.mxu0 %v907
  %3281 = vmatpush1.bf16.msra.mxu0 %v906
  %3282 = vmatprep.subr.bf16.mxu0 %v909
  %3283 = vmatpush1.bf16.msra.mxu0 %v908
  %3284 = vmatprep.subr.bf16.mxu0 %v911
  %3285 = vmatpush1.bf16.msra.mxu0 %v910
  %3286 = vmatprep.subr.bf16.mxu0 %v913
  %3287 = vmatpush1.bf16.msra.mxu0 %v912
  %3288 = vmatprep.subr.bf16.mxu0 %v915
  %3289 = vmatpush1.bf16.msra.mxu0 %v914
  %3290 = vmatprep.mubr.bf16.mxu0 %v3090
  %3291 = vmatmul.mubr.bf16.gmra.mrb[0].mxu0 %v3089
  %v3292 = vpop.f32.mrb[0].mxu0
  %v3293 = vadd.f32 %v3212, %v3292
  %v3294 = vpop.f32.mrb[0].mxu0
  %v3295 = vadd.f32 %v3214, %v3294
  %v3296 = vpop.f32.mrb[0].mxu0
  %v3297 = vadd.f32 %v3216, %v3296
  %v3298 = vpop.f32.mrb[0].mxu0
  %v3299 = vadd.f32 %v3218, %v3298
  %3300 = vmatprep.mubr.bf16.mxu0 %v3099
  %3301 = vmatmul.mubr.bf16.gmra.mrb[0].mxu0 %v3098
  %v3302 = vpop.f32.mrb[0].mxu0
  %v3303 = vadd.f32 %v3222, %v3302
  %v3304 = vpop.f32.mrb[0].mxu0
  %v3305 = vadd.f32 %v3224, %v3304
  %v3306 = vpop.f32.mrb[0].mxu0
  %v3307 = vadd.f32 %v3226, %v3306
  %v3308 = vpop.f32.mrb[0].mxu0
  %v3309 = vadd.f32 %v3228, %v3308
  %3310 = vmatprep.mubr.bf16.mxu0 %v3108
  %3311 = vmatmul.mubr.bf16.gmra.mrb[0].mxu0 %v3107
  %v3312 = vpop.f32.mrb[0].mxu0
  %v3313 = vadd.f32 %v3232, %v3312
  %v3314 = vpop.f32.mrb[0].mxu0
  %v3315 = vadd.f32 %v3234, %v3314
  %v3316 = vpop.f32.mrb[0].mxu0
  %v3317 = vadd.f32 %v3236, %v3316
  %v3318 = vpop.f32.mrb[0].mxu0
  %v3319 = vadd.f32 %v3238, %v3318
  %3320 = vmatprep.mubr.bf16.mxu0 %v3117
  %3321 = vmatmul.mubr.bf16.gmra.mrb[0].mxu0 %v3116
  %v3322 = vpop.f32.mrb[0].mxu0
  %v3323 = vadd.f32 %v3242, %v3322
  %v3324 = vpop.f32.mrb[0].mxu0
  %v3325 = vadd.f32 %v3244, %v3324
  %v3326 = vpop.f32.mrb[0].mxu0
  %v3327 = vadd.f32 %v3246, %v3326
  %v3328 = vpop.f32.mrb[0].mxu0
  %v3329 = vadd.f32 %v3248, %v3328
  %3330 = vmatprep.mubr.bf16.mxu0 %v3126
  %3331 = vmatmul.mubr.bf16.gmra.mrb[0].mxu0 %v3125
  %v3332 = vpop.f32.mrb[0].mxu0
  %v3333 = vadd.f32 %v3252, %v3332
  %v3334 = vpop.f32.mrb[0].mxu0
  %v3335 = vadd.f32 %v3254, %v3334
  %v3336 = vpop.f32.mrb[0].mxu0
  %v3337 = vpop.f32.mrb[0].mxu0
  %3338 = vdwg.mxu0
  %3339 = vmatprep.subr.bf16.mxu0 %v917
  %3340 = vmatpush1.bf16.msra.mxu0 %v916
  %3341 = vmatprep.subr.bf16.mxu0 %v919
  %3342 = vmatpush1.bf16.msra.mxu0 %v918
  %3343 = vmatprep.subr.bf16.mxu0 %v921
  %3344 = vmatpush1.bf16.msra.mxu0 %v920
  %3345 = vmatprep.subr.bf16.mxu0 %v923
  %3346 = vmatpush1.bf16.msra.mxu0 %v922
  %3347 = vmatprep.subr.bf16.mxu0 %v925
  %3348 = vmatpush1.bf16.msra.mxu0 %v924
  %3349 = vmatprep.subr.bf16.mxu0 %v927
  %3350 = vmatpush1.bf16.msra.mxu0 %v926
  %3351 = vmatprep.subr.bf16.mxu0 %v929
  %3352 = vmatpush1.bf16.msra.mxu0 %v928
  %3353 = vmatprep.subr.bf16.mxu0 %v931
  %3354 = vmatpush1.bf16.msra.mxu0 %v930
  %3355 = vmatprep.subr.bf16.mxu0 %v933
  %3356 = vmatpush1.bf16.msra.mxu0 %v932
  %3357 = vmatprep.subr.bf16.mxu0 %v935
  %3358 = vmatpush1.bf16.msra.mxu0 %v934
  %3359 = vmatprep.subr.bf16.mxu0 %v937
  %3360 = vmatpush1.bf16.msra.mxu0 %v936
  %3361 = vmatprep.subr.bf16.mxu0 %v939
  %3362 = vmatpush1.bf16.msra.mxu0 %v938
  %3363 = vmatprep.subr.bf16.mxu0 %v941
  %3364 = vmatpush1.bf16.msra.mxu0 %v940
  %3365 = vmatprep.subr.bf16.mxu0 %v943
  %3366 = vmatpush1.bf16.msra.mxu0 %v942
  %3367 = vmatprep.subr.bf16.mxu0 %v945
  %3368 = vmatpush1.bf16.msra.mxu0 %v944
  %3369 = vmatprep.subr.bf16.mxu0 %v947
  %3370 = vmatpush1.bf16.msra.mxu0 %v946
  %3371 = vmatprep.mubr.bf16.mxu0 %v3092
  %3372 = vmatmul.mubr.bf16.gmra.mrb[0].mxu0 %v3091
  %v3373 = vpop.f32.mrb[0].mxu0
  %v3374 = vadd.f32 %v3293, %v3373
  %v3375 = vpop.f32.mrb[0].mxu0
  %v3376 = vadd.f32 %v3295, %v3375
  %v3377 = vpop.f32.mrb[0].mxu0
  %v3378 = vadd.f32 %v3297, %v3377
  %v3379 = vpop.f32.mrb[0].mxu0
  %v3380 = vadd.f32 %v3299, %v3379
  %3381 = vmatprep.mubr.bf16.mxu0 %v3101
  %3382 = vmatmul.mubr.bf16.gmra.mrb[0].mxu0 %v3100
  %v3383 = vpop.f32.mrb[0].mxu0
  %v3384 = vadd.f32 %v3303, %v3383
  %v3385 = vpop.f32.mrb[0].mxu0
  %v3386 = vadd.f32 %v3305, %v3385
  %v3387 = vpop.f32.mrb[0].mxu0
  %v3388 = vadd.f32 %v3307, %v3387
  %v3389 = vpop.f32.mrb[0].mxu0
  %v3390 = vadd.f32 %v3309, %v3389
  %3391 = vmatprep.mubr.bf16.mxu0 %v3110
  %3392 = vmatmul.mubr.bf16.gmra.mrb[0].mxu0 %v3109
  %v3393 = vpop.f32.mrb[0].mxu0
  %v3394 = vadd.f32 %v3313, %v3393
  %v3395 = vpop.f32.mrb[0].mxu0
  %v3396 = vadd.f32 %v3315, %v3395
  %v3397 = vpop.f32.mrb[0].mxu0
  %v3398 = vadd.f32 %v3317, %v3397
  %v3399 = vpop.f32.mrb[0].mxu0
  %v3400 = vadd.f32 %v3319, %v3399
  %3401 = vmatprep.mubr.bf16.mxu0 %v3119
  %3402 = vmatmul.mubr.bf16.gmra.mrb[0].mxu0 %v3118
  %v3403 = vpop.f32.mrb[0].mxu0
  %v3404 = vadd.f32 %v3323, %v3403
  %v3405 = vpop.f32.mrb[0].mxu0
  %v3406 = vadd.f32 %v3325, %v3405
  %v3407 = vpop.f32.mrb[0].mxu0
  %v3408 = vadd.f32 %v3327, %v3407
  %v3409 = vpop.f32.mrb[0].mxu0
  %v3410 = vadd.f32 %v3329, %v3409
  %3411 = vmatprep.mubr.bf16.mxu0 %v3128
  %3412 = vmatmul.mubr.bf16.gmra.mrb[0].mxu0 %v3127
  %v3413 = vpop.f32.mrb[0].mxu0
  %v3414 = vadd.f32 %v3333, %v3413
  %v3415 = vpop.f32.mrb[0].mxu0
  %v3416 = vadd.f32 %v3335, %v3415
  %v3417 = vpop.f32.mrb[0].mxu0
  %v3418 = vpop.f32.mrb[0].mxu0
  %3419 = vdwg.mxu0
  %3420 = vmatprep.subr.bf16.mxu0 %v949
  %3421 = vmatpush1.bf16.msra.mxu0 %v948
  %3422 = vmatprep.subr.bf16.mxu0 %v951
  %3423 = vmatpush1.bf16.msra.mxu0 %v950
  %3424 = vmatprep.subr.bf16.mxu0 %v953
  %3425 = vmatpush1.bf16.msra.mxu0 %v952
  %3426 = vmatprep.subr.bf16.mxu0 %v955
  %3427 = vmatpush1.bf16.msra.mxu0 %v954
  %3428 = vmatprep.subr.bf16.mxu0 %v957
  %3429 = vmatpush1.bf16.msra.mxu0 %v956
  %3430 = vmatprep.subr.bf16.mxu0 %v959
  %3431 = vmatpush1.bf16.msra.mxu0 %v958
  %3432 = vmatprep.subr.bf16.mxu0 %v961
  %3433 = vmatpush1.bf16.msra.mxu0 %v960
  %3434 = vmatprep.subr.bf16.mxu0 %v963
  %3435 = vmatpush1.bf16.msra.mxu0 %v962
  %3436 = vmatprep.subr.bf16.mxu0 %v965
  %3437 = vmatpush1.bf16.msra.mxu0 %v964
  %3438 = vmatprep.subr.bf16.mxu0 %v967
  %3439 = vmatpush1.bf16.msra.mxu0 %v966
  %3440 = vmatprep.subr.bf16.mxu0 %v969
  %3441 = vmatpush1.bf16.msra.mxu0 %v968
  %3442 = vmatprep.subr.bf16.mxu0 %v971
  %3443 = vmatpush1.bf16.msra.mxu0 %v970
  %3444 = vmatprep.subr.bf16.mxu0 %v973
  %3445 = vmatpush1.bf16.msra.mxu0 %v972
  %3446 = vmatprep.subr.bf16.mxu0 %v975
  %3447 = vmatpush1.bf16.msra.mxu0 %v974
  %3448 = vmatprep.subr.bf16.mxu0 %v977
  %3449 = vmatpush1.bf16.msra.mxu0 %v976
  %3450 = vmatprep.subr.bf16.mxu0 %v979
  %3451 = vmatpush1.bf16.msra.mxu0 %v978
  %3452 = vmatprep.mubr.bf16.mxu0 %v3094
  %3453 = vmatmul.mubr.bf16.gmra.mrb[0].mxu0 %v3093
  %v3454 = vpop.f32.mrb[0].mxu0
  %v3455 = vadd.f32 %v3374, %v3454
  %v3456 = vpop.f32.mrb[0].mxu0
  %v3457 = vadd.f32 %v3376, %v3456
  %v3458 = vpop.f32.mrb[0].mxu0
  %v3459 = vadd.f32 %v3378, %v3458
  %v3460 = vpop.f32.mrb[0].mxu0
  %v3461 = vadd.f32 %v3380, %v3460
  %3462 = vmatprep.mubr.bf16.mxu0 %v3103
  %3463 = vmatmul.mubr.bf16.gmra.mrb[0].mxu0 %v3102
  %v3464 = vpop.f32.mrb[0].mxu0
  %v3465 = vadd.f32 %v3384, %v3464
  %v3466 = vpop.f32.mrb[0].mxu0
  %v3467 = vadd.f32 %v3386, %v3466
  %v3468 = vpop.f32.mrb[0].mxu0
  %v3469 = vadd.f32 %v3388, %v3468
  %v3470 = vpop.f32.mrb[0].mxu0
  %v3471 = vadd.f32 %v3390, %v3470
  %3472 = vmatprep.mubr.bf16.mxu0 %v3112
  %3473 = vmatmul.mubr.bf16.gmra.mrb[0].mxu0 %v3111
  %v3474 = vpop.f32.mrb[0].mxu0
  %v3475 = vadd.f32 %v3394, %v3474
  %v3476 = vpop.f32.mrb[0].mxu0
  %v3477 = vadd.f32 %v3396, %v3476
  %v3478 = vpop.f32.mrb[0].mxu0
  %v3479 = vadd.f32 %v3398, %v3478
  %v3480 = vpop.f32.mrb[0].mxu0
  %v3481 = vadd.f32 %v3400, %v3480
  %3482 = vmatprep.mubr.bf16.mxu0 %v3121
  %3483 = vmatmul.mubr.bf16.gmra.mrb[0].mxu0 %v3120
  %v3484 = vpop.f32.mrb[0].mxu0
  %v3485 = vadd.f32 %v3404, %v3484
  %v3486 = vpop.f32.mrb[0].mxu0
  %v3487 = vadd.f32 %v3406, %v3486
  %v3488 = vpop.f32.mrb[0].mxu0
  %v3489 = vadd.f32 %v3408, %v3488
  %v3490 = vpop.f32.mrb[0].mxu0
  %v3491 = vadd.f32 %v3410, %v3490
  %3492 = vmatprep.mubr.bf16.mxu0 %v3130
  %3493 = vmatmul.mubr.bf16.gmra.mrb[0].mxu0 %v3129
  %v3494 = vpop.f32.mrb[0].mxu0
  %v3495 = vadd.f32 %v3414, %v3494
  %v3496 = vpop.f32.mrb[0].mxu0
  %v3497 = vadd.f32 %v3416, %v3496
  %v3498 = vpop.f32.mrb[0].mxu0
  %v3499 = vpop.f32.mrb[0].mxu0
  %3500 = vdwg.mxu0
  %3501 = vmatprep.subr.bf16.mxu0 %v981
  %3502 = vmatpush1.bf16.msra.mxu0 %v980
  %3503 = vmatprep.subr.bf16.mxu0 %v983
  %3504 = vmatpush1.bf16.msra.mxu0 %v982
  %3505 = vmatprep.subr.bf16.mxu0 %v985
  %3506 = vmatpush1.bf16.msra.mxu0 %v984
  %3507 = vmatprep.subr.bf16.mxu0 %v987
  %3508 = vmatpush1.bf16.msra.mxu0 %v986
  %3509 = vmatprep.subr.bf16.mxu0 %v989
  %3510 = vmatpush1.bf16.msra.mxu0 %v988
  %3511 = vmatprep.subr.bf16.mxu0 %v991
  %3512 = vmatpush1.bf16.msra.mxu0 %v990
  %3513 = vmatprep.subr.bf16.mxu0 %v993
  %3514 = vmatpush1.bf16.msra.mxu0 %v992
  %3515 = vmatprep.subr.bf16.mxu0 %v995
  %3516 = vmatpush1.bf16.msra.mxu0 %v994
  %3517 = vmatprep.subr.bf16.mxu0 0
  %3518 = vmatpush1.bf16.msra.mxu0 0
  %3519 = vmatprep.subr.bf16.mxu0 0
  %3520 = vmatpush1.bf16.msra.mxu0 0
  %3521 = vmatprep.subr.bf16.mxu0 0
  %3522 = vmatpush1.bf16.msra.mxu0 0
  %3523 = vmatprep.subr.bf16.mxu0 0
  %3524 = vmatpush1.bf16.msra.mxu0 0
  %3525 = vmatprep.subr.bf16.mxu0 0
  %3526 = vmatpush1.bf16.msra.mxu0 0
  %3527 = vmatprep.subr.bf16.mxu0 0
  %3528 = vmatpush1.bf16.msra.mxu0 0
  %3529 = vmatprep.subr.bf16.mxu0 0
  %3530 = vmatpush1.bf16.msra.mxu0 0
  %3531 = vmatprep.subr.bf16.mxu0 0
  %3532 = vmatpush1.bf16.msra.mxu0 0
  %3533 = vmatprep.mubr.bf16.mxu0 0
  %3534 = vmatmul.mubr.bf16.gmra.mrb[0].mxu0 %v3095
  %v3535 = vpop.f32.mrb[0].mxu0
  %v3536 = vadd.f32 %v3455, %v3535
  %v3537 = vpop.f32.mrb[0].mxu0
  %v3538 = vadd.f32 %v3457, %v3537
  %v3539 = vpop.f32.mrb[0].mxu0
  %v3540 = vadd.f32 %v3459, %v3539
  %v3541 = vpop.f32.mrb[0].mxu0
  %v3542 = vadd.f32 %v3461, %v3541
  %3543 = vmatprep.mubr.bf16.mxu0 0
  %3544 = vmatmul.mubr.bf16.gmra.mrb[0].mxu0 %v3104
  %v3545 = vpop.f32.mrb[0].mxu0
  %v3546 = vadd.f32 %v3465, %v3545
  %v3547 = vpop.f32.mrb[0].mxu0
  %v3548 = vadd.f32 %v3467, %v3547
  %v3549 = vpop.f32.mrb[0].mxu0
  %v3550 = vadd.f32 %v3469, %v3549
  %v3551 = vpop.f32.mrb[0].mxu0
  %v3552 = vadd.f32 %v3471, %v3551
  %3553 = vmatprep.mubr.bf16.mxu0 0
  %3554 = vmatmul.mubr.bf16.gmra.mrb[0].mxu0 %v3113
  %v3555 = vpop.f32.mrb[0].mxu0
  %v3556 = vadd.f32 %v3475, %v3555
  %v3557 = vpop.f32.mrb[0].mxu0
  %v3558 = vadd.f32 %v3477, %v3557
  %v3559 = vpop.f32.mrb[0].mxu0
  %v3560 = vadd.f32 %v3479, %v3559
  %v3561 = vpop.f32.mrb[0].mxu0
  %v3562 = vadd.f32 %v3481, %v3561
  %3563 = vmatprep.mubr.bf16.mxu0 0
  %3564 = vmatmul.mubr.bf16.gmra.mrb[0].mxu0 %v3122
  %v3565 = vpop.f32.mrb[0].mxu0
  %v3566 = vadd.f32 %v3485, %v3565
  %v3567 = vpop.f32.mrb[0].mxu0
  %v3568 = vadd.f32 %v3487, %v3567
  %v3569 = vpop.f32.mrb[0].mxu0
  %v3570 = vadd.f32 %v3489, %v3569
  %v3571 = vpop.f32.mrb[0].mxu0
  %v3572 = vadd.f32 %v3491, %v3571
  %3573 = vmatprep.mubr.bf16.mxu0 0
  %3574 = vmatmul.mubr.bf16.gmra.mrb[0].mxu0 %v3131
  %v3575 = vpop.f32.mrb[0].mxu0
  %v3576 = vadd.f32 %v3495, %v3575
  %v3577 = vpop.f32.mrb[0].mxu0
  %v3578 = vadd.f32 %v3497, %v3577
  %v3579 = vpop.f32.mrb[0].mxu0
  %v3580 = vpop.f32.mrb[0].mxu0
  %3581 = vdwg.mxu0
  %v3582 = vmax.f32 %v2897, %v3536
  %v3583 = vmax.f32 %v2898, %v3538
  %v3584 = vmax.f32 %v2899, %v3540
  %v3585 = vmax.f32 %v2900, %v3542
  %v3586 = vmax.f32 %v2901, %v3546
  %v3587 = vmax.f32 %v2902, %v3548
  %v3588 = vmax.f32 %v2903, %v3550
  %v3589 = vmax.f32 %v2904, %v3552
  %v3590 = vmax.f32 %v2905, %v3556
  %v3591 = vmax.f32 %v2906, %v3558
  %v3592 = vmax.f32 %v2907, %v3560
  %v3593 = vmax.f32 %v2908, %v3562
  %v3594 = vmax.f32 %v2909, %v3566
  %v3595 = vmax.f32 %v2910, %v3568
  %v3596 = vmax.f32 %v2911, %v3570
  %v3597 = vmax.f32 %v2912, %v3572
  %v3598 = vmax.f32 %v2913, %v3576
  %v3599 = vmax.f32 %v2914, %v3578
  %v3600 = vld [vmem:[%s2] sm:$0x3]
  %v3602 = vlaneseq
  %v3603 = vshrl.u32 %v3602, 7
  %v3604 = vsub.s32 0, %v3603
  %v3605 = vrot.slane %v3600, %v3604
  %v3606 = vlaneseq
  %v3607 = vshrl.u32 %v3606, 7
  %v3608 = vsub.s32 1, %v3607
  %v3609 = vrot.slane %v3600, %v3608
  %v3612 = vadd.f32 %v3582, %v3605
  %v3613 = vadd.f32 %v3583, %v3609
  %v3614 = vadd.f32 %v3584, %v3605
  %v3615 = vadd.f32 %v3585, %v3609
  %v3616 = vadd.f32 %v3586, %v3605
  %v3617 = vadd.f32 %v3587, %v3609
  %v3618 = vadd.f32 %v3588, %v3605
  %v3619 = vadd.f32 %v3589, %v3609
  %v3620 = vadd.f32 %v3590, %v3605
  %v3621 = vadd.f32 %v3591, %v3609
  %v3622 = vadd.f32 %v3592, %v3605
  %v3623 = vadd.f32 %v3593, %v3609
  %v3624 = vadd.f32 %v3594, %v3605
  %v3625 = vadd.f32 %v3595, %v3609
  %v3626 = vadd.f32 %v3596, %v3605
  %v3627 = vadd.f32 %v3597, %v3609
  %v3628 = vadd.f32 %v3598, %v3605
  %v3629 = vadd.f32 %v3599, %v3609
  %v3630 = vmax.f32 %v3612, 0.0
  %v3631 = vmax.f32 %v3613, 0.0
  %v3632 = vmax.f32 %v3614, 0.0
  %v3633 = vmax.f32 %v3615, 0.0
  %v3634 = vmax.f32 %v3616, 0.0
  %v3635 = vmax.f32 %v3617, 0.0
  %v3636 = vmax.f32 %v3618, 0.0
  %v3637 = vmax.f32 %v3619, 0.0
  %v3638 = vmax.f32 %v3620, 0.0
  %v3639 = vmax.f32 %v3621, 0.0
  %v3640 = vmax.f32 %v3622, 0.0
  %v3641 = vmax.f32 %v3623, 0.0
  %v3642 = vmax.f32 %v3624, 0.0
  %v3643 = vmax.f32 %v3625, 0.0
  %v3644 = vmax.f32 %v3626, 0.0
  %v3645 = vmax.f32 %v3627, 0.0
  %v3646 = vmax.f32 %v3628, 0.0
  %v3647 = vmax.f32 %v3629, 0.0
  %v3648 = vpack.c.bf16 %v3632, %v3630
  %v3649 = vpack.c.bf16 %v3633, %v3631
  %v3650 = vpack.c.bf16 %v3636, %v3634
  %v3651 = vpack.c.bf16 %v3637, %v3635
  %v3652 = vpack.c.bf16 %v3640, %v3638
  %v3653 = vpack.c.bf16 %v3641, %v3639
  %v3654 = vpack.c.bf16 %v3644, %v3642
  %v3655 = vpack.c.bf16 %v3645, %v3643
  %v3656 = vpack.c.bf16 %v3646, %v3646
  %v3657 = vpack.c.bf16 %v3647, %v3647
  %v3668 = vunpack.c.l.b16 %v3648
  %v3669 = vunpack.c.l.b16 %v3649
  %v3670 = vunpack.c.h.b16 %v3648
  %v3671 = vunpack.c.h.b16 %v3649
  %v3672 = vunpack.c.l.b16 %v3650
  %v3673 = vunpack.c.l.b16 %v3651
  %v3674 = vunpack.c.h.b16 %v3650
  %v3675 = vunpack.c.h.b16 %v3651
  %v3676 = vunpack.c.l.b16 %v3652
  %v3677 = vunpack.c.l.b16 %v3653
  %v3678 = vunpack.c.h.b16 %v3652
  %v3679 = vunpack.c.h.b16 %v3653
  %v3680 = vunpack.c.l.b16 %v3654
  %v3681 = vunpack.c.l.b16 %v3655
  %v3682 = vunpack.c.h.b16 %v3654
  %v3683 = vunpack.c.h.b16 %v3655
  %v3684 = vunpack.c.l.b16 %v3656
  %v3685 = vunpack.c.l.b16 %v3657
  %v3686 = vpack.c.b16 %v3669, %v3668
  %v3687 = vpack.c.b16 %v3671, %v3670
  %v3688 = vpack.c.b16 %v3673, %v3672
  %v3689 = vpack.c.b16 %v3675, %v3674
  %v3690 = vpack.c.b16 %v3677, %v3676
  %v3691 = vpack.c.b16 %v3679, %v3678
  %v3692 = vpack.c.b16 %v3681, %v3680
  %v3693 = vpack.c.b16 %v3683, %v3682
  %v3694 = vpack.c.b16 %v3685, %v3684
  %3704 = vst [vmem:[%s3] sm:$0xff] %v3686
  %3705 = vst [vmem:[%s3 + $0x8] sm:$0xff] %v3687
  %3706 = vst [vmem:[%s3 + $0x10] sm:$0xff] %v3688
  %3707 = vst [vmem:[%s3 + $0x18] sm:$0xff] %v3689
  %3708 = vst [vmem:[%s3 + $0x20] sm:$0xff] %v3690
  %3709 = vst [vmem:[%s3 + $0x28] sm:$0xff] %v3691
  %3710 = vst [vmem:[%s3 + $0x30] sm:$0xff] %v3692
  %3711 = vst [vmem:[%s3 + $0x38] sm:$0xff] %v3693
  %3712 = vst [vmem:[%s3 + $0x40] sm:$0xff] %v3694
  // Predicated region
  $region14: #{ble_cnn_forward.4} parent=0 // pred_check
    _
  $region15: #{ble_cnn_forward.4} parent=0 // pred_check_branch
    %3714 = sbr.rel (0) target = $region17
  $region16: #{ble_cnn_forward.4} parent=0 // pred_region
    _
  $region17: #{ble_cnn_forward.4} parent=0 // pred_fallthru
    _
  // Predicated region
  $region18: #{ble_cnn_forward.4} parent=0 // pred_check
    _
  $region19: #{ble_cnn_forward.4} parent=0 // pred_check_branch
    %3716 = sbr.rel (0) target = $region21
  $region20: #{ble_cnn_forward.4} parent=0 // pred_region
    _
  $region21: #{ble_cnn_forward.4} parent=0 // pred_fallthru
    _

// kernel: ble_cnn_forward.5
$region0: #{ble_cnn_forward.5}
  #allocation0 [shape = 'u32[]', space=smem, size = 0x4, offset = 0x4, fixed_abs, tag = 'smem constant byte address 0x4 - core index']
  #allocation1 [shape = 'u32[144,128]{1,0:T(1,128)}', space=vmem, size = 0x12000, scoped, tag = 'internal scratch']
  %s0 = inlined_call_operand.vmem [shape: bf16[2,9216], index: 0, kind: input, shape index: {}]
  %s1 = inlined_call_operand.vmem [shape: bf16[9216,128], index: 1, kind: input, shape index: {}]
  %s2 = inlined_call_operand.vmem [shape: f32[1,128], index: 2, kind: input, shape index: {}]
  %s3 = inlined_call_operand.hbm [shape: f32[2,128], index: 3, kind: output, shape index: {}]
  %s4 = sld [smem:[#allocation0]]
  $region22: #{ble_cnn_forward.5} parent=0
    _
  %s6 = ssub.s32 1, %s4
  %s7 = scalar_select 0, %s6, %s4
  $region1: #{ble_cnn_forward.5} parent=0
    #allocation2 [shape = 'u8[1024]{0}', space=vmem, size = 0x400, scoped, tag = 'output window, operand 0, single buffered']
    #allocation3 [shape = 's32[1]{0}', space=sflag, size = 0x4, scoped, tag = 'scoped memory for ble_cnn_forward.5']
    %8 = vsyncpa [#allocation3], 0
    // Predicated region
    $region2: #{ble_cnn_forward.5} parent=1 // pred_check
      _
    $region3: #{ble_cnn_forward.5} parent=1 // pred_check_branch
      %10 = sbr.rel (0) target = $region5
    $region4: #{ble_cnn_forward.5} parent=1 // pred_region
      _
    $region5: #{ble_cnn_forward.5} parent=1 // pred_fallthru
      _
    // Predicated region
    $region6: #{ble_cnn_forward.5} parent=1 // pred_check
      _
    $region7: #{ble_cnn_forward.5} parent=1 // pred_check_branch
      %12 = sbr.rel (0) target = $region9
    $region8: #{ble_cnn_forward.5} parent=1 // pred_region
      _
    $region9: #{ble_cnn_forward.5} parent=1 // pred_fallthru
      _
    // Predicated region
    $region10: #{ble_cnn_forward.5} parent=1 // pred_check
      _
    $region11: #{ble_cnn_forward.5} parent=1 // pred_check_branch
      %14 = sbr.rel (0) target = $region13
    $region12: #{ble_cnn_forward.5} parent=1 // pred_region
      _
    $region13: #{ble_cnn_forward.5} parent=1 // pred_fallthru
      _
    %v16 = vld [vmem:[%s0] sm:$0xff]
    %v17 = vld [vmem:[%s0 + $0x8] sm:$0xff]
    %v18 = vld [vmem:[%s0 + $0x10] sm:$0xff]
    %v19 = vld [vmem:[%s0 + $0x18] sm:$0xff]
    %v20 = vld [vmem:[%s0 + $0x20] sm:$0xff]
    %v21 = vld [vmem:[%s0 + $0x28] sm:$0xff]
    %v22 = vld [vmem:[%s0 + $0x30] sm:$0xff]
    %v23 = vld [vmem:[%s0 + $0x38] sm:$0xff]
    %v24 = vld [vmem:[%s0 + $0x40] sm:$0xff]
    %v25 = vld [vmem:[%s1] sm:$0xf]
    %v26 = vld [vmem:[%s1 + $0x4] sm:$0xf]
    %v27 = vld [vmem:[%s1 + $0x8] sm:$0xf]
    %v28 = vld [vmem:[%s1 + $0xc] sm:$0xf]
    %v29 = vld [vmem:[%s1 + $0x10] sm:$0xf]
    %v30 = vld [vmem:[%s1 + $0x14] sm:$0xf]
    %v31 = vld [vmem:[%s1 + $0x18] sm:$0xf]
    %v32 = vld [vmem:[%s1 + $0x1c] sm:$0xf]
    %v33 = vld [vmem:[%s1 + $0x20] sm:$0xf]
    %v34 = vld [vmem:[%s1 + $0x24] sm:$0xf]
    %v35 = vld [vmem:[%s1 + $0x28] sm:$0xf]
    %v36 = vld [vmem:[%s1 + $0x2c] sm:$0xf]
    %v37 = vld [vmem:[%s1 + $0x30] sm:$0xf]
    %v38 = vld [vmem:[%s1 + $0x34] sm:$0xf]
    %v39 = vld [vmem:[%s1 + $0x38] sm:$0xf]
    %v40 = vld [vmem:[%s1 + $0x3c] sm:$0xf]
    %v41 = vld [vmem:[%s1 + $0x40] sm:$0xf]
    %v42 = vld [vmem:[%s1 + $0x44] sm:$0xf]
    %v43 = vld [vmem:[%s1 + $0x48] sm:$0xf]
    %v44 = vld [vmem:[%s1 + $0x4c] sm:$0xf]
    %v45 = vld [vmem:[%s1 + $0x50] sm:$0xf]
    %v46 = vld [vmem:[%s1 + $0x54] sm:$0xf]
    %v47 = vld [vmem:[%s1 + $0x58] sm:$0xf]
    %v48 = vld [vmem:[%s1 + $0x5c] sm:$0xf]
    %v49 = vld [vmem:[%s1 + $0x60] sm:$0xf]
    %v50 = vld [vmem:[%s1 + $0x64] sm:$0xf]
    %v51 = vld [vmem:[%s1 + $0x68] sm:$0xf]
    %v52 = vld [vmem:[%s1 + $0x6c] sm:$0xf]
    %v53 = vld [vmem:[%s1 + $0x70] sm:$0xf]
    %v54 = vld [vmem:[%s1 + $0x74] sm:$0xf]
    %v55 = vld [vmem:[%s1 + $0x78] sm:$0xf]
    %v56 = vld [vmem:[%s1 + $0x7c] sm:$0xf]
    %v57 = vld [vmem:[%s1 + $0x80] sm:$0xf]
    %v58 = vld [vmem:[%s1 + $0x84] sm:$0xf]
    %v59 = vld [vmem:[%s1 + $0x88] sm:$0xf]
    %v60 = vld [vmem:[%s1 + $0x8c] sm:$0xf]
    %v61 = vld [vmem:[%s1 + $0x90] sm:$0xf]
    %v62 = vld [vmem:[%s1 + $0x94] sm:$0xf]
    %v63 = vld [vmem:[%s1 + $0x98] sm:$0xf]
    %v64 = vld [vmem:[%s1 + $0x9c] sm:$0xf]
    %v65 = vld [vmem:[%s1 + $0xa0] sm:$0xf]
    %v66 = vld [vmem:[%s1 + $0xa4] sm:$0xf]
    %v67 = vld [vmem:[%s1 + $0xa8] sm:$0xf]
    %v68 = vld [vmem:[%s1 + $0xac] sm:$0xf]
    %v69 = vld [vmem:[%s1 + $0xb0] sm:$0xf]
    %v70 = vld [vmem:[%s1 + $0xb4] sm:$0xf]
    %v71 = vld [vmem:[%s1 + $0xb8] sm:$0xf]
    %v72 = vld [vmem:[%s1 + $0xbc] sm:$0xf]
    %v73 = vld [vmem:[%s1 + $0xc0] sm:$0xf]
    %v74 = vld [vmem:[%s1 + $0xc4] sm:$0xf]
    %v75 = vld [vmem:[%s1 + $0xc8] sm:$0xf]
    %v76 = vld [vmem:[%s1 + $0xcc] sm:$0xf]
    %v77 = vld [vmem:[%s1 + $0xd0] sm:$0xf]
    %v78 = vld [vmem:[%s1 + $0xd4] sm:$0xf]
    %v79 = vld [vmem:[%s1 + $0xd8] sm:$0xf]
    %v80 = vld [vmem:[%s1 + $0xdc] sm:$0xf]
    %v81 = vld [vmem:[%s1 + $0xe0] sm:$0xf]
    %v82 = vld [vmem:[%s1 + $0xe4] sm:$0xf]
    %v83 = vld [vmem:[%s1 + $0xe8] sm:$0xf]
    %v84 = vld [vmem:[%s1 + $0xec] sm:$0xf]
    %v85 = vld [vmem:[%s1 + $0xf0] sm:$0xf]
    %v86 = vld [vmem:[%s1 + $0xf4] sm:$0xf]
    %v87 = vld [vmem:[%s1 + $0xf8] sm:$0xf]
    %v88 = vld [vmem:[%s1 + $0xfc] sm:$0xf]
    %v89 = vld [vmem:[%s1 + $0x100] sm:$0xf]
    %v90 = vld [vmem:[%s1 + $0x104] sm:$0xf]
    %v91 = vld [vmem:[%s1 + $0x108] sm:$0xf]
    %v92 = vld [vmem:[%s1 + $0x10c] sm:$0xf]
    %v93 = vld [vmem:[%s1 + $0x110] sm:$0xf]
    %v94 = vld [vmem:[%s1 + $0x114] sm:$0xf]
    %v95 = vld [vmem:[%s1 + $0x118] sm:$0xf]
    %v96 = vld [vmem:[%s1 + $0x11c] sm:$0xf]
    %v97 = vld [vmem:[%s1 + $0x120] sm:$0xf]
    %v98 = vld [vmem:[%s1 + $0x124] sm:$0xf]
    %v99 = vld [vmem:[%s1 + $0x128] sm:$0xf]
    %v100 = vld [vmem:[%s1 + $0x12c] sm:$0xf]
    %v101 = vld [vmem:[%s1 + $0x130] sm:$0xf]
    %v102 = vld [vmem:[%s1 + $0x134] sm:$0xf]
    %v103 = vld [vmem:[%s1 + $0x138] sm:$0xf]
    %v104 = vld [vmem:[%s1 + $0x13c] sm:$0xf]
    %v105 = vld [vmem:[%s1 + $0x140] sm:$0xf]
    %v106 = vld [vmem:[%s1 + $0x144] sm:$0xf]
    %v107 = vld [vmem:[%s1 + $0x148] sm:$0xf]
    %v108 = vld [vmem:[%s1 + $0x14c] sm:$0xf]
    %v109 = vld [vmem:[%s1 + $0x150] sm:$0xf]
    %v110 = vld [vmem:[%s1 + $0x154] sm:$0xf]
    %v111 = vld [vmem:[%s1 + $0x158] sm:$0xf]
    %v112 = vld [vmem:[%s1 + $0x15c] sm:$0xf]
    %v113 = vld [vmem:[%s1 + $0x160] sm:$0xf]
    %v114 = vld [vmem:[%s1 + $0x164] sm:$0xf]
    %v115 = vld [vmem:[%s1 + $0x168] sm:$0xf]
    %v116 = vld [vmem:[%s1 + $0x16c] sm:$0xf]
    %v117 = vld [vmem:[%s1 + $0x170] sm:$0xf]
    %v118 = vld [vmem:[%s1 + $0x174] sm:$0xf]
    %v119 = vld [vmem:[%s1 + $0x178] sm:$0xf]
    %v120 = vld [vmem:[%s1 + $0x17c] sm:$0xf]
    %v121 = vld [vmem:[%s1 + $0x180] sm:$0xf]
    %v122 = vld [vmem:[%s1 + $0x184] sm:$0xf]
    %v123 = vld [vmem:[%s1 + $0x188] sm:$0xf]
    %v124 = vld [vmem:[%s1 + $0x18c] sm:$0xf]
    %v125 = vld [vmem:[%s1 + $0x190] sm:$0xf]
    %v126 = vld [vmem:[%s1 + $0x194] sm:$0xf]
    %v127 = vld [vmem:[%s1 + $0x198] sm:$0xf]
    %v128 = vld [vmem:[%s1 + $0x19c] sm:$0xf]
    %v129 = vld [vmem:[%s1 + $0x1a0] sm:$0xf]
    %v130 = vld [vmem:[%s1 + $0x1a4] sm:$0xf]
    %v131 = vld [vmem:[%s1 + $0x1a8] sm:$0xf]
    %v132 = vld [vmem:[%s1 + $0x1ac] sm:$0xf]
    %v133 = vld [vmem:[%s1 + $0x1b0] sm:$0xf]
    %v134 = vld [vmem:[%s1 + $0x1b4] sm:$0xf]
    %v135 = vld [vmem:[%s1 + $0x1b8] sm:$0xf]
    %v136 = vld [vmem:[%s1 + $0x1bc] sm:$0xf]
    %v137 = vld [vmem:[%s1 + $0x1c0] sm:$0xf]
    %v138 = vld [vmem:[%s1 + $0x1c4] sm:$0xf]
    %v139 = vld [vmem:[%s1 + $0x1c8] sm:$0xf]
    %v140 = vld [vmem:[%s1 + $0x1cc] sm:$0xf]
    %v141 = vld [vmem:[%s1 + $0x1d0] sm:$0xf]
    %v142 = vld [vmem:[%s1 + $0x1d4] sm:$0xf]
    %v143 = vld [vmem:[%s1 + $0x1d8] sm:$0xf]
    %v144 = vld [vmem:[%s1 + $0x1dc] sm:$0xf]
    %v145 = vld [vmem:[%s1 + $0x1e0] sm:$0xf]
    %v146 = vld [vmem:[%s1 + $0x1e4] sm:$0xf]
    %v147 = vld [vmem:[%s1 + $0x1e8] sm:$0xf]
    %v148 = vld [vmem:[%s1 + $0x1ec] sm:$0xf]
    %v149 = vld [vmem:[%s1 + $0x1f0] sm:$0xf]
    %v150 = vld [vmem:[%s1 + $0x1f4] sm:$0xf]
    %v151 = vld [vmem:[%s1 + $0x1f8] sm:$0xf]
    %v152 = vld [vmem:[%s1 + $0x1fc] sm:$0xf]
    %v153 = vld [vmem:[%s1 + $0x200] sm:$0xf]
    %v154 = vld [vmem:[%s1 + $0x204] sm:$0xf]
    %v155 = vld [vmem:[%s1 + $0x208] sm:$0xf]
    %v156 = vld [vmem:[%s1 + $0x20c] sm:$0xf]
    %v157 = vld [vmem:[%s1 + $0x210] sm:$0xf]
    %v158 = vld [vmem:[%s1 + $0x214] sm:$0xf]
    %v159 = vld [vmem:[%s1 + $0x218] sm:$0xf]
    %v160 = vld [vmem:[%s1 + $0x21c] sm:$0xf]
    %v161 = vld [vmem:[%s1 + $0x220] sm:$0xf]
    %v162 = vld [vmem:[%s1 + $0x224] sm:$0xf]
    %v163 = vld [vmem:[%s1 + $0x228] sm:$0xf]
    %v164 = vld [vmem:[%s1 + $0x22c] sm:$0xf]
    %v165 = vld [vmem:[%s1 + $0x230] sm:$0xf]
    %v166 = vld [vmem:[%s1 + $0x234] sm:$0xf]
    %v167 = vld [vmem:[%s1 + $0x238] sm:$0xf]
    %v168 = vld [vmem:[%s1 + $0x23c] sm:$0xf]
    %v169 = vld [vmem:[%s1 + $0x240] sm:$0xf]
    %v170 = vld [vmem:[%s1 + $0x244] sm:$0xf]
    %v171 = vld [vmem:[%s1 + $0x248] sm:$0xf]
    %v172 = vld [vmem:[%s1 + $0x24c] sm:$0xf]
    %v173 = vld [vmem:[%s1 + $0x250] sm:$0xf]
    %v174 = vld [vmem:[%s1 + $0x254] sm:$0xf]
    %v175 = vld [vmem:[%s1 + $0x258] sm:$0xf]
    %v176 = vld [vmem:[%s1 + $0x25c] sm:$0xf]
    %v177 = vld [vmem:[%s1 + $0x260] sm:$0xf]
    %v178 = vld [vmem:[%s1 + $0x264] sm:$0xf]
    %v179 = vld [vmem:[%s1 + $0x268] sm:$0xf]
    %v180 = vld [vmem:[%s1 + $0x26c] sm:$0xf]
    %v181 = vld [vmem:[%s1 + $0x270] sm:$0xf]
    %v182 = vld [vmem:[%s1 + $0x274] sm:$0xf]
    %v183 = vld [vmem:[%s1 + $0x278] sm:$0xf]
    %v184 = vld [vmem:[%s1 + $0x27c] sm:$0xf]
    %v185 = vld [vmem:[%s1 + $0x280] sm:$0xf]
    %v186 = vld [vmem:[%s1 + $0x284] sm:$0xf]
    %v187 = vld [vmem:[%s1 + $0x288] sm:$0xf]
    %v188 = vld [vmem:[%s1 + $0x28c] sm:$0xf]
    %v189 = vld [vmem:[%s1 + $0x290] sm:$0xf]
    %v190 = vld [vmem:[%s1 + $0x294] sm:$0xf]
    %v191 = vld [vmem:[%s1 + $0x298] sm:$0xf]
    %v192 = vld [vmem:[%s1 + $0x29c] sm:$0xf]
    %v193 = vld [vmem:[%s1 + $0x2a0] sm:$0xf]
    %v194 = vld [vmem:[%s1 + $0x2a4] sm:$0xf]
    %v195 = vld [vmem:[%s1 + $0x2a8] sm:$0xf]
    %v196 = vld [vmem:[%s1 + $0x2ac] sm:$0xf]
    %v197 = vld [vmem:[%s1 + $0x2b0] sm:$0xf]
    %v198 = vld [vmem:[%s1 + $0x2b4] sm:$0xf]
    %v199 = vld [vmem:[%s1 + $0x2b8] sm:$0xf]
    %v200 = vld [vmem:[%s1 + $0x2bc] sm:$0xf]
    %v201 = vld [vmem:[%s1 + $0x2c0] sm:$0xf]
    %v202 = vld [vmem:[%s1 + $0x2c4] sm:$0xf]
    %v203 = vld [vmem:[%s1 + $0x2c8] sm:$0xf]
    %v204 = vld [vmem:[%s1 + $0x2cc] sm:$0xf]
    %v205 = vld [vmem:[%s1 + $0x2d0] sm:$0xf]
    %v206 = vld [vmem:[%s1 + $0x2d4] sm:$0xf]
    %v207 = vld [vmem:[%s1 + $0x2d8] sm:$0xf]
    %v208 = vld [vmem:[%s1 + $0x2dc] sm:$0xf]
    %v209 = vld [vmem:[%s1 + $0x2e0] sm:$0xf]
    %v210 = vld [vmem:[%s1 + $0x2e4] sm:$0xf]
    %v211 = vld [vmem:[%s1 + $0x2e8] sm:$0xf]
    %v212 = vld [vmem:[%s1 + $0x2ec] sm:$0xf]
    %v213 = vld [vmem:[%s1 + $0x2f0] sm:$0xf]
    %v214 = vld [vmem:[%s1 + $0x2f4] sm:$0xf]
    %v215 = vld [vmem:[%s1 + $0x2f8] sm:$0xf]
    %v216 = vld [vmem:[%s1 + $0x2fc] sm:$0xf]
    %v217 = vld [vmem:[%s1 + $0x300] sm:$0xf]
    %v218 = vld [vmem:[%s1 + $0x304] sm:$0xf]
    %v219 = vld [vmem:[%s1 + $0x308] sm:$0xf]
    %v220 = vld [vmem:[%s1 + $0x30c] sm:$0xf]
    %v221 = vld [vmem:[%s1 + $0x310] sm:$0xf]
    %v222 = vld [vmem:[%s1 + $0x314] sm:$0xf]
    %v223 = vld [vmem:[%s1 + $0x318] sm:$0xf]
    %v224 = vld [vmem:[%s1 + $0x31c] sm:$0xf]
    %v225 = vld [vmem:[%s1 + $0x320] sm:$0xf]
    %v226 = vld [vmem:[%s1 + $0x324] sm:$0xf]
    %v227 = vld [vmem:[%s1 + $0x328] sm:$0xf]
    %v228 = vld [vmem:[%s1 + $0x32c] sm:$0xf]
    %v229 = vld [vmem:[%s1 + $0x330] sm:$0xf]
    %v230 = vld [vmem:[%s1 + $0x334] sm:$0xf]
    %v231 = vld [vmem:[%s1 + $0x338] sm:$0xf]
    %v232 = vld [vmem:[%s1 + $0x33c] sm:$0xf]
    %v233 = vld [vmem:[%s1 + $0x340] sm:$0xf]
    %v234 = vld [vmem:[%s1 + $0x344] sm:$0xf]
    %v235 = vld [vmem:[%s1 + $0x348] sm:$0xf]
    %v236 = vld [vmem:[%s1 + $0x34c] sm:$0xf]
    %v237 = vld [vmem:[%s1 + $0x350] sm:$0xf]
    %v238 = vld [vmem:[%s1 + $0x354] sm:$0xf]
    %v239 = vld [vmem:[%s1 + $0x358] sm:$0xf]
    %v240 = vld [vmem:[%s1 + $0x35c] sm:$0xf]
    %v241 = vld [vmem:[%s1 + $0x360] sm:$0xf]
    %v242 = vld [vmem:[%s1 + $0x364] sm:$0xf]
    %v243 = vld [vmem:[%s1 + $0x368] sm:$0xf]
    %v244 = vld [vmem:[%s1 + $0x36c] sm:$0xf]
    %v245 = vld [vmem:[%s1 + $0x370] sm:$0xf]
    %v246 = vld [vmem:[%s1 + $0x374] sm:$0xf]
    %v247 = vld [vmem:[%s1 + $0x378] sm:$0xf]
    %v248 = vld [vmem:[%s1 + $0x37c] sm:$0xf]
    %v249 = vld [vmem:[%s1 + $0x380] sm:$0xf]
    %v250 = vld [vmem:[%s1 + $0x384] sm:$0xf]
    %v251 = vld [vmem:[%s1 + $0x388] sm:$0xf]
    %v252 = vld [vmem:[%s1 + $0x38c] sm:$0xf]
    %v253 = vld [vmem:[%s1 + $0x390] sm:$0xf]
    %v254 = vld [vmem:[%s1 + $0x394] sm:$0xf]
    %v255 = vld [vmem:[%s1 + $0x398] sm:$0xf]
    %v256 = vld [vmem:[%s1 + $0x39c] sm:$0xf]
    %v257 = vld [vmem:[%s1 + $0x3a0] sm:$0xf]
    %v258 = vld [vmem:[%s1 + $0x3a4] sm:$0xf]
    %v259 = vld [vmem:[%s1 + $0x3a8] sm:$0xf]
    %v260 = vld [vmem:[%s1 + $0x3ac] sm:$0xf]
    %v261 = vld [vmem:[%s1 + $0x3b0] sm:$0xf]
    %v262 = vld [vmem:[%s1 + $0x3b4] sm:$0xf]
    %v263 = vld [vmem:[%s1 + $0x3b8] sm:$0xf]
    %v264 = vld [vmem:[%s1 + $0x3bc] sm:$0xf]
    %v265 = vld [vmem:[%s1 + $0x3c0] sm:$0xf]
    %v266 = vld [vmem:[%s1 + $0x3c4] sm:$0xf]
    %v267 = vld [vmem:[%s1 + $0x3c8] sm:$0xf]
    %v268 = vld [vmem:[%s1 + $0x3cc] sm:$0xf]
    %v269 = vld [vmem:[%s1 + $0x3d0] sm:$0xf]
    %v270 = vld [vmem:[%s1 + $0x3d4] sm:$0xf]
    %v271 = vld [vmem:[%s1 + $0x3d8] sm:$0xf]
    %v272 = vld [vmem:[%s1 + $0x3dc] sm:$0xf]
    %v273 = vld [vmem:[%s1 + $0x3e0] sm:$0xf]
    %v274 = vld [vmem:[%s1 + $0x3e4] sm:$0xf]
    %v275 = vld [vmem:[%s1 + $0x3e8] sm:$0xf]
    %v276 = vld [vmem:[%s1 + $0x3ec] sm:$0xf]
    %v277 = vld [vmem:[%s1 + $0x3f0] sm:$0xf]
    %v278 = vld [vmem:[%s1 + $0x3f4] sm:$0xf]
    %v279 = vld [vmem:[%s1 + $0x3f8] sm:$0xf]
    %v280 = vld [vmem:[%s1 + $0x3fc] sm:$0xf]
    %v281 = vld [vmem:[%s1 + $0x400] sm:$0xf]
    %v282 = vld [vmem:[%s1 + $0x404] sm:$0xf]
    %v283 = vld [vmem:[%s1 + $0x408] sm:$0xf]
    %v284 = vld [vmem:[%s1 + $0x40c] sm:$0xf]
    %v285 = vld [vmem:[%s1 + $0x410] sm:$0xf]
    %v286 = vld [vmem:[%s1 + $0x414] sm:$0xf]
    %v287 = vld [vmem:[%s1 + $0x418] sm:$0xf]
    %v288 = vld [vmem:[%s1 + $0x41c] sm:$0xf]
    %v289 = vld [vmem:[%s1 + $0x420] sm:$0xf]
    %v290 = vld [vmem:[%s1 + $0x424] sm:$0xf]
    %v291 = vld [vmem:[%s1 + $0x428] sm:$0xf]
    %v292 = vld [vmem:[%s1 + $0x42c] sm:$0xf]
    %v293 = vld [vmem:[%s1 + $0x430] sm:$0xf]
    %v294 = vld [vmem:[%s1 + $0x434] sm:$0xf]
    %v295 = vld [vmem:[%s1 + $0x438] sm:$0xf]
    %v296 = vld [vmem:[%s1 + $0x43c] sm:$0xf]
    %v297 = vld [vmem:[%s1 + $0x440] sm:$0xf]
    %v298 = vld [vmem:[%s1 + $0x444] sm:$0xf]
    %v299 = vld [vmem:[%s1 + $0x448] sm:$0xf]
    %v300 = vld [vmem:[%s1 + $0x44c] sm:$0xf]
    %v301 = vld [vmem:[%s1 + $0x450] sm:$0xf]
    %v302 = vld [vmem:[%s1 + $0x454] sm:$0xf]
    %v303 = vld [vmem:[%s1 + $0x458] sm:$0xf]
    %v304 = vld [vmem:[%s1 + $0x45c] sm:$0xf]
    %v305 = vld [vmem:[%s1 + $0x460] sm:$0xf]
    %v306 = vld [vmem:[%s1 + $0x464] sm:$0xf]
    %v307 = vld [vmem:[%s1 + $0x468] sm:$0xf]
    %v308 = vld [vmem:[%s1 + $0x46c] sm:$0xf]
    %v309 = vld [vmem:[%s1 + $0x470] sm:$0xf]
    %v310 = vld [vmem:[%s1 + $0x474] sm:$0xf]
    %v311 = vld [vmem:[%s1 + $0x478] sm:$0xf]
    %v312 = vld [vmem:[%s1 + $0x47c] sm:$0xf]
    %v313 = vld [vmem:[%s1 + $0x480] sm:$0xf]
    %v314 = vld [vmem:[%s1 + $0x484] sm:$0xf]
    %v315 = vld [vmem:[%s1 + $0x488] sm:$0xf]
    %v316 = vld [vmem:[%s1 + $0x48c] sm:$0xf]
    %v317 = vld [vmem:[%s1 + $0x490] sm:$0xf]
    %v318 = vld [vmem:[%s1 + $0x494] sm:$0xf]
    %v319 = vld [vmem:[%s1 + $0x498] sm:$0xf]
    %v320 = vld [vmem:[%s1 + $0x49c] sm:$0xf]
    %v321 = vld [vmem:[%s1 + $0x4a0] sm:$0xf]
    %v322 = vld [vmem:[%s1 + $0x4a4] sm:$0xf]
    %v323 = vld [vmem:[%s1 + $0x4a8] sm:$0xf]
    %v324 = vld [vmem:[%s1 + $0x4ac] sm:$0xf]
    %v325 = vld [vmem:[%s1 + $0x4b0] sm:$0xf]
    %v326 = vld [vmem:[%s1 + $0x4b4] sm:$0xf]
    %v327 = vld [vmem:[%s1 + $0x4b8] sm:$0xf]
    %v328 = vld [vmem:[%s1 + $0x4bc] sm:$0xf]
    %v329 = vld [vmem:[%s1 + $0x4c0] sm:$0xf]
    %v330 = vld [vmem:[%s1 + $0x4c4] sm:$0xf]
    %v331 = vld [vmem:[%s1 + $0x4c8] sm:$0xf]
    %v332 = vld [vmem:[%s1 + $0x4cc] sm:$0xf]
    %v333 = vld [vmem:[%s1 + $0x4d0] sm:$0xf]
    %v334 = vld [vmem:[%s1 + $0x4d4] sm:$0xf]
    %v335 = vld [vmem:[%s1 + $0x4d8] sm:$0xf]
    %v336 = vld [vmem:[%s1 + $0x4dc] sm:$0xf]
    %v337 = vld [vmem:[%s1 + $0x4e0] sm:$0xf]
    %v338 = vld [vmem:[%s1 + $0x4e4] sm:$0xf]
    %v339 = vld [vmem:[%s1 + $0x4e8] sm:$0xf]
    %v340 = vld [vmem:[%s1 + $0x4ec] sm:$0xf]
    %v341 = vld [vmem:[%s1 + $0x4f0] sm:$0xf]
    %v342 = vld [vmem:[%s1 + $0x4f4] sm:$0xf]
    %v343 = vld [vmem:[%s1 + $0x4f8] sm:$0xf]
    %v344 = vld [vmem:[%s1 + $0x4fc] sm:$0xf]
    %v345 = vld [vmem:[%s1 + $0x500] sm:$0xf]
    %v346 = vld [vmem:[%s1 + $0x504] sm:$0xf]
    %v347 = vld [vmem:[%s1 + $0x508] sm:$0xf]
    %v348 = vld [vmem:[%s1 + $0x50c] sm:$0xf]
    %v349 = vld [vmem:[%s1 + $0x510] sm:$0xf]
    %v350 = vld [vmem:[%s1 + $0x514] sm:$0xf]
    %v351 = vld [vmem:[%s1 + $0x518] sm:$0xf]
    %v352 = vld [vmem:[%s1 + $0x51c] sm:$0xf]
    %v353 = vld [vmem:[%s1 + $0x520] sm:$0xf]
    %v354 = vld [vmem:[%s1 + $0x524] sm:$0xf]
    %v355 = vld [vmem:[%s1 + $0x528] sm:$0xf]
    %v356 = vld [vmem:[%s1 + $0x52c] sm:$0xf]
    %v357 = vld [vmem:[%s1 + $0x530] sm:$0xf]
    %v358 = vld [vmem:[%s1 + $0x534] sm:$0xf]
    %v359 = vld [vmem:[%s1 + $0x538] sm:$0xf]
    %v360 = vld [vmem:[%s1 + $0x53c] sm:$0xf]
    %v361 = vld [vmem:[%s1 + $0x540] sm:$0xf]
    %v362 = vld [vmem:[%s1 + $0x544] sm:$0xf]
    %v363 = vld [vmem:[%s1 + $0x548] sm:$0xf]
    %v364 = vld [vmem:[%s1 + $0x54c] sm:$0xf]
    %v365 = vld [vmem:[%s1 + $0x550] sm:$0xf]
    %v366 = vld [vmem:[%s1 + $0x554] sm:$0xf]
    %v367 = vld [vmem:[%s1 + $0x558] sm:$0xf]
    %v368 = vld [vmem:[%s1 + $0x55c] sm:$0xf]
    %v369 = vld [vmem:[%s1 + $0x560] sm:$0xf]
    %v370 = vld [vmem:[%s1 + $0x564] sm:$0xf]
    %v371 = vld [vmem:[%s1 + $0x568] sm:$0xf]
    %v372 = vld [vmem:[%s1 + $0x56c] sm:$0xf]
    %v373 = vld [vmem:[%s1 + $0x570] sm:$0xf]
    %v374 = vld [vmem:[%s1 + $0x574] sm:$0xf]
    %v375 = vld [vmem:[%s1 + $0x578] sm:$0xf]
    %v376 = vld [vmem:[%s1 + $0x57c] sm:$0xf]
    %v377 = vld [vmem:[%s1 + $0x580] sm:$0xf]
    %v378 = vld [vmem:[%s1 + $0x584] sm:$0xf]
    %v379 = vld [vmem:[%s1 + $0x588] sm:$0xf]
    %v380 = vld [vmem:[%s1 + $0x58c] sm:$0xf]
    %v381 = vld [vmem:[%s1 + $0x590] sm:$0xf]
    %v382 = vld [vmem:[%s1 + $0x594] sm:$0xf]
    %v383 = vld [vmem:[%s1 + $0x598] sm:$0xf]
    %v384 = vld [vmem:[%s1 + $0x59c] sm:$0xf]
    %v385 = vld [vmem:[%s1 + $0x5a0] sm:$0xf]
    %v386 = vld [vmem:[%s1 + $0x5a4] sm:$0xf]
    %v387 = vld [vmem:[%s1 + $0x5a8] sm:$0xf]
    %v388 = vld [vmem:[%s1 + $0x5ac] sm:$0xf]
    %v389 = vld [vmem:[%s1 + $0x5b0] sm:$0xf]
    %v390 = vld [vmem:[%s1 + $0x5b4] sm:$0xf]
    %v391 = vld [vmem:[%s1 + $0x5b8] sm:$0xf]
    %v392 = vld [vmem:[%s1 + $0x5bc] sm:$0xf]
    %v393 = vld [vmem:[%s1 + $0x5c0] sm:$0xf]
    %v394 = vld [vmem:[%s1 + $0x5c4] sm:$0xf]
    %v395 = vld [vmem:[%s1 + $0x5c8] sm:$0xf]
    %v396 = vld [vmem:[%s1 + $0x5cc] sm:$0xf]
    %v397 = vld [vmem:[%s1 + $0x5d0] sm:$0xf]
    %v398 = vld [vmem:[%s1 + $0x5d4] sm:$0xf]
    %v399 = vld [vmem:[%s1 + $0x5d8] sm:$0xf]
    %v400 = vld [vmem:[%s1 + $0x5dc] sm:$0xf]
    %v401 = vld [vmem:[%s1 + $0x5e0] sm:$0xf]
    %v402 = vld [vmem:[%s1 + $0x5e4] sm:$0xf]
    %v403 = vld [vmem:[%s1 + $0x5e8] sm:$0xf]
    %v404 = vld [vmem:[%s1 + $0x5ec] sm:$0xf]
    %v405 = vld [vmem:[%s1 + $0x5f0] sm:$0xf]
    %v406 = vld [vmem:[%s1 + $0x5f4] sm:$0xf]
    %v407 = vld [vmem:[%s1 + $0x5f8] sm:$0xf]
    %v408 = vld [vmem:[%s1 + $0x5fc] sm:$0xf]
    %v409 = vld [vmem:[%s1 + $0x600] sm:$0xf]
    %v410 = vld [vmem:[%s1 + $0x604] sm:$0xf]
    %v411 = vld [vmem:[%s1 + $0x608] sm:$0xf]
    %v412 = vld [vmem:[%s1 + $0x60c] sm:$0xf]
    %v413 = vld [vmem:[%s1 + $0x610] sm:$0xf]
    %v414 = vld [vmem:[%s1 + $0x614] sm:$0xf]
    %v415 = vld [vmem:[%s1 + $0x618] sm:$0xf]
    %v416 = vld [vmem:[%s1 + $0x61c] sm:$0xf]
    %v417 = vld [vmem:[%s1 + $0x620] sm:$0xf]
    %v418 = vld [vmem:[%s1 + $0x624] sm:$0xf]
    %v419 = vld [vmem:[%s1 + $0x628] sm:$0xf]
    %v420 = vld [vmem:[%s1 + $0x62c] sm:$0xf]
    %v421 = vld [vmem:[%s1 + $0x630] sm:$0xf]
    %v422 = vld [vmem:[%s1 + $0x634] sm:$0xf]
    %v423 = vld [vmem:[%s1 + $0x638] sm:$0xf]
    %v424 = vld [vmem:[%s1 + $0x63c] sm:$0xf]
    %v425 = vld [vmem:[%s1 + $0x640] sm:$0xf]
    %v426 = vld [vmem:[%s1 + $0x644] sm:$0xf]
    %v427 = vld [vmem:[%s1 + $0x648] sm:$0xf]
    %v428 = vld [vmem:[%s1 + $0x64c] sm:$0xf]
    %v429 = vld [vmem:[%s1 + $0x650] sm:$0xf]
    %v430 = vld [vmem:[%s1 + $0x654] sm:$0xf]
    %v431 = vld [vmem:[%s1 + $0x658] sm:$0xf]
    %v432 = vld [vmem:[%s1 + $0x65c] sm:$0xf]
    %v433 = vld [vmem:[%s1 + $0x660] sm:$0xf]
    %v434 = vld [vmem:[%s1 + $0x664] sm:$0xf]
    %v435 = vld [vmem:[%s1 + $0x668] sm:$0xf]
    %v436 = vld [vmem:[%s1 + $0x66c] sm:$0xf]
    %v437 = vld [vmem:[%s1 + $0x670] sm:$0xf]
    %v438 = vld [vmem:[%s1 + $0x674] sm:$0xf]
    %v439 = vld [vmem:[%s1 + $0x678] sm:$0xf]
    %v440 = vld [vmem:[%s1 + $0x67c] sm:$0xf]
    %v441 = vld [vmem:[%s1 + $0x680] sm:$0xf]
    %v442 = vld [vmem:[%s1 + $0x684] sm:$0xf]
    %v443 = vld [vmem:[%s1 + $0x688] sm:$0xf]
    %v444 = vld [vmem:[%s1 + $0x68c] sm:$0xf]
    %v445 = vld [vmem:[%s1 + $0x690] sm:$0xf]
    %v446 = vld [vmem:[%s1 + $0x694] sm:$0xf]
    %v447 = vld [vmem:[%s1 + $0x698] sm:$0xf]
    %v448 = vld [vmem:[%s1 + $0x69c] sm:$0xf]
    %v449 = vld [vmem:[%s1 + $0x6a0] sm:$0xf]
    %v450 = vld [vmem:[%s1 + $0x6a4] sm:$0xf]
    %v451 = vld [vmem:[%s1 + $0x6a8] sm:$0xf]
    %v452 = vld [vmem:[%s1 + $0x6ac] sm:$0xf]
    %v453 = vld [vmem:[%s1 + $0x6b0] sm:$0xf]
    %v454 = vld [vmem:[%s1 + $0x6b4] sm:$0xf]
    %v455 = vld [vmem:[%s1 + $0x6b8] sm:$0xf]
    %v456 = vld [vmem:[%s1 + $0x6bc] sm:$0xf]
    %v457 = vld [vmem:[%s1 + $0x6c0] sm:$0xf]
    %v458 = vld [vmem:[%s1 + $0x6c4] sm:$0xf]
    %v459 = vld [vmem:[%s1 + $0x6c8] sm:$0xf]
    %v460 = vld [vmem:[%s1 + $0x6cc] sm:$0xf]
    %v461 = vld [vmem:[%s1 + $0x6d0] sm:$0xf]
    %v462 = vld [vmem:[%s1 + $0x6d4] sm:$0xf]
    %v463 = vld [vmem:[%s1 + $0x6d8] sm:$0xf]
    %v464 = vld [vmem:[%s1 + $0x6dc] sm:$0xf]
    %v465 = vld [vmem:[%s1 + $0x6e0] sm:$0xf]
    %v466 = vld [vmem:[%s1 + $0x6e4] sm:$0xf]
    %v467 = vld [vmem:[%s1 + $0x6e8] sm:$0xf]
    %v468 = vld [vmem:[%s1 + $0x6ec] sm:$0xf]
    %v469 = vld [vmem:[%s1 + $0x6f0] sm:$0xf]
    %v470 = vld [vmem:[%s1 + $0x6f4] sm:$0xf]
    %v471 = vld [vmem:[%s1 + $0x6f8] sm:$0xf]
    %v472 = vld [vmem:[%s1 + $0x6fc] sm:$0xf]
    %v473 = vld [vmem:[%s1 + $0x700] sm:$0xf]
    %v474 = vld [vmem:[%s1 + $0x704] sm:$0xf]
    %v475 = vld [vmem:[%s1 + $0x708] sm:$0xf]
    %v476 = vld [vmem:[%s1 + $0x70c] sm:$0xf]
    %v477 = vld [vmem:[%s1 + $0x710] sm:$0xf]
    %v478 = vld [vmem:[%s1 + $0x714] sm:$0xf]
    %v479 = vld [vmem:[%s1 + $0x718] sm:$0xf]
    %v480 = vld [vmem:[%s1 + $0x71c] sm:$0xf]
    %v481 = vld [vmem:[%s1 + $0x720] sm:$0xf]
    %v482 = vld [vmem:[%s1 + $0x724] sm:$0xf]
    %v483 = vld [vmem:[%s1 + $0x728] sm:$0xf]
    %v484 = vld [vmem:[%s1 + $0x72c] sm:$0xf]
    %v485 = vld [vmem:[%s1 + $0x730] sm:$0xf]
    %v486 = vld [vmem:[%s1 + $0x734] sm:$0xf]
    %v487 = vld [vmem:[%s1 + $0x738] sm:$0xf]
    %v488 = vld [vmem:[%s1 + $0x73c] sm:$0xf]
    %v489 = vld [vmem:[%s1 + $0x740] sm:$0xf]
    %v490 = vld [vmem:[%s1 + $0x744] sm:$0xf]
    %v491 = vld [vmem:[%s1 + $0x748] sm:$0xf]
    %v492 = vld [vmem:[%s1 + $0x74c] sm:$0xf]
    %v493 = vld [vmem:[%s1 + $0x750] sm:$0xf]
    %v494 = vld [vmem:[%s1 + $0x754] sm:$0xf]
    %v495 = vld [vmem:[%s1 + $0x758] sm:$0xf]
    %v496 = vld [vmem:[%s1 + $0x75c] sm:$0xf]
    %v497 = vld [vmem:[%s1 + $0x760] sm:$0xf]
    %v498 = vld [vmem:[%s1 + $0x764] sm:$0xf]
    %v499 = vld [vmem:[%s1 + $0x768] sm:$0xf]
    %v500 = vld [vmem:[%s1 + $0x76c] sm:$0xf]
    %v501 = vld [vmem:[%s1 + $0x770] sm:$0xf]
    %v502 = vld [vmem:[%s1 + $0x774] sm:$0xf]
    %v503 = vld [vmem:[%s1 + $0x778] sm:$0xf]
    %v504 = vld [vmem:[%s1 + $0x77c] sm:$0xf]
    %v505 = vld [vmem:[%s1 + $0x780] sm:$0xf]
    %v506 = vld [vmem:[%s1 + $0x784] sm:$0xf]
    %v507 = vld [vmem:[%s1 + $0x788] sm:$0xf]
    %v508 = vld [vmem:[%s1 + $0x78c] sm:$0xf]
    %v509 = vld [vmem:[%s1 + $0x790] sm:$0xf]
    %v510 = vld [vmem:[%s1 + $0x794] sm:$0xf]
    %v511 = vld [vmem:[%s1 + $0x798] sm:$0xf]
    %v512 = vld [vmem:[%s1 + $0x79c] sm:$0xf]
    %v513 = vld [vmem:[%s1 + $0x7a0] sm:$0xf]
    %v514 = vld [vmem:[%s1 + $0x7a4] sm:$0xf]
    %v515 = vld [vmem:[%s1 + $0x7a8] sm:$0xf]
    %v516 = vld [vmem:[%s1 + $0x7ac] sm:$0xf]
    %v517 = vld [vmem:[%s1 + $0x7b0] sm:$0xf]
    %v518 = vld [vmem:[%s1 + $0x7b4] sm:$0xf]
    %v519 = vld [vmem:[%s1 + $0x7b8] sm:$0xf]
    %v520 = vld [vmem:[%s1 + $0x7bc] sm:$0xf]
    %v521 = vld [vmem:[%s1 + $0x7c0] sm:$0xf]
    %v522 = vld [vmem:[%s1 + $0x7c4] sm:$0xf]
    %v523 = vld [vmem:[%s1 + $0x7c8] sm:$0xf]
    %v524 = vld [vmem:[%s1 + $0x7cc] sm:$0xf]
    %v525 = vld [vmem:[%s1 + $0x7d0] sm:$0xf]
    %v526 = vld [vmem:[%s1 + $0x7d4] sm:$0xf]
    %v527 = vld [vmem:[%s1 + $0x7d8] sm:$0xf]
    %v528 = vld [vmem:[%s1 + $0x7dc] sm:$0xf]
    %v529 = vld [vmem:[%s1 + $0x7e0] sm:$0xf]
    %v530 = vld [vmem:[%s1 + $0x7e4] sm:$0xf]
    %v531 = vld [vmem:[%s1 + $0x7e8] sm:$0xf]
    %v532 = vld [vmem:[%s1 + $0x7ec] sm:$0xf]
    %v533 = vld [vmem:[%s1 + $0x7f0] sm:$0xf]
    %v534 = vld [vmem:[%s1 + $0x7f4] sm:$0xf]
    %v535 = vld [vmem:[%s1 + $0x7f8] sm:$0xf]
    %v536 = vld [vmem:[%s1 + $0x7fc] sm:$0xf]
    %v537 = vld [vmem:[%s1 + $0x800] sm:$0xf]
    %v538 = vld [vmem:[%s1 + $0x804] sm:$0xf]
    %v539 = vld [vmem:[%s1 + $0x808] sm:$0xf]
    %v540 = vld [vmem:[%s1 + $0x80c] sm:$0xf]
    %v541 = vld [vmem:[%s1 + $0x810] sm:$0xf]
    %v542 = vld [vmem:[%s1 + $0x814] sm:$0xf]
    %v543 = vld [vmem:[%s1 + $0x818] sm:$0xf]
    %v544 = vld [vmem:[%s1 + $0x81c] sm:$0xf]
    %v545 = vld [vmem:[%s1 + $0x820] sm:$0xf]
    %v546 = vld [vmem:[%s1 + $0x824] sm:$0xf]
    %v547 = vld [vmem:[%s1 + $0x828] sm:$0xf]
    %v548 = vld [vmem:[%s1 + $0x82c] sm:$0xf]
    %v549 = vld [vmem:[%s1 + $0x830] sm:$0xf]
    %v550 = vld [vmem:[%s1 + $0x834] sm:$0xf]
    %v551 = vld [vmem:[%s1 + $0x838] sm:$0xf]
    %v552 = vld [vmem:[%s1 + $0x83c] sm:$0xf]
    %v553 = vld [vmem:[%s1 + $0x840] sm:$0xf]
    %v554 = vld [vmem:[%s1 + $0x844] sm:$0xf]
    %v555 = vld [vmem:[%s1 + $0x848] sm:$0xf]
    %v556 = vld [vmem:[%s1 + $0x84c] sm:$0xf]
    %v557 = vld [vmem:[%s1 + $0x850] sm:$0xf]
    %v558 = vld [vmem:[%s1 + $0x854] sm:$0xf]
    %v559 = vld [vmem:[%s1 + $0x858] sm:$0xf]
    %v560 = vld [vmem:[%s1 + $0x85c] sm:$0xf]
    %v561 = vld [vmem:[%s1 + $0x860] sm:$0xf]
    %v562 = vld [vmem:[%s1 + $0x864] sm:$0xf]
    %v563 = vld [vmem:[%s1 + $0x868] sm:$0xf]
    %v564 = vld [vmem:[%s1 + $0x86c] sm:$0xf]
    %v565 = vld [vmem:[%s1 + $0x870] sm:$0xf]
    %v566 = vld [vmem:[%s1 + $0x874] sm:$0xf]
    %v567 = vld [vmem:[%s1 + $0x878] sm:$0xf]
    %v568 = vld [vmem:[%s1 + $0x87c] sm:$0xf]
    %v569 = vld [vmem:[%s1 + $0x880] sm:$0xf]
    %v570 = vld [vmem:[%s1 + $0x884] sm:$0xf]
    %v571 = vld [vmem:[%s1 + $0x888] sm:$0xf]
    %v572 = vld [vmem:[%s1 + $0x88c] sm:$0xf]
    %v573 = vld [vmem:[%s1 + $0x890] sm:$0xf]
    %v574 = vld [vmem:[%s1 + $0x894] sm:$0xf]
    %v575 = vld [vmem:[%s1 + $0x898] sm:$0xf]
    %v576 = vld [vmem:[%s1 + $0x89c] sm:$0xf]
    %v577 = vld [vmem:[%s1 + $0x8a0] sm:$0xf]
    %v578 = vld [vmem:[%s1 + $0x8a4] sm:$0xf]
    %v579 = vld [vmem:[%s1 + $0x8a8] sm:$0xf]
    %v580 = vld [vmem:[%s1 + $0x8ac] sm:$0xf]
    %v581 = vld [vmem:[%s1 + $0x8b0] sm:$0xf]
    %v582 = vld [vmem:[%s1 + $0x8b4] sm:$0xf]
    %v583 = vld [vmem:[%s1 + $0x8b8] sm:$0xf]
    %v584 = vld [vmem:[%s1 + $0x8bc] sm:$0xf]
    %v585 = vld [vmem:[%s1 + $0x8c0] sm:$0xf]
    %v586 = vld [vmem:[%s1 + $0x8c4] sm:$0xf]
    %v587 = vld [vmem:[%s1 + $0x8c8] sm:$0xf]
    %v588 = vld [vmem:[%s1 + $0x8cc] sm:$0xf]
    %v589 = vld [vmem:[%s1 + $0x8d0] sm:$0xf]
    %v590 = vld [vmem:[%s1 + $0x8d4] sm:$0xf]
    %v591 = vld [vmem:[%s1 + $0x8d8] sm:$0xf]
    %v592 = vld [vmem:[%s1 + $0x8dc] sm:$0xf]
    %v593 = vld [vmem:[%s1 + $0x8e0] sm:$0xf]
    %v594 = vld [vmem:[%s1 + $0x8e4] sm:$0xf]
    %v595 = vld [vmem:[%s1 + $0x8e8] sm:$0xf]
    %v596 = vld [vmem:[%s1 + $0x8ec] sm:$0xf]
    %v597 = vld [vmem:[%s1 + $0x8f0] sm:$0xf]
    %v598 = vld [vmem:[%s1 + $0x8f4] sm:$0xf]
    %v599 = vld [vmem:[%s1 + $0x8f8] sm:$0xf]
    %v600 = vld [vmem:[%s1 + $0x8fc] sm:$0xf]
    %v601 = vld [vmem:[%s1 + $0x900] sm:$0xf]
    %v602 = vld [vmem:[%s1 + $0x904] sm:$0xf]
    %v603 = vld [vmem:[%s1 + $0x908] sm:$0xf]
    %v604 = vld [vmem:[%s1 + $0x90c] sm:$0xf]
    %v605 = vld [vmem:[%s1 + $0x910] sm:$0xf]
    %v606 = vld [vmem:[%s1 + $0x914] sm:$0xf]
    %v607 = vld [vmem:[%s1 + $0x918] sm:$0xf]
    %v608 = vld [vmem:[%s1 + $0x91c] sm:$0xf]
    %v609 = vld [vmem:[%s1 + $0x920] sm:$0xf]
    %v610 = vld [vmem:[%s1 + $0x924] sm:$0xf]
    %v611 = vld [vmem:[%s1 + $0x928] sm:$0xf]
    %v612 = vld [vmem:[%s1 + $0x92c] sm:$0xf]
    %v613 = vld [vmem:[%s1 + $0x930] sm:$0xf]
    %v614 = vld [vmem:[%s1 + $0x934] sm:$0xf]
    %v615 = vld [vmem:[%s1 + $0x938] sm:$0xf]
    %v616 = vld [vmem:[%s1 + $0x93c] sm:$0xf]
    %v617 = vld [vmem:[%s1 + $0x940] sm:$0xf]
    %v618 = vld [vmem:[%s1 + $0x944] sm:$0xf]
    %v619 = vld [vmem:[%s1 + $0x948] sm:$0xf]
    %v620 = vld [vmem:[%s1 + $0x94c] sm:$0xf]
    %v621 = vld [vmem:[%s1 + $0x950] sm:$0xf]
    %v622 = vld [vmem:[%s1 + $0x954] sm:$0xf]
    %v623 = vld [vmem:[%s1 + $0x958] sm:$0xf]
    %v624 = vld [vmem:[%s1 + $0x95c] sm:$0xf]
    %v625 = vld [vmem:[%s1 + $0x960] sm:$0xf]
    %v626 = vld [vmem:[%s1 + $0x964] sm:$0xf]
    %v627 = vld [vmem:[%s1 + $0x968] sm:$0xf]
    %v628 = vld [vmem:[%s1 + $0x96c] sm:$0xf]
    %v629 = vld [vmem:[%s1 + $0x970] sm:$0xf]
    %v630 = vld [vmem:[%s1 + $0x974] sm:$0xf]
    %v631 = vld [vmem:[%s1 + $0x978] sm:$0xf]
    %v632 = vld [vmem:[%s1 + $0x97c] sm:$0xf]
    %v633 = vld [vmem:[%s1 + $0x980] sm:$0xf]
    %v634 = vld [vmem:[%s1 + $0x984] sm:$0xf]
    %v635 = vld [vmem:[%s1 + $0x988] sm:$0xf]
    %v636 = vld [vmem:[%s1 + $0x98c] sm:$0xf]
    %v637 = vld [vmem:[%s1 + $0x990] sm:$0xf]
    %v638 = vld [vmem:[%s1 + $0x994] sm:$0xf]
    %v639 = vld [vmem:[%s1 + $0x998] sm:$0xf]
    %v640 = vld [vmem:[%s1 + $0x99c] sm:$0xf]
    %v641 = vld [vmem:[%s1 + $0x9a0] sm:$0xf]
    %v642 = vld [vmem:[%s1 + $0x9a4] sm:$0xf]
    %v643 = vld [vmem:[%s1 + $0x9a8] sm:$0xf]
    %v644 = vld [vmem:[%s1 + $0x9ac] sm:$0xf]
    %v645 = vld [vmem:[%s1 + $0x9b0] sm:$0xf]
    %v646 = vld [vmem:[%s1 + $0x9b4] sm:$0xf]
    %v647 = vld [vmem:[%s1 + $0x9b8] sm:$0xf]
    %v648 = vld [vmem:[%s1 + $0x9bc] sm:$0xf]
    %v649 = vld [vmem:[%s1 + $0x9c0] sm:$0xf]
    %v650 = vld [vmem:[%s1 + $0x9c4] sm:$0xf]
    %v651 = vld [vmem:[%s1 + $0x9c8] sm:$0xf]
    %v652 = vld [vmem:[%s1 + $0x9cc] sm:$0xf]
    %v653 = vld [vmem:[%s1 + $0x9d0] sm:$0xf]
    %v654 = vld [vmem:[%s1 + $0x9d4] sm:$0xf]
    %v655 = vld [vmem:[%s1 + $0x9d8] sm:$0xf]
    %v656 = vld [vmem:[%s1 + $0x9dc] sm:$0xf]
    %v657 = vld [vmem:[%s1 + $0x9e0] sm:$0xf]
    %v658 = vld [vmem:[%s1 + $0x9e4] sm:$0xf]
    %v659 = vld [vmem:[%s1 + $0x9e8] sm:$0xf]
    %v660 = vld [vmem:[%s1 + $0x9ec] sm:$0xf]
    %v661 = vld [vmem:[%s1 + $0x9f0] sm:$0xf]
    %v662 = vld [vmem:[%s1 + $0x9f4] sm:$0xf]
    %v663 = vld [vmem:[%s1 + $0x9f8] sm:$0xf]
    %v664 = vld [vmem:[%s1 + $0x9fc] sm:$0xf]
    %v665 = vld [vmem:[%s1 + $0xa00] sm:$0xf]
    %v666 = vld [vmem:[%s1 + $0xa04] sm:$0xf]
    %v667 = vld [vmem:[%s1 + $0xa08] sm:$0xf]
    %v668 = vld [vmem:[%s1 + $0xa0c] sm:$0xf]
    %v669 = vld [vmem:[%s1 + $0xa10] sm:$0xf]
    %v670 = vld [vmem:[%s1 + $0xa14] sm:$0xf]
    %v671 = vld [vmem:[%s1 + $0xa18] sm:$0xf]
    %v672 = vld [vmem:[%s1 + $0xa1c] sm:$0xf]
    %v673 = vld [vmem:[%s1 + $0xa20] sm:$0xf]
    %v674 = vld [vmem:[%s1 + $0xa24] sm:$0xf]
    %v675 = vld [vmem:[%s1 + $0xa28] sm:$0xf]
    %v676 = vld [vmem:[%s1 + $0xa2c] sm:$0xf]
    %v677 = vld [vmem:[%s1 + $0xa30] sm:$0xf]
    %v678 = vld [vmem:[%s1 + $0xa34] sm:$0xf]
    %v679 = vld [vmem:[%s1 + $0xa38] sm:$0xf]
    %v680 = vld [vmem:[%s1 + $0xa3c] sm:$0xf]
    %v681 = vld [vmem:[%s1 + $0xa40] sm:$0xf]
    %v682 = vld [vmem:[%s1 + $0xa44] sm:$0xf]
    %v683 = vld [vmem:[%s1 + $0xa48] sm:$0xf]
    %v684 = vld [vmem:[%s1 + $0xa4c] sm:$0xf]
    %v685 = vld [vmem:[%s1 + $0xa50] sm:$0xf]
    %v686 = vld [vmem:[%s1 + $0xa54] sm:$0xf]
    %v687 = vld [vmem:[%s1 + $0xa58] sm:$0xf]
    %v688 = vld [vmem:[%s1 + $0xa5c] sm:$0xf]
    %v689 = vld [vmem:[%s1 + $0xa60] sm:$0xf]
    %v690 = vld [vmem:[%s1 + $0xa64] sm:$0xf]
    %v691 = vld [vmem:[%s1 + $0xa68] sm:$0xf]
    %v692 = vld [vmem:[%s1 + $0xa6c] sm:$0xf]
    %v693 = vld [vmem:[%s1 + $0xa70] sm:$0xf]
    %v694 = vld [vmem:[%s1 + $0xa74] sm:$0xf]
    %v695 = vld [vmem:[%s1 + $0xa78] sm:$0xf]
    %v696 = vld [vmem:[%s1 + $0xa7c] sm:$0xf]
    %v697 = vld [vmem:[%s1 + $0xa80] sm:$0xf]
    %v698 = vld [vmem:[%s1 + $0xa84] sm:$0xf]
    %v699 = vld [vmem:[%s1 + $0xa88] sm:$0xf]
    %v700 = vld [vmem:[%s1 + $0xa8c] sm:$0xf]
    %v701 = vld [vmem:[%s1 + $0xa90] sm:$0xf]
    %v702 = vld [vmem:[%s1 + $0xa94] sm:$0xf]
    %v703 = vld [vmem:[%s1 + $0xa98] sm:$0xf]
    %v704 = vld [vmem:[%s1 + $0xa9c] sm:$0xf]
    %v705 = vld [vmem:[%s1 + $0xaa0] sm:$0xf]
    %v706 = vld [vmem:[%s1 + $0xaa4] sm:$0xf]
    %v707 = vld [vmem:[%s1 + $0xaa8] sm:$0xf]
    %v708 = vld [vmem:[%s1 + $0xaac] sm:$0xf]
    %v709 = vld [vmem:[%s1 + $0xab0] sm:$0xf]
    %v710 = vld [vmem:[%s1 + $0xab4] sm:$0xf]
    %v711 = vld [vmem:[%s1 + $0xab8] sm:$0xf]
    %v712 = vld [vmem:[%s1 + $0xabc] sm:$0xf]
    %v713 = vld [vmem:[%s1 + $0xac0] sm:$0xf]
    %v714 = vld [vmem:[%s1 + $0xac4] sm:$0xf]
    %v715 = vld [vmem:[%s1 + $0xac8] sm:$0xf]
    %v716 = vld [vmem:[%s1 + $0xacc] sm:$0xf]
    %v717 = vld [vmem:[%s1 + $0xad0] sm:$0xf]
    %v718 = vld [vmem:[%s1 + $0xad4] sm:$0xf]
    %v719 = vld [vmem:[%s1 + $0xad8] sm:$0xf]
    %v720 = vld [vmem:[%s1 + $0xadc] sm:$0xf]
    %v721 = vld [vmem:[%s1 + $0xae0] sm:$0xf]
    %v722 = vld [vmem:[%s1 + $0xae4] sm:$0xf]
    %v723 = vld [vmem:[%s1 + $0xae8] sm:$0xf]
    %v724 = vld [vmem:[%s1 + $0xaec] sm:$0xf]
    %v725 = vld [vmem:[%s1 + $0xaf0] sm:$0xf]
    %v726 = vld [vmem:[%s1 + $0xaf4] sm:$0xf]
    %v727 = vld [vmem:[%s1 + $0xaf8] sm:$0xf]
    %v728 = vld [vmem:[%s1 + $0xafc] sm:$0xf]
    %v729 = vld [vmem:[%s1 + $0xb00] sm:$0xf]
    %v730 = vld [vmem:[%s1 + $0xb04] sm:$0xf]
    %v731 = vld [vmem:[%s1 + $0xb08] sm:$0xf]
    %v732 = vld [vmem:[%s1 + $0xb0c] sm:$0xf]
    %v733 = vld [vmem:[%s1 + $0xb10] sm:$0xf]
    %v734 = vld [vmem:[%s1 + $0xb14] sm:$0xf]
    %v735 = vld [vmem:[%s1 + $0xb18] sm:$0xf]
    %v736 = vld [vmem:[%s1 + $0xb1c] sm:$0xf]
    %v737 = vld [vmem:[%s1 + $0xb20] sm:$0xf]
    %v738 = vld [vmem:[%s1 + $0xb24] sm:$0xf]
    %v739 = vld [vmem:[%s1 + $0xb28] sm:$0xf]
    %v740 = vld [vmem:[%s1 + $0xb2c] sm:$0xf]
    %v741 = vld [vmem:[%s1 + $0xb30] sm:$0xf]
    %v742 = vld [vmem:[%s1 + $0xb34] sm:$0xf]
    %v743 = vld [vmem:[%s1 + $0xb38] sm:$0xf]
    %v744 = vld [vmem:[%s1 + $0xb3c] sm:$0xf]
    %v745 = vld [vmem:[%s1 + $0xb40] sm:$0xf]
    %v746 = vld [vmem:[%s1 + $0xb44] sm:$0xf]
    %v747 = vld [vmem:[%s1 + $0xb48] sm:$0xf]
    %v748 = vld [vmem:[%s1 + $0xb4c] sm:$0xf]
    %v749 = vld [vmem:[%s1 + $0xb50] sm:$0xf]
    %v750 = vld [vmem:[%s1 + $0xb54] sm:$0xf]
    %v751 = vld [vmem:[%s1 + $0xb58] sm:$0xf]
    %v752 = vld [vmem:[%s1 + $0xb5c] sm:$0xf]
    %v753 = vld [vmem:[%s1 + $0xb60] sm:$0xf]
    %v754 = vld [vmem:[%s1 + $0xb64] sm:$0xf]
    %v755 = vld [vmem:[%s1 + $0xb68] sm:$0xf]
    %v756 = vld [vmem:[%s1 + $0xb6c] sm:$0xf]
    %v757 = vld [vmem:[%s1 + $0xb70] sm:$0xf]
    %v758 = vld [vmem:[%s1 + $0xb74] sm:$0xf]
    %v759 = vld [vmem:[%s1 + $0xb78] sm:$0xf]
    %v760 = vld [vmem:[%s1 + $0xb7c] sm:$0xf]
    %v761 = vld [vmem:[%s1 + $0xb80] sm:$0xf]
    %v762 = vld [vmem:[%s1 + $0xb84] sm:$0xf]
    %v763 = vld [vmem:[%s1 + $0xb88] sm:$0xf]
    %v764 = vld [vmem:[%s1 + $0xb8c] sm:$0xf]
    %v765 = vld [vmem:[%s1 + $0xb90] sm:$0xf]
    %v766 = vld [vmem:[%s1 + $0xb94] sm:$0xf]
    %v767 = vld [vmem:[%s1 + $0xb98] sm:$0xf]
    %v768 = vld [vmem:[%s1 + $0xb9c] sm:$0xf]
    %v769 = vld [vmem:[%s1 + $0xba0] sm:$0xf]
    %v770 = vld [vmem:[%s1 + $0xba4] sm:$0xf]
    %v771 = vld [vmem:[%s1 + $0xba8] sm:$0xf]
    %v772 = vld [vmem:[%s1 + $0xbac] sm:$0xf]
    %v773 = vld [vmem:[%s1 + $0xbb0] sm:$0xf]
    %v774 = vld [vmem:[%s1 + $0xbb4] sm:$0xf]
    %v775 = vld [vmem:[%s1 + $0xbb8] sm:$0xf]
    %v776 = vld [vmem:[%s1 + $0xbbc] sm:$0xf]
    %v777 = vld [vmem:[%s1 + $0xbc0] sm:$0xf]
    %v778 = vld [vmem:[%s1 + $0xbc4] sm:$0xf]
    %v779 = vld [vmem:[%s1 + $0xbc8] sm:$0xf]
    %v780 = vld [vmem:[%s1 + $0xbcc] sm:$0xf]
    %v781 = vld [vmem:[%s1 + $0xbd0] sm:$0xf]
    %v782 = vld [vmem:[%s1 + $0xbd4] sm:$0xf]
    %v783 = vld [vmem:[%s1 + $0xbd8] sm:$0xf]
    %v784 = vld [vmem:[%s1 + $0xbdc] sm:$0xf]
    %v785 = vld [vmem:[%s1 + $0xbe0] sm:$0xf]
    %v786 = vld [vmem:[%s1 + $0xbe4] sm:$0xf]
    %v787 = vld [vmem:[%s1 + $0xbe8] sm:$0xf]
    %v788 = vld [vmem:[%s1 + $0xbec] sm:$0xf]
    %v789 = vld [vmem:[%s1 + $0xbf0] sm:$0xf]
    %v790 = vld [vmem:[%s1 + $0xbf4] sm:$0xf]
    %v791 = vld [vmem:[%s1 + $0xbf8] sm:$0xf]
    %v792 = vld [vmem:[%s1 + $0xbfc] sm:$0xf]
    %v793 = vld [vmem:[%s1 + $0xc00] sm:$0xf]
    %v794 = vld [vmem:[%s1 + $0xc04] sm:$0xf]
    %v795 = vld [vmem:[%s1 + $0xc08] sm:$0xf]
    %v796 = vld [vmem:[%s1 + $0xc0c] sm:$0xf]
    %v797 = vld [vmem:[%s1 + $0xc10] sm:$0xf]
    %v798 = vld [vmem:[%s1 + $0xc14] sm:$0xf]
    %v799 = vld [vmem:[%s1 + $0xc18] sm:$0xf]
    %v800 = vld [vmem:[%s1 + $0xc1c] sm:$0xf]
    %v801 = vld [vmem:[%s1 + $0xc20] sm:$0xf]
    %v802 = vld [vmem:[%s1 + $0xc24] sm:$0xf]
    %v803 = vld [vmem:[%s1 + $0xc28] sm:$0xf]
    %v804 = vld [vmem:[%s1 + $0xc2c] sm:$0xf]
    %v805 = vld [vmem:[%s1 + $0xc30] sm:$0xf]
    %v806 = vld [vmem:[%s1 + $0xc34] sm:$0xf]
    %v807 = vld [vmem:[%s1 + $0xc38] sm:$0xf]
    %v808 = vld [vmem:[%s1 + $0xc3c] sm:$0xf]
    %v809 = vld [vmem:[%s1 + $0xc40] sm:$0xf]
    %v810 = vld [vmem:[%s1 + $0xc44] sm:$0xf]
    %v811 = vld [vmem:[%s1 + $0xc48] sm:$0xf]
    %v812 = vld [vmem:[%s1 + $0xc4c] sm:$0xf]
    %v813 = vld [vmem:[%s1 + $0xc50] sm:$0xf]
    %v814 = vld [vmem:[%s1 + $0xc54] sm:$0xf]
    %v815 = vld [vmem:[%s1 + $0xc58] sm:$0xf]
    %v816 = vld [vmem:[%s1 + $0xc5c] sm:$0xf]
    %v817 = vld [vmem:[%s1 + $0xc60] sm:$0xf]
    %v818 = vld [vmem:[%s1 + $0xc64] sm:$0xf]
    %v819 = vld [vmem:[%s1 + $0xc68] sm:$0xf]
    %v820 = vld [vmem:[%s1 + $0xc6c] sm:$0xf]
    %v821 = vld [vmem:[%s1 + $0xc70] sm:$0xf]
    %v822 = vld [vmem:[%s1 + $0xc74] sm:$0xf]
    %v823 = vld [vmem:[%s1 + $0xc78] sm:$0xf]
    %v824 = vld [vmem:[%s1 + $0xc7c] sm:$0xf]
    %v825 = vld [vmem:[%s1 + $0xc80] sm:$0xf]
    %v826 = vld [vmem:[%s1 + $0xc84] sm:$0xf]
    %v827 = vld [vmem:[%s1 + $0xc88] sm:$0xf]
    %v828 = vld [vmem:[%s1 + $0xc8c] sm:$0xf]
    %v829 = vld [vmem:[%s1 + $0xc90] sm:$0xf]
    %v830 = vld [vmem:[%s1 + $0xc94] sm:$0xf]
    %v831 = vld [vmem:[%s1 + $0xc98] sm:$0xf]
    %v832 = vld [vmem:[%s1 + $0xc9c] sm:$0xf]
    %v833 = vld [vmem:[%s1 + $0xca0] sm:$0xf]
    %v834 = vld [vmem:[%s1 + $0xca4] sm:$0xf]
    %v835 = vld [vmem:[%s1 + $0xca8] sm:$0xf]
    %v836 = vld [vmem:[%s1 + $0xcac] sm:$0xf]
    %v837 = vld [vmem:[%s1 + $0xcb0] sm:$0xf]
    %v838 = vld [vmem:[%s1 + $0xcb4] sm:$0xf]
    %v839 = vld [vmem:[%s1 + $0xcb8] sm:$0xf]
    %v840 = vld [vmem:[%s1 + $0xcbc] sm:$0xf]
    %v841 = vld [vmem:[%s1 + $0xcc0] sm:$0xf]
    %v842 = vld [vmem:[%s1 + $0xcc4] sm:$0xf]
    %v843 = vld [vmem:[%s1 + $0xcc8] sm:$0xf]
    %v844 = vld [vmem:[%s1 + $0xccc] sm:$0xf]
    %v845 = vld [vmem:[%s1 + $0xcd0] sm:$0xf]
    %v846 = vld [vmem:[%s1 + $0xcd4] sm:$0xf]
    %v847 = vld [vmem:[%s1 + $0xcd8] sm:$0xf]
    %v848 = vld [vmem:[%s1 + $0xcdc] sm:$0xf]
    %v849 = vld [vmem:[%s1 + $0xce0] sm:$0xf]
    %v850 = vld [vmem:[%s1 + $0xce4] sm:$0xf]
    %v851 = vld [vmem:[%s1 + $0xce8] sm:$0xf]
    %v852 = vld [vmem:[%s1 + $0xcec] sm:$0xf]
    %v853 = vld [vmem:[%s1 + $0xcf0] sm:$0xf]
    %v854 = vld [vmem:[%s1 + $0xcf4] sm:$0xf]
    %v855 = vld [vmem:[%s1 + $0xcf8] sm:$0xf]
    %v856 = vld [vmem:[%s1 + $0xcfc] sm:$0xf]
    %v857 = vld [vmem:[%s1 + $0xd00] sm:$0xf]
    %v858 = vld [vmem:[%s1 + $0xd04] sm:$0xf]
    %v859 = vld [vmem:[%s1 + $0xd08] sm:$0xf]
    %v860 = vld [vmem:[%s1 + $0xd0c] sm:$0xf]
    %v861 = vld [vmem:[%s1 + $0xd10] sm:$0xf]
    %v862 = vld [vmem:[%s1 + $0xd14] sm:$0xf]
    %v863 = vld [vmem:[%s1 + $0xd18] sm:$0xf]
    %v864 = vld [vmem:[%s1 + $0xd1c] sm:$0xf]
    %v865 = vld [vmem:[%s1 + $0xd20] sm:$0xf]
    %v866 = vld [vmem:[%s1 + $0xd24] sm:$0xf]
    %v867 = vld [vmem:[%s1 + $0xd28] sm:$0xf]
    %v868 = vld [vmem:[%s1 + $0xd2c] sm:$0xf]
    %v869 = vld [vmem:[%s1 + $0xd30] sm:$0xf]
    %v870 = vld [vmem:[%s1 + $0xd34] sm:$0xf]
    %v871 = vld [vmem:[%s1 + $0xd38] sm:$0xf]
    %v872 = vld [vmem:[%s1 + $0xd3c] sm:$0xf]
    %v873 = vld [vmem:[%s1 + $0xd40] sm:$0xf]
    %v874 = vld [vmem:[%s1 + $0xd44] sm:$0xf]
    %v875 = vld [vmem:[%s1 + $0xd48] sm:$0xf]
    %v876 = vld [vmem:[%s1 + $0xd4c] sm:$0xf]
    %v877 = vld [vmem:[%s1 + $0xd50] sm:$0xf]
    %v878 = vld [vmem:[%s1 + $0xd54] sm:$0xf]
    %v879 = vld [vmem:[%s1 + $0xd58] sm:$0xf]
    %v880 = vld [vmem:[%s1 + $0xd5c] sm:$0xf]
    %v881 = vld [vmem:[%s1 + $0xd60] sm:$0xf]
    %v882 = vld [vmem:[%s1 + $0xd64] sm:$0xf]
    %v883 = vld [vmem:[%s1 + $0xd68] sm:$0xf]
    %v884 = vld [vmem:[%s1 + $0xd6c] sm:$0xf]
    %v885 = vld [vmem:[%s1 + $0xd70] sm:$0xf]
    %v886 = vld [vmem:[%s1 + $0xd74] sm:$0xf]
    %v887 = vld [vmem:[%s1 + $0xd78] sm:$0xf]
    %v888 = vld [vmem:[%s1 + $0xd7c] sm:$0xf]
    %v889 = vld [vmem:[%s1 + $0xd80] sm:$0xf]
    %v890 = vld [vmem:[%s1 + $0xd84] sm:$0xf]
    %v891 = vld [vmem:[%s1 + $0xd88] sm:$0xf]
    %v892 = vld [vmem:[%s1 + $0xd8c] sm:$0xf]
    %v893 = vld [vmem:[%s1 + $0xd90] sm:$0xf]
    %v894 = vld [vmem:[%s1 + $0xd94] sm:$0xf]
    %v895 = vld [vmem:[%s1 + $0xd98] sm:$0xf]
    %v896 = vld [vmem:[%s1 + $0xd9c] sm:$0xf]
    %v897 = vld [vmem:[%s1 + $0xda0] sm:$0xf]
    %v898 = vld [vmem:[%s1 + $0xda4] sm:$0xf]
    %v899 = vld [vmem:[%s1 + $0xda8] sm:$0xf]
    %v900 = vld [vmem:[%s1 + $0xdac] sm:$0xf]
    %v901 = vld [vmem:[%s1 + $0xdb0] sm:$0xf]
    %v902 = vld [vmem:[%s1 + $0xdb4] sm:$0xf]
    %v903 = vld [vmem:[%s1 + $0xdb8] sm:$0xf]
    %v904 = vld [vmem:[%s1 + $0xdbc] sm:$0xf]
    %v905 = vld [vmem:[%s1 + $0xdc0] sm:$0xf]
    %v906 = vld [vmem:[%s1 + $0xdc4] sm:$0xf]
    %v907 = vld [vmem:[%s1 + $0xdc8] sm:$0xf]
    %v908 = vld [vmem:[%s1 + $0xdcc] sm:$0xf]
    %v909 = vld [vmem:[%s1 + $0xdd0] sm:$0xf]
    %v910 = vld [vmem:[%s1 + $0xdd4] sm:$0xf]
    %v911 = vld [vmem:[%s1 + $0xdd8] sm:$0xf]
    %v912 = vld [vmem:[%s1 + $0xddc] sm:$0xf]
    %v913 = vld [vmem:[%s1 + $0xde0] sm:$0xf]
    %v914 = vld [vmem:[%s1 + $0xde4] sm:$0xf]
    %v915 = vld [vmem:[%s1 + $0xde8] sm:$0xf]
    %v916 = vld [vmem:[%s1 + $0xdec] sm:$0xf]
    %v917 = vld [vmem:[%s1 + $0xdf0] sm:$0xf]
    %v918 = vld [vmem:[%s1 + $0xdf4] sm:$0xf]
    %v919 = vld [vmem:[%s1 + $0xdf8] sm:$0xf]
    %v920 = vld [vmem:[%s1 + $0xdfc] sm:$0xf]
    %v921 = vld [vmem:[%s1 + $0xe00] sm:$0xf]
    %v922 = vld [vmem:[%s1 + $0xe04] sm:$0xf]
    %v923 = vld [vmem:[%s1 + $0xe08] sm:$0xf]
    %v924 = vld [vmem:[%s1 + $0xe0c] sm:$0xf]
    %v925 = vld [vmem:[%s1 + $0xe10] sm:$0xf]
    %v926 = vld [vmem:[%s1 + $0xe14] sm:$0xf]
    %v927 = vld [vmem:[%s1 + $0xe18] sm:$0xf]
    %v928 = vld [vmem:[%s1 + $0xe1c] sm:$0xf]
    %v929 = vld [vmem:[%s1 + $0xe20] sm:$0xf]
    %v930 = vld [vmem:[%s1 + $0xe24] sm:$0xf]
    %v931 = vld [vmem:[%s1 + $0xe28] sm:$0xf]
    %v932 = vld [vmem:[%s1 + $0xe2c] sm:$0xf]
    %v933 = vld [vmem:[%s1 + $0xe30] sm:$0xf]
    %v934 = vld [vmem:[%s1 + $0xe34] sm:$0xf]
    %v935 = vld [vmem:[%s1 + $0xe38] sm:$0xf]
    %v936 = vld [vmem:[%s1 + $0xe3c] sm:$0xf]
    %v937 = vld [vmem:[%s1 + $0xe40] sm:$0xf]
    %v938 = vld [vmem:[%s1 + $0xe44] sm:$0xf]
    %v939 = vld [vmem:[%s1 + $0xe48] sm:$0xf]
    %v940 = vld [vmem:[%s1 + $0xe4c] sm:$0xf]
    %v941 = vld [vmem:[%s1 + $0xe50] sm:$0xf]
    %v942 = vld [vmem:[%s1 + $0xe54] sm:$0xf]
    %v943 = vld [vmem:[%s1 + $0xe58] sm:$0xf]
    %v944 = vld [vmem:[%s1 + $0xe5c] sm:$0xf]
    %v945 = vld [vmem:[%s1 + $0xe60] sm:$0xf]
    %v946 = vld [vmem:[%s1 + $0xe64] sm:$0xf]
    %v947 = vld [vmem:[%s1 + $0xe68] sm:$0xf]
    %v948 = vld [vmem:[%s1 + $0xe6c] sm:$0xf]
    %v949 = vld [vmem:[%s1 + $0xe70] sm:$0xf]
    %v950 = vld [vmem:[%s1 + $0xe74] sm:$0xf]
    %v951 = vld [vmem:[%s1 + $0xe78] sm:$0xf]
    %v952 = vld [vmem:[%s1 + $0xe7c] sm:$0xf]
    %v953 = vld [vmem:[%s1 + $0xe80] sm:$0xf]
    %v954 = vld [vmem:[%s1 + $0xe84] sm:$0xf]
    %v955 = vld [vmem:[%s1 + $0xe88] sm:$0xf]
    %v956 = vld [vmem:[%s1 + $0xe8c] sm:$0xf]
    %v957 = vld [vmem:[%s1 + $0xe90] sm:$0xf]
    %v958 = vld [vmem:[%s1 + $0xe94] sm:$0xf]
    %v959 = vld [vmem:[%s1 + $0xe98] sm:$0xf]
    %v960 = vld [vmem:[%s1 + $0xe9c] sm:$0xf]
    %v961 = vld [vmem:[%s1 + $0xea0] sm:$0xf]
    %v962 = vld [vmem:[%s1 + $0xea4] sm:$0xf]
    %v963 = vld [vmem:[%s1 + $0xea8] sm:$0xf]
    %v964 = vld [vmem:[%s1 + $0xeac] sm:$0xf]
    %v965 = vld [vmem:[%s1 + $0xeb0] sm:$0xf]
    %v966 = vld [vmem:[%s1 + $0xeb4] sm:$0xf]
    %v967 = vld [vmem:[%s1 + $0xeb8] sm:$0xf]
    %v968 = vld [vmem:[%s1 + $0xebc] sm:$0xf]
    %v969 = vld [vmem:[%s1 + $0xec0] sm:$0xf]
    %v970 = vld [vmem:[%s1 + $0xec4] sm:$0xf]
    %v971 = vld [vmem:[%s1 + $0xec8] sm:$0xf]
    %v972 = vld [vmem:[%s1 + $0xecc] sm:$0xf]
    %v973 = vld [vmem:[%s1 + $0xed0] sm:$0xf]
    %v974 = vld [vmem:[%s1 + $0xed4] sm:$0xf]
    %v975 = vld [vmem:[%s1 + $0xed8] sm:$0xf]
    %v976 = vld [vmem:[%s1 + $0xedc] sm:$0xf]
    %v977 = vld [vmem:[%s1 + $0xee0] sm:$0xf]
    %v978 = vld [vmem:[%s1 + $0xee4] sm:$0xf]
    %v979 = vld [vmem:[%s1 + $0xee8] sm:$0xf]
    %v980 = vld [vmem:[%s1 + $0xeec] sm:$0xf]
    %v981 = vld [vmem:[%s1 + $0xef0] sm:$0xf]
    %v982 = vld [vmem:[%s1 + $0xef4] sm:$0xf]
    %v983 = vld [vmem:[%s1 + $0xef8] sm:$0xf]
    %v984 = vld [vmem:[%s1 + $0xefc] sm:$0xf]
    %v985 = vld [vmem:[%s1 + $0xf00] sm:$0xf]
    %v986 = vld [vmem:[%s1 + $0xf04] sm:$0xf]
    %v987 = vld [vmem:[%s1 + $0xf08] sm:$0xf]
    %v988 = vld [vmem:[%s1 + $0xf0c] sm:$0xf]
    %v989 = vld [vmem:[%s1 + $0xf10] sm:$0xf]
    %v990 = vld [vmem:[%s1 + $0xf14] sm:$0xf]
    %v991 = vld [vmem:[%s1 + $0xf18] sm:$0xf]
    %v992 = vld [vmem:[%s1 + $0xf1c] sm:$0xf]
    %v993 = vld [vmem:[%s1 + $0xf20] sm:$0xf]
    %v994 = vld [vmem:[%s1 + $0xf24] sm:$0xf]
    %v995 = vld [vmem:[%s1 + $0xf28] sm:$0xf]
    %v996 = vld [vmem:[%s1 + $0xf2c] sm:$0xf]
    %v997 = vld [vmem:[%s1 + $0xf30] sm:$0xf]
    %v998 = vld [vmem:[%s1 + $0xf34] sm:$0xf]
    %v999 = vld [vmem:[%s1 + $0xf38] sm:$0xf]
    %v1000 = vld [vmem:[%s1 + $0xf3c] sm:$0xf]
    %v1001 = vld [vmem:[%s1 + $0xf40] sm:$0xf]
    %v1002 = vld [vmem:[%s1 + $0xf44] sm:$0xf]
    %v1003 = vld [vmem:[%s1 + $0xf48] sm:$0xf]
    %v1004 = vld [vmem:[%s1 + $0xf4c] sm:$0xf]
    %v1005 = vld [vmem:[%s1 + $0xf50] sm:$0xf]
    %v1006 = vld [vmem:[%s1 + $0xf54] sm:$0xf]
    %v1007 = vld [vmem:[%s1 + $0xf58] sm:$0xf]
    %v1008 = vld [vmem:[%s1 + $0xf5c] sm:$0xf]
    %v1009 = vld [vmem:[%s1 + $0xf60] sm:$0xf]
    %v1010 = vld [vmem:[%s1 + $0xf64] sm:$0xf]
    %v1011 = vld [vmem:[%s1 + $0xf68] sm:$0xf]
    %v1012 = vld [vmem:[%s1 + $0xf6c] sm:$0xf]
    %v1013 = vld [vmem:[%s1 + $0xf70] sm:$0xf]
    %v1014 = vld [vmem:[%s1 + $0xf74] sm:$0xf]
    %v1015 = vld [vmem:[%s1 + $0xf78] sm:$0xf]
    %v1016 = vld [vmem:[%s1 + $0xf7c] sm:$0xf]
    %v1017 = vld [vmem:[%s1 + $0xf80] sm:$0xf]
    %v1018 = vld [vmem:[%s1 + $0xf84] sm:$0xf]
    %v1019 = vld [vmem:[%s1 + $0xf88] sm:$0xf]
    %v1020 = vld [vmem:[%s1 + $0xf8c] sm:$0xf]
    %v1021 = vld [vmem:[%s1 + $0xf90] sm:$0xf]
    %v1022 = vld [vmem:[%s1 + $0xf94] sm:$0xf]
    %v1023 = vld [vmem:[%s1 + $0xf98] sm:$0xf]
    %v1024 = vld [vmem:[%s1 + $0xf9c] sm:$0xf]
    %v1025 = vld [vmem:[%s1 + $0xfa0] sm:$0xf]
    %v1026 = vld [vmem:[%s1 + $0xfa4] sm:$0xf]
    %v1027 = vld [vmem:[%s1 + $0xfa8] sm:$0xf]
    %v1028 = vld [vmem:[%s1 + $0xfac] sm:$0xf]
    %v1029 = vld [vmem:[%s1 + $0xfb0] sm:$0xf]
    %v1030 = vld [vmem:[%s1 + $0xfb4] sm:$0xf]
    %v1031 = vld [vmem:[%s1 + $0xfb8] sm:$0xf]
    %v1032 = vld [vmem:[%s1 + $0xfbc] sm:$0xf]
    %v1033 = vld [vmem:[%s1 + $0xfc0] sm:$0xf]
    %v1034 = vld [vmem:[%s1 + $0xfc4] sm:$0xf]
    %v1035 = vld [vmem:[%s1 + $0xfc8] sm:$0xf]
    %v1036 = vld [vmem:[%s1 + $0xfcc] sm:$0xf]
    %v1037 = vld [vmem:[%s1 + $0xfd0] sm:$0xf]
    %v1038 = vld [vmem:[%s1 + $0xfd4] sm:$0xf]
    %v1039 = vld [vmem:[%s1 + $0xfd8] sm:$0xf]
    %v1040 = vld [vmem:[%s1 + $0xfdc] sm:$0xf]
    %v1041 = vld [vmem:[%s1 + $0xfe0] sm:$0xf]
    %v1042 = vld [vmem:[%s1 + $0xfe4] sm:$0xf]
    %v1043 = vld [vmem:[%s1 + $0xfe8] sm:$0xf]
    %v1044 = vld [vmem:[%s1 + $0xfec] sm:$0xf]
    %v1045 = vld [vmem:[%s1 + $0xff0] sm:$0xf]
    %v1046 = vld [vmem:[%s1 + $0xff4] sm:$0xf]
    %v1047 = vld [vmem:[%s1 + $0xff8] sm:$0xf]
    %v1048 = vld [vmem:[%s1 + $0xffc] sm:$0xf]
    %v1049 = vld [vmem:[%s1 + $0x1000] sm:$0xf]
    %v1050 = vld [vmem:[%s1 + $0x1004] sm:$0xf]
    %v1051 = vld [vmem:[%s1 + $0x1008] sm:$0xf]
    %v1052 = vld [vmem:[%s1 + $0x100c] sm:$0xf]
    %v1053 = vld [vmem:[%s1 + $0x1010] sm:$0xf]
    %v1054 = vld [vmem:[%s1 + $0x1014] sm:$0xf]
    %v1055 = vld [vmem:[%s1 + $0x1018] sm:$0xf]
    %v1056 = vld [vmem:[%s1 + $0x101c] sm:$0xf]
    %v1057 = vld [vmem:[%s1 + $0x1020] sm:$0xf]
    %v1058 = vld [vmem:[%s1 + $0x1024] sm:$0xf]
    %v1059 = vld [vmem:[%s1 + $0x1028] sm:$0xf]
    %v1060 = vld [vmem:[%s1 + $0x102c] sm:$0xf]
    %v1061 = vld [vmem:[%s1 + $0x1030] sm:$0xf]
    %v1062 = vld [vmem:[%s1 + $0x1034] sm:$0xf]
    %v1063 = vld [vmem:[%s1 + $0x1038] sm:$0xf]
    %v1064 = vld [vmem:[%s1 + $0x103c] sm:$0xf]
    %v1065 = vld [vmem:[%s1 + $0x1040] sm:$0xf]
    %v1066 = vld [vmem:[%s1 + $0x1044] sm:$0xf]
    %v1067 = vld [vmem:[%s1 + $0x1048] sm:$0xf]
    %v1068 = vld [vmem:[%s1 + $0x104c] sm:$0xf]
    %v1069 = vld [vmem:[%s1 + $0x1050] sm:$0xf]
    %v1070 = vld [vmem:[%s1 + $0x1054] sm:$0xf]
    %v1071 = vld [vmem:[%s1 + $0x1058] sm:$0xf]
    %v1072 = vld [vmem:[%s1 + $0x105c] sm:$0xf]
    %v1073 = vld [vmem:[%s1 + $0x1060] sm:$0xf]
    %v1074 = vld [vmem:[%s1 + $0x1064] sm:$0xf]
    %v1075 = vld [vmem:[%s1 + $0x1068] sm:$0xf]
    %v1076 = vld [vmem:[%s1 + $0x106c] sm:$0xf]
    %v1077 = vld [vmem:[%s1 + $0x1070] sm:$0xf]
    %v1078 = vld [vmem:[%s1 + $0x1074] sm:$0xf]
    %v1079 = vld [vmem:[%s1 + $0x1078] sm:$0xf]
    %v1080 = vld [vmem:[%s1 + $0x107c] sm:$0xf]
    %v1081 = vld [vmem:[%s1 + $0x1080] sm:$0xf]
    %v1082 = vld [vmem:[%s1 + $0x1084] sm:$0xf]
    %v1083 = vld [vmem:[%s1 + $0x1088] sm:$0xf]
    %v1084 = vld [vmem:[%s1 + $0x108c] sm:$0xf]
    %v1085 = vld [vmem:[%s1 + $0x1090] sm:$0xf]
    %v1086 = vld [vmem:[%s1 + $0x1094] sm:$0xf]
    %v1087 = vld [vmem:[%s1 + $0x1098] sm:$0xf]
    %v1088 = vld [vmem:[%s1 + $0x109c] sm:$0xf]
    %v1089 = vld [vmem:[%s1 + $0x10a0] sm:$0xf]
    %v1090 = vld [vmem:[%s1 + $0x10a4] sm:$0xf]
    %v1091 = vld [vmem:[%s1 + $0x10a8] sm:$0xf]
    %v1092 = vld [vmem:[%s1 + $0x10ac] sm:$0xf]
    %v1093 = vld [vmem:[%s1 + $0x10b0] sm:$0xf]
    %v1094 = vld [vmem:[%s1 + $0x10b4] sm:$0xf]
    %v1095 = vld [vmem:[%s1 + $0x10b8] sm:$0xf]
    %v1096 = vld [vmem:[%s1 + $0x10bc] sm:$0xf]
    %v1097 = vld [vmem:[%s1 + $0x10c0] sm:$0xf]
    %v1098 = vld [vmem:[%s1 + $0x10c4] sm:$0xf]
    %v1099 = vld [vmem:[%s1 + $0x10c8] sm:$0xf]
    %v1100 = vld [vmem:[%s1 + $0x10cc] sm:$0xf]
    %v1101 = vld [vmem:[%s1 + $0x10d0] sm:$0xf]
    %v1102 = vld [vmem:[%s1 + $0x10d4] sm:$0xf]
    %v1103 = vld [vmem:[%s1 + $0x10d8] sm:$0xf]
    %v1104 = vld [vmem:[%s1 + $0x10dc] sm:$0xf]
    %v1105 = vld [vmem:[%s1 + $0x10e0] sm:$0xf]
    %v1106 = vld [vmem:[%s1 + $0x10e4] sm:$0xf]
    %v1107 = vld [vmem:[%s1 + $0x10e8] sm:$0xf]
    %v1108 = vld [vmem:[%s1 + $0x10ec] sm:$0xf]
    %v1109 = vld [vmem:[%s1 + $0x10f0] sm:$0xf]
    %v1110 = vld [vmem:[%s1 + $0x10f4] sm:$0xf]
    %v1111 = vld [vmem:[%s1 + $0x10f8] sm:$0xf]
    %v1112 = vld [vmem:[%s1 + $0x10fc] sm:$0xf]
    %v1113 = vld [vmem:[%s1 + $0x1100] sm:$0xf]
    %v1114 = vld [vmem:[%s1 + $0x1104] sm:$0xf]
    %v1115 = vld [vmem:[%s1 + $0x1108] sm:$0xf]
    %v1116 = vld [vmem:[%s1 + $0x110c] sm:$0xf]
    %v1117 = vld [vmem:[%s1 + $0x1110] sm:$0xf]
    %v1118 = vld [vmem:[%s1 + $0x1114] sm:$0xf]
    %v1119 = vld [vmem:[%s1 + $0x1118] sm:$0xf]
    %v1120 = vld [vmem:[%s1 + $0x111c] sm:$0xf]
    %v1121 = vld [vmem:[%s1 + $0x1120] sm:$0xf]
    %v1122 = vld [vmem:[%s1 + $0x1124] sm:$0xf]
    %v1123 = vld [vmem:[%s1 + $0x1128] sm:$0xf]
    %v1124 = vld [vmem:[%s1 + $0x112c] sm:$0xf]
    %v1125 = vld [vmem:[%s1 + $0x1130] sm:$0xf]
    %v1126 = vld [vmem:[%s1 + $0x1134] sm:$0xf]
    %v1127 = vld [vmem:[%s1 + $0x1138] sm:$0xf]
    %v1128 = vld [vmem:[%s1 + $0x113c] sm:$0xf]
    %v1129 = vld [vmem:[%s1 + $0x1140] sm:$0xf]
    %v1130 = vld [vmem:[%s1 + $0x1144] sm:$0xf]
    %v1131 = vld [vmem:[%s1 + $0x1148] sm:$0xf]
    %v1132 = vld [vmem:[%s1 + $0x114c] sm:$0xf]
    %v1133 = vld [vmem:[%s1 + $0x1150] sm:$0xf]
    %v1134 = vld [vmem:[%s1 + $0x1154] sm:$0xf]
    %v1135 = vld [vmem:[%s1 + $0x1158] sm:$0xf]
    %v1136 = vld [vmem:[%s1 + $0x115c] sm:$0xf]
    %v1137 = vld [vmem:[%s1 + $0x1160] sm:$0xf]
    %v1138 = vld [vmem:[%s1 + $0x1164] sm:$0xf]
    %v1139 = vld [vmem:[%s1 + $0x1168] sm:$0xf]
    %v1140 = vld [vmem:[%s1 + $0x116c] sm:$0xf]
    %v1141 = vld [vmem:[%s1 + $0x1170] sm:$0xf]
    %v1142 = vld [vmem:[%s1 + $0x1174] sm:$0xf]
    %v1143 = vld [vmem:[%s1 + $0x1178] sm:$0xf]
    %v1144 = vld [vmem:[%s1 + $0x117c] sm:$0xf]
    %v1145 = vld [vmem:[%s1 + $0x1180] sm:$0xf]
    %v1146 = vld [vmem:[%s1 + $0x1184] sm:$0xf]
    %v1147 = vld [vmem:[%s1 + $0x1188] sm:$0xf]
    %v1148 = vld [vmem:[%s1 + $0x118c] sm:$0xf]
    %v1149 = vld [vmem:[%s1 + $0x1190] sm:$0xf]
    %v1150 = vld [vmem:[%s1 + $0x1194] sm:$0xf]
    %v1151 = vld [vmem:[%s1 + $0x1198] sm:$0xf]
    %v1152 = vld [vmem:[%s1 + $0x119c] sm:$0xf]
    %v1153 = vld [vmem:[%s1 + $0x11a0] sm:$0xf]
    %v1154 = vld [vmem:[%s1 + $0x11a4] sm:$0xf]
    %v1155 = vld [vmem:[%s1 + $0x11a8] sm:$0xf]
    %v1156 = vld [vmem:[%s1 + $0x11ac] sm:$0xf]
    %v1157 = vld [vmem:[%s1 + $0x11b0] sm:$0xf]
    %v1158 = vld [vmem:[%s1 + $0x11b4] sm:$0xf]
    %v1159 = vld [vmem:[%s1 + $0x11b8] sm:$0xf]
    %v1160 = vld [vmem:[%s1 + $0x11bc] sm:$0xf]
    %v1161 = vld [vmem:[%s1 + $0x11c0] sm:$0xf]
    %v1162 = vld [vmem:[%s1 + $0x11c4] sm:$0xf]
    %v1163 = vld [vmem:[%s1 + $0x11c8] sm:$0xf]
    %v1164 = vld [vmem:[%s1 + $0x11cc] sm:$0xf]
    %v1165 = vld [vmem:[%s1 + $0x11d0] sm:$0xf]
    %v1166 = vld [vmem:[%s1 + $0x11d4] sm:$0xf]
    %v1167 = vld [vmem:[%s1 + $0x11d8] sm:$0xf]
    %v1168 = vld [vmem:[%s1 + $0x11dc] sm:$0xf]
    %v1169 = vld [vmem:[%s1 + $0x11e0] sm:$0xf]
    %v1170 = vld [vmem:[%s1 + $0x11e4] sm:$0xf]
    %v1171 = vld [vmem:[%s1 + $0x11e8] sm:$0xf]
    %v1172 = vld [vmem:[%s1 + $0x11ec] sm:$0xf]
    %v1173 = vld [vmem:[%s1 + $0x11f0] sm:$0xf]
    %v1174 = vld [vmem:[%s1 + $0x11f4] sm:$0xf]
    %v1175 = vld [vmem:[%s1 + $0x11f8] sm:$0xf]
    %v1176 = vld [vmem:[%s1 + $0x11fc] sm:$0xf]
    %v1177 = vld [vmem:[%s2] sm:$0x1]
    %v1179 = vlaneseq
    %v1180 = vshrl.u32 %v1179, 7
    %v1181 = vsub.s32 0, %v1180
    %v1182 = vrot.slane %v1177, %v1181
    %v1193 = vcombine.high %v16, %v16
    %v1195 = vunpack.c.l.s4 1966171168
    %v1196 = vunpack.c.0.s8 %v1195
    %v1197 = vlaneseq
    %v1198 = vshrl.u32 %v1197, 7
    %v1199 = vsub.s32 %v1196, %v1198
    %v1200 = vrot.slane %v16, %v1199
    %v1202 = vunpack.c.l.s4 1966171168
    %v1203 = vunpack.c.0.s8 %v1202
    %v1204 = vlaneseq
    %v1205 = vshrl.u32 %v1204, 7
    %v1206 = vsub.s32 %v1203, %v1205
    %v1207 = vrot.slane %v1193, %v1206
    %v1208 = vcombine.high %v1200, %v1200
    %v1209 = vcombine.high %v1207, %v1207
    %v1211 = vunpack.c.l.s4 1966171168
    %v1212 = vunpack.c.0.s8 %v1211
    %v1213 = vlaneseq
    %v1214 = vshrl.u32 %v1213, 7
    %v1215 = vsub.s32 %v1212, %v1214
    %v1216 = vrot.slane %v1200, %v1215
    %v1218 = vunpack.c.l.s4 1966171168
    %v1219 = vunpack.c.0.s8 %v1218
    %v1220 = vlaneseq
    %v1221 = vshrl.u32 %v1220, 7
    %v1222 = vsub.s32 %v1219, %v1221
    %v1223 = vrot.slane %v1207, %v1222
    %v1225 = vunpack.c.l.s4 1966171168
    %v1226 = vunpack.c.0.s8 %v1225
    %v1227 = vlaneseq
    %v1228 = vshrl.u32 %v1227, 7
    %v1229 = vsub.s32 %v1226, %v1228
    %v1230 = vrot.slane %v1208, %v1229
    %v1232 = vunpack.c.l.s4 1966171168
    %v1233 = vunpack.c.0.s8 %v1232
    %v1234 = vlaneseq
    %v1235 = vshrl.u32 %v1234, 7
    %v1236 = vsub.s32 %v1233, %v1235
    %v1237 = vrot.slane %v1209, %v1236
    %v1238 = vcombine.high %v1216, %v1216
    %v1239 = vcombine.high %v1223, %v1223
    %v1240 = vcombine.high %v1230, %v1230
    %v1241 = vcombine.high %v1237, %v1237
    %v1242 = vcombine.high %v17, %v17
    %v1244 = vunpack.c.l.s4 1966171168
    %v1245 = vunpack.c.0.s8 %v1244
    %v1246 = vlaneseq
    %v1247 = vshrl.u32 %v1246, 7
    %v1248 = vsub.s32 %v1245, %v1247
    %v1249 = vrot.slane %v17, %v1248
    %v1251 = vunpack.c.l.s4 1966171168
    %v1252 = vunpack.c.0.s8 %v1251
    %v1253 = vlaneseq
    %v1254 = vshrl.u32 %v1253, 7
    %v1255 = vsub.s32 %v1252, %v1254
    %v1256 = vrot.slane %v1242, %v1255
    %v1257 = vcombine.high %v1249, %v1249
    %v1258 = vcombine.high %v1256, %v1256
    %v1260 = vunpack.c.l.s4 1966171168
    %v1261 = vunpack.c.0.s8 %v1260
    %v1262 = vlaneseq
    %v1263 = vshrl.u32 %v1262, 7
    %v1264 = vsub.s32 %v1261, %v1263
    %v1265 = vrot.slane %v1249, %v1264
    %v1267 = vunpack.c.l.s4 1966171168
    %v1268 = vunpack.c.0.s8 %v1267
    %v1269 = vlaneseq
    %v1270 = vshrl.u32 %v1269, 7
    %v1271 = vsub.s32 %v1268, %v1270
    %v1272 = vrot.slane %v1256, %v1271
    %v1274 = vunpack.c.l.s4 1966171168
    %v1275 = vunpack.c.0.s8 %v1274
    %v1276 = vlaneseq
    %v1277 = vshrl.u32 %v1276, 7
    %v1278 = vsub.s32 %v1275, %v1277
    %v1279 = vrot.slane %v1257, %v1278
    %v1281 = vunpack.c.l.s4 1966171168
    %v1282 = vunpack.c.0.s8 %v1281
    %v1283 = vlaneseq
    %v1284 = vshrl.u32 %v1283, 7
    %v1285 = vsub.s32 %v1282, %v1284
    %v1286 = vrot.slane %v1258, %v1285
    %v1287 = vcombine.high %v1265, %v1265
    %v1288 = vcombine.high %v1272, %v1272
    %v1289 = vcombine.high %v1279, %v1279
    %v1290 = vcombine.high %v1286, %v1286
    %v1291 = vcombine.high %v18, %v18
    %v1293 = vunpack.c.l.s4 1966171168
    %v1294 = vunpack.c.0.s8 %v1293
    %v1295 = vlaneseq
    %v1296 = vshrl.u32 %v1295, 7
    %v1297 = vsub.s32 %v1294, %v1296
    %v1298 = vrot.slane %v18, %v1297
    %v1300 = vunpack.c.l.s4 1966171168
    %v1301 = vunpack.c.0.s8 %v1300
    %v1302 = vlaneseq
    %v1303 = vshrl.u32 %v1302, 7
    %v1304 = vsub.s32 %v1301, %v1303
    %v1305 = vrot.slane %v1291, %v1304
    %v1306 = vcombine.high %v1298, %v1298
    %v1307 = vcombine.high %v1305, %v1305
    %v1309 = vunpack.c.l.s4 1966171168
    %v1310 = vunpack.c.0.s8 %v1309
    %v1311 = vlaneseq
    %v1312 = vshrl.u32 %v1311, 7
    %v1313 = vsub.s32 %v1310, %v1312
    %v1314 = vrot.slane %v1298, %v1313
    %v1316 = vunpack.c.l.s4 1966171168
    %v1317 = vunpack.c.0.s8 %v1316
    %v1318 = vlaneseq
    %v1319 = vshrl.u32 %v1318, 7
    %v1320 = vsub.s32 %v1317, %v1319
    %v1321 = vrot.slane %v1305, %v1320
    %v1323 = vunpack.c.l.s4 1966171168
    %v1324 = vunpack.c.0.s8 %v1323
    %v1325 = vlaneseq
    %v1326 = vshrl.u32 %v1325, 7
    %v1327 = vsub.s32 %v1324, %v1326
    %v1328 = vrot.slane %v1306, %v1327
    %v1330 = vunpack.c.l.s4 1966171168
    %v1331 = vunpack.c.0.s8 %v1330
    %v1332 = vlaneseq
    %v1333 = vshrl.u32 %v1332, 7
    %v1334 = vsub.s32 %v1331, %v1333
    %v1335 = vrot.slane %v1307, %v1334
    %v1336 = vcombine.high %v1314, %v1314
    %v1337 = vcombine.high %v1321, %v1321
    %v1338 = vcombine.high %v1328, %v1328
    %v1339 = vcombine.high %v1335, %v1335
    %v1340 = vcombine.high %v19, %v19
    %v1342 = vunpack.c.l.s4 1966171168
    %v1343 = vunpack.c.0.s8 %v1342
    %v1344 = vlaneseq
    %v1345 = vshrl.u32 %v1344, 7
    %v1346 = vsub.s32 %v1343, %v1345
    %v1347 = vrot.slane %v19, %v1346
    %v1349 = vunpack.c.l.s4 1966171168
    %v1350 = vunpack.c.0.s8 %v1349
    %v1351 = vlaneseq
    %v1352 = vshrl.u32 %v1351, 7
    %v1353 = vsub.s32 %v1350, %v1352
    %v1354 = vrot.slane %v1340, %v1353
    %v1355 = vcombine.high %v1347, %v1347
    %v1356 = vcombine.high %v1354, %v1354
    %v1358 = vunpack.c.l.s4 1966171168
    %v1359 = vunpack.c.0.s8 %v1358
    %v1360 = vlaneseq
    %v1361 = vshrl.u32 %v1360, 7
    %v1362 = vsub.s32 %v1359, %v1361
    %v1363 = vrot.slane %v1347, %v1362
    %v1365 = vunpack.c.l.s4 1966171168
    %v1366 = vunpack.c.0.s8 %v1365
    %v1367 = vlaneseq
    %v1368 = vshrl.u32 %v1367, 7
    %v1369 = vsub.s32 %v1366, %v1368
    %v1370 = vrot.slane %v1354, %v1369
    %v1372 = vunpack.c.l.s4 1966171168
    %v1373 = vunpack.c.0.s8 %v1372
    %v1374 = vlaneseq
    %v1375 = vshrl.u32 %v1374, 7
    %v1376 = vsub.s32 %v1373, %v1375
    %v1377 = vrot.slane %v1355, %v1376
    %v1379 = vunpack.c.l.s4 1966171168
    %v1380 = vunpack.c.0.s8 %v1379
    %v1381 = vlaneseq
    %v1382 = vshrl.u32 %v1381, 7
    %v1383 = vsub.s32 %v1380, %v1382
    %v1384 = vrot.slane %v1356, %v1383
    %v1385 = vcombine.high %v1363, %v1363
    %v1386 = vcombine.high %v1370, %v1370
    %v1387 = vcombine.high %v1377, %v1377
    %v1388 = vcombine.high %v1384, %v1384
    %v1389 = vcombine.high %v20, %v20
    %v1391 = vunpack.c.l.s4 1966171168
    %v1392 = vunpack.c.0.s8 %v1391
    %v1393 = vlaneseq
    %v1394 = vshrl.u32 %v1393, 7
    %v1395 = vsub.s32 %v1392, %v1394
    %v1396 = vrot.slane %v20, %v1395
    %v1398 = vunpack.c.l.s4 1966171168
    %v1399 = vunpack.c.0.s8 %v1398
    %v1400 = vlaneseq
    %v1401 = vshrl.u32 %v1400, 7
    %v1402 = vsub.s32 %v1399, %v1401
    %v1403 = vrot.slane %v1389, %v1402
    %v1404 = vcombine.high %v1396, %v1396
    %v1405 = vcombine.high %v1403, %v1403
    %v1407 = vunpack.c.l.s4 1966171168
    %v1408 = vunpack.c.0.s8 %v1407
    %v1409 = vlaneseq
    %v1410 = vshrl.u32 %v1409, 7
    %v1411 = vsub.s32 %v1408, %v1410
    %v1412 = vrot.slane %v1396, %v1411
    %v1414 = vunpack.c.l.s4 1966171168
    %v1415 = vunpack.c.0.s8 %v1414
    %v1416 = vlaneseq
    %v1417 = vshrl.u32 %v1416, 7
    %v1418 = vsub.s32 %v1415, %v1417
    %v1419 = vrot.slane %v1403, %v1418
    %v1421 = vunpack.c.l.s4 1966171168
    %v1422 = vunpack.c.0.s8 %v1421
    %v1423 = vlaneseq
    %v1424 = vshrl.u32 %v1423, 7
    %v1425 = vsub.s32 %v1422, %v1424
    %v1426 = vrot.slane %v1404, %v1425
    %v1428 = vunpack.c.l.s4 1966171168
    %v1429 = vunpack.c.0.s8 %v1428
    %v1430 = vlaneseq
    %v1431 = vshrl.u32 %v1430, 7
    %v1432 = vsub.s32 %v1429, %v1431
    %v1433 = vrot.slane %v1405, %v1432
    %v1434 = vcombine.high %v1412, %v1412
    %v1435 = vcombine.high %v1419, %v1419
    %v1436 = vcombine.high %v1426, %v1426
    %v1437 = vcombine.high %v1433, %v1433
    %v1438 = vcombine.high %v21, %v21
    %v1440 = vunpack.c.l.s4 1966171168
    %v1441 = vunpack.c.0.s8 %v1440
    %v1442 = vlaneseq
    %v1443 = vshrl.u32 %v1442, 7
    %v1444 = vsub.s32 %v1441, %v1443
    %v1445 = vrot.slane %v21, %v1444
    %v1447 = vunpack.c.l.s4 1966171168
    %v1448 = vunpack.c.0.s8 %v1447
    %v1449 = vlaneseq
    %v1450 = vshrl.u32 %v1449, 7
    %v1451 = vsub.s32 %v1448, %v1450
    %v1452 = vrot.slane %v1438, %v1451
    %v1453 = vcombine.high %v1445, %v1445
    %v1454 = vcombine.high %v1452, %v1452
    %v1456 = vunpack.c.l.s4 1966171168
    %v1457 = vunpack.c.0.s8 %v1456
    %v1458 = vlaneseq
    %v1459 = vshrl.u32 %v1458, 7
    %v1460 = vsub.s32 %v1457, %v1459
    %v1461 = vrot.slane %v1445, %v1460
    %v1463 = vunpack.c.l.s4 1966171168
    %v1464 = vunpack.c.0.s8 %v1463
    %v1465 = vlaneseq
    %v1466 = vshrl.u32 %v1465, 7
    %v1467 = vsub.s32 %v1464, %v1466
    %v1468 = vrot.slane %v1452, %v1467
    %v1470 = vunpack.c.l.s4 1966171168
    %v1471 = vunpack.c.0.s8 %v1470
    %v1472 = vlaneseq
    %v1473 = vshrl.u32 %v1472, 7
    %v1474 = vsub.s32 %v1471, %v1473
    %v1475 = vrot.slane %v1453, %v1474
    %v1477 = vunpack.c.l.s4 1966171168
    %v1478 = vunpack.c.0.s8 %v1477
    %v1479 = vlaneseq
    %v1480 = vshrl.u32 %v1479, 7
    %v1481 = vsub.s32 %v1478, %v1480
    %v1482 = vrot.slane %v1454, %v1481
    %v1483 = vcombine.high %v1461, %v1461
    %v1484 = vcombine.high %v1468, %v1468
    %v1485 = vcombine.high %v1475, %v1475
    %v1486 = vcombine.high %v1482, %v1482
    %v1487 = vcombine.high %v22, %v22
    %v1489 = vunpack.c.l.s4 1966171168
    %v1490 = vunpack.c.0.s8 %v1489
    %v1491 = vlaneseq
    %v1492 = vshrl.u32 %v1491, 7
    %v1493 = vsub.s32 %v1490, %v1492
    %v1494 = vrot.slane %v22, %v1493
    %v1496 = vunpack.c.l.s4 1966171168
    %v1497 = vunpack.c.0.s8 %v1496
    %v1498 = vlaneseq
    %v1499 = vshrl.u32 %v1498, 7
    %v1500 = vsub.s32 %v1497, %v1499
    %v1501 = vrot.slane %v1487, %v1500
    %v1502 = vcombine.high %v1494, %v1494
    %v1503 = vcombine.high %v1501, %v1501
    %v1505 = vunpack.c.l.s4 1966171168
    %v1506 = vunpack.c.0.s8 %v1505
    %v1507 = vlaneseq
    %v1508 = vshrl.u32 %v1507, 7
    %v1509 = vsub.s32 %v1506, %v1508
    %v1510 = vrot.slane %v1494, %v1509
    %v1512 = vunpack.c.l.s4 1966171168
    %v1513 = vunpack.c.0.s8 %v1512
    %v1514 = vlaneseq
    %v1515 = vshrl.u32 %v1514, 7
    %v1516 = vsub.s32 %v1513, %v1515
    %v1517 = vrot.slane %v1501, %v1516
    %v1519 = vunpack.c.l.s4 1966171168
    %v1520 = vunpack.c.0.s8 %v1519
    %v1521 = vlaneseq
    %v1522 = vshrl.u32 %v1521, 7
    %v1523 = vsub.s32 %v1520, %v1522
    %v1524 = vrot.slane %v1502, %v1523
    %v1526 = vunpack.c.l.s4 1966171168
    %v1527 = vunpack.c.0.s8 %v1526
    %v1528 = vlaneseq
    %v1529 = vshrl.u32 %v1528, 7
    %v1530 = vsub.s32 %v1527, %v1529
    %v1531 = vrot.slane %v1503, %v1530
    %v1532 = vcombine.high %v1510, %v1510
    %v1533 = vcombine.high %v1517, %v1517
    %v1534 = vcombine.high %v1524, %v1524
    %v1535 = vcombine.high %v1531, %v1531
    %v1536 = vcombine.high %v23, %v23
    %v1538 = vunpack.c.l.s4 1966171168
    %v1539 = vunpack.c.0.s8 %v1538
    %v1540 = vlaneseq
    %v1541 = vshrl.u32 %v1540, 7
    %v1542 = vsub.s32 %v1539, %v1541
    %v1543 = vrot.slane %v23, %v1542
    %v1545 = vunpack.c.l.s4 1966171168
    %v1546 = vunpack.c.0.s8 %v1545
    %v1547 = vlaneseq
    %v1548 = vshrl.u32 %v1547, 7
    %v1549 = vsub.s32 %v1546, %v1548
    %v1550 = vrot.slane %v1536, %v1549
    %v1551 = vcombine.high %v1543, %v1543
    %v1552 = vcombine.high %v1550, %v1550
    %v1554 = vunpack.c.l.s4 1966171168
    %v1555 = vunpack.c.0.s8 %v1554
    %v1556 = vlaneseq
    %v1557 = vshrl.u32 %v1556, 7
    %v1558 = vsub.s32 %v1555, %v1557
    %v1559 = vrot.slane %v1543, %v1558
    %v1561 = vunpack.c.l.s4 1966171168
    %v1562 = vunpack.c.0.s8 %v1561
    %v1563 = vlaneseq
    %v1564 = vshrl.u32 %v1563, 7
    %v1565 = vsub.s32 %v1562, %v1564
    %v1566 = vrot.slane %v1550, %v1565
    %v1568 = vunpack.c.l.s4 1966171168
    %v1569 = vunpack.c.0.s8 %v1568
    %v1570 = vlaneseq
    %v1571 = vshrl.u32 %v1570, 7
    %v1572 = vsub.s32 %v1569, %v1571
    %v1573 = vrot.slane %v1551, %v1572
    %v1575 = vunpack.c.l.s4 1966171168
    %v1576 = vunpack.c.0.s8 %v1575
    %v1577 = vlaneseq
    %v1578 = vshrl.u32 %v1577, 7
    %v1579 = vsub.s32 %v1576, %v1578
    %v1580 = vrot.slane %v1552, %v1579
    %v1581 = vcombine.high %v1559, %v1559
    %v1582 = vcombine.high %v1566, %v1566
    %v1583 = vcombine.high %v1573, %v1573
    %v1584 = vcombine.high %v1580, %v1580
    %v1585 = vcombine.high %v24, %v24
    %v1587 = vunpack.c.l.s4 1966171168
    %v1588 = vunpack.c.0.s8 %v1587
    %v1589 = vlaneseq
    %v1590 = vshrl.u32 %v1589, 7
    %v1591 = vsub.s32 %v1588, %v1590
    %v1592 = vrot.slane %v24, %v1591
    %v1594 = vunpack.c.l.s4 1966171168
    %v1595 = vunpack.c.0.s8 %v1594
    %v1596 = vlaneseq
    %v1597 = vshrl.u32 %v1596, 7
    %v1598 = vsub.s32 %v1595, %v1597
    %v1599 = vrot.slane %v1585, %v1598
    %v1600 = vcombine.high %v1592, %v1592
    %v1601 = vcombine.high %v1599, %v1599
    %v1603 = vunpack.c.l.s4 1966171168
    %v1604 = vunpack.c.0.s8 %v1603
    %v1605 = vlaneseq
    %v1606 = vshrl.u32 %v1605, 7
    %v1607 = vsub.s32 %v1604, %v1606
    %v1608 = vrot.slane %v1592, %v1607
    %v1610 = vunpack.c.l.s4 1966171168
    %v1611 = vunpack.c.0.s8 %v1610
    %v1612 = vlaneseq
    %v1613 = vshrl.u32 %v1612, 7
    %v1614 = vsub.s32 %v1611, %v1613
    %v1615 = vrot.slane %v1599, %v1614
    %v1617 = vunpack.c.l.s4 1966171168
    %v1618 = vunpack.c.0.s8 %v1617
    %v1619 = vlaneseq
    %v1620 = vshrl.u32 %v1619, 7
    %v1621 = vsub.s32 %v1618, %v1620
    %v1622 = vrot.slane %v1600, %v1621
    %v1624 = vunpack.c.l.s4 1966171168
    %v1625 = vunpack.c.0.s8 %v1624
    %v1626 = vlaneseq
    %v1627 = vshrl.u32 %v1626, 7
    %v1628 = vsub.s32 %v1625, %v1627
    %v1629 = vrot.slane %v1601, %v1628
    %v1630 = vcombine.high %v1608, %v1608
    %v1631 = vcombine.high %v1615, %v1615
    %v1632 = vcombine.high %v1622, %v1622
    %v1633 = vcombine.high %v1629, %v1629
    %v2858 = vunpack.c.l.b16 %v25
    %v2859 = vunpack.c.l.b16 %v26
    %v2860 = vunpack.c.l.b16 %v27
    %v2861 = vunpack.c.l.b16 %v28
    %v2862 = vunpack.c.l.b16 %v29
    %v2863 = vunpack.c.l.b16 %v30
    %v2864 = vunpack.c.l.b16 %v31
    %v2865 = vunpack.c.l.b16 %v32
    %v2866 = vunpack.c.l.b16 %v33
    %v2867 = vunpack.c.l.b16 %v34
    %v2868 = vunpack.c.l.b16 %v35
    %v2869 = vunpack.c.l.b16 %v36
    %v2870 = vunpack.c.l.b16 %v37
    %v2871 = vunpack.c.l.b16 %v38
    %v2872 = vunpack.c.l.b16 %v39
    %v2873 = vunpack.c.l.b16 %v40
    %v2874 = vunpack.c.l.b16 %v41
    %v2875 = vunpack.c.l.b16 %v42
    %v2876 = vunpack.c.l.b16 %v43
    %v2877 = vunpack.c.l.b16 %v44
    %v2878 = vunpack.c.l.b16 %v45
    %v2879 = vunpack.c.l.b16 %v46
    %v2880 = vunpack.c.l.b16 %v47
    %v2881 = vunpack.c.l.b16 %v48
    %v2882 = vunpack.c.l.b16 %v49
    %v2883 = vunpack.c.l.b16 %v50
    %v2884 = vunpack.c.l.b16 %v51
    %v2885 = vunpack.c.l.b16 %v52
    %v2886 = vunpack.c.l.b16 %v53
    %v2887 = vunpack.c.l.b16 %v54
    %v2888 = vunpack.c.l.b16 %v55
    %v2889 = vunpack.c.l.b16 %v56
    %v2890 = vunpack.c.l.b16 %v57
    %v2891 = vunpack.c.l.b16 %v58
    %v2892 = vunpack.c.l.b16 %v59
    %v2893 = vunpack.c.l.b16 %v60
    %v2894 = vunpack.c.l.b16 %v61
    %v2895 = vunpack.c.l.b16 %v62
    %v2896 = vunpack.c.l.b16 %v63
    %v2897 = vunpack.c.l.b16 %v64
    %v2898 = vunpack.c.l.b16 %v65
    %v2899 = vunpack.c.l.b16 %v66
    %v2900 = vunpack.c.l.b16 %v67
    %v2901 = vunpack.c.l.b16 %v68
    %v2902 = vunpack.c.l.b16 %v69
    %v2903 = vunpack.c.l.b16 %v70
    %v2904 = vunpack.c.l.b16 %v71
    %v2905 = vunpack.c.l.b16 %v72
    %v2906 = vunpack.c.l.b16 %v73
    %v2907 = vunpack.c.l.b16 %v74
    %v2908 = vunpack.c.l.b16 %v75
    %v2909 = vunpack.c.l.b16 %v76
    %v2910 = vunpack.c.l.b16 %v77
    %v2911 = vunpack.c.l.b16 %v78
    %v2912 = vunpack.c.l.b16 %v79
    %v2913 = vunpack.c.l.b16 %v80
    %v2914 = vunpack.c.l.b16 %v81
    %v2915 = vunpack.c.l.b16 %v82
    %v2916 = vunpack.c.l.b16 %v83
    %v2917 = vunpack.c.l.b16 %v84
    %v2918 = vunpack.c.l.b16 %v85
    %v2919 = vunpack.c.l.b16 %v86
    %v2920 = vunpack.c.l.b16 %v87
    %v2921 = vunpack.c.l.b16 %v88
    %v2922 = vunpack.c.l.b16 %v89
    %v2923 = vunpack.c.l.b16 %v90
    %v2924 = vunpack.c.l.b16 %v91
    %v2925 = vunpack.c.l.b16 %v92
    %v2926 = vunpack.c.l.b16 %v93
    %v2927 = vunpack.c.l.b16 %v94
    %v2928 = vunpack.c.l.b16 %v95
    %v2929 = vunpack.c.l.b16 %v96
    %v2930 = vunpack.c.l.b16 %v97
    %v2931 = vunpack.c.l.b16 %v98
    %v2932 = vunpack.c.l.b16 %v99
    %v2933 = vunpack.c.l.b16 %v100
    %v2934 = vunpack.c.l.b16 %v101
    %v2935 = vunpack.c.l.b16 %v102
    %v2936 = vunpack.c.l.b16 %v103
    %v2937 = vunpack.c.l.b16 %v104
    %v2938 = vunpack.c.l.b16 %v105
    %v2939 = vunpack.c.l.b16 %v106
    %v2940 = vunpack.c.l.b16 %v107
    %v2941 = vunpack.c.l.b16 %v108
    %v2942 = vunpack.c.l.b16 %v109
    %v2943 = vunpack.c.l.b16 %v110
    %v2944 = vunpack.c.l.b16 %v111
    %v2945 = vunpack.c.l.b16 %v112
    %v2946 = vunpack.c.l.b16 %v113
    %v2947 = vunpack.c.l.b16 %v114
    %v2948 = vunpack.c.l.b16 %v115
    %v2949 = vunpack.c.l.b16 %v116
    %v2950 = vunpack.c.l.b16 %v117
    %v2951 = vunpack.c.l.b16 %v118
    %v2952 = vunpack.c.l.b16 %v119
    %v2953 = vunpack.c.l.b16 %v120
    %v2954 = vunpack.c.l.b16 %v121
    %v2955 = vunpack.c.l.b16 %v122
    %v2956 = vunpack.c.l.b16 %v123
    %v2957 = vunpack.c.l.b16 %v124
    %v2958 = vunpack.c.l.b16 %v125
    %v2959 = vunpack.c.l.b16 %v126
    %v2960 = vunpack.c.l.b16 %v127
    %v2961 = vunpack.c.l.b16 %v128
    %v2962 = vunpack.c.l.b16 %v129
    %v2963 = vunpack.c.l.b16 %v130
    %v2964 = vunpack.c.l.b16 %v131
    %v2965 = vunpack.c.l.b16 %v132
    %v2966 = vunpack.c.l.b16 %v133
    %v2967 = vunpack.c.l.b16 %v134
    %v2968 = vunpack.c.l.b16 %v135
    %v2969 = vunpack.c.l.b16 %v136
    %v2970 = vunpack.c.l.b16 %v137
    %v2971 = vunpack.c.l.b16 %v138
    %v2972 = vunpack.c.l.b16 %v139
    %v2973 = vunpack.c.l.b16 %v140
    %v2974 = vunpack.c.l.b16 %v141
    %v2975 = vunpack.c.l.b16 %v142
    %v2976 = vunpack.c.l.b16 %v143
    %v2977 = vunpack.c.l.b16 %v144
    %v2978 = vunpack.c.l.b16 %v145
    %v2979 = vunpack.c.l.b16 %v146
    %v2980 = vunpack.c.l.b16 %v147
    %v2981 = vunpack.c.l.b16 %v148
    %v2982 = vunpack.c.l.b16 %v149
    %v2983 = vunpack.c.l.b16 %v150
    %v2984 = vunpack.c.l.b16 %v151
    %v2985 = vunpack.c.l.b16 %v152
    %v2986 = vunpack.c.l.b16 %v153
    %v2987 = vunpack.c.l.b16 %v154
    %v2988 = vunpack.c.l.b16 %v155
    %v2989 = vunpack.c.l.b16 %v156
    %v2990 = vunpack.c.l.b16 %v157
    %v2991 = vunpack.c.l.b16 %v158
    %v2992 = vunpack.c.l.b16 %v159
    %v2993 = vunpack.c.l.b16 %v160
    %v2994 = vunpack.c.l.b16 %v161
    %v2995 = vunpack.c.l.b16 %v162
    %v2996 = vunpack.c.l.b16 %v163
    %v2997 = vunpack.c.l.b16 %v164
    %v2998 = vunpack.c.l.b16 %v165
    %v2999 = vunpack.c.l.b16 %v166
    %v3000 = vunpack.c.l.b16 %v167
    %v3001 = vunpack.c.l.b16 %v168
    %v3002 = vunpack.c.l.b16 %v169
    %v3003 = vunpack.c.l.b16 %v170
    %v3004 = vunpack.c.l.b16 %v171
    %v3005 = vunpack.c.l.b16 %v172
    %v3006 = vunpack.c.l.b16 %v173
    %v3007 = vunpack.c.l.b16 %v174
    %v3008 = vunpack.c.l.b16 %v175
    %v3009 = vunpack.c.l.b16 %v176
    %v3010 = vunpack.c.l.b16 %v177
    %v3011 = vunpack.c.l.b16 %v178
    %v3012 = vunpack.c.l.b16 %v179
    %v3013 = vunpack.c.l.b16 %v180
    %v3014 = vunpack.c.l.b16 %v181
    %v3015 = vunpack.c.l.b16 %v182
    %v3016 = vunpack.c.l.b16 %v183
    %v3017 = vunpack.c.l.b16 %v184
    %v3018 = vunpack.c.l.b16 %v185
    %v3019 = vunpack.c.l.b16 %v186
    %v3020 = vunpack.c.l.b16 %v187
    %v3021 = vunpack.c.l.b16 %v188
    %v3022 = vunpack.c.l.b16 %v189
    %v3023 = vunpack.c.l.b16 %v190
    %v3024 = vunpack.c.l.b16 %v191
    %v3025 = vunpack.c.l.b16 %v192
    %v3026 = vunpack.c.l.b16 %v193
    %v3027 = vunpack.c.l.b16 %v194
    %v3028 = vunpack.c.l.b16 %v195
    %v3029 = vunpack.c.l.b16 %v196
    %v3030 = vunpack.c.l.b16 %v197
    %v3031 = vunpack.c.l.b16 %v198
    %v3032 = vunpack.c.l.b16 %v199
    %v3033 = vunpack.c.l.b16 %v200
    %v3034 = vunpack.c.l.b16 %v201
    %v3035 = vunpack.c.l.b16 %v202
    %v3036 = vunpack.c.l.b16 %v203
    %v3037 = vunpack.c.l.b16 %v204
    %v3038 = vunpack.c.l.b16 %v205
    %v3039 = vunpack.c.l.b16 %v206
    %v3040 = vunpack.c.l.b16 %v207
    %v3041 = vunpack.c.l.b16 %v208
    %v3042 = vunpack.c.l.b16 %v209
    %v3043 = vunpack.c.l.b16 %v210
    %v3044 = vunpack.c.l.b16 %v211
    %v3045 = vunpack.c.l.b16 %v212
    %v3046 = vunpack.c.l.b16 %v213
    %v3047 = vunpack.c.l.b16 %v214
    %v3048 = vunpack.c.l.b16 %v215
    %v3049 = vunpack.c.l.b16 %v216
    %v3050 = vunpack.c.l.b16 %v217
    %v3051 = vunpack.c.l.b16 %v218
    %v3052 = vunpack.c.l.b16 %v219
    %v3053 = vunpack.c.l.b16 %v220
    %v3054 = vunpack.c.l.b16 %v221
    %v3055 = vunpack.c.l.b16 %v222
    %v3056 = vunpack.c.l.b16 %v223
    %v3057 = vunpack.c.l.b16 %v224
    %v3058 = vunpack.c.l.b16 %v225
    %v3059 = vunpack.c.l.b16 %v226
    %v3060 = vunpack.c.l.b16 %v227
    %v3061 = vunpack.c.l.b16 %v228
    %v3062 = vunpack.c.l.b16 %v229
    %v3063 = vunpack.c.l.b16 %v230
    %v3064 = vunpack.c.l.b16 %v231
    %v3065 = vunpack.c.l.b16 %v232
    %v3066 = vunpack.c.l.b16 %v233
    %v3067 = vunpack.c.l.b16 %v234
    %v3068 = vunpack.c.l.b16 %v235
    %v3069 = vunpack.c.l.b16 %v236
    %v3070 = vunpack.c.l.b16 %v237
    %v3071 = vunpack.c.l.b16 %v238
    %v3072 = vunpack.c.l.b16 %v239
    %v3073 = vunpack.c.l.b16 %v240
    %v3074 = vunpack.c.l.b16 %v241
    %v3075 = vunpack.c.l.b16 %v242
    %v3076 = vunpack.c.l.b16 %v243
    %v3077 = vunpack.c.l.b16 %v244
    %v3078 = vunpack.c.l.b16 %v245
    %v3079 = vunpack.c.l.b16 %v246
    %v3080 = vunpack.c.l.b16 %v247
    %v3081 = vunpack.c.l.b16 %v248
    %v3082 = vunpack.c.l.b16 %v249
    %v3083 = vunpack.c.l.b16 %v250
    %v3084 = vunpack.c.l.b16 %v251
    %v3085 = vunpack.c.l.b16 %v252
    %v3086 = vunpack.c.l.b16 %v253
    %v3087 = vunpack.c.l.b16 %v254
    %v3088 = vunpack.c.l.b16 %v255
    %v3089 = vunpack.c.l.b16 %v256
    %v3090 = vunpack.c.l.b16 %v257
    %v3091 = vunpack.c.l.b16 %v258
    %v3092 = vunpack.c.l.b16 %v259
    %v3093 = vunpack.c.l.b16 %v260
    %v3094 = vunpack.c.l.b16 %v261
    %v3095 = vunpack.c.l.b16 %v262
    %v3096 = vunpack.c.l.b16 %v263
    %v3097 = vunpack.c.l.b16 %v264
    %v3098 = vunpack.c.l.b16 %v265
    %v3099 = vunpack.c.l.b16 %v266
    %v3100 = vunpack.c.l.b16 %v267
    %v3101 = vunpack.c.l.b16 %v268
    %v3102 = vunpack.c.l.b16 %v269
    %v3103 = vunpack.c.l.b16 %v270
    %v3104 = vunpack.c.l.b16 %v271
    %v3105 = vunpack.c.l.b16 %v272
    %v3106 = vunpack.c.l.b16 %v273
    %v3107 = vunpack.c.l.b16 %v274
    %v3108 = vunpack.c.l.b16 %v275
    %v3109 = vunpack.c.l.b16 %v276
    %v3110 = vunpack.c.l.b16 %v277
    %v3111 = vunpack.c.l.b16 %v278
    %v3112 = vunpack.c.l.b16 %v279
    %v3113 = vunpack.c.l.b16 %v280
    %v3114 = vunpack.c.l.b16 %v281
    %v3115 = vunpack.c.l.b16 %v282
    %v3116 = vunpack.c.l.b16 %v283
    %v3117 = vunpack.c.l.b16 %v284
    %v3118 = vunpack.c.l.b16 %v285
    %v3119 = vunpack.c.l.b16 %v286
    %v3120 = vunpack.c.l.b16 %v287
    %v3121 = vunpack.c.l.b16 %v288
    %v3122 = vunpack.c.l.b16 %v289
    %v3123 = vunpack.c.l.b16 %v290
    %v3124 = vunpack.c.l.b16 %v291
    %v3125 = vunpack.c.l.b16 %v292
    %v3126 = vunpack.c.l.b16 %v293
    %v3127 = vunpack.c.l.b16 %v294
    %v3128 = vunpack.c.l.b16 %v295
    %v3129 = vunpack.c.l.b16 %v296
    %v3130 = vunpack.c.l.b16 %v297
    %v3131 = vunpack.c.l.b16 %v298
    %v3132 = vunpack.c.l.b16 %v299
    %v3133 = vunpack.c.l.b16 %v300
    %v3134 = vunpack.c.l.b16 %v301
    %v3135 = vunpack.c.l.b16 %v302
    %v3136 = vunpack.c.l.b16 %v303
    %v3137 = vunpack.c.l.b16 %v304
    %v3138 = vunpack.c.l.b16 %v305
    %v3139 = vunpack.c.l.b16 %v306
    %v3140 = vunpack.c.l.b16 %v307
    %v3141 = vunpack.c.l.b16 %v308
    %v3142 = vunpack.c.l.b16 %v309
    %v3143 = vunpack.c.l.b16 %v310
    %v3144 = vunpack.c.l.b16 %v311
    %v3145 = vunpack.c.l.b16 %v312
    %v3146 = vunpack.c.l.b16 %v313
    %v3147 = vunpack.c.l.b16 %v314
    %v3148 = vunpack.c.l.b16 %v315
    %v3149 = vunpack.c.l.b16 %v316
    %v3150 = vunpack.c.l.b16 %v317
    %v3151 = vunpack.c.l.b16 %v318
    %v3152 = vunpack.c.l.b16 %v319
    %v3153 = vunpack.c.l.b16 %v320
    %v3154 = vunpack.c.l.b16 %v321
    %v3155 = vunpack.c.l.b16 %v322
    %v3156 = vunpack.c.l.b16 %v323
    %v3157 = vunpack.c.l.b16 %v324
    %v3158 = vunpack.c.l.b16 %v325
    %v3159 = vunpack.c.l.b16 %v326
    %v3160 = vunpack.c.l.b16 %v327
    %v3161 = vunpack.c.l.b16 %v328
    %v3162 = vunpack.c.l.b16 %v329
    %v3163 = vunpack.c.l.b16 %v330
    %v3164 = vunpack.c.l.b16 %v331
    %v3165 = vunpack.c.l.b16 %v332
    %v3166 = vunpack.c.l.b16 %v333
    %v3167 = vunpack.c.l.b16 %v334
    %v3168 = vunpack.c.l.b16 %v335
    %v3169 = vunpack.c.l.b16 %v336
    %v3170 = vunpack.c.l.b16 %v337
    %v3171 = vunpack.c.l.b16 %v338
    %v3172 = vunpack.c.l.b16 %v339
    %v3173 = vunpack.c.l.b16 %v340
    %v3174 = vunpack.c.l.b16 %v341
    %v3175 = vunpack.c.l.b16 %v342
    %v3176 = vunpack.c.l.b16 %v343
    %v3177 = vunpack.c.l.b16 %v344
    %v3178 = vunpack.c.l.b16 %v345
    %v3179 = vunpack.c.l.b16 %v346
    %v3180 = vunpack.c.l.b16 %v347
    %v3181 = vunpack.c.l.b16 %v348
    %v3182 = vunpack.c.l.b16 %v349
    %v3183 = vunpack.c.l.b16 %v350
    %v3184 = vunpack.c.l.b16 %v351
    %v3185 = vunpack.c.l.b16 %v352
    %v3186 = vunpack.c.l.b16 %v353
    %v3187 = vunpack.c.l.b16 %v354
    %v3188 = vunpack.c.l.b16 %v355
    %v3189 = vunpack.c.l.b16 %v356
    %v3190 = vunpack.c.l.b16 %v357
    %v3191 = vunpack.c.l.b16 %v358
    %v3192 = vunpack.c.l.b16 %v359
    %v3193 = vunpack.c.l.b16 %v360
    %v3194 = vunpack.c.l.b16 %v361
    %v3195 = vunpack.c.l.b16 %v362
    %v3196 = vunpack.c.l.b16 %v363
    %v3197 = vunpack.c.l.b16 %v364
    %v3198 = vunpack.c.l.b16 %v365
    %v3199 = vunpack.c.l.b16 %v366
    %v3200 = vunpack.c.l.b16 %v367
    %v3201 = vunpack.c.l.b16 %v368
    %v3202 = vunpack.c.l.b16 %v369
    %v3203 = vunpack.c.l.b16 %v370
    %v3204 = vunpack.c.l.b16 %v371
    %v3205 = vunpack.c.l.b16 %v372
    %v3206 = vunpack.c.l.b16 %v373
    %v3207 = vunpack.c.l.b16 %v374
    %v3208 = vunpack.c.l.b16 %v375
    %v3209 = vunpack.c.l.b16 %v376
    %v3210 = vunpack.c.l.b16 %v377
    %v3211 = vunpack.c.l.b16 %v378
    %v3212 = vunpack.c.l.b16 %v379
    %v3213 = vunpack.c.l.b16 %v380
    %v3214 = vunpack.c.l.b16 %v381
    %v3215 = vunpack.c.l.b16 %v382
    %v3216 = vunpack.c.l.b16 %v383
    %v3217 = vunpack.c.l.b16 %v384
    %v3218 = vunpack.c.l.b16 %v385
    %v3219 = vunpack.c.l.b16 %v386
    %v3220 = vunpack.c.l.b16 %v387
    %v3221 = vunpack.c.l.b16 %v388
    %v3222 = vunpack.c.l.b16 %v389
    %v3223 = vunpack.c.l.b16 %v390
    %v3224 = vunpack.c.l.b16 %v391
    %v3225 = vunpack.c.l.b16 %v392
    %v3226 = vunpack.c.l.b16 %v393
    %v3227 = vunpack.c.l.b16 %v394
    %v3228 = vunpack.c.l.b16 %v395
    %v3229 = vunpack.c.l.b16 %v396
    %v3230 = vunpack.c.l.b16 %v397
    %v3231 = vunpack.c.l.b16 %v398
    %v3232 = vunpack.c.l.b16 %v399
    %v3233 = vunpack.c.l.b16 %v400
    %v3234 = vunpack.c.l.b16 %v401
    %v3235 = vunpack.c.l.b16 %v402
    %v3236 = vunpack.c.l.b16 %v403
    %v3237 = vunpack.c.l.b16 %v404
    %v3238 = vunpack.c.l.b16 %v405
    %v3239 = vunpack.c.l.b16 %v406
    %v3240 = vunpack.c.l.b16 %v407
    %v3241 = vunpack.c.l.b16 %v408
    %v3242 = vunpack.c.l.b16 %v409
    %v3243 = vunpack.c.l.b16 %v410
    %v3244 = vunpack.c.l.b16 %v411
    %v3245 = vunpack.c.l.b16 %v412
    %v3246 = vunpack.c.l.b16 %v413
    %v3247 = vunpack.c.l.b16 %v414
    %v3248 = vunpack.c.l.b16 %v415
    %v3249 = vunpack.c.l.b16 %v416
    %v3250 = vunpack.c.l.b16 %v417
    %v3251 = vunpack.c.l.b16 %v418
    %v3252 = vunpack.c.l.b16 %v419
    %v3253 = vunpack.c.l.b16 %v420
    %v3254 = vunpack.c.l.b16 %v421
    %v3255 = vunpack.c.l.b16 %v422
    %v3256 = vunpack.c.l.b16 %v423
    %v3257 = vunpack.c.l.b16 %v424
    %v3258 = vunpack.c.l.b16 %v425
    %v3259 = vunpack.c.l.b16 %v426
    %v3260 = vunpack.c.l.b16 %v427
    %v3261 = vunpack.c.l.b16 %v428
    %v3262 = vunpack.c.l.b16 %v429
    %v3263 = vunpack.c.l.b16 %v430
    %v3264 = vunpack.c.l.b16 %v431
    %v3265 = vunpack.c.l.b16 %v432
    %v3266 = vunpack.c.l.b16 %v433
    %v3267 = vunpack.c.l.b16 %v434
    %v3268 = vunpack.c.l.b16 %v435
    %v3269 = vunpack.c.l.b16 %v436
    %v3270 = vunpack.c.l.b16 %v437
    %v3271 = vunpack.c.l.b16 %v438
    %v3272 = vunpack.c.l.b16 %v439
    %v3273 = vunpack.c.l.b16 %v440
    %v3274 = vunpack.c.l.b16 %v441
    %v3275 = vunpack.c.l.b16 %v442
    %v3276 = vunpack.c.l.b16 %v443
    %v3277 = vunpack.c.l.b16 %v444
    %v3278 = vunpack.c.l.b16 %v445
    %v3279 = vunpack.c.l.b16 %v446
    %v3280 = vunpack.c.l.b16 %v447
    %v3281 = vunpack.c.l.b16 %v448
    %v3282 = vunpack.c.l.b16 %v449
    %v3283 = vunpack.c.l.b16 %v450
    %v3284 = vunpack.c.l.b16 %v451
    %v3285 = vunpack.c.l.b16 %v452
    %v3286 = vunpack.c.l.b16 %v453
    %v3287 = vunpack.c.l.b16 %v454
    %v3288 = vunpack.c.l.b16 %v455
    %v3289 = vunpack.c.l.b16 %v456
    %v3290 = vunpack.c.l.b16 %v457
    %v3291 = vunpack.c.l.b16 %v458
    %v3292 = vunpack.c.l.b16 %v459
    %v3293 = vunpack.c.l.b16 %v460
    %v3294 = vunpack.c.l.b16 %v461
    %v3295 = vunpack.c.l.b16 %v462
    %v3296 = vunpack.c.l.b16 %v463
    %v3297 = vunpack.c.l.b16 %v464
    %v3298 = vunpack.c.l.b16 %v465
    %v3299 = vunpack.c.l.b16 %v466
    %v3300 = vunpack.c.l.b16 %v467
    %v3301 = vunpack.c.l.b16 %v468
    %v3302 = vunpack.c.l.b16 %v469
    %v3303 = vunpack.c.l.b16 %v470
    %v3304 = vunpack.c.l.b16 %v471
    %v3305 = vunpack.c.l.b16 %v472
    %v3306 = vunpack.c.l.b16 %v473
    %v3307 = vunpack.c.l.b16 %v474
    %v3308 = vunpack.c.l.b16 %v475
    %v3309 = vunpack.c.l.b16 %v476
    %v3310 = vunpack.c.l.b16 %v477
    %v3311 = vunpack.c.l.b16 %v478
    %v3312 = vunpack.c.l.b16 %v479
    %v3313 = vunpack.c.l.b16 %v480
    %v3314 = vunpack.c.l.b16 %v481
    %v3315 = vunpack.c.l.b16 %v482
    %v3316 = vunpack.c.l.b16 %v483
    %v3317 = vunpack.c.l.b16 %v484
    %v3318 = vunpack.c.l.b16 %v485
    %v3319 = vunpack.c.l.b16 %v486
    %v3320 = vunpack.c.l.b16 %v487
    %v3321 = vunpack.c.l.b16 %v488
    %v3322 = vunpack.c.l.b16 %v489
    %v3323 = vunpack.c.l.b16 %v490
    %v3324 = vunpack.c.l.b16 %v491
    %v3325 = vunpack.c.l.b16 %v492
    %v3326 = vunpack.c.l.b16 %v493
    %v3327 = vunpack.c.l.b16 %v494
    %v3328 = vunpack.c.l.b16 %v495
    %v3329 = vunpack.c.l.b16 %v496
    %v3330 = vunpack.c.l.b16 %v497
    %v3331 = vunpack.c.l.b16 %v498
    %v3332 = vunpack.c.l.b16 %v499
    %v3333 = vunpack.c.l.b16 %v500
    %v3334 = vunpack.c.l.b16 %v501
    %v3335 = vunpack.c.l.b16 %v502
    %v3336 = vunpack.c.l.b16 %v503
    %v3337 = vunpack.c.l.b16 %v504
    %v3338 = vunpack.c.l.b16 %v505
    %v3339 = vunpack.c.l.b16 %v506
    %v3340 = vunpack.c.l.b16 %v507
    %v3341 = vunpack.c.l.b16 %v508
    %v3342 = vunpack.c.l.b16 %v509
    %v3343 = vunpack.c.l.b16 %v510
    %v3344 = vunpack.c.l.b16 %v511
    %v3345 = vunpack.c.l.b16 %v512
    %v3346 = vunpack.c.l.b16 %v513
    %v3347 = vunpack.c.l.b16 %v514
    %v3348 = vunpack.c.l.b16 %v515
    %v3349 = vunpack.c.l.b16 %v516
    %v3350 = vunpack.c.l.b16 %v517
    %v3351 = vunpack.c.l.b16 %v518
    %v3352 = vunpack.c.l.b16 %v519
    %v3353 = vunpack.c.l.b16 %v520
    %v3354 = vunpack.c.l.b16 %v521
    %v3355 = vunpack.c.l.b16 %v522
    %v3356 = vunpack.c.l.b16 %v523
    %v3357 = vunpack.c.l.b16 %v524
    %v3358 = vunpack.c.l.b16 %v525
    %v3359 = vunpack.c.l.b16 %v526
    %v3360 = vunpack.c.l.b16 %v527
    %v3361 = vunpack.c.l.b16 %v528
    %v3362 = vunpack.c.l.b16 %v529
    %v3363 = vunpack.c.l.b16 %v530
    %v3364 = vunpack.c.l.b16 %v531
    %v3365 = vunpack.c.l.b16 %v532
    %v3366 = vunpack.c.l.b16 %v533
    %v3367 = vunpack.c.l.b16 %v534
    %v3368 = vunpack.c.l.b16 %v535
    %v3369 = vunpack.c.l.b16 %v536
    %v3370 = vunpack.c.l.b16 %v537
    %v3371 = vunpack.c.l.b16 %v538
    %v3372 = vunpack.c.l.b16 %v539
    %v3373 = vunpack.c.l.b16 %v540
    %v3374 = vunpack.c.l.b16 %v541
    %v3375 = vunpack.c.l.b16 %v542
    %v3376 = vunpack.c.l.b16 %v543
    %v3377 = vunpack.c.l.b16 %v544
    %v3378 = vunpack.c.l.b16 %v545
    %v3379 = vunpack.c.l.b16 %v546
    %v3380 = vunpack.c.l.b16 %v547
    %v3381 = vunpack.c.l.b16 %v548
    %v3382 = vunpack.c.l.b16 %v549
    %v3383 = vunpack.c.l.b16 %v550
    %v3384 = vunpack.c.l.b16 %v551
    %v3385 = vunpack.c.l.b16 %v552
    %v3386 = vunpack.c.l.b16 %v553
    %v3387 = vunpack.c.l.b16 %v554
    %v3388 = vunpack.c.l.b16 %v555
    %v3389 = vunpack.c.l.b16 %v556
    %v3390 = vunpack.c.l.b16 %v557
    %v3391 = vunpack.c.l.b16 %v558
    %v3392 = vunpack.c.l.b16 %v559
    %v3393 = vunpack.c.l.b16 %v560
    %v3394 = vunpack.c.l.b16 %v561
    %v3395 = vunpack.c.l.b16 %v562
    %v3396 = vunpack.c.l.b16 %v563
    %v3397 = vunpack.c.l.b16 %v564
    %v3398 = vunpack.c.l.b16 %v565
    %v3399 = vunpack.c.l.b16 %v566
    %v3400 = vunpack.c.l.b16 %v567
    %v3401 = vunpack.c.l.b16 %v568
    %v3402 = vunpack.c.l.b16 %v569
    %v3403 = vunpack.c.l.b16 %v570
    %v3404 = vunpack.c.l.b16 %v571
    %v3405 = vunpack.c.l.b16 %v572
    %v3406 = vunpack.c.l.b16 %v573
    %v3407 = vunpack.c.l.b16 %v574
    %v3408 = vunpack.c.l.b16 %v575
    %v3409 = vunpack.c.l.b16 %v576
    %v3410 = vunpack.c.l.b16 %v577
    %v3411 = vunpack.c.l.b16 %v578
    %v3412 = vunpack.c.l.b16 %v579
    %v3413 = vunpack.c.l.b16 %v580
    %v3414 = vunpack.c.l.b16 %v581
    %v3415 = vunpack.c.l.b16 %v582
    %v3416 = vunpack.c.l.b16 %v583
    %v3417 = vunpack.c.l.b16 %v584
    %v3418 = vunpack.c.l.b16 %v585
    %v3419 = vunpack.c.l.b16 %v586
    %v3420 = vunpack.c.l.b16 %v587
    %v3421 = vunpack.c.l.b16 %v588
    %v3422 = vunpack.c.l.b16 %v589
    %v3423 = vunpack.c.l.b16 %v590
    %v3424 = vunpack.c.l.b16 %v591
    %v3425 = vunpack.c.l.b16 %v592
    %v3426 = vunpack.c.l.b16 %v593
    %v3427 = vunpack.c.l.b16 %v594
    %v3428 = vunpack.c.l.b16 %v595
    %v3429 = vunpack.c.l.b16 %v596
    %v3430 = vunpack.c.l.b16 %v597
    %v3431 = vunpack.c.l.b16 %v598
    %v3432 = vunpack.c.l.b16 %v599
    %v3433 = vunpack.c.l.b16 %v600
    %v3434 = vunpack.c.l.b16 %v601
    %v3435 = vunpack.c.l.b16 %v602
    %v3436 = vunpack.c.l.b16 %v603
    %v3437 = vunpack.c.l.b16 %v604
    %v3438 = vunpack.c.l.b16 %v605
    %v3439 = vunpack.c.l.b16 %v606
    %v3440 = vunpack.c.l.b16 %v607
    %v3441 = vunpack.c.l.b16 %v608
    %v3442 = vunpack.c.l.b16 %v609
    %v3443 = vunpack.c.l.b16 %v610
    %v3444 = vunpack.c.l.b16 %v611
    %v3445 = vunpack.c.l.b16 %v612
    %v3446 = vunpack.c.l.b16 %v613
    %v3447 = vunpack.c.l.b16 %v614
    %v3448 = vunpack.c.l.b16 %v615
    %v3449 = vunpack.c.l.b16 %v616
    %v3450 = vunpack.c.l.b16 %v617
    %v3451 = vunpack.c.l.b16 %v618
    %v3452 = vunpack.c.l.b16 %v619
    %v3453 = vunpack.c.l.b16 %v620
    %v3454 = vunpack.c.l.b16 %v621
    %v3455 = vunpack.c.l.b16 %v622
    %v3456 = vunpack.c.l.b16 %v623
    %v3457 = vunpack.c.l.b16 %v624
    %v3458 = vunpack.c.l.b16 %v625
    %v3459 = vunpack.c.l.b16 %v626
    %v3460 = vunpack.c.l.b16 %v627
    %v3461 = vunpack.c.l.b16 %v628
    %v3462 = vunpack.c.l.b16 %v629
    %v3463 = vunpack.c.l.b16 %v630
    %v3464 = vunpack.c.l.b16 %v631
    %v3465 = vunpack.c.l.b16 %v632
    %v3466 = vunpack.c.l.b16 %v633
    %v3467 = vunpack.c.l.b16 %v634
    %v3468 = vunpack.c.l.b16 %v635
    %v3469 = vunpack.c.l.b16 %v636
    %v3470 = vunpack.c.l.b16 %v637
    %v3471 = vunpack.c.l.b16 %v638
    %v3472 = vunpack.c.l.b16 %v639
    %v3473 = vunpack.c.l.b16 %v640
    %v3474 = vunpack.c.l.b16 %v641
    %v3475 = vunpack.c.l.b16 %v642
    %v3476 = vunpack.c.l.b16 %v643
    %v3477 = vunpack.c.l.b16 %v644
    %v3478 = vunpack.c.l.b16 %v645
    %v3479 = vunpack.c.l.b16 %v646
    %v3480 = vunpack.c.l.b16 %v647
    %v3481 = vunpack.c.l.b16 %v648
    %v3482 = vunpack.c.l.b16 %v649
    %v3483 = vunpack.c.l.b16 %v650
    %v3484 = vunpack.c.l.b16 %v651
    %v3485 = vunpack.c.l.b16 %v652
    %v3486 = vunpack.c.l.b16 %v653
    %v3487 = vunpack.c.l.b16 %v654
    %v3488 = vunpack.c.l.b16 %v655
    %v3489 = vunpack.c.l.b16 %v656
    %v3490 = vunpack.c.l.b16 %v657
    %v3491 = vunpack.c.l.b16 %v658
    %v3492 = vunpack.c.l.b16 %v659
    %v3493 = vunpack.c.l.b16 %v660
    %v3494 = vunpack.c.l.b16 %v661
    %v3495 = vunpack.c.l.b16 %v662
    %v3496 = vunpack.c.l.b16 %v663
    %v3497 = vunpack.c.l.b16 %v664
    %v3498 = vunpack.c.l.b16 %v665
    %v3499 = vunpack.c.l.b16 %v666
    %v3500 = vunpack.c.l.b16 %v667
    %v3501 = vunpack.c.l.b16 %v668
    %v3502 = vunpack.c.l.b16 %v669
    %v3503 = vunpack.c.l.b16 %v670
    %v3504 = vunpack.c.l.b16 %v671
    %v3505 = vunpack.c.l.b16 %v672
    %v3506 = vunpack.c.l.b16 %v673
    %v3507 = vunpack.c.l.b16 %v674
    %v3508 = vunpack.c.l.b16 %v675
    %v3509 = vunpack.c.l.b16 %v676
    %v3510 = vunpack.c.l.b16 %v677
    %v3511 = vunpack.c.l.b16 %v678
    %v3512 = vunpack.c.l.b16 %v679
    %v3513 = vunpack.c.l.b16 %v680
    %v3514 = vunpack.c.l.b16 %v681
    %v3515 = vunpack.c.l.b16 %v682
    %v3516 = vunpack.c.l.b16 %v683
    %v3517 = vunpack.c.l.b16 %v684
    %v3518 = vunpack.c.l.b16 %v685
    %v3519 = vunpack.c.l.b16 %v686
    %v3520 = vunpack.c.l.b16 %v687
    %v3521 = vunpack.c.l.b16 %v688
    %v3522 = vunpack.c.l.b16 %v689
    %v3523 = vunpack.c.l.b16 %v690
    %v3524 = vunpack.c.l.b16 %v691
    %v3525 = vunpack.c.l.b16 %v692
    %v3526 = vunpack.c.l.b16 %v693
    %v3527 = vunpack.c.l.b16 %v694
    %v3528 = vunpack.c.l.b16 %v695
    %v3529 = vunpack.c.l.b16 %v696
    %v3530 = vunpack.c.l.b16 %v697
    %v3531 = vunpack.c.l.b16 %v698
    %v3532 = vunpack.c.l.b16 %v699
    %v3533 = vunpack.c.l.b16 %v700
    %v3534 = vunpack.c.l.b16 %v701
    %v3535 = vunpack.c.l.b16 %v702
    %v3536 = vunpack.c.l.b16 %v703
    %v3537 = vunpack.c.l.b16 %v704
    %v3538 = vunpack.c.l.b16 %v705
    %v3539 = vunpack.c.l.b16 %v706
    %v3540 = vunpack.c.l.b16 %v707
    %v3541 = vunpack.c.l.b16 %v708
    %v3542 = vunpack.c.l.b16 %v709
    %v3543 = vunpack.c.l.b16 %v710
    %v3544 = vunpack.c.l.b16 %v711
    %v3545 = vunpack.c.l.b16 %v712
    %v3546 = vunpack.c.l.b16 %v713
    %v3547 = vunpack.c.l.b16 %v714
    %v3548 = vunpack.c.l.b16 %v715
    %v3549 = vunpack.c.l.b16 %v716
    %v3550 = vunpack.c.l.b16 %v717
    %v3551 = vunpack.c.l.b16 %v718
    %v3552 = vunpack.c.l.b16 %v719
    %v3553 = vunpack.c.l.b16 %v720
    %v3554 = vunpack.c.l.b16 %v721
    %v3555 = vunpack.c.l.b16 %v722
    %v3556 = vunpack.c.l.b16 %v723
    %v3557 = vunpack.c.l.b16 %v724
    %v3558 = vunpack.c.l.b16 %v725
    %v3559 = vunpack.c.l.b16 %v726
    %v3560 = vunpack.c.l.b16 %v727
    %v3561 = vunpack.c.l.b16 %v728
    %v3562 = vunpack.c.l.b16 %v729
    %v3563 = vunpack.c.l.b16 %v730
    %v3564 = vunpack.c.l.b16 %v731
    %v3565 = vunpack.c.l.b16 %v732
    %v3566 = vunpack.c.l.b16 %v733
    %v3567 = vunpack.c.l.b16 %v734
    %v3568 = vunpack.c.l.b16 %v735
    %v3569 = vunpack.c.l.b16 %v736
    %v3570 = vunpack.c.l.b16 %v737
    %v3571 = vunpack.c.l.b16 %v738
    %v3572 = vunpack.c.l.b16 %v739
    %v3573 = vunpack.c.l.b16 %v740
    %v3574 = vunpack.c.l.b16 %v741
    %v3575 = vunpack.c.l.b16 %v742
    %v3576 = vunpack.c.l.b16 %v743
    %v3577 = vunpack.c.l.b16 %v744
    %v3578 = vunpack.c.l.b16 %v745
    %v3579 = vunpack.c.l.b16 %v746
    %v3580 = vunpack.c.l.b16 %v747
    %v3581 = vunpack.c.l.b16 %v748
    %v3582 = vunpack.c.l.b16 %v749
    %v3583 = vunpack.c.l.b16 %v750
    %v3584 = vunpack.c.l.b16 %v751
    %v3585 = vunpack.c.l.b16 %v752
    %v3586 = vunpack.c.l.b16 %v753
    %v3587 = vunpack.c.l.b16 %v754
    %v3588 = vunpack.c.l.b16 %v755
    %v3589 = vunpack.c.l.b16 %v756
    %v3590 = vunpack.c.l.b16 %v757
    %v3591 = vunpack.c.l.b16 %v758
    %v3592 = vunpack.c.l.b16 %v759
    %v3593 = vunpack.c.l.b16 %v760
    %v3594 = vunpack.c.l.b16 %v761
    %v3595 = vunpack.c.l.b16 %v762
    %v3596 = vunpack.c.l.b16 %v763
    %v3597 = vunpack.c.l.b16 %v764
    %v3598 = vunpack.c.l.b16 %v765
    %v3599 = vunpack.c.l.b16 %v766
    %v3600 = vunpack.c.l.b16 %v767
    %v3601 = vunpack.c.l.b16 %v768
    %v3602 = vunpack.c.l.b16 %v769
    %v3603 = vunpack.c.l.b16 %v770
    %v3604 = vunpack.c.l.b16 %v771
    %v3605 = vunpack.c.l.b16 %v772
    %v3606 = vunpack.c.l.b16 %v773
    %v3607 = vunpack.c.l.b16 %v774
    %v3608 = vunpack.c.l.b16 %v775
    %v3609 = vunpack.c.l.b16 %v776
    %v3610 = vunpack.c.l.b16 %v777
    %v3611 = vunpack.c.l.b16 %v778
    %v3612 = vunpack.c.l.b16 %v779
    %v3613 = vunpack.c.l.b16 %v780
    %v3614 = vunpack.c.l.b16 %v781
    %v3615 = vunpack.c.l.b16 %v782
    %v3616 = vunpack.c.l.b16 %v783
    %v3617 = vunpack.c.l.b16 %v784
    %v3618 = vunpack.c.l.b16 %v785
    %v3619 = vunpack.c.l.b16 %v786
    %v3620 = vunpack.c.l.b16 %v787
    %v3621 = vunpack.c.l.b16 %v788
    %v3622 = vunpack.c.l.b16 %v789
    %v3623 = vunpack.c.l.b16 %v790
    %v3624 = vunpack.c.l.b16 %v791
    %v3625 = vunpack.c.l.b16 %v792
    %v3626 = vunpack.c.l.b16 %v793
    %v3627 = vunpack.c.l.b16 %v794
    %v3628 = vunpack.c.l.b16 %v795
    %v3629 = vunpack.c.l.b16 %v796
    %v3630 = vunpack.c.l.b16 %v797
    %v3631 = vunpack.c.l.b16 %v798
    %v3632 = vunpack.c.l.b16 %v799
    %v3633 = vunpack.c.l.b16 %v800
    %v3634 = vunpack.c.l.b16 %v801
    %v3635 = vunpack.c.l.b16 %v802
    %v3636 = vunpack.c.l.b16 %v803
    %v3637 = vunpack.c.l.b16 %v804
    %v3638 = vunpack.c.l.b16 %v805
    %v3639 = vunpack.c.l.b16 %v806
    %v3640 = vunpack.c.l.b16 %v807
    %v3641 = vunpack.c.l.b16 %v808
    %v3642 = vunpack.c.l.b16 %v809
    %v3643 = vunpack.c.l.b16 %v810
    %v3644 = vunpack.c.l.b16 %v811
    %v3645 = vunpack.c.l.b16 %v812
    %v3646 = vunpack.c.l.b16 %v813
    %v3647 = vunpack.c.l.b16 %v814
    %v3648 = vunpack.c.l.b16 %v815
    %v3649 = vunpack.c.l.b16 %v816
    %v3650 = vunpack.c.l.b16 %v817
    %v3651 = vunpack.c.l.b16 %v818
    %v3652 = vunpack.c.l.b16 %v819
    %v3653 = vunpack.c.l.b16 %v820
    %v3654 = vunpack.c.l.b16 %v821
    %v3655 = vunpack.c.l.b16 %v822
    %v3656 = vunpack.c.l.b16 %v823
    %v3657 = vunpack.c.l.b16 %v824
    %v3658 = vunpack.c.l.b16 %v825
    %v3659 = vunpack.c.l.b16 %v826
    %v3660 = vunpack.c.l.b16 %v827
    %v3661 = vunpack.c.l.b16 %v828
    %v3662 = vunpack.c.l.b16 %v829
    %v3663 = vunpack.c.l.b16 %v830
    %v3664 = vunpack.c.l.b16 %v831
    %v3665 = vunpack.c.l.b16 %v832
    %v3666 = vunpack.c.l.b16 %v833
    %v3667 = vunpack.c.l.b16 %v834
    %v3668 = vunpack.c.l.b16 %v835
    %v3669 = vunpack.c.l.b16 %v836
    %v3670 = vunpack.c.l.b16 %v837
    %v3671 = vunpack.c.l.b16 %v838
    %v3672 = vunpack.c.l.b16 %v839
    %v3673 = vunpack.c.l.b16 %v840
    %v3674 = vunpack.c.l.b16 %v841
    %v3675 = vunpack.c.l.b16 %v842
    %v3676 = vunpack.c.l.b16 %v843
    %v3677 = vunpack.c.l.b16 %v844
    %v3678 = vunpack.c.l.b16 %v845
    %v3679 = vunpack.c.l.b16 %v846
    %v3680 = vunpack.c.l.b16 %v847
    %v3681 = vunpack.c.l.b16 %v848
    %v3682 = vunpack.c.l.b16 %v849
    %v3683 = vunpack.c.l.b16 %v850
    %v3684 = vunpack.c.l.b16 %v851
    %v3685 = vunpack.c.l.b16 %v852
    %v3686 = vunpack.c.l.b16 %v853
    %v3687 = vunpack.c.l.b16 %v854
    %v3688 = vunpack.c.l.b16 %v855
    %v3689 = vunpack.c.l.b16 %v856
    %v3690 = vunpack.c.l.b16 %v857
    %v3691 = vunpack.c.l.b16 %v858
    %v3692 = vunpack.c.l.b16 %v859
    %v3693 = vunpack.c.l.b16 %v860
    %v3694 = vunpack.c.l.b16 %v861
    %v3695 = vunpack.c.l.b16 %v862
    %v3696 = vunpack.c.l.b16 %v863
    %v3697 = vunpack.c.l.b16 %v864
    %v3698 = vunpack.c.l.b16 %v865
    %v3699 = vunpack.c.l.b16 %v866
    %v3700 = vunpack.c.l.b16 %v867
    %v3701 = vunpack.c.l.b16 %v868
    %v3702 = vunpack.c.l.b16 %v869
    %v3703 = vunpack.c.l.b16 %v870
    %v3704 = vunpack.c.l.b16 %v871
    %v3705 = vunpack.c.l.b16 %v872
    %v3706 = vunpack.c.l.b16 %v873
    %v3707 = vunpack.c.l.b16 %v874
    %v3708 = vunpack.c.l.b16 %v875
    %v3709 = vunpack.c.l.b16 %v876
    %v3710 = vunpack.c.l.b16 %v877
    %v3711 = vunpack.c.l.b16 %v878
    %v3712 = vunpack.c.l.b16 %v879
    %v3713 = vunpack.c.l.b16 %v880
    %v3714 = vunpack.c.l.b16 %v881
    %v3715 = vunpack.c.l.b16 %v882
    %v3716 = vunpack.c.l.b16 %v883
    %v3717 = vunpack.c.l.b16 %v884
    %v3718 = vunpack.c.l.b16 %v885
    %v3719 = vunpack.c.l.b16 %v886
    %v3720 = vunpack.c.l.b16 %v887
    %v3721 = vunpack.c.l.b16 %v888
    %v3722 = vunpack.c.l.b16 %v889
    %v3723 = vunpack.c.l.b16 %v890
    %v3724 = vunpack.c.l.b16 %v891
    %v3725 = vunpack.c.l.b16 %v892
    %v3726 = vunpack.c.l.b16 %v893
    %v3727 = vunpack.c.l.b16 %v894
    %v3728 = vunpack.c.l.b16 %v895
    %v3729 = vunpack.c.l.b16 %v896
    %v3730 = vunpack.c.l.b16 %v897
    %v3731 = vunpack.c.l.b16 %v898
    %v3732 = vunpack.c.l.b16 %v899
    %v3733 = vunpack.c.l.b16 %v900
    %v3734 = vunpack.c.l.b16 %v901
    %v3735 = vunpack.c.l.b16 %v902
    %v3736 = vunpack.c.l.b16 %v903
    %v3737 = vunpack.c.l.b16 %v904
    %v3738 = vunpack.c.l.b16 %v905
    %v3739 = vunpack.c.l.b16 %v906
    %v3740 = vunpack.c.l.b16 %v907
    %v3741 = vunpack.c.l.b16 %v908
    %v3742 = vunpack.c.l.b16 %v909
    %v3743 = vunpack.c.l.b16 %v910
    %v3744 = vunpack.c.l.b16 %v911
    %v3745 = vunpack.c.l.b16 %v912
    %v3746 = vunpack.c.l.b16 %v913
    %v3747 = vunpack.c.l.b16 %v914
    %v3748 = vunpack.c.l.b16 %v915
    %v3749 = vunpack.c.l.b16 %v916
    %v3750 = vunpack.c.l.b16 %v917
    %v3751 = vunpack.c.l.b16 %v918
    %v3752 = vunpack.c.l.b16 %v919
    %v3753 = vunpack.c.l.b16 %v920
    %v3754 = vunpack.c.l.b16 %v921
    %v3755 = vunpack.c.l.b16 %v922
    %v3756 = vunpack.c.l.b16 %v923
    %v3757 = vunpack.c.l.b16 %v924
    %v3758 = vunpack.c.l.b16 %v925
    %v3759 = vunpack.c.l.b16 %v926
    %v3760 = vunpack.c.l.b16 %v927
    %v3761 = vunpack.c.l.b16 %v928
    %v3762 = vunpack.c.l.b16 %v929
    %v3763 = vunpack.c.l.b16 %v930
    %v3764 = vunpack.c.l.b16 %v931
    %v3765 = vunpack.c.l.b16 %v932
    %v3766 = vunpack.c.l.b16 %v933
    %v3767 = vunpack.c.l.b16 %v934
    %v3768 = vunpack.c.l.b16 %v935
    %v3769 = vunpack.c.l.b16 %v936
    %v3770 = vunpack.c.l.b16 %v937
    %v3771 = vunpack.c.l.b16 %v938
    %v3772 = vunpack.c.l.b16 %v939
    %v3773 = vunpack.c.l.b16 %v940
    %v3774 = vunpack.c.l.b16 %v941
    %v3775 = vunpack.c.l.b16 %v942
    %v3776 = vunpack.c.l.b16 %v943
    %v3777 = vunpack.c.l.b16 %v944
    %v3778 = vunpack.c.l.b16 %v945
    %v3779 = vunpack.c.l.b16 %v946
    %v3780 = vunpack.c.l.b16 %v947
    %v3781 = vunpack.c.l.b16 %v948
    %v3782 = vunpack.c.l.b16 %v949
    %v3783 = vunpack.c.l.b16 %v950
    %v3784 = vunpack.c.l.b16 %v951
    %v3785 = vunpack.c.l.b16 %v952
    %v3786 = vunpack.c.l.b16 %v953
    %v3787 = vunpack.c.l.b16 %v954
    %v3788 = vunpack.c.l.b16 %v955
    %v3789 = vunpack.c.l.b16 %v956
    %v3790 = vunpack.c.l.b16 %v957
    %v3791 = vunpack.c.l.b16 %v958
    %v3792 = vunpack.c.l.b16 %v959
    %v3793 = vunpack.c.l.b16 %v960
    %v3794 = vunpack.c.l.b16 %v961
    %v3795 = vunpack.c.l.b16 %v962
    %v3796 = vunpack.c.l.b16 %v963
    %v3797 = vunpack.c.l.b16 %v964
    %v3798 = vunpack.c.l.b16 %v965
    %v3799 = vunpack.c.l.b16 %v966
    %v3800 = vunpack.c.l.b16 %v967
    %v3801 = vunpack.c.l.b16 %v968
    %v3802 = vunpack.c.l.b16 %v969
    %v3803 = vunpack.c.l.b16 %v970
    %v3804 = vunpack.c.l.b16 %v971
    %v3805 = vunpack.c.l.b16 %v972
    %v3806 = vunpack.c.l.b16 %v973
    %v3807 = vunpack.c.l.b16 %v974
    %v3808 = vunpack.c.l.b16 %v975
    %v3809 = vunpack.c.l.b16 %v976
    %v3810 = vunpack.c.l.b16 %v977
    %v3811 = vunpack.c.l.b16 %v978
    %v3812 = vunpack.c.l.b16 %v979
    %v3813 = vunpack.c.l.b16 %v980
    %v3814 = vunpack.c.l.b16 %v981
    %v3815 = vunpack.c.l.b16 %v982
    %v3816 = vunpack.c.l.b16 %v983
    %v3817 = vunpack.c.l.b16 %v984
    %v3818 = vunpack.c.l.b16 %v985
    %v3819 = vunpack.c.l.b16 %v986
    %v3820 = vunpack.c.l.b16 %v987
    %v3821 = vunpack.c.l.b16 %v988
    %v3822 = vunpack.c.l.b16 %v989
    %v3823 = vunpack.c.l.b16 %v990
    %v3824 = vunpack.c.l.b16 %v991
    %v3825 = vunpack.c.l.b16 %v992
    %v3826 = vunpack.c.l.b16 %v993
    %v3827 = vunpack.c.l.b16 %v994
    %v3828 = vunpack.c.l.b16 %v995
    %v3829 = vunpack.c.l.b16 %v996
    %v3830 = vunpack.c.l.b16 %v997
    %v3831 = vunpack.c.l.b16 %v998
    %v3832 = vunpack.c.l.b16 %v999
    %v3833 = vunpack.c.l.b16 %v1000
    %v3834 = vunpack.c.l.b16 %v1001
    %v3835 = vunpack.c.l.b16 %v1002
    %v3836 = vunpack.c.l.b16 %v1003
    %v3837 = vunpack.c.l.b16 %v1004
    %v3838 = vunpack.c.l.b16 %v1005
    %v3839 = vunpack.c.l.b16 %v1006
    %v3840 = vunpack.c.l.b16 %v1007
    %v3841 = vunpack.c.l.b16 %v1008
    %v3842 = vunpack.c.l.b16 %v1009
    %v3843 = vunpack.c.l.b16 %v1010
    %v3844 = vunpack.c.l.b16 %v1011
    %v3845 = vunpack.c.l.b16 %v1012
    %v3846 = vunpack.c.l.b16 %v1013
    %v3847 = vunpack.c.l.b16 %v1014
    %v3848 = vunpack.c.l.b16 %v1015
    %v3849 = vunpack.c.l.b16 %v1016
    %v3850 = vunpack.c.l.b16 %v1017
    %v3851 = vunpack.c.l.b16 %v1018
    %v3852 = vunpack.c.l.b16 %v1019
    %v3853 = vunpack.c.l.b16 %v1020
    %v3854 = vunpack.c.l.b16 %v1021
    %v3855 = vunpack.c.l.b16 %v1022
    %v3856 = vunpack.c.l.b16 %v1023
    %v3857 = vunpack.c.l.b16 %v1024
    %v3858 = vunpack.c.l.b16 %v1025
    %v3859 = vunpack.c.l.b16 %v1026
    %v3860 = vunpack.c.l.b16 %v1027
    %v3861 = vunpack.c.l.b16 %v1028
    %v3862 = vunpack.c.l.b16 %v1029
    %v3863 = vunpack.c.l.b16 %v1030
    %v3864 = vunpack.c.l.b16 %v1031
    %v3865 = vunpack.c.l.b16 %v1032
    %v3866 = vunpack.c.l.b16 %v1033
    %v3867 = vunpack.c.l.b16 %v1034
    %v3868 = vunpack.c.l.b16 %v1035
    %v3869 = vunpack.c.l.b16 %v1036
    %v3870 = vunpack.c.l.b16 %v1037
    %v3871 = vunpack.c.l.b16 %v1038
    %v3872 = vunpack.c.l.b16 %v1039
    %v3873 = vunpack.c.l.b16 %v1040
    %v3874 = vunpack.c.l.b16 %v1041
    %v3875 = vunpack.c.l.b16 %v1042
    %v3876 = vunpack.c.l.b16 %v1043
    %v3877 = vunpack.c.l.b16 %v1044
    %v3878 = vunpack.c.l.b16 %v1045
    %v3879 = vunpack.c.l.b16 %v1046
    %v3880 = vunpack.c.l.b16 %v1047
    %v3881 = vunpack.c.l.b16 %v1048
    %v3882 = vunpack.c.l.b16 %v1049
    %v3883 = vunpack.c.l.b16 %v1050
    %v3884 = vunpack.c.l.b16 %v1051
    %v3885 = vunpack.c.l.b16 %v1052
    %v3886 = vunpack.c.l.b16 %v1053
    %v3887 = vunpack.c.l.b16 %v1054
    %v3888 = vunpack.c.l.b16 %v1055
    %v3889 = vunpack.c.l.b16 %v1056
    %v3890 = vunpack.c.l.b16 %v1057
    %v3891 = vunpack.c.l.b16 %v1058
    %v3892 = vunpack.c.l.b16 %v1059
    %v3893 = vunpack.c.l.b16 %v1060
    %v3894 = vunpack.c.l.b16 %v1061
    %v3895 = vunpack.c.l.b16 %v1062
    %v3896 = vunpack.c.l.b16 %v1063
    %v3897 = vunpack.c.l.b16 %v1064
    %v3898 = vunpack.c.l.b16 %v1065
    %v3899 = vunpack.c.l.b16 %v1066
    %v3900 = vunpack.c.l.b16 %v1067
    %v3901 = vunpack.c.l.b16 %v1068
    %v3902 = vunpack.c.l.b16 %v1069
    %v3903 = vunpack.c.l.b16 %v1070
    %v3904 = vunpack.c.l.b16 %v1071
    %v3905 = vunpack.c.l.b16 %v1072
    %v3906 = vunpack.c.l.b16 %v1073
    %v3907 = vunpack.c.l.b16 %v1074
    %v3908 = vunpack.c.l.b16 %v1075
    %v3909 = vunpack.c.l.b16 %v1076
    %v3910 = vunpack.c.l.b16 %v1077
    %v3911 = vunpack.c.l.b16 %v1078
    %v3912 = vunpack.c.l.b16 %v1079
    %v3913 = vunpack.c.l.b16 %v1080
    %v3914 = vunpack.c.l.b16 %v1081
    %v3915 = vunpack.c.l.b16 %v1082
    %v3916 = vunpack.c.l.b16 %v1083
    %v3917 = vunpack.c.l.b16 %v1084
    %v3918 = vunpack.c.l.b16 %v1085
    %v3919 = vunpack.c.l.b16 %v1086
    %v3920 = vunpack.c.l.b16 %v1087
    %v3921 = vunpack.c.l.b16 %v1088
    %v3922 = vunpack.c.l.b16 %v1089
    %v3923 = vunpack.c.l.b16 %v1090
    %v3924 = vunpack.c.l.b16 %v1091
    %v3925 = vunpack.c.l.b16 %v1092
    %v3926 = vunpack.c.l.b16 %v1093
    %v3927 = vunpack.c.l.b16 %v1094
    %v3928 = vunpack.c.l.b16 %v1095
    %v3929 = vunpack.c.l.b16 %v1096
    %v3930 = vunpack.c.l.b16 %v1097
    %v3931 = vunpack.c.l.b16 %v1098
    %v3932 = vunpack.c.l.b16 %v1099
    %v3933 = vunpack.c.l.b16 %v1100
    %v3934 = vunpack.c.l.b16 %v1101
    %v3935 = vunpack.c.l.b16 %v1102
    %v3936 = vunpack.c.l.b16 %v1103
    %v3937 = vunpack.c.l.b16 %v1104
    %v3938 = vunpack.c.l.b16 %v1105
    %v3939 = vunpack.c.l.b16 %v1106
    %v3940 = vunpack.c.l.b16 %v1107
    %v3941 = vunpack.c.l.b16 %v1108
    %v3942 = vunpack.c.l.b16 %v1109
    %v3943 = vunpack.c.l.b16 %v1110
    %v3944 = vunpack.c.l.b16 %v1111
    %v3945 = vunpack.c.l.b16 %v1112
    %v3946 = vunpack.c.l.b16 %v1113
    %v3947 = vunpack.c.l.b16 %v1114
    %v3948 = vunpack.c.l.b16 %v1115
    %v3949 = vunpack.c.l.b16 %v1116
    %v3950 = vunpack.c.l.b16 %v1117
    %v3951 = vunpack.c.l.b16 %v1118
    %v3952 = vunpack.c.l.b16 %v1119
    %v3953 = vunpack.c.l.b16 %v1120
    %v3954 = vunpack.c.l.b16 %v1121
    %v3955 = vunpack.c.l.b16 %v1122
    %v3956 = vunpack.c.l.b16 %v1123
    %v3957 = vunpack.c.l.b16 %v1124
    %v3958 = vunpack.c.l.b16 %v1125
    %v3959 = vunpack.c.l.b16 %v1126
    %v3960 = vunpack.c.l.b16 %v1127
    %v3961 = vunpack.c.l.b16 %v1128
    %v3962 = vunpack.c.l.b16 %v1129
    %v3963 = vunpack.c.l.b16 %v1130
    %v3964 = vunpack.c.l.b16 %v1131
    %v3965 = vunpack.c.l.b16 %v1132
    %v3966 = vunpack.c.l.b16 %v1133
    %v3967 = vunpack.c.l.b16 %v1134
    %v3968 = vunpack.c.l.b16 %v1135
    %v3969 = vunpack.c.l.b16 %v1136
    %v3970 = vunpack.c.l.b16 %v1137
    %v3971 = vunpack.c.l.b16 %v1138
    %v3972 = vunpack.c.l.b16 %v1139
    %v3973 = vunpack.c.l.b16 %v1140
    %v3974 = vunpack.c.l.b16 %v1141
    %v3975 = vunpack.c.l.b16 %v1142
    %v3976 = vunpack.c.l.b16 %v1143
    %v3977 = vunpack.c.l.b16 %v1144
    %v3978 = vunpack.c.l.b16 %v1145
    %v3979 = vunpack.c.l.b16 %v1146
    %v3980 = vunpack.c.l.b16 %v1147
    %v3981 = vunpack.c.l.b16 %v1148
    %v3982 = vunpack.c.l.b16 %v1149
    %v3983 = vunpack.c.l.b16 %v1150
    %v3984 = vunpack.c.l.b16 %v1151
    %v3985 = vunpack.c.l.b16 %v1152
    %v3986 = vunpack.c.l.b16 %v1153
    %v3987 = vunpack.c.l.b16 %v1154
    %v3988 = vunpack.c.l.b16 %v1155
    %v3989 = vunpack.c.l.b16 %v1156
    %v3990 = vunpack.c.l.b16 %v1157
    %v3991 = vunpack.c.l.b16 %v1158
    %v3992 = vunpack.c.l.b16 %v1159
    %v3993 = vunpack.c.l.b16 %v1160
    %v3994 = vunpack.c.l.b16 %v1161
    %v3995 = vunpack.c.l.b16 %v1162
    %v3996 = vunpack.c.l.b16 %v1163
    %v3997 = vunpack.c.l.b16 %v1164
    %v3998 = vunpack.c.l.b16 %v1165
    %v3999 = vunpack.c.l.b16 %v1166
    %v4000 = vunpack.c.l.b16 %v1167
    %v4001 = vunpack.c.l.b16 %v1168
    %v4002 = vunpack.c.l.b16 %v1169
    %v4003 = vunpack.c.l.b16 %v1170
    %v4004 = vunpack.c.l.b16 %v1171
    %v4005 = vunpack.c.l.b16 %v1172
    %v4006 = vunpack.c.l.b16 %v1173
    %v4007 = vunpack.c.l.b16 %v1174
    %v4008 = vunpack.c.l.b16 %v1175
    %v4009 = vunpack.c.l.b16 %v1176
    %v4010 = vpack.c.b16 %v2859, %v2858
    %v4011 = vpack.c.b16 %v2861, %v2860
    %v4012 = vpack.c.b16 %v2863, %v2862
    %v4013 = vpack.c.b16 %v2865, %v2864
    %v4014 = vpack.c.b16 %v2867, %v2866
    %v4015 = vpack.c.b16 %v2869, %v2868
    %v4016 = vpack.c.b16 %v2871, %v2870
    %v4017 = vpack.c.b16 %v2873, %v2872
    %v4018 = vpack.c.b16 %v2875, %v2874
    %v4019 = vpack.c.b16 %v2877, %v2876
    %v4020 = vpack.c.b16 %v2879, %v2878
    %v4021 = vpack.c.b16 %v2881, %v2880
    %v4022 = vpack.c.b16 %v2883, %v2882
    %v4023 = vpack.c.b16 %v2885, %v2884
    %v4024 = vpack.c.b16 %v2887, %v2886
    %v4025 = vpack.c.b16 %v2889, %v2888
    %v4026 = vpack.c.b16 %v2891, %v2890
    %v4027 = vpack.c.b16 %v2893, %v2892
    %v4028 = vpack.c.b16 %v2895, %v2894
    %v4029 = vpack.c.b16 %v2897, %v2896
    %v4030 = vpack.c.b16 %v2899, %v2898
    %v4031 = vpack.c.b16 %v2901, %v2900
    %v4032 = vpack.c.b16 %v2903, %v2902
    %v4033 = vpack.c.b16 %v2905, %v2904
    %v4034 = vpack.c.b16 %v2907, %v2906
    %v4035 = vpack.c.b16 %v2909, %v2908
    %v4036 = vpack.c.b16 %v2911, %v2910
    %v4037 = vpack.c.b16 %v2913, %v2912
    %v4038 = vpack.c.b16 %v2915, %v2914
    %v4039 = vpack.c.b16 %v2917, %v2916
    %v4040 = vpack.c.b16 %v2919, %v2918
    %v4041 = vpack.c.b16 %v2921, %v2920
    %v4042 = vpack.c.b16 %v2923, %v2922
    %v4043 = vpack.c.b16 %v2925, %v2924
    %v4044 = vpack.c.b16 %v2927, %v2926
    %v4045 = vpack.c.b16 %v2929, %v2928
    %v4046 = vpack.c.b16 %v2931, %v2930
    %v4047 = vpack.c.b16 %v2933, %v2932
    %v4048 = vpack.c.b16 %v2935, %v2934
    %v4049 = vpack.c.b16 %v2937, %v2936
    %v4050 = vpack.c.b16 %v2939, %v2938
    %v4051 = vpack.c.b16 %v2941, %v2940
    %v4052 = vpack.c.b16 %v2943, %v2942
    %v4053 = vpack.c.b16 %v2945, %v2944
    %v4054 = vpack.c.b16 %v2947, %v2946
    %v4055 = vpack.c.b16 %v2949, %v2948
    %v4056 = vpack.c.b16 %v2951, %v2950
    %v4057 = vpack.c.b16 %v2953, %v2952
    %v4058 = vpack.c.b16 %v2955, %v2954
    %v4059 = vpack.c.b16 %v2957, %v2956
    %v4060 = vpack.c.b16 %v2959, %v2958
    %v4061 = vpack.c.b16 %v2961, %v2960
    %v4062 = vpack.c.b16 %v2963, %v2962
    %v4063 = vpack.c.b16 %v2965, %v2964
    %v4064 = vpack.c.b16 %v2967, %v2966
    %v4065 = vpack.c.b16 %v2969, %v2968
    %v4066 = vpack.c.b16 %v2971, %v2970
    %v4067 = vpack.c.b16 %v2973, %v2972
    %v4068 = vpack.c.b16 %v2975, %v2974
    %v4069 = vpack.c.b16 %v2977, %v2976
    %v4070 = vpack.c.b16 %v2979, %v2978
    %v4071 = vpack.c.b16 %v2981, %v2980
    %v4072 = vpack.c.b16 %v2983, %v2982
    %v4073 = vpack.c.b16 %v2985, %v2984
    %v4074 = vpack.c.b16 %v2987, %v2986
    %v4075 = vpack.c.b16 %v2989, %v2988
    %v4076 = vpack.c.b16 %v2991, %v2990
    %v4077 = vpack.c.b16 %v2993, %v2992
    %v4078 = vpack.c.b16 %v2995, %v2994
    %v4079 = vpack.c.b16 %v2997, %v2996
    %v4080 = vpack.c.b16 %v2999, %v2998
    %v4081 = vpack.c.b16 %v3001, %v3000
    %v4082 = vpack.c.b16 %v3003, %v3002
    %v4083 = vpack.c.b16 %v3005, %v3004
    %v4084 = vpack.c.b16 %v3007, %v3006
    %v4085 = vpack.c.b16 %v3009, %v3008
    %v4086 = vpack.c.b16 %v3011, %v3010
    %v4087 = vpack.c.b16 %v3013, %v3012
    %v4088 = vpack.c.b16 %v3015, %v3014
    %v4089 = vpack.c.b16 %v3017, %v3016
    %v4090 = vpack.c.b16 %v3019, %v3018
    %v4091 = vpack.c.b16 %v3021, %v3020
    %v4092 = vpack.c.b16 %v3023, %v3022
    %v4093 = vpack.c.b16 %v3025, %v3024
    %v4094 = vpack.c.b16 %v3027, %v3026
    %v4095 = vpack.c.b16 %v3029, %v3028
    %v4096 = vpack.c.b16 %v3031, %v3030
    %v4097 = vpack.c.b16 %v3033, %v3032
    %v4098 = vpack.c.b16 %v3035, %v3034
    %v4099 = vpack.c.b16 %v3037, %v3036
    %v4100 = vpack.c.b16 %v3039, %v3038
    %v4101 = vpack.c.b16 %v3041, %v3040
    %v4102 = vpack.c.b16 %v3043, %v3042
    %v4103 = vpack.c.b16 %v3045, %v3044
    %v4104 = vpack.c.b16 %v3047, %v3046
    %v4105 = vpack.c.b16 %v3049, %v3048
    %v4106 = vpack.c.b16 %v3051, %v3050
    %v4107 = vpack.c.b16 %v3053, %v3052
    %v4108 = vpack.c.b16 %v3055, %v3054
    %v4109 = vpack.c.b16 %v3057, %v3056
    %v4110 = vpack.c.b16 %v3059, %v3058
    %v4111 = vpack.c.b16 %v3061, %v3060
    %v4112 = vpack.c.b16 %v3063, %v3062
    %v4113 = vpack.c.b16 %v3065, %v3064
    %v4114 = vpack.c.b16 %v3067, %v3066
    %v4115 = vpack.c.b16 %v3069, %v3068
    %v4116 = vpack.c.b16 %v3071, %v3070
    %v4117 = vpack.c.b16 %v3073, %v3072
    %v4118 = vpack.c.b16 %v3075, %v3074
    %v4119 = vpack.c.b16 %v3077, %v3076
    %v4120 = vpack.c.b16 %v3079, %v3078
    %v4121 = vpack.c.b16 %v3081, %v3080
    %v4122 = vpack.c.b16 %v3083, %v3082
    %v4123 = vpack.c.b16 %v3085, %v3084
    %v4124 = vpack.c.b16 %v3087, %v3086
    %v4125 = vpack.c.b16 %v3089, %v3088
    %v4126 = vpack.c.b16 %v3091, %v3090
    %v4127 = vpack.c.b16 %v3093, %v3092
    %v4128 = vpack.c.b16 %v3095, %v3094
    %v4129 = vpack.c.b16 %v3097, %v3096
    %v4130 = vpack.c.b16 %v3099, %v3098
    %v4131 = vpack.c.b16 %v3101, %v3100
    %v4132 = vpack.c.b16 %v3103, %v3102
    %v4133 = vpack.c.b16 %v3105, %v3104
    %v4134 = vpack.c.b16 %v3107, %v3106
    %v4135 = vpack.c.b16 %v3109, %v3108
    %v4136 = vpack.c.b16 %v3111, %v3110
    %v4137 = vpack.c.b16 %v3113, %v3112
    %v4138 = vpack.c.b16 %v3115, %v3114
    %v4139 = vpack.c.b16 %v3117, %v3116
    %v4140 = vpack.c.b16 %v3119, %v3118
    %v4141 = vpack.c.b16 %v3121, %v3120
    %v4142 = vpack.c.b16 %v3123, %v3122
    %v4143 = vpack.c.b16 %v3125, %v3124
    %v4144 = vpack.c.b16 %v3127, %v3126
    %v4145 = vpack.c.b16 %v3129, %v3128
    %v4146 = vpack.c.b16 %v3131, %v3130
    %v4147 = vpack.c.b16 %v3133, %v3132
    %v4148 = vpack.c.b16 %v3135, %v3134
    %v4149 = vpack.c.b16 %v3137, %v3136
    %v4150 = vpack.c.b16 %v3139, %v3138
    %v4151 = vpack.c.b16 %v3141, %v3140
    %v4152 = vpack.c.b16 %v3143, %v3142
    %v4153 = vpack.c.b16 %v3145, %v3144
    %v4154 = vpack.c.b16 %v3147, %v3146
    %v4155 = vpack.c.b16 %v3149, %v3148
    %v4156 = vpack.c.b16 %v3151, %v3150
    %v4157 = vpack.c.b16 %v3153, %v3152
    %v4158 = vpack.c.b16 %v3155, %v3154
    %v4159 = vpack.c.b16 %v3157, %v3156
    %v4160 = vpack.c.b16 %v3159, %v3158
    %v4161 = vpack.c.b16 %v3161, %v3160
    %v4162 = vpack.c.b16 %v3163, %v3162
    %v4163 = vpack.c.b16 %v3165, %v3164
    %v4164 = vpack.c.b16 %v3167, %v3166
    %v4165 = vpack.c.b16 %v3169, %v3168
    %v4166 = vpack.c.b16 %v3171, %v3170
    %v4167 = vpack.c.b16 %v3173, %v3172
    %v4168 = vpack.c.b16 %v3175, %v3174
    %v4169 = vpack.c.b16 %v3177, %v3176
    %v4170 = vpack.c.b16 %v3179, %v3178
    %v4171 = vpack.c.b16 %v3181, %v3180
    %v4172 = vpack.c.b16 %v3183, %v3182
    %v4173 = vpack.c.b16 %v3185, %v3184
    %v4174 = vpack.c.b16 %v3187, %v3186
    %v4175 = vpack.c.b16 %v3189, %v3188
    %v4176 = vpack.c.b16 %v3191, %v3190
    %v4177 = vpack.c.b16 %v3193, %v3192
    %v4178 = vpack.c.b16 %v3195, %v3194
    %v4179 = vpack.c.b16 %v3197, %v3196
    %v4180 = vpack.c.b16 %v3199, %v3198
    %v4181 = vpack.c.b16 %v3201, %v3200
    %v4182 = vpack.c.b16 %v3203, %v3202
    %v4183 = vpack.c.b16 %v3205, %v3204
    %v4184 = vpack.c.b16 %v3207, %v3206
    %v4185 = vpack.c.b16 %v3209, %v3208
    %v4186 = vpack.c.b16 %v3211, %v3210
    %v4187 = vpack.c.b16 %v3213, %v3212
    %v4188 = vpack.c.b16 %v3215, %v3214
    %v4189 = vpack.c.b16 %v3217, %v3216
    %v4190 = vpack.c.b16 %v3219, %v3218
    %v4191 = vpack.c.b16 %v3221, %v3220
    %v4192 = vpack.c.b16 %v3223, %v3222
    %v4193 = vpack.c.b16 %v3225, %v3224
    %v4194 = vpack.c.b16 %v3227, %v3226
    %v4195 = vpack.c.b16 %v3229, %v3228
    %v4196 = vpack.c.b16 %v3231, %v3230
    %v4197 = vpack.c.b16 %v3233, %v3232
    %v4198 = vpack.c.b16 %v3235, %v3234
    %v4199 = vpack.c.b16 %v3237, %v3236
    %v4200 = vpack.c.b16 %v3239, %v3238
    %v4201 = vpack.c.b16 %v3241, %v3240
    %v4202 = vpack.c.b16 %v3243, %v3242
    %v4203 = vpack.c.b16 %v3245, %v3244
    %v4204 = vpack.c.b16 %v3247, %v3246
    %v4205 = vpack.c.b16 %v3249, %v3248
    %v4206 = vpack.c.b16 %v3251, %v3250
    %v4207 = vpack.c.b16 %v3253, %v3252
    %v4208 = vpack.c.b16 %v3255, %v3254
    %v4209 = vpack.c.b16 %v3257, %v3256
    %v4210 = vpack.c.b16 %v3259, %v3258
    %v4211 = vpack.c.b16 %v3261, %v3260
    %v4212 = vpack.c.b16 %v3263, %v3262
    %v4213 = vpack.c.b16 %v3265, %v3264
    %v4214 = vpack.c.b16 %v3267, %v3266
    %v4215 = vpack.c.b16 %v3269, %v3268
    %v4216 = vpack.c.b16 %v3271, %v3270
    %v4217 = vpack.c.b16 %v3273, %v3272
    %v4218 = vpack.c.b16 %v3275, %v3274
    %v4219 = vpack.c.b16 %v3277, %v3276
    %v4220 = vpack.c.b16 %v3279, %v3278
    %v4221 = vpack.c.b16 %v3281, %v3280
    %v4222 = vpack.c.b16 %v3283, %v3282
    %v4223 = vpack.c.b16 %v3285, %v3284
    %v4224 = vpack.c.b16 %v3287, %v3286
    %v4225 = vpack.c.b16 %v3289, %v3288
    %v4226 = vpack.c.b16 %v3291, %v3290
    %v4227 = vpack.c.b16 %v3293, %v3292
    %v4228 = vpack.c.b16 %v3295, %v3294
    %v4229 = vpack.c.b16 %v3297, %v3296
    %v4230 = vpack.c.b16 %v3299, %v3298
    %v4231 = vpack.c.b16 %v3301, %v3300
    %v4232 = vpack.c.b16 %v3303, %v3302
    %v4233 = vpack.c.b16 %v3305, %v3304
    %v4234 = vpack.c.b16 %v3307, %v3306
    %v4235 = vpack.c.b16 %v3309, %v3308
    %v4236 = vpack.c.b16 %v3311, %v3310
    %v4237 = vpack.c.b16 %v3313, %v3312
    %v4238 = vpack.c.b16 %v3315, %v3314
    %v4239 = vpack.c.b16 %v3317, %v3316
    %v4240 = vpack.c.b16 %v3319, %v3318
    %v4241 = vpack.c.b16 %v3321, %v3320
    %v4242 = vpack.c.b16 %v3323, %v3322
    %v4243 = vpack.c.b16 %v3325, %v3324
    %v4244 = vpack.c.b16 %v3327, %v3326
    %v4245 = vpack.c.b16 %v3329, %v3328
    %v4246 = vpack.c.b16 %v3331, %v3330
    %v4247 = vpack.c.b16 %v3333, %v3332
    %v4248 = vpack.c.b16 %v3335, %v3334
    %v4249 = vpack.c.b16 %v3337, %v3336
    %v4250 = vpack.c.b16 %v3339, %v3338
    %v4251 = vpack.c.b16 %v3341, %v3340
    %v4252 = vpack.c.b16 %v3343, %v3342
    %v4253 = vpack.c.b16 %v3345, %v3344
    %v4254 = vpack.c.b16 %v3347, %v3346
    %v4255 = vpack.c.b16 %v3349, %v3348
    %v4256 = vpack.c.b16 %v3351, %v3350
    %v4257 = vpack.c.b16 %v3353, %v3352
    %v4258 = vpack.c.b16 %v3355, %v3354
    %v4259 = vpack.c.b16 %v3357, %v3356
    %v4260 = vpack.c.b16 %v3359, %v3358
    %v4261 = vpack.c.b16 %v3361, %v3360
    %v4262 = vpack.c.b16 %v3363, %v3362
    %v4263 = vpack.c.b16 %v3365, %v3364
    %v4264 = vpack.c.b16 %v3367, %v3366
    %v4265 = vpack.c.b16 %v3369, %v3368
    %v4266 = vpack.c.b16 %v3371, %v3370
    %v4267 = vpack.c.b16 %v3373, %v3372
    %v4268 = vpack.c.b16 %v3375, %v3374
    %v4269 = vpack.c.b16 %v3377, %v3376
    %v4270 = vpack.c.b16 %v3379, %v3378
    %v4271 = vpack.c.b16 %v3381, %v3380
    %v4272 = vpack.c.b16 %v3383, %v3382
    %v4273 = vpack.c.b16 %v3385, %v3384
    %v4274 = vpack.c.b16 %v3387, %v3386
    %v4275 = vpack.c.b16 %v3389, %v3388
    %v4276 = vpack.c.b16 %v3391, %v3390
    %v4277 = vpack.c.b16 %v3393, %v3392
    %v4278 = vpack.c.b16 %v3395, %v3394
    %v4279 = vpack.c.b16 %v3397, %v3396
    %v4280 = vpack.c.b16 %v3399, %v3398
    %v4281 = vpack.c.b16 %v3401, %v3400
    %v4282 = vpack.c.b16 %v3403, %v3402
    %v4283 = vpack.c.b16 %v3405, %v3404
    %v4284 = vpack.c.b16 %v3407, %v3406
    %v4285 = vpack.c.b16 %v3409, %v3408
    %v4286 = vpack.c.b16 %v3411, %v3410
    %v4287 = vpack.c.b16 %v3413, %v3412
    %v4288 = vpack.c.b16 %v3415, %v3414
    %v4289 = vpack.c.b16 %v3417, %v3416
    %v4290 = vpack.c.b16 %v3419, %v3418
    %v4291 = vpack.c.b16 %v3421, %v3420
    %v4292 = vpack.c.b16 %v3423, %v3422
    %v4293 = vpack.c.b16 %v3425, %v3424
    %v4294 = vpack.c.b16 %v3427, %v3426
    %v4295 = vpack.c.b16 %v3429, %v3428
    %v4296 = vpack.c.b16 %v3431, %v3430
    %v4297 = vpack.c.b16 %v3433, %v3432
    %v4298 = vpack.c.b16 %v3435, %v3434
    %v4299 = vpack.c.b16 %v3437, %v3436
    %v4300 = vpack.c.b16 %v3439, %v3438
    %v4301 = vpack.c.b16 %v3441, %v3440
    %v4302 = vpack.c.b16 %v3443, %v3442
    %v4303 = vpack.c.b16 %v3445, %v3444
    %v4304 = vpack.c.b16 %v3447, %v3446
    %v4305 = vpack.c.b16 %v3449, %v3448
    %v4306 = vpack.c.b16 %v3451, %v3450
    %v4307 = vpack.c.b16 %v3453, %v3452
    %v4308 = vpack.c.b16 %v3455, %v3454
    %v4309 = vpack.c.b16 %v3457, %v3456
    %v4310 = vpack.c.b16 %v3459, %v3458
    %v4311 = vpack.c.b16 %v3461, %v3460
    %v4312 = vpack.c.b16 %v3463, %v3462
    %v4313 = vpack.c.b16 %v3465, %v3464
    %v4314 = vpack.c.b16 %v3467, %v3466
    %v4315 = vpack.c.b16 %v3469, %v3468
    %v4316 = vpack.c.b16 %v3471, %v3470
    %v4317 = vpack.c.b16 %v3473, %v3472
    %v4318 = vpack.c.b16 %v3475, %v3474
    %v4319 = vpack.c.b16 %v3477, %v3476
    %v4320 = vpack.c.b16 %v3479, %v3478
    %v4321 = vpack.c.b16 %v3481, %v3480
    %v4322 = vpack.c.b16 %v3483, %v3482
    %v4323 = vpack.c.b16 %v3485, %v3484
    %v4324 = vpack.c.b16 %v3487, %v3486
    %v4325 = vpack.c.b16 %v3489, %v3488
    %v4326 = vpack.c.b16 %v3491, %v3490
    %v4327 = vpack.c.b16 %v3493, %v3492
    %v4328 = vpack.c.b16 %v3495, %v3494
    %v4329 = vpack.c.b16 %v3497, %v3496
    %v4330 = vpack.c.b16 %v3499, %v3498
    %v4331 = vpack.c.b16 %v3501, %v3500
    %v4332 = vpack.c.b16 %v3503, %v3502
    %v4333 = vpack.c.b16 %v3505, %v3504
    %v4334 = vpack.c.b16 %v3507, %v3506
    %v4335 = vpack.c.b16 %v3509, %v3508
    %v4336 = vpack.c.b16 %v3511, %v3510
    %v4337 = vpack.c.b16 %v3513, %v3512
    %v4338 = vpack.c.b16 %v3515, %v3514
    %v4339 = vpack.c.b16 %v3517, %v3516
    %v4340 = vpack.c.b16 %v3519, %v3518
    %v4341 = vpack.c.b16 %v3521, %v3520
    %v4342 = vpack.c.b16 %v3523, %v3522
    %v4343 = vpack.c.b16 %v3525, %v3524
    %v4344 = vpack.c.b16 %v3527, %v3526
    %v4345 = vpack.c.b16 %v3529, %v3528
    %v4346 = vpack.c.b16 %v3531, %v3530
    %v4347 = vpack.c.b16 %v3533, %v3532
    %v4348 = vpack.c.b16 %v3535, %v3534
    %v4349 = vpack.c.b16 %v3537, %v3536
    %v4350 = vpack.c.b16 %v3539, %v3538
    %v4351 = vpack.c.b16 %v3541, %v3540
    %v4352 = vpack.c.b16 %v3543, %v3542
    %v4353 = vpack.c.b16 %v3545, %v3544
    %v4354 = vpack.c.b16 %v3547, %v3546
    %v4355 = vpack.c.b16 %v3549, %v3548
    %v4356 = vpack.c.b16 %v3551, %v3550
    %v4357 = vpack.c.b16 %v3553, %v3552
    %v4358 = vpack.c.b16 %v3555, %v3554
    %v4359 = vpack.c.b16 %v3557, %v3556
    %v4360 = vpack.c.b16 %v3559, %v3558
    %v4361 = vpack.c.b16 %v3561, %v3560
    %v4362 = vpack.c.b16 %v3563, %v3562
    %v4363 = vpack.c.b16 %v3565, %v3564
    %v4364 = vpack.c.b16 %v3567, %v3566
    %v4365 = vpack.c.b16 %v3569, %v3568
    %v4366 = vpack.c.b16 %v3571, %v3570
    %v4367 = vpack.c.b16 %v3573, %v3572
    %v4368 = vpack.c.b16 %v3575, %v3574
    %v4369 = vpack.c.b16 %v3577, %v3576
    %v4370 = vpack.c.b16 %v3579, %v3578
    %v4371 = vpack.c.b16 %v3581, %v3580
    %v4372 = vpack.c.b16 %v3583, %v3582
    %v4373 = vpack.c.b16 %v3585, %v3584
    %v4374 = vpack.c.b16 %v3587, %v3586
    %v4375 = vpack.c.b16 %v3589, %v3588
    %v4376 = vpack.c.b16 %v3591, %v3590
    %v4377 = vpack.c.b16 %v3593, %v3592
    %v4378 = vpack.c.b16 %v3595, %v3594
    %v4379 = vpack.c.b16 %v3597, %v3596
    %v4380 = vpack.c.b16 %v3599, %v3598
    %v4381 = vpack.c.b16 %v3601, %v3600
    %v4382 = vpack.c.b16 %v3603, %v3602
    %v4383 = vpack.c.b16 %v3605, %v3604
    %v4384 = vpack.c.b16 %v3607, %v3606
    %v4385 = vpack.c.b16 %v3609, %v3608
    %v4386 = vpack.c.b16 %v3611, %v3610
    %v4387 = vpack.c.b16 %v3613, %v3612
    %v4388 = vpack.c.b16 %v3615, %v3614
    %v4389 = vpack.c.b16 %v3617, %v3616
    %v4390 = vpack.c.b16 %v3619, %v3618
    %v4391 = vpack.c.b16 %v3621, %v3620
    %v4392 = vpack.c.b16 %v3623, %v3622
    %v4393 = vpack.c.b16 %v3625, %v3624
    %v4394 = vpack.c.b16 %v3627, %v3626
    %v4395 = vpack.c.b16 %v3629, %v3628
    %v4396 = vpack.c.b16 %v3631, %v3630
    %v4397 = vpack.c.b16 %v3633, %v3632
    %v4398 = vpack.c.b16 %v3635, %v3634
    %v4399 = vpack.c.b16 %v3637, %v3636
    %v4400 = vpack.c.b16 %v3639, %v3638
    %v4401 = vpack.c.b16 %v3641, %v3640
    %v4402 = vpack.c.b16 %v3643, %v3642
    %v4403 = vpack.c.b16 %v3645, %v3644
    %v4404 = vpack.c.b16 %v3647, %v3646
    %v4405 = vpack.c.b16 %v3649, %v3648
    %v4406 = vpack.c.b16 %v3651, %v3650
    %v4407 = vpack.c.b16 %v3653, %v3652
    %v4408 = vpack.c.b16 %v3655, %v3654
    %v4409 = vpack.c.b16 %v3657, %v3656
    %v4410 = vpack.c.b16 %v3659, %v3658
    %v4411 = vpack.c.b16 %v3661, %v3660
    %v4412 = vpack.c.b16 %v3663, %v3662
    %v4413 = vpack.c.b16 %v3665, %v3664
    %v4414 = vpack.c.b16 %v3667, %v3666
    %v4415 = vpack.c.b16 %v3669, %v3668
    %v4416 = vpack.c.b16 %v3671, %v3670
    %v4417 = vpack.c.b16 %v3673, %v3672
    %v4418 = vpack.c.b16 %v3675, %v3674
    %v4419 = vpack.c.b16 %v3677, %v3676
    %v4420 = vpack.c.b16 %v3679, %v3678
    %v4421 = vpack.c.b16 %v3681, %v3680
    %v4422 = vpack.c.b16 %v3683, %v3682
    %v4423 = vpack.c.b16 %v3685, %v3684
    %v4424 = vpack.c.b16 %v3687, %v3686
    %v4425 = vpack.c.b16 %v3689, %v3688
    %v4426 = vpack.c.b16 %v3691, %v3690
    %v4427 = vpack.c.b16 %v3693, %v3692
    %v4428 = vpack.c.b16 %v3695, %v3694
    %v4429 = vpack.c.b16 %v3697, %v3696
    %v4430 = vpack.c.b16 %v3699, %v3698
    %v4431 = vpack.c.b16 %v3701, %v3700
    %v4432 = vpack.c.b16 %v3703, %v3702
    %v4433 = vpack.c.b16 %v3705, %v3704
    %v4434 = vpack.c.b16 %v3707, %v3706
    %v4435 = vpack.c.b16 %v3709, %v3708
    %v4436 = vpack.c.b16 %v3711, %v3710
    %v4437 = vpack.c.b16 %v3713, %v3712
    %v4438 = vpack.c.b16 %v3715, %v3714
    %v4439 = vpack.c.b16 %v3717, %v3716
    %v4440 = vpack.c.b16 %v3719, %v3718
    %v4441 = vpack.c.b16 %v3721, %v3720
    %v4442 = vpack.c.b16 %v3723, %v3722
    %v4443 = vpack.c.b16 %v3725, %v3724
    %v4444 = vpack.c.b16 %v3727, %v3726
    %v4445 = vpack.c.b16 %v3729, %v3728
    %v4446 = vpack.c.b16 %v3731, %v3730
    %v4447 = vpack.c.b16 %v3733, %v3732
    %v4448 = vpack.c.b16 %v3735, %v3734
    %v4449 = vpack.c.b16 %v3737, %v3736
    %v4450 = vpack.c.b16 %v3739, %v3738
    %v4451 = vpack.c.b16 %v3741, %v3740
    %v4452 = vpack.c.b16 %v3743, %v3742
    %v4453 = vpack.c.b16 %v3745, %v3744
    %v4454 = vpack.c.b16 %v3747, %v3746
    %v4455 = vpack.c.b16 %v3749, %v3748
    %v4456 = vpack.c.b16 %v3751, %v3750
    %v4457 = vpack.c.b16 %v3753, %v3752
    %v4458 = vpack.c.b16 %v3755, %v3754
    %v4459 = vpack.c.b16 %v3757, %v3756
    %v4460 = vpack.c.b16 %v3759, %v3758
    %v4461 = vpack.c.b16 %v3761, %v3760
    %v4462 = vpack.c.b16 %v3763, %v3762
    %v4463 = vpack.c.b16 %v3765, %v3764
    %v4464 = vpack.c.b16 %v3767, %v3766
    %v4465 = vpack.c.b16 %v3769, %v3768
    %v4466 = vpack.c.b16 %v3771, %v3770
    %v4467 = vpack.c.b16 %v3773, %v3772
    %v4468 = vpack.c.b16 %v3775, %v3774
    %v4469 = vpack.c.b16 %v3777, %v3776
    %v4470 = vpack.c.b16 %v3779, %v3778
    %v4471 = vpack.c.b16 %v3781, %v3780
    %v4472 = vpack.c.b16 %v3783, %v3782
    %v4473 = vpack.c.b16 %v3785, %v3784
    %v4474 = vpack.c.b16 %v3787, %v3786
    %v4475 = vpack.c.b16 %v3789, %v3788
    %v4476 = vpack.c.b16 %v3791, %v3790
    %v4477 = vpack.c.b16 %v3793, %v3792
    %v4478 = vpack.c.b16 %v3795, %v3794
    %v4479 = vpack.c.b16 %v3797, %v3796
    %v4480 = vpack.c.b16 %v3799, %v3798
    %v4481 = vpack.c.b16 %v3801, %v3800
    %v4482 = vpack.c.b16 %v3803, %v3802
    %v4483 = vpack.c.b16 %v3805, %v3804
    %v4484 = vpack.c.b16 %v3807, %v3806
    %v4485 = vpack.c.b16 %v3809, %v3808
    %v4486 = vpack.c.b16 %v3811, %v3810
    %v4487 = vpack.c.b16 %v3813, %v3812
    %v4488 = vpack.c.b16 %v3815, %v3814
    %v4489 = vpack.c.b16 %v3817, %v3816
    %v4490 = vpack.c.b16 %v3819, %v3818
    %v4491 = vpack.c.b16 %v3821, %v3820
    %v4492 = vpack.c.b16 %v3823, %v3822
    %v4493 = vpack.c.b16 %v3825, %v3824
    %v4494 = vpack.c.b16 %v3827, %v3826
    %v4495 = vpack.c.b16 %v3829, %v3828
    %v4496 = vpack.c.b16 %v3831, %v3830
    %v4497 = vpack.c.b16 %v3833, %v3832
    %v4498 = vpack.c.b16 %v3835, %v3834
    %v4499 = vpack.c.b16 %v3837, %v3836
    %v4500 = vpack.c.b16 %v3839, %v3838
    %v4501 = vpack.c.b16 %v3841, %v3840
    %v4502 = vpack.c.b16 %v3843, %v3842
    %v4503 = vpack.c.b16 %v3845, %v3844
    %v4504 = vpack.c.b16 %v3847, %v3846
    %v4505 = vpack.c.b16 %v3849, %v3848
    %v4506 = vpack.c.b16 %v3851, %v3850
    %v4507 = vpack.c.b16 %v3853, %v3852
    %v4508 = vpack.c.b16 %v3855, %v3854
    %v4509 = vpack.c.b16 %v3857, %v3856
    %v4510 = vpack.c.b16 %v3859, %v3858
    %v4511 = vpack.c.b16 %v3861, %v3860
    %v4512 = vpack.c.b16 %v3863, %v3862
    %v4513 = vpack.c.b16 %v3865, %v3864
    %v4514 = vpack.c.b16 %v3867, %v3866
    %v4515 = vpack.c.b16 %v3869, %v3868
    %v4516 = vpack.c.b16 %v3871, %v3870
    %v4517 = vpack.c.b16 %v3873, %v3872
    %v4518 = vpack.c.b16 %v3875, %v3874
    %v4519 = vpack.c.b16 %v3877, %v3876
    %v4520 = vpack.c.b16 %v3879, %v3878
    %v4521 = vpack.c.b16 %v3881, %v3880
    %v4522 = vpack.c.b16 %v3883, %v3882
    %v4523 = vpack.c.b16 %v3885, %v3884
    %v4524 = vpack.c.b16 %v3887, %v3886
    %v4525 = vpack.c.b16 %v3889, %v3888
    %v4526 = vpack.c.b16 %v3891, %v3890
    %v4527 = vpack.c.b16 %v3893, %v3892
    %v4528 = vpack.c.b16 %v3895, %v3894
    %v4529 = vpack.c.b16 %v3897, %v3896
    %v4530 = vpack.c.b16 %v3899, %v3898
    %v4531 = vpack.c.b16 %v3901, %v3900
    %v4532 = vpack.c.b16 %v3903, %v3902
    %v4533 = vpack.c.b16 %v3905, %v3904
    %v4534 = vpack.c.b16 %v3907, %v3906
    %v4535 = vpack.c.b16 %v3909, %v3908
    %v4536 = vpack.c.b16 %v3911, %v3910
    %v4537 = vpack.c.b16 %v3913, %v3912
    %v4538 = vpack.c.b16 %v3915, %v3914
    %v4539 = vpack.c.b16 %v3917, %v3916
    %v4540 = vpack.c.b16 %v3919, %v3918
    %v4541 = vpack.c.b16 %v3921, %v3920
    %v4542 = vpack.c.b16 %v3923, %v3922
    %v4543 = vpack.c.b16 %v3925, %v3924
    %v4544 = vpack.c.b16 %v3927, %v3926
    %v4545 = vpack.c.b16 %v3929, %v3928
    %v4546 = vpack.c.b16 %v3931, %v3930
    %v4547 = vpack.c.b16 %v3933, %v3932
    %v4548 = vpack.c.b16 %v3935, %v3934
    %v4549 = vpack.c.b16 %v3937, %v3936
    %v4550 = vpack.c.b16 %v3939, %v3938
    %v4551 = vpack.c.b16 %v3941, %v3940
    %v4552 = vpack.c.b16 %v3943, %v3942
    %v4553 = vpack.c.b16 %v3945, %v3944
    %v4554 = vpack.c.b16 %v3947, %v3946
    %v4555 = vpack.c.b16 %v3949, %v3948
    %v4556 = vpack.c.b16 %v3951, %v3950
    %v4557 = vpack.c.b16 %v3953, %v3952
    %v4558 = vpack.c.b16 %v3955, %v3954
    %v4559 = vpack.c.b16 %v3957, %v3956
    %v4560 = vpack.c.b16 %v3959, %v3958
    %v4561 = vpack.c.b16 %v3961, %v3960
    %v4562 = vpack.c.b16 %v3963, %v3962
    %v4563 = vpack.c.b16 %v3965, %v3964
    %v4564 = vpack.c.b16 %v3967, %v3966
    %v4565 = vpack.c.b16 %v3969, %v3968
    %v4566 = vpack.c.b16 %v3971, %v3970
    %v4567 = vpack.c.b16 %v3973, %v3972
    %v4568 = vpack.c.b16 %v3975, %v3974
    %v4569 = vpack.c.b16 %v3977, %v3976
    %v4570 = vpack.c.b16 %v3979, %v3978
    %v4571 = vpack.c.b16 %v3981, %v3980
    %v4572 = vpack.c.b16 %v3983, %v3982
    %v4573 = vpack.c.b16 %v3985, %v3984
    %v4574 = vpack.c.b16 %v3987, %v3986
    %v4575 = vpack.c.b16 %v3989, %v3988
    %v4576 = vpack.c.b16 %v3991, %v3990
    %v4577 = vpack.c.b16 %v3993, %v3992
    %v4578 = vpack.c.b16 %v3995, %v3994
    %v4579 = vpack.c.b16 %v3997, %v3996
    %v4580 = vpack.c.b16 %v3999, %v3998
    %v4581 = vpack.c.b16 %v4001, %v4000
    %v4582 = vpack.c.b16 %v4003, %v4002
    %v4583 = vpack.c.b16 %v4005, %v4004
    %v4584 = vpack.c.b16 %v4007, %v4006
    %v4585 = vpack.c.b16 %v4009, %v4008
    %5162 = vmatprep.subr.bf16.mxu0 0
    %5163 = vmatpush1.bf16.msra.mxu0 %v4010
    %5164 = vmatprep.subr.bf16.mxu0 0
    %5165 = vmatpush1.bf16.msra.mxu0 %v4011
    %5166 = vmatprep.subr.bf16.mxu0 0
    %5167 = vmatpush1.bf16.msra.mxu0 %v4012
    %5168 = vmatprep.subr.bf16.mxu0 0
    %5169 = vmatpush1.bf16.msra.mxu0 %v4013
    %5170 = vmatprep.subr.bf16.mxu0 0
    %5171 = vmatpush1.bf16.msra.mxu0 %v4014
    %5172 = vmatprep.subr.bf16.mxu0 0
    %5173 = vmatpush1.bf16.msra.mxu0 %v4015
    %5174 = vmatprep.subr.bf16.mxu0 0
    %5175 = vmatpush1.bf16.msra.mxu0 %v4016
    %5176 = vmatprep.subr.bf16.mxu0 0
    %5177 = vmatpush1.bf16.msra.mxu0 %v4017
    %5178 = vmatprep.subr.bf16.mxu0 0
    %5179 = vmatpush1.bf16.msra.mxu0 %v4018
    %5180 = vmatprep.subr.bf16.mxu0 0
    %5181 = vmatpush1.bf16.msra.mxu0 %v4019
    %5182 = vmatprep.subr.bf16.mxu0 0
    %5183 = vmatpush1.bf16.msra.mxu0 %v4020
    %5184 = vmatprep.subr.bf16.mxu0 0
    %5185 = vmatpush1.bf16.msra.mxu0 %v4021
    %5186 = vmatprep.subr.bf16.mxu0 0
    %5187 = vmatpush1.bf16.msra.mxu0 %v4022
    %5188 = vmatprep.subr.bf16.mxu0 0
    %5189 = vmatpush1.bf16.msra.mxu0 %v4023
    %5190 = vmatprep.subr.bf16.mxu0 0
    %5191 = vmatpush1.bf16.msra.mxu0 %v4024
    %5192 = vmatprep.subr.bf16.mxu0 0
    %5193 = vmatpush1.bf16.msra.mxu0 %v4025
    %5194 = vmatprep.mubr.bf16.mxu0 %v1230
    %5195 = vmatmul.mubr.bf16.gmra.mrb[0].mxu0 %v1216
    %v5196 = vpop.f32.mrb[0].mxu0
    %v5197 = vadd.f32 %v1182, %v5196
    %v5198 = vpop.f32.mrb[0].mxu0
    %v5199 = vpop.f32.mrb[0].mxu0
    %v5200 = vpop.f32.mrb[0].mxu0
    %5201 = vdwg.mxu0
    %5202 = vmatprep.subr.bf16.mxu0 0
    %5203 = vmatpush1.bf16.msra.mxu0 %v4026
    %5204 = vmatprep.subr.bf16.mxu0 0
    %5205 = vmatpush1.bf16.msra.mxu0 %v4027
    %5206 = vmatprep.subr.bf16.mxu0 0
    %5207 = vmatpush1.bf16.msra.mxu0 %v4028
    %5208 = vmatprep.subr.bf16.mxu0 0
    %5209 = vmatpush1.bf16.msra.mxu0 %v4029
    %5210 = vmatprep.subr.bf16.mxu0 0
    %5211 = vmatpush1.bf16.msra.mxu0 %v4030
    %5212 = vmatprep.subr.bf16.mxu0 0
    %5213 = vmatpush1.bf16.msra.mxu0 %v4031
    %5214 = vmatprep.subr.bf16.mxu0 0
    %5215 = vmatpush1.bf16.msra.mxu0 %v4032
    %5216 = vmatprep.subr.bf16.mxu0 0
    %5217 = vmatpush1.bf16.msra.mxu0 %v4033
    %5218 = vmatprep.subr.bf16.mxu0 0
    %5219 = vmatpush1.bf16.msra.mxu0 %v4034
    %5220 = vmatprep.subr.bf16.mxu0 0
    %5221 = vmatpush1.bf16.msra.mxu0 %v4035
    %5222 = vmatprep.subr.bf16.mxu0 0
    %5223 = vmatpush1.bf16.msra.mxu0 %v4036
    %5224 = vmatprep.subr.bf16.mxu0 0
    %5225 = vmatpush1.bf16.msra.mxu0 %v4037
    %5226 = vmatprep.subr.bf16.mxu0 0
    %5227 = vmatpush1.bf16.msra.mxu0 %v4038
    %5228 = vmatprep.subr.bf16.mxu0 0
    %5229 = vmatpush1.bf16.msra.mxu0 %v4039
    %5230 = vmatprep.subr.bf16.mxu0 0
    %5231 = vmatpush1.bf16.msra.mxu0 %v4040
    %5232 = vmatprep.subr.bf16.mxu0 0
    %5233 = vmatpush1.bf16.msra.mxu0 %v4041
    %5234 = vmatprep.mubr.bf16.mxu0 %v1240
    %5235 = vmatmul.mubr.bf16.gmra.mrb[0].mxu0 %v1238
    %v5236 = vpop.f32.mrb[0].mxu0
    %v5237 = vadd.f32 %v5197, %v5236
    %v5238 = vpop.f32.mrb[0].mxu0
    %v5239 = vpop.f32.mrb[0].mxu0
    %v5240 = vpop.f32.mrb[0].mxu0
    %5241 = vdwg.mxu0
    %5242 = vmatprep.subr.bf16.mxu0 0
    %5243 = vmatpush1.bf16.msra.mxu0 %v4042
    %5244 = vmatprep.subr.bf16.mxu0 0
    %5245 = vmatpush1.bf16.msra.mxu0 %v4043
    %5246 = vmatprep.subr.bf16.mxu0 0
    %5247 = vmatpush1.bf16.msra.mxu0 %v4044
    %5248 = vmatprep.subr.bf16.mxu0 0
    %5249 = vmatpush1.bf16.msra.mxu0 %v4045
    %5250 = vmatprep.subr.bf16.mxu0 0
    %5251 = vmatpush1.bf16.msra.mxu0 %v4046
    %5252 = vmatprep.subr.bf16.mxu0 0
    %5253 = vmatpush1.bf16.msra.mxu0 %v4047
    %5254 = vmatprep.subr.bf16.mxu0 0
    %5255 = vmatpush1.bf16.msra.mxu0 %v4048
    %5256 = vmatprep.subr.bf16.mxu0 0
    %5257 = vmatpush1.bf16.msra.mxu0 %v4049
    %5258 = vmatprep.subr.bf16.mxu0 0
    %5259 = vmatpush1.bf16.msra.mxu0 %v4050
    %5260 = vmatprep.subr.bf16.mxu0 0
    %5261 = vmatpush1.bf16.msra.mxu0 %v4051
    %5262 = vmatprep.subr.bf16.mxu0 0
    %5263 = vmatpush1.bf16.msra.mxu0 %v4052
    %5264 = vmatprep.subr.bf16.mxu0 0
    %5265 = vmatpush1.bf16.msra.mxu0 %v4053
    %5266 = vmatprep.subr.bf16.mxu0 0
    %5267 = vmatpush1.bf16.msra.mxu0 %v4054
    %5268 = vmatprep.subr.bf16.mxu0 0
    %5269 = vmatpush1.bf16.msra.mxu0 %v4055
    %5270 = vmatprep.subr.bf16.mxu0 0
    %5271 = vmatpush1.bf16.msra.mxu0 %v4056
    %5272 = vmatprep.subr.bf16.mxu0 0
    %5273 = vmatpush1.bf16.msra.mxu0 %v4057
    %5274 = vmatprep.mubr.bf16.mxu0 %v1237
    %5275 = vmatmul.mubr.bf16.gmra.mrb[0].mxu0 %v1223
    %v5276 = vpop.f32.mrb[0].mxu0
    %v5277 = vadd.f32 %v5237, %v5276
    %v5278 = vpop.f32.mrb[0].mxu0
    %v5279 = vpop.f32.mrb[0].mxu0
    %v5280 = vpop.f32.mrb[0].mxu0
    %5281 = vdwg.mxu0
    %5282 = vmatprep.subr.bf16.mxu0 0
    %5283 = vmatpush1.bf16.msra.mxu0 %v4058
    %5284 = vmatprep.subr.bf16.mxu0 0
    %5285 = vmatpush1.bf16.msra.mxu0 %v4059
    %5286 = vmatprep.subr.bf16.mxu0 0
    %5287 = vmatpush1.bf16.msra.mxu0 %v4060
    %5288 = vmatprep.subr.bf16.mxu0 0
    %5289 = vmatpush1.bf16.msra.mxu0 %v4061
    %5290 = vmatprep.subr.bf16.mxu0 0
    %5291 = vmatpush1.bf16.msra.mxu0 %v4062
    %5292 = vmatprep.subr.bf16.mxu0 0
    %5293 = vmatpush1.bf16.msra.mxu0 %v4063
    %5294 = vmatprep.subr.bf16.mxu0 0
    %5295 = vmatpush1.bf16.msra.mxu0 %v4064
    %5296 = vmatprep.subr.bf16.mxu0 0
    %5297 = vmatpush1.bf16.msra.mxu0 %v4065
    %5298 = vmatprep.subr.bf16.mxu0 0
    %5299 = vmatpush1.bf16.msra.mxu0 %v4066
    %5300 = vmatprep.subr.bf16.mxu0 0
    %5301 = vmatpush1.bf16.msra.mxu0 %v4067
    %5302 = vmatprep.subr.bf16.mxu0 0
    %5303 = vmatpush1.bf16.msra.mxu0 %v4068
    %5304 = vmatprep.subr.bf16.mxu0 0
    %5305 = vmatpush1.bf16.msra.mxu0 %v4069
    %5306 = vmatprep.subr.bf16.mxu0 0
    %5307 = vmatpush1.bf16.msra.mxu0 %v4070
    %5308 = vmatprep.subr.bf16.mxu0 0
    %5309 = vmatpush1.bf16.msra.mxu0 %v4071
    %5310 = vmatprep.subr.bf16.mxu0 0
    %5311 = vmatpush1.bf16.msra.mxu0 %v4072
    %5312 = vmatprep.subr.bf16.mxu0 0
    %5313 = vmatpush1.bf16.msra.mxu0 %v4073
    %5314 = vmatprep.mubr.bf16.mxu0 %v1241
    %5315 = vmatmul.mubr.bf16.gmra.mrb[0].mxu0 %v1239
    %v5316 = vpop.f32.mrb[0].mxu0
    %v5317 = vadd.f32 %v5277, %v5316
    %v5318 = vpop.f32.mrb[0].mxu0
    %v5319 = vpop.f32.mrb[0].mxu0
    %v5320 = vpop.f32.mrb[0].mxu0
    %5321 = vdwg.mxu0
    %5322 = vmatprep.subr.bf16.mxu0 0
    %5323 = vmatpush1.bf16.msra.mxu0 %v4074
    %5324 = vmatprep.subr.bf16.mxu0 0
    %5325 = vmatpush1.bf16.msra.mxu0 %v4075
    %5326 = vmatprep.subr.bf16.mxu0 0
    %5327 = vmatpush1.bf16.msra.mxu0 %v4076
    %5328 = vmatprep.subr.bf16.mxu0 0
    %5329 = vmatpush1.bf16.msra.mxu0 %v4077
    %5330 = vmatprep.subr.bf16.mxu0 0
    %5331 = vmatpush1.bf16.msra.mxu0 %v4078
    %5332 = vmatprep.subr.bf16.mxu0 0
    %5333 = vmatpush1.bf16.msra.mxu0 %v4079
    %5334 = vmatprep.subr.bf16.mxu0 0
    %5335 = vmatpush1.bf16.msra.mxu0 %v4080
    %5336 = vmatprep.subr.bf16.mxu0 0
    %5337 = vmatpush1.bf16.msra.mxu0 %v4081
    %5338 = vmatprep.subr.bf16.mxu0 0
    %5339 = vmatpush1.bf16.msra.mxu0 %v4082
    %5340 = vmatprep.subr.bf16.mxu0 0
    %5341 = vmatpush1.bf16.msra.mxu0 %v4083
    %5342 = vmatprep.subr.bf16.mxu0 0
    %5343 = vmatpush1.bf16.msra.mxu0 %v4084
    %5344 = vmatprep.subr.bf16.mxu0 0
    %5345 = vmatpush1.bf16.msra.mxu0 %v4085
    %5346 = vmatprep.subr.bf16.mxu0 0
    %5347 = vmatpush1.bf16.msra.mxu0 %v4086
    %5348 = vmatprep.subr.bf16.mxu0 0
    %5349 = vmatpush1.bf16.msra.mxu0 %v4087
    %5350 = vmatprep.subr.bf16.mxu0 0
    %5351 = vmatpush1.bf16.msra.mxu0 %v4088
    %5352 = vmatprep.subr.bf16.mxu0 0
    %5353 = vmatpush1.bf16.msra.mxu0 %v4089
    %5354 = vmatprep.mubr.bf16.mxu0 %v1279
    %5355 = vmatmul.mubr.bf16.gmra.mrb[0].mxu0 %v1265
    %v5356 = vpop.f32.mrb[0].mxu0
    %v5357 = vadd.f32 %v5317, %v5356
    %v5358 = vpop.f32.mrb[0].mxu0
    %v5359 = vpop.f32.mrb[0].mxu0
    %v5360 = vpop.f32.mrb[0].mxu0
    %5361 = vdwg.mxu0
    %5362 = vmatprep.subr.bf16.mxu0 0
    %5363 = vmatpush1.bf16.msra.mxu0 %v4090
    %5364 = vmatprep.subr.bf16.mxu0 0
    %5365 = vmatpush1.bf16.msra.mxu0 %v4091
    %5366 = vmatprep.subr.bf16.mxu0 0
    %5367 = vmatpush1.bf16.msra.mxu0 %v4092
    %5368 = vmatprep.subr.bf16.mxu0 0
    %5369 = vmatpush1.bf16.msra.mxu0 %v4093
    %5370 = vmatprep.subr.bf16.mxu0 0
    %5371 = vmatpush1.bf16.msra.mxu0 %v4094
    %5372 = vmatprep.subr.bf16.mxu0 0
    %5373 = vmatpush1.bf16.msra.mxu0 %v4095
    %5374 = vmatprep.subr.bf16.mxu0 0
    %5375 = vmatpush1.bf16.msra.mxu0 %v4096
    %5376 = vmatprep.subr.bf16.mxu0 0
    %5377 = vmatpush1.bf16.msra.mxu0 %v4097
    %5378 = vmatprep.subr.bf16.mxu0 0
    %5379 = vmatpush1.bf16.msra.mxu0 %v4098
    %5380 = vmatprep.subr.bf16.mxu0 0
    %5381 = vmatpush1.bf16.msra.mxu0 %v4099
    %5382 = vmatprep.subr.bf16.mxu0 0
    %5383 = vmatpush1.bf16.msra.mxu0 %v4100
    %5384 = vmatprep.subr.bf16.mxu0 0
    %5385 = vmatpush1.bf16.msra.mxu0 %v4101
    %5386 = vmatprep.subr.bf16.mxu0 0
    %5387 = vmatpush1.bf16.msra.mxu0 %v4102
    %5388 = vmatprep.subr.bf16.mxu0 0
    %5389 = vmatpush1.bf16.msra.mxu0 %v4103
    %5390 = vmatprep.subr.bf16.mxu0 0
    %5391 = vmatpush1.bf16.msra.mxu0 %v4104
    %5392 = vmatprep.subr.bf16.mxu0 0
    %5393 = vmatpush1.bf16.msra.mxu0 %v4105
    %5394 = vmatprep.mubr.bf16.mxu0 %v1289
    %5395 = vmatmul.mubr.bf16.gmra.mrb[0].mxu0 %v1287
    %v5396 = vpop.f32.mrb[0].mxu0
    %v5397 = vadd.f32 %v5357, %v5396
    %v5398 = vpop.f32.mrb[0].mxu0
    %v5399 = vpop.f32.mrb[0].mxu0
    %v5400 = vpop.f32.mrb[0].mxu0
    %5401 = vdwg.mxu0
    %5402 = vmatprep.subr.bf16.mxu0 0
    %5403 = vmatpush1.bf16.msra.mxu0 %v4106
    %5404 = vmatprep.subr.bf16.mxu0 0
    %5405 = vmatpush1.bf16.msra.mxu0 %v4107
    %5406 = vmatprep.subr.bf16.mxu0 0
    %5407 = vmatpush1.bf16.msra.mxu0 %v4108
    %5408 = vmatprep.subr.bf16.mxu0 0
    %5409 = vmatpush1.bf16.msra.mxu0 %v4109
    %5410 = vmatprep.subr.bf16.mxu0 0
    %5411 = vmatpush1.bf16.msra.mxu0 %v4110
    %5412 = vmatprep.subr.bf16.mxu0 0
    %5413 = vmatpush1.bf16.msra.mxu0 %v4111
    %5414 = vmatprep.subr.bf16.mxu0 0
    %5415 = vmatpush1.bf16.msra.mxu0 %v4112
    %5416 = vmatprep.subr.bf16.mxu0 0
    %5417 = vmatpush1.bf16.msra.mxu0 %v4113
    %5418 = vmatprep.subr.bf16.mxu0 0
    %5419 = vmatpush1.bf16.msra.mxu0 %v4114
    %5420 = vmatprep.subr.bf16.mxu0 0
    %5421 = vmatpush1.bf16.msra.mxu0 %v4115
    %5422 = vmatprep.subr.bf16.mxu0 0
    %5423 = vmatpush1.bf16.msra.mxu0 %v4116
    %5424 = vmatprep.subr.bf16.mxu0 0
    %5425 = vmatpush1.bf16.msra.mxu0 %v4117
    %5426 = vmatprep.subr.bf16.mxu0 0
    %5427 = vmatpush1.bf16.msra.mxu0 %v4118
    %5428 = vmatprep.subr.bf16.mxu0 0
    %5429 = vmatpush1.bf16.msra.mxu0 %v4119
    %5430 = vmatprep.subr.bf16.mxu0 0
    %5431 = vmatpush1.bf16.msra.mxu0 %v4120
    %5432 = vmatprep.subr.bf16.mxu0 0
    %5433 = vmatpush1.bf16.msra.mxu0 %v4121
    %5434 = vmatprep.mubr.bf16.mxu0 %v1286
    %5435 = vmatmul.mubr.bf16.gmra.mrb[0].mxu0 %v1272
    %v5436 = vpop.f32.mrb[0].mxu0
    %v5437 = vadd.f32 %v5397, %v5436
    %v5438 = vpop.f32.mrb[0].mxu0
    %v5439 = vpop.f32.mrb[0].mxu0
    %v5440 = vpop.f32.mrb[0].mxu0
    %5441 = vdwg.mxu0
    %5442 = vmatprep.subr.bf16.mxu0 0
    %5443 = vmatpush1.bf16.msra.mxu0 %v4122
    %5444 = vmatprep.subr.bf16.mxu0 0
    %5445 = vmatpush1.bf16.msra.mxu0 %v4123
    %5446 = vmatprep.subr.bf16.mxu0 0
    %5447 = vmatpush1.bf16.msra.mxu0 %v4124
    %5448 = vmatprep.subr.bf16.mxu0 0
    %5449 = vmatpush1.bf16.msra.mxu0 %v4125
    %5450 = vmatprep.subr.bf16.mxu0 0
    %5451 = vmatpush1.bf16.msra.mxu0 %v4126
    %5452 = vmatprep.subr.bf16.mxu0 0
    %5453 = vmatpush1.bf16.msra.mxu0 %v4127
    %5454 = vmatprep.subr.bf16.mxu0 0
    %5455 = vmatpush1.bf16.msra.mxu0 %v4128
    %5456 = vmatprep.subr.bf16.mxu0 0
    %5457 = vmatpush1.bf16.msra.mxu0 %v4129
    %5458 = vmatprep.subr.bf16.mxu0 0
    %5459 = vmatpush1.bf16.msra.mxu0 %v4130
    %5460 = vmatprep.subr.bf16.mxu0 0
    %5461 = vmatpush1.bf16.msra.mxu0 %v4131
    %5462 = vmatprep.subr.bf16.mxu0 0
    %5463 = vmatpush1.bf16.msra.mxu0 %v4132
    %5464 = vmatprep.subr.bf16.mxu0 0
    %5465 = vmatpush1.bf16.msra.mxu0 %v4133
    %5466 = vmatprep.subr.bf16.mxu0 0
    %5467 = vmatpush1.bf16.msra.mxu0 %v4134
    %5468 = vmatprep.subr.bf16.mxu0 0
    %5469 = vmatpush1.bf16.msra.mxu0 %v4135
    %5470 = vmatprep.subr.bf16.mxu0 0
    %5471 = vmatpush1.bf16.msra.mxu0 %v4136
    %5472 = vmatprep.subr.bf16.mxu0 0
    %5473 = vmatpush1.bf16.msra.mxu0 %v4137
    %5474 = vmatprep.mubr.bf16.mxu0 %v1290
    %5475 = vmatmul.mubr.bf16.gmra.mrb[0].mxu0 %v1288
    %v5476 = vpop.f32.mrb[0].mxu0
    %v5477 = vadd.f32 %v5437, %v5476
    %v5478 = vpop.f32.mrb[0].mxu0
    %v5479 = vpop.f32.mrb[0].mxu0
    %v5480 = vpop.f32.mrb[0].mxu0
    %5481 = vdwg.mxu0
    %5482 = vmatprep.subr.bf16.mxu0 0
    %5483 = vmatpush1.bf16.msra.mxu0 %v4138
    %5484 = vmatprep.subr.bf16.mxu0 0
    %5485 = vmatpush1.bf16.msra.mxu0 %v4139
    %5486 = vmatprep.subr.bf16.mxu0 0
    %5487 = vmatpush1.bf16.msra.mxu0 %v4140
    %5488 = vmatprep.subr.bf16.mxu0 0
    %5489 = vmatpush1.bf16.msra.mxu0 %v4141
    %5490 = vmatprep.subr.bf16.mxu0 0
    %5491 = vmatpush1.bf16.msra.mxu0 %v4142
    %5492 = vmatprep.subr.bf16.mxu0 0
    %5493 = vmatpush1.bf16.msra.mxu0 %v4143
    %5494 = vmatprep.subr.bf16.mxu0 0
    %5495 = vmatpush1.bf16.msra.mxu0 %v4144
    %5496 = vmatprep.subr.bf16.mxu0 0
    %5497 = vmatpush1.bf16.msra.mxu0 %v4145
    %5498 = vmatprep.subr.bf16.mxu0 0
    %5499 = vmatpush1.bf16.msra.mxu0 %v4146
    %5500 = vmatprep.subr.bf16.mxu0 0
    %5501 = vmatpush1.bf16.msra.mxu0 %v4147
    %5502 = vmatprep.subr.bf16.mxu0 0
    %5503 = vmatpush1.bf16.msra.mxu0 %v4148
    %5504 = vmatprep.subr.bf16.mxu0 0
    %5505 = vmatpush1.bf16.msra.mxu0 %v4149
    %5506 = vmatprep.subr.bf16.mxu0 0
    %5507 = vmatpush1.bf16.msra.mxu0 %v4150
    %5508 = vmatprep.subr.bf16.mxu0 0
    %5509 = vmatpush1.bf16.msra.mxu0 %v4151
    %5510 = vmatprep.subr.bf16.mxu0 0
    %5511 = vmatpush1.bf16.msra.mxu0 %v4152
    %5512 = vmatprep.subr.bf16.mxu0 0
    %5513 = vmatpush1.bf16.msra.mxu0 %v4153
    %5514 = vmatprep.mubr.bf16.mxu0 %v1328
    %5515 = vmatmul.mubr.bf16.gmra.mrb[0].mxu0 %v1314
    %v5516 = vpop.f32.mrb[0].mxu0
    %v5517 = vadd.f32 %v5477, %v5516
    %v5518 = vpop.f32.mrb[0].mxu0
    %v5519 = vpop.f32.mrb[0].mxu0
    %v5520 = vpop.f32.mrb[0].mxu0
    %5521 = vdwg.mxu0
    %5522 = vmatprep.subr.bf16.mxu0 0
    %5523 = vmatpush1.bf16.msra.mxu0 %v4154
    %5524 = vmatprep.subr.bf16.mxu0 0
    %5525 = vmatpush1.bf16.msra.mxu0 %v4155
    %5526 = vmatprep.subr.bf16.mxu0 0
    %5527 = vmatpush1.bf16.msra.mxu0 %v4156
    %5528 = vmatprep.subr.bf16.mxu0 0
    %5529 = vmatpush1.bf16.msra.mxu0 %v4157
    %5530 = vmatprep.subr.bf16.mxu0 0
    %5531 = vmatpush1.bf16.msra.mxu0 %v4158
    %5532 = vmatprep.subr.bf16.mxu0 0
    %5533 = vmatpush1.bf16.msra.mxu0 %v4159
    %5534 = vmatprep.subr.bf16.mxu0 0
    %5535 = vmatpush1.bf16.msra.mxu0 %v4160
    %5536 = vmatprep.subr.bf16.mxu0 0
    %5537 = vmatpush1.bf16.msra.mxu0 %v4161
    %5538 = vmatprep.subr.bf16.mxu0 0
    %5539 = vmatpush1.bf16.msra.mxu0 %v4162
    %5540 = vmatprep.subr.bf16.mxu0 0
    %5541 = vmatpush1.bf16.msra.mxu0 %v4163
    %5542 = vmatprep.subr.bf16.mxu0 0
    %5543 = vmatpush1.bf16.msra.mxu0 %v4164
    %5544 = vmatprep.subr.bf16.mxu0 0
    %5545 = vmatpush1.bf16.msra.mxu0 %v4165
    %5546 = vmatprep.subr.bf16.mxu0 0
    %5547 = vmatpush1.bf16.msra.mxu0 %v4166
    %5548 = vmatprep.subr.bf16.mxu0 0
    %5549 = vmatpush1.bf16.msra.mxu0 %v4167
    %5550 = vmatprep.subr.bf16.mxu0 0
    %5551 = vmatpush1.bf16.msra.mxu0 %v4168
    %5552 = vmatprep.subr.bf16.mxu0 0
    %5553 = vmatpush1.bf16.msra.mxu0 %v4169
    %5554 = vmatprep.mubr.bf16.mxu0 %v1338
    %5555 = vmatmul.mubr.bf16.gmra.mrb[0].mxu0 %v1336
    %v5556 = vpop.f32.mrb[0].mxu0
    %v5557 = vadd.f32 %v5517, %v5556
    %v5558 = vpop.f32.mrb[0].mxu0
    %v5559 = vpop.f32.mrb[0].mxu0
    %v5560 = vpop.f32.mrb[0].mxu0
    %5561 = vdwg.mxu0
    %5562 = vmatprep.subr.bf16.mxu0 0
    %5563 = vmatpush1.bf16.msra.mxu0 %v4170
    %5564 = vmatprep.subr.bf16.mxu0 0
    %5565 = vmatpush1.bf16.msra.mxu0 %v4171
    %5566 = vmatprep.subr.bf16.mxu0 0
    %5567 = vmatpush1.bf16.msra.mxu0 %v4172
    %5568 = vmatprep.subr.bf16.mxu0 0
    %5569 = vmatpush1.bf16.msra.mxu0 %v4173
    %5570 = vmatprep.subr.bf16.mxu0 0
    %5571 = vmatpush1.bf16.msra.mxu0 %v4174
    %5572 = vmatprep.subr.bf16.mxu0 0
    %5573 = vmatpush1.bf16.msra.mxu0 %v4175
    %5574 = vmatprep.subr.bf16.mxu0 0
    %5575 = vmatpush1.bf16.msra.mxu0 %v4176
    %5576 = vmatprep.subr.bf16.mxu0 0
    %5577 = vmatpush1.bf16.msra.mxu0 %v4177
    %5578 = vmatprep.subr.bf16.mxu0 0
    %5579 = vmatpush1.bf16.msra.mxu0 %v4178
    %5580 = vmatprep.subr.bf16.mxu0 0
    %5581 = vmatpush1.bf16.msra.mxu0 %v4179
    %5582 = vmatprep.subr.bf16.mxu0 0
    %5583 = vmatpush1.bf16.msra.mxu0 %v4180
    %5584 = vmatprep.subr.bf16.mxu0 0
    %5585 = vmatpush1.bf16.msra.mxu0 %v4181
    %5586 = vmatprep.subr.bf16.mxu0 0
    %5587 = vmatpush1.bf16.msra.mxu0 %v4182
    %5588 = vmatprep.subr.bf16.mxu0 0
    %5589 = vmatpush1.bf16.msra.mxu0 %v4183
    %5590 = vmatprep.subr.bf16.mxu0 0
    %5591 = vmatpush1.bf16.msra.mxu0 %v4184
    %5592 = vmatprep.subr.bf16.mxu0 0
    %5593 = vmatpush1.bf16.msra.mxu0 %v4185
    %5594 = vmatprep.mubr.bf16.mxu0 %v1335
    %5595 = vmatmul.mubr.bf16.gmra.mrb[0].mxu0 %v1321
    %v5596 = vpop.f32.mrb[0].mxu0
    %v5597 = vadd.f32 %v5557, %v5596
    %v5598 = vpop.f32.mrb[0].mxu0
    %v5599 = vpop.f32.mrb[0].mxu0
    %v5600 = vpop.f32.mrb[0].mxu0
    %5601 = vdwg.mxu0
    %5602 = vmatprep.subr.bf16.mxu0 0
    %5603 = vmatpush1.bf16.msra.mxu0 %v4186
    %5604 = vmatprep.subr.bf16.mxu0 0
    %5605 = vmatpush1.bf16.msra.mxu0 %v4187
    %5606 = vmatprep.subr.bf16.mxu0 0
    %5607 = vmatpush1.bf16.msra.mxu0 %v4188
    %5608 = vmatprep.subr.bf16.mxu0 0
    %5609 = vmatpush1.bf16.msra.mxu0 %v4189
    %5610 = vmatprep.subr.bf16.mxu0 0
    %5611 = vmatpush1.bf16.msra.mxu0 %v4190
    %5612 = vmatprep.subr.bf16.mxu0 0
    %5613 = vmatpush1.bf16.msra.mxu0 %v4191
    %5614 = vmatprep.subr.bf16.mxu0 0
    %5615 = vmatpush1.bf16.msra.mxu0 %v4192
    %5616 = vmatprep.subr.bf16.mxu0 0
    %5617 = vmatpush1.bf16.msra.mxu0 %v4193
    %5618 = vmatprep.subr.bf16.mxu0 0
    %5619 = vmatpush1.bf16.msra.mxu0 %v4194
    %5620 = vmatprep.subr.bf16.mxu0 0
    %5621 = vmatpush1.bf16.msra.mxu0 %v4195
    %5622 = vmatprep.subr.bf16.mxu0 0
    %5623 = vmatpush1.bf16.msra.mxu0 %v4196
    %5624 = vmatprep.subr.bf16.mxu0 0
    %5625 = vmatpush1.bf16.msra.mxu0 %v4197
    %5626 = vmatprep.subr.bf16.mxu0 0
    %5627 = vmatpush1.bf16.msra.mxu0 %v4198
    %5628 = vmatprep.subr.bf16.mxu0 0
    %5629 = vmatpush1.bf16.msra.mxu0 %v4199
    %5630 = vmatprep.subr.bf16.mxu0 0
    %5631 = vmatpush1.bf16.msra.mxu0 %v4200
    %5632 = vmatprep.subr.bf16.mxu0 0
    %5633 = vmatpush1.bf16.msra.mxu0 %v4201
    %5634 = vmatprep.mubr.bf16.mxu0 %v1339
    %5635 = vmatmul.mubr.bf16.gmra.mrb[0].mxu0 %v1337
    %v5636 = vpop.f32.mrb[0].mxu0
    %v5637 = vadd.f32 %v5597, %v5636
    %v5638 = vpop.f32.mrb[0].mxu0
    %v5639 = vpop.f32.mrb[0].mxu0
    %v5640 = vpop.f32.mrb[0].mxu0
    %5641 = vdwg.mxu0
    %5642 = vmatprep.subr.bf16.mxu0 0
    %5643 = vmatpush1.bf16.msra.mxu0 %v4202
    %5644 = vmatprep.subr.bf16.mxu0 0
    %5645 = vmatpush1.bf16.msra.mxu0 %v4203
    %5646 = vmatprep.subr.bf16.mxu0 0
    %5647 = vmatpush1.bf16.msra.mxu0 %v4204
    %5648 = vmatprep.subr.bf16.mxu0 0
    %5649 = vmatpush1.bf16.msra.mxu0 %v4205
    %5650 = vmatprep.subr.bf16.mxu0 0
    %5651 = vmatpush1.bf16.msra.mxu0 %v4206
    %5652 = vmatprep.subr.bf16.mxu0 0
    %5653 = vmatpush1.bf16.msra.mxu0 %v4207
    %5654 = vmatprep.subr.bf16.mxu0 0
    %5655 = vmatpush1.bf16.msra.mxu0 %v4208
    %5656 = vmatprep.subr.bf16.mxu0 0
    %5657 = vmatpush1.bf16.msra.mxu0 %v4209
    %5658 = vmatprep.subr.bf16.mxu0 0
    %5659 = vmatpush1.bf16.msra.mxu0 %v4210
    %5660 = vmatprep.subr.bf16.mxu0 0
    %5661 = vmatpush1.bf16.msra.mxu0 %v4211
    %5662 = vmatprep.subr.bf16.mxu0 0
    %5663 = vmatpush1.bf16.msra.mxu0 %v4212
    %5664 = vmatprep.subr.bf16.mxu0 0
    %5665 = vmatpush1.bf16.msra.mxu0 %v4213
    %5666 = vmatprep.subr.bf16.mxu0 0
    %5667 = vmatpush1.bf16.msra.mxu0 %v4214
    %5668 = vmatprep.subr.bf16.mxu0 0
    %5669 = vmatpush1.bf16.msra.mxu0 %v4215
    %5670 = vmatprep.subr.bf16.mxu0 0
    %5671 = vmatpush1.bf16.msra.mxu0 %v4216
    %5672 = vmatprep.subr.bf16.mxu0 0
    %5673 = vmatpush1.bf16.msra.mxu0 %v4217
    %5674 = vmatprep.mubr.bf16.mxu0 %v1377
    %5675 = vmatmul.mubr.bf16.gmra.mrb[0].mxu0 %v1363
    %v5676 = vpop.f32.mrb[0].mxu0
    %v5677 = vadd.f32 %v5637, %v5676
    %v5678 = vpop.f32.mrb[0].mxu0
    %v5679 = vpop.f32.mrb[0].mxu0
    %v5680 = vpop.f32.mrb[0].mxu0
    %5681 = vdwg.mxu0
    %5682 = vmatprep.subr.bf16.mxu0 0
    %5683 = vmatpush1.bf16.msra.mxu0 %v4218
    %5684 = vmatprep.subr.bf16.mxu0 0
    %5685 = vmatpush1.bf16.msra.mxu0 %v4219
    %5686 = vmatprep.subr.bf16.mxu0 0
    %5687 = vmatpush1.bf16.msra.mxu0 %v4220
    %5688 = vmatprep.subr.bf16.mxu0 0
    %5689 = vmatpush1.bf16.msra.mxu0 %v4221
    %5690 = vmatprep.subr.bf16.mxu0 0
    %5691 = vmatpush1.bf16.msra.mxu0 %v4222
    %5692 = vmatprep.subr.bf16.mxu0 0
    %5693 = vmatpush1.bf16.msra.mxu0 %v4223
    %5694 = vmatprep.subr.bf16.mxu0 0
    %5695 = vmatpush1.bf16.msra.mxu0 %v4224
    %5696 = vmatprep.subr.bf16.mxu0 0
    %5697 = vmatpush1.bf16.msra.mxu0 %v4225
    %5698 = vmatprep.subr.bf16.mxu0 0
    %5699 = vmatpush1.bf16.msra.mxu0 %v4226
    %5700 = vmatprep.subr.bf16.mxu0 0
    %5701 = vmatpush1.bf16.msra.mxu0 %v4227
    %5702 = vmatprep.subr.bf16.mxu0 0
    %5703 = vmatpush1.bf16.msra.mxu0 %v4228
    %5704 = vmatprep.subr.bf16.mxu0 0
    %5705 = vmatpush1.bf16.msra.mxu0 %v4229
    %5706 = vmatprep.subr.bf16.mxu0 0
    %5707 = vmatpush1.bf16.msra.mxu0 %v4230
    %5708 = vmatprep.subr.bf16.mxu0 0
    %5709 = vmatpush1.bf16.msra.mxu0 %v4231
    %5710 = vmatprep.subr.bf16.mxu0 0
    %5711 = vmatpush1.bf16.msra.mxu0 %v4232
    %5712 = vmatprep.subr.bf16.mxu0 0
    %5713 = vmatpush1.bf16.msra.mxu0 %v4233
    %5714 = vmatprep.mubr.bf16.mxu0 %v1387
    %5715 = vmatmul.mubr.bf16.gmra.mrb[0].mxu0 %v1385
    %v5716 = vpop.f32.mrb[0].mxu0
    %v5717 = vadd.f32 %v5677, %v5716
    %v5718 = vpop.f32.mrb[0].mxu0
    %v5719 = vpop.f32.mrb[0].mxu0
    %v5720 = vpop.f32.mrb[0].mxu0
    %5721 = vdwg.mxu0
    %5722 = vmatprep.subr.bf16.mxu0 0
    %5723 = vmatpush1.bf16.msra.mxu0 %v4234
    %5724 = vmatprep.subr.bf16.mxu0 0
    %5725 = vmatpush1.bf16.msra.mxu0 %v4235
    %5726 = vmatprep.subr.bf16.mxu0 0
    %5727 = vmatpush1.bf16.msra.mxu0 %v4236
    %5728 = vmatprep.subr.bf16.mxu0 0
    %5729 = vmatpush1.bf16.msra.mxu0 %v4237
    %5730 = vmatprep.subr.bf16.mxu0 0
    %5731 = vmatpush1.bf16.msra.mxu0 %v4238
    %5732 = vmatprep.subr.bf16.mxu0 0
    %5733 = vmatpush1.bf16.msra.mxu0 %v4239
    %5734 = vmatprep.subr.bf16.mxu0 0
    %5735 = vmatpush1.bf16.msra.mxu0 %v4240
    %5736 = vmatprep.subr.bf16.mxu0 0
    %5737 = vmatpush1.bf16.msra.mxu0 %v4241
    %5738 = vmatprep.subr.bf16.mxu0 0
    %5739 = vmatpush1.bf16.msra.mxu0 %v4242
    %5740 = vmatprep.subr.bf16.mxu0 0
    %5741 = vmatpush1.bf16.msra.mxu0 %v4243
    %5742 = vmatprep.subr.bf16.mxu0 0
    %5743 = vmatpush1.bf16.msra.mxu0 %v4244
    %5744 = vmatprep.subr.bf16.mxu0 0
    %5745 = vmatpush1.bf16.msra.mxu0 %v4245
    %5746 = vmatprep.subr.bf16.mxu0 0
    %5747 = vmatpush1.bf16.msra.mxu0 %v4246
    %5748 = vmatprep.subr.bf16.mxu0 0
    %5749 = vmatpush1.bf16.msra.mxu0 %v4247
    %5750 = vmatprep.subr.bf16.mxu0 0
    %5751 = vmatpush1.bf16.msra.mxu0 %v4248
    %5752 = vmatprep.subr.bf16.mxu0 0
    %5753 = vmatpush1.bf16.msra.mxu0 %v4249
    %5754 = vmatprep.mubr.bf16.mxu0 %v1384
    %5755 = vmatmul.mubr.bf16.gmra.mrb[0].mxu0 %v1370
    %v5756 = vpop.f32.mrb[0].mxu0
    %v5757 = vadd.f32 %v5717, %v5756
    %v5758 = vpop.f32.mrb[0].mxu0
    %v5759 = vpop.f32.mrb[0].mxu0
    %v5760 = vpop.f32.mrb[0].mxu0
    %5761 = vdwg.mxu0
    %5762 = vmatprep.subr.bf16.mxu0 0
    %5763 = vmatpush1.bf16.msra.mxu0 %v4250
    %5764 = vmatprep.subr.bf16.mxu0 0
    %5765 = vmatpush1.bf16.msra.mxu0 %v4251
    %5766 = vmatprep.subr.bf16.mxu0 0
    %5767 = vmatpush1.bf16.msra.mxu0 %v4252
    %5768 = vmatprep.subr.bf16.mxu0 0
    %5769 = vmatpush1.bf16.msra.mxu0 %v4253
    %5770 = vmatprep.subr.bf16.mxu0 0
    %5771 = vmatpush1.bf16.msra.mxu0 %v4254
    %5772 = vmatprep.subr.bf16.mxu0 0
    %5773 = vmatpush1.bf16.msra.mxu0 %v4255
    %5774 = vmatprep.subr.bf16.mxu0 0
    %5775 = vmatpush1.bf16.msra.mxu0 %v4256
    %5776 = vmatprep.subr.bf16.mxu0 0
    %5777 = vmatpush1.bf16.msra.mxu0 %v4257
    %5778 = vmatprep.subr.bf16.mxu0 0
    %5779 = vmatpush1.bf16.msra.mxu0 %v4258
    %5780 = vmatprep.subr.bf16.mxu0 0
    %5781 = vmatpush1.bf16.msra.mxu0 %v4259
    %5782 = vmatprep.subr.bf16.mxu0 0
    %5783 = vmatpush1.bf16.msra.mxu0 %v4260
    %5784 = vmatprep.subr.bf16.mxu0 0
    %5785 = vmatpush1.bf16.msra.mxu0 %v4261
    %5786 = vmatprep.subr.bf16.mxu0 0
    %5787 = vmatpush1.bf16.msra.mxu0 %v4262
    %5788 = vmatprep.subr.bf16.mxu0 0
    %5789 = vmatpush1.bf16.msra.mxu0 %v4263
    %5790 = vmatprep.subr.bf16.mxu0 0
    %5791 = vmatpush1.bf16.msra.mxu0 %v4264
    %5792 = vmatprep.subr.bf16.mxu0 0
    %5793 = vmatpush1.bf16.msra.mxu0 %v4265
    %5794 = vmatprep.mubr.bf16.mxu0 %v1388
    %5795 = vmatmul.mubr.bf16.gmra.mrb[0].mxu0 %v1386
    %v5796 = vpop.f32.mrb[0].mxu0
    %v5797 = vadd.f32 %v5757, %v5796
    %v5798 = vpop.f32.mrb[0].mxu0
    %v5799 = vpop.f32.mrb[0].mxu0
    %v5800 = vpop.f32.mrb[0].mxu0
    %5801 = vdwg.mxu0
    %5802 = vmatprep.subr.bf16.mxu0 0
    %5803 = vmatpush1.bf16.msra.mxu0 %v4266
    %5804 = vmatprep.subr.bf16.mxu0 0
    %5805 = vmatpush1.bf16.msra.mxu0 %v4267
    %5806 = vmatprep.subr.bf16.mxu0 0
    %5807 = vmatpush1.bf16.msra.mxu0 %v4268
    %5808 = vmatprep.subr.bf16.mxu0 0
    %5809 = vmatpush1.bf16.msra.mxu0 %v4269
    %5810 = vmatprep.subr.bf16.mxu0 0
    %5811 = vmatpush1.bf16.msra.mxu0 %v4270
    %5812 = vmatprep.subr.bf16.mxu0 0
    %5813 = vmatpush1.bf16.msra.mxu0 %v4271
    %5814 = vmatprep.subr.bf16.mxu0 0
    %5815 = vmatpush1.bf16.msra.mxu0 %v4272
    %5816 = vmatprep.subr.bf16.mxu0 0
    %5817 = vmatpush1.bf16.msra.mxu0 %v4273
    %5818 = vmatprep.subr.bf16.mxu0 0
    %5819 = vmatpush1.bf16.msra.mxu0 %v4274
    %5820 = vmatprep.subr.bf16.mxu0 0
    %5821 = vmatpush1.bf16.msra.mxu0 %v4275
    %5822 = vmatprep.subr.bf16.mxu0 0
    %5823 = vmatpush1.bf16.msra.mxu0 %v4276
    %5824 = vmatprep.subr.bf16.mxu0 0
    %5825 = vmatpush1.bf16.msra.mxu0 %v4277
    %5826 = vmatprep.subr.bf16.mxu0 0
    %5827 = vmatpush1.bf16.msra.mxu0 %v4278
    %5828 = vmatprep.subr.bf16.mxu0 0
    %5829 = vmatpush1.bf16.msra.mxu0 %v4279
    %5830 = vmatprep.subr.bf16.mxu0 0
    %5831 = vmatpush1.bf16.msra.mxu0 %v4280
    %5832 = vmatprep.subr.bf16.mxu0 0
    %5833 = vmatpush1.bf16.msra.mxu0 %v4281
    %5834 = vmatprep.mubr.bf16.mxu0 %v1426
    %5835 = vmatmul.mubr.bf16.gmra.mrb[0].mxu0 %v1412
    %v5836 = vpop.f32.mrb[0].mxu0
    %v5837 = vadd.f32 %v5797, %v5836
    %v5838 = vpop.f32.mrb[0].mxu0
    %v5839 = vpop.f32.mrb[0].mxu0
    %v5840 = vpop.f32.mrb[0].mxu0
    %5841 = vdwg.mxu0
    %5842 = vmatprep.subr.bf16.mxu0 0
    %5843 = vmatpush1.bf16.msra.mxu0 %v4282
    %5844 = vmatprep.subr.bf16.mxu0 0
    %5845 = vmatpush1.bf16.msra.mxu0 %v4283
    %5846 = vmatprep.subr.bf16.mxu0 0
    %5847 = vmatpush1.bf16.msra.mxu0 %v4284
    %5848 = vmatprep.subr.bf16.mxu0 0
    %5849 = vmatpush1.bf16.msra.mxu0 %v4285
    %5850 = vmatprep.subr.bf16.mxu0 0
    %5851 = vmatpush1.bf16.msra.mxu0 %v4286
    %5852 = vmatprep.subr.bf16.mxu0 0
    %5853 = vmatpush1.bf16.msra.mxu0 %v4287
    %5854 = vmatprep.subr.bf16.mxu0 0
    %5855 = vmatpush1.bf16.msra.mxu0 %v4288
    %5856 = vmatprep.subr.bf16.mxu0 0
    %5857 = vmatpush1.bf16.msra.mxu0 %v4289
    %5858 = vmatprep.subr.bf16.mxu0 0
    %5859 = vmatpush1.bf16.msra.mxu0 %v4290
    %5860 = vmatprep.subr.bf16.mxu0 0
    %5861 = vmatpush1.bf16.msra.mxu0 %v4291
    %5862 = vmatprep.subr.bf16.mxu0 0
    %5863 = vmatpush1.bf16.msra.mxu0 %v4292
    %5864 = vmatprep.subr.bf16.mxu0 0
    %5865 = vmatpush1.bf16.msra.mxu0 %v4293
    %5866 = vmatprep.subr.bf16.mxu0 0
    %5867 = vmatpush1.bf16.msra.mxu0 %v4294
    %5868 = vmatprep.subr.bf16.mxu0 0
    %5869 = vmatpush1.bf16.msra.mxu0 %v4295
    %5870 = vmatprep.subr.bf16.mxu0 0
    %5871 = vmatpush1.bf16.msra.mxu0 %v4296
    %5872 = vmatprep.subr.bf16.mxu0 0
    %5873 = vmatpush1.bf16.msra.mxu0 %v4297
    %5874 = vmatprep.mubr.bf16.mxu0 %v1436
    %5875 = vmatmul.mubr.bf16.gmra.mrb[0].mxu0 %v1434
    %v5876 = vpop.f32.mrb[0].mxu0
    %v5877 = vadd.f32 %v5837, %v5876
    %v5878 = vpop.f32.mrb[0].mxu0
    %v5879 = vpop.f32.mrb[0].mxu0
    %v5880 = vpop.f32.mrb[0].mxu0
    %5881 = vdwg.mxu0
    %5882 = vmatprep.subr.bf16.mxu0 0
    %5883 = vmatpush1.bf16.msra.mxu0 %v4298
    %5884 = vmatprep.subr.bf16.mxu0 0
    %5885 = vmatpush1.bf16.msra.mxu0 %v4299
    %5886 = vmatprep.subr.bf16.mxu0 0
    %5887 = vmatpush1.bf16.msra.mxu0 %v4300
    %5888 = vmatprep.subr.bf16.mxu0 0
    %5889 = vmatpush1.bf16.msra.mxu0 %v4301
    %5890 = vmatprep.subr.bf16.mxu0 0
    %5891 = vmatpush1.bf16.msra.mxu0 %v4302
    %5892 = vmatprep.subr.bf16.mxu0 0
    %5893 = vmatpush1.bf16.msra.mxu0 %v4303
    %5894 = vmatprep.subr.bf16.mxu0 0
    %5895 = vmatpush1.bf16.msra.mxu0 %v4304
    %5896 = vmatprep.subr.bf16.mxu0 0
    %5897 = vmatpush1.bf16.msra.mxu0 %v4305
    %5898 = vmatprep.subr.bf16.mxu0 0
    %5899 = vmatpush1.bf16.msra.mxu0 %v4306
    %5900 = vmatprep.subr.bf16.mxu0 0
    %5901 = vmatpush1.bf16.msra.mxu0 %v4307
    %5902 = vmatprep.subr.bf16.mxu0 0
    %5903 = vmatpush1.bf16.msra.mxu0 %v4308
    %5904 = vmatprep.subr.bf16.mxu0 0
    %5905 = vmatpush1.bf16.msra.mxu0 %v4309
    %5906 = vmatprep.subr.bf16.mxu0 0
    %5907 = vmatpush1.bf16.msra.mxu0 %v4310
    %5908 = vmatprep.subr.bf16.mxu0 0
    %5909 = vmatpush1.bf16.msra.mxu0 %v4311
    %5910 = vmatprep.subr.bf16.mxu0 0
    %5911 = vmatpush1.bf16.msra.mxu0 %v4312
    %5912 = vmatprep.subr.bf16.mxu0 0
    %5913 = vmatpush1.bf16.msra.mxu0 %v4313
    %5914 = vmatprep.mubr.bf16.mxu0 %v1433
    %5915 = vmatmul.mubr.bf16.gmra.mrb[0].mxu0 %v1419
    %v5916 = vpop.f32.mrb[0].mxu0
    %v5917 = vadd.f32 %v5877, %v5916
    %v5918 = vpop.f32.mrb[0].mxu0
    %v5919 = vpop.f32.mrb[0].mxu0
    %v5920 = vpop.f32.mrb[0].mxu0
    %5921 = vdwg.mxu0
    %5922 = vmatprep.subr.bf16.mxu0 0
    %5923 = vmatpush1.bf16.msra.mxu0 %v4314
    %5924 = vmatprep.subr.bf16.mxu0 0
    %5925 = vmatpush1.bf16.msra.mxu0 %v4315
    %5926 = vmatprep.subr.bf16.mxu0 0
    %5927 = vmatpush1.bf16.msra.mxu0 %v4316
    %5928 = vmatprep.subr.bf16.mxu0 0
    %5929 = vmatpush1.bf16.msra.mxu0 %v4317
    %5930 = vmatprep.subr.bf16.mxu0 0
    %5931 = vmatpush1.bf16.msra.mxu0 %v4318
    %5932 = vmatprep.subr.bf16.mxu0 0
    %5933 = vmatpush1.bf16.msra.mxu0 %v4319
    %5934 = vmatprep.subr.bf16.mxu0 0
    %5935 = vmatpush1.bf16.msra.mxu0 %v4320
    %5936 = vmatprep.subr.bf16.mxu0 0
    %5937 = vmatpush1.bf16.msra.mxu0 %v4321
    %5938 = vmatprep.subr.bf16.mxu0 0
    %5939 = vmatpush1.bf16.msra.mxu0 %v4322
    %5940 = vmatprep.subr.bf16.mxu0 0
    %5941 = vmatpush1.bf16.msra.mxu0 %v4323
    %5942 = vmatprep.subr.bf16.mxu0 0
    %5943 = vmatpush1.bf16.msra.mxu0 %v4324
    %5944 = vmatprep.subr.bf16.mxu0 0
    %5945 = vmatpush1.bf16.msra.mxu0 %v4325
    %5946 = vmatprep.subr.bf16.mxu0 0
    %5947 = vmatpush1.bf16.msra.mxu0 %v4326
    %5948 = vmatprep.subr.bf16.mxu0 0
    %5949 = vmatpush1.bf16.msra.mxu0 %v4327
    %5950 = vmatprep.subr.bf16.mxu0 0
    %5951 = vmatpush1.bf16.msra.mxu0 %v4328
    %5952 = vmatprep.subr.bf16.mxu0 0
    %5953 = vmatpush1.bf16.msra.mxu0 %v4329
    %5954 = vmatprep.mubr.bf16.mxu0 %v1437
    %5955 = vmatmul.mubr.bf16.gmra.mrb[0].mxu0 %v1435
    %v5956 = vpop.f32.mrb[0].mxu0
    %v5957 = vadd.f32 %v5917, %v5956
    %v5958 = vpop.f32.mrb[0].mxu0
    %v5959 = vpop.f32.mrb[0].mxu0
    %v5960 = vpop.f32.mrb[0].mxu0
    %5961 = vdwg.mxu0
    %5962 = vmatprep.subr.bf16.mxu0 0
    %5963 = vmatpush1.bf16.msra.mxu0 %v4330
    %5964 = vmatprep.subr.bf16.mxu0 0
    %5965 = vmatpush1.bf16.msra.mxu0 %v4331
    %5966 = vmatprep.subr.bf16.mxu0 0
    %5967 = vmatpush1.bf16.msra.mxu0 %v4332
    %5968 = vmatprep.subr.bf16.mxu0 0
    %5969 = vmatpush1.bf16.msra.mxu0 %v4333
    %5970 = vmatprep.subr.bf16.mxu0 0
    %5971 = vmatpush1.bf16.msra.mxu0 %v4334
    %5972 = vmatprep.subr.bf16.mxu0 0
    %5973 = vmatpush1.bf16.msra.mxu0 %v4335
    %5974 = vmatprep.subr.bf16.mxu0 0
    %5975 = vmatpush1.bf16.msra.mxu0 %v4336
    %5976 = vmatprep.subr.bf16.mxu0 0
    %5977 = vmatpush1.bf16.msra.mxu0 %v4337
    %5978 = vmatprep.subr.bf16.mxu0 0
    %5979 = vmatpush1.bf16.msra.mxu0 %v4338
    %5980 = vmatprep.subr.bf16.mxu0 0
    %5981 = vmatpush1.bf16.msra.mxu0 %v4339
    %5982 = vmatprep.subr.bf16.mxu0 0
    %5983 = vmatpush1.bf16.msra.mxu0 %v4340
    %5984 = vmatprep.subr.bf16.mxu0 0
    %5985 = vmatpush1.bf16.msra.mxu0 %v4341
    %5986 = vmatprep.subr.bf16.mxu0 0
    %5987 = vmatpush1.bf16.msra.mxu0 %v4342
    %5988 = vmatprep.subr.bf16.mxu0 0
    %5989 = vmatpush1.bf16.msra.mxu0 %v4343
    %5990 = vmatprep.subr.bf16.mxu0 0
    %5991 = vmatpush1.bf16.msra.mxu0 %v4344
    %5992 = vmatprep.subr.bf16.mxu0 0
    %5993 = vmatpush1.bf16.msra.mxu0 %v4345
    %5994 = vmatprep.mubr.bf16.mxu0 %v1475
    %5995 = vmatmul.mubr.bf16.gmra.mrb[0].mxu0 %v1461
    %v5996 = vpop.f32.mrb[0].mxu0
    %v5997 = vadd.f32 %v5957, %v5996
    %v5998 = vpop.f32.mrb[0].mxu0
    %v5999 = vpop.f32.mrb[0].mxu0
    %v6000 = vpop.f32.mrb[0].mxu0
    %6001 = vdwg.mxu0
    %6002 = vmatprep.subr.bf16.mxu0 0
    %6003 = vmatpush1.bf16.msra.mxu0 %v4346
    %6004 = vmatprep.subr.bf16.mxu0 0
    %6005 = vmatpush1.bf16.msra.mxu0 %v4347
    %6006 = vmatprep.subr.bf16.mxu0 0
    %6007 = vmatpush1.bf16.msra.mxu0 %v4348
    %6008 = vmatprep.subr.bf16.mxu0 0
    %6009 = vmatpush1.bf16.msra.mxu0 %v4349
    %6010 = vmatprep.subr.bf16.mxu0 0
    %6011 = vmatpush1.bf16.msra.mxu0 %v4350
    %6012 = vmatprep.subr.bf16.mxu0 0
    %6013 = vmatpush1.bf16.msra.mxu0 %v4351
    %6014 = vmatprep.subr.bf16.mxu0 0
    %6015 = vmatpush1.bf16.msra.mxu0 %v4352
    %6016 = vmatprep.subr.bf16.mxu0 0
    %6017 = vmatpush1.bf16.msra.mxu0 %v4353
    %6018 = vmatprep.subr.bf16.mxu0 0
    %6019 = vmatpush1.bf16.msra.mxu0 %v4354
    %6020 = vmatprep.subr.bf16.mxu0 0
    %6021 = vmatpush1.bf16.msra.mxu0 %v4355
    %6022 = vmatprep.subr.bf16.mxu0 0
    %6023 = vmatpush1.bf16.msra.mxu0 %v4356
    %6024 = vmatprep.subr.bf16.mxu0 0
    %6025 = vmatpush1.bf16.msra.mxu0 %v4357
    %6026 = vmatprep.subr.bf16.mxu0 0
    %6027 = vmatpush1.bf16.msra.mxu0 %v4358
    %6028 = vmatprep.subr.bf16.mxu0 0
    %6029 = vmatpush1.bf16.msra.mxu0 %v4359
    %6030 = vmatprep.subr.bf16.mxu0 0
    %6031 = vmatpush1.bf16.msra.mxu0 %v4360
    %6032 = vmatprep.subr.bf16.mxu0 0
    %6033 = vmatpush1.bf16.msra.mxu0 %v4361
    %6034 = vmatprep.mubr.bf16.mxu0 %v1485
    %6035 = vmatmul.mubr.bf16.gmra.mrb[0].mxu0 %v1483
    %v6036 = vpop.f32.mrb[0].mxu0
    %v6037 = vadd.f32 %v5997, %v6036
    %v6038 = vpop.f32.mrb[0].mxu0
    %v6039 = vpop.f32.mrb[0].mxu0
    %v6040 = vpop.f32.mrb[0].mxu0
    %6041 = vdwg.mxu0
    %6042 = vmatprep.subr.bf16.mxu0 0
    %6043 = vmatpush1.bf16.msra.mxu0 %v4362
    %6044 = vmatprep.subr.bf16.mxu0 0
    %6045 = vmatpush1.bf16.msra.mxu0 %v4363
    %6046 = vmatprep.subr.bf16.mxu0 0
    %6047 = vmatpush1.bf16.msra.mxu0 %v4364
    %6048 = vmatprep.subr.bf16.mxu0 0
    %6049 = vmatpush1.bf16.msra.mxu0 %v4365
    %6050 = vmatprep.subr.bf16.mxu0 0
    %6051 = vmatpush1.bf16.msra.mxu0 %v4366
    %6052 = vmatprep.subr.bf16.mxu0 0
    %6053 = vmatpush1.bf16.msra.mxu0 %v4367
    %6054 = vmatprep.subr.bf16.mxu0 0
    %6055 = vmatpush1.bf16.msra.mxu0 %v4368
    %6056 = vmatprep.subr.bf16.mxu0 0
    %6057 = vmatpush1.bf16.msra.mxu0 %v4369
    %6058 = vmatprep.subr.bf16.mxu0 0
    %6059 = vmatpush1.bf16.msra.mxu0 %v4370
    %6060 = vmatprep.subr.bf16.mxu0 0
    %6061 = vmatpush1.bf16.msra.mxu0 %v4371
    %6062 = vmatprep.subr.bf16.mxu0 0
    %6063 = vmatpush1.bf16.msra.mxu0 %v4372
    %6064 = vmatprep.subr.bf16.mxu0 0
    %6065 = vmatpush1.bf16.msra.mxu0 %v4373
    %6066 = vmatprep.subr.bf16.mxu0 0
    %6067 = vmatpush1.bf16.msra.mxu0 %v4374
    %6068 = vmatprep.subr.bf16.mxu0 0
    %6069 = vmatpush1.bf16.msra.mxu0 %v4375
    %6070 = vmatprep.subr.bf16.mxu0 0
    %6071 = vmatpush1.bf16.msra.mxu0 %v4376
    %6072 = vmatprep.subr.bf16.mxu0 0
    %6073 = vmatpush1.bf16.msra.mxu0 %v4377
    %6074 = vmatprep.mubr.bf16.mxu0 %v1482
    %6075 = vmatmul.mubr.bf16.gmra.mrb[0].mxu0 %v1468
    %v6076 = vpop.f32.mrb[0].mxu0
    %v6077 = vadd.f32 %v6037, %v6076
    %v6078 = vpop.f32.mrb[0].mxu0
    %v6079 = vpop.f32.mrb[0].mxu0
    %v6080 = vpop.f32.mrb[0].mxu0
    %6081 = vdwg.mxu0
    %6082 = vmatprep.subr.bf16.mxu0 0
    %6083 = vmatpush1.bf16.msra.mxu0 %v4378
    %6084 = vmatprep.subr.bf16.mxu0 0
    %6085 = vmatpush1.bf16.msra.mxu0 %v4379
    %6086 = vmatprep.subr.bf16.mxu0 0
    %6087 = vmatpush1.bf16.msra.mxu0 %v4380
    %6088 = vmatprep.subr.bf16.mxu0 0
    %6089 = vmatpush1.bf16.msra.mxu0 %v4381
    %6090 = vmatprep.subr.bf16.mxu0 0
    %6091 = vmatpush1.bf16.msra.mxu0 %v4382
    %6092 = vmatprep.subr.bf16.mxu0 0
    %6093 = vmatpush1.bf16.msra.mxu0 %v4383
    %6094 = vmatprep.subr.bf16.mxu0 0
    %6095 = vmatpush1.bf16.msra.mxu0 %v4384
    %6096 = vmatprep.subr.bf16.mxu0 0
    %6097 = vmatpush1.bf16.msra.mxu0 %v4385
    %6098 = vmatprep.subr.bf16.mxu0 0
    %6099 = vmatpush1.bf16.msra.mxu0 %v4386
    %6100 = vmatprep.subr.bf16.mxu0 0
    %6101 = vmatpush1.bf16.msra.mxu0 %v4387
    %6102 = vmatprep.subr.bf16.mxu0 0
    %6103 = vmatpush1.bf16.msra.mxu0 %v4388
    %6104 = vmatprep.subr.bf16.mxu0 0
    %6105 = vmatpush1.bf16.msra.mxu0 %v4389
    %6106 = vmatprep.subr.bf16.mxu0 0
    %6107 = vmatpush1.bf16.msra.mxu0 %v4390
    %6108 = vmatprep.subr.bf16.mxu0 0
    %6109 = vmatpush1.bf16.msra.mxu0 %v4391
    %6110 = vmatprep.subr.bf16.mxu0 0
    %6111 = vmatpush1.bf16.msra.mxu0 %v4392
    %6112 = vmatprep.subr.bf16.mxu0 0
    %6113 = vmatpush1.bf16.msra.mxu0 %v4393
    %6114 = vmatprep.mubr.bf16.mxu0 %v1486
    %6115 = vmatmul.mubr.bf16.gmra.mrb[0].mxu0 %v1484
    %v6116 = vpop.f32.mrb[0].mxu0
    %v6117 = vadd.f32 %v6077, %v6116
    %v6118 = vpop.f32.mrb[0].mxu0
    %v6119 = vpop.f32.mrb[0].mxu0
    %v6120 = vpop.f32.mrb[0].mxu0
    %6121 = vdwg.mxu0
    %6122 = vmatprep.subr.bf16.mxu0 0
    %6123 = vmatpush1.bf16.msra.mxu0 %v4394
    %6124 = vmatprep.subr.bf16.mxu0 0
    %6125 = vmatpush1.bf16.msra.mxu0 %v4395
    %6126 = vmatprep.subr.bf16.mxu0 0
    %6127 = vmatpush1.bf16.msra.mxu0 %v4396
    %6128 = vmatprep.subr.bf16.mxu0 0
    %6129 = vmatpush1.bf16.msra.mxu0 %v4397
    %6130 = vmatprep.subr.bf16.mxu0 0
    %6131 = vmatpush1.bf16.msra.mxu0 %v4398
    %6132 = vmatprep.subr.bf16.mxu0 0
    %6133 = vmatpush1.bf16.msra.mxu0 %v4399
    %6134 = vmatprep.subr.bf16.mxu0 0
    %6135 = vmatpush1.bf16.msra.mxu0 %v4400
    %6136 = vmatprep.subr.bf16.mxu0 0
    %6137 = vmatpush1.bf16.msra.mxu0 %v4401
    %6138 = vmatprep.subr.bf16.mxu0 0
    %6139 = vmatpush1.bf16.msra.mxu0 %v4402
    %6140 = vmatprep.subr.bf16.mxu0 0
    %6141 = vmatpush1.bf16.msra.mxu0 %v4403
    %6142 = vmatprep.subr.bf16.mxu0 0
    %6143 = vmatpush1.bf16.msra.mxu0 %v4404
    %6144 = vmatprep.subr.bf16.mxu0 0
    %6145 = vmatpush1.bf16.msra.mxu0 %v4405
    %6146 = vmatprep.subr.bf16.mxu0 0
    %6147 = vmatpush1.bf16.msra.mxu0 %v4406
    %6148 = vmatprep.subr.bf16.mxu0 0
    %6149 = vmatpush1.bf16.msra.mxu0 %v4407
    %6150 = vmatprep.subr.bf16.mxu0 0
    %6151 = vmatpush1.bf16.msra.mxu0 %v4408
    %6152 = vmatprep.subr.bf16.mxu0 0
    %6153 = vmatpush1.bf16.msra.mxu0 %v4409
    %6154 = vmatprep.mubr.bf16.mxu0 %v1524
    %6155 = vmatmul.mubr.bf16.gmra.mrb[0].mxu0 %v1510
    %v6156 = vpop.f32.mrb[0].mxu0
    %v6157 = vadd.f32 %v6117, %v6156
    %v6158 = vpop.f32.mrb[0].mxu0
    %v6159 = vpop.f32.mrb[0].mxu0
    %v6160 = vpop.f32.mrb[0].mxu0
    %6161 = vdwg.mxu0
    %6162 = vmatprep.subr.bf16.mxu0 0
    %6163 = vmatpush1.bf16.msra.mxu0 %v4410
    %6164 = vmatprep.subr.bf16.mxu0 0
    %6165 = vmatpush1.bf16.msra.mxu0 %v4411
    %6166 = vmatprep.subr.bf16.mxu0 0
    %6167 = vmatpush1.bf16.msra.mxu0 %v4412
    %6168 = vmatprep.subr.bf16.mxu0 0
    %6169 = vmatpush1.bf16.msra.mxu0 %v4413
    %6170 = vmatprep.subr.bf16.mxu0 0
    %6171 = vmatpush1.bf16.msra.mxu0 %v4414
    %6172 = vmatprep.subr.bf16.mxu0 0
    %6173 = vmatpush1.bf16.msra.mxu0 %v4415
    %6174 = vmatprep.subr.bf16.mxu0 0
    %6175 = vmatpush1.bf16.msra.mxu0 %v4416
    %6176 = vmatprep.subr.bf16.mxu0 0
    %6177 = vmatpush1.bf16.msra.mxu0 %v4417
    %6178 = vmatprep.subr.bf16.mxu0 0
    %6179 = vmatpush1.bf16.msra.mxu0 %v4418
    %6180 = vmatprep.subr.bf16.mxu0 0
    %6181 = vmatpush1.bf16.msra.mxu0 %v4419
    %6182 = vmatprep.subr.bf16.mxu0 0
    %6183 = vmatpush1.bf16.msra.mxu0 %v4420
    %6184 = vmatprep.subr.bf16.mxu0 0
    %6185 = vmatpush1.bf16.msra.mxu0 %v4421
    %6186 = vmatprep.subr.bf16.mxu0 0
    %6187 = vmatpush1.bf16.msra.mxu0 %v4422
    %6188 = vmatprep.subr.bf16.mxu0 0
    %6189 = vmatpush1.bf16.msra.mxu0 %v4423
    %6190 = vmatprep.subr.bf16.mxu0 0
    %6191 = vmatpush1.bf16.msra.mxu0 %v4424
    %6192 = vmatprep.subr.bf16.mxu0 0
    %6193 = vmatpush1.bf16.msra.mxu0 %v4425
    %6194 = vmatprep.mubr.bf16.mxu0 %v1534
    %6195 = vmatmul.mubr.bf16.gmra.mrb[0].mxu0 %v1532
    %v6196 = vpop.f32.mrb[0].mxu0
    %v6197 = vadd.f32 %v6157, %v6196
    %v6198 = vpop.f32.mrb[0].mxu0
    %v6199 = vpop.f32.mrb[0].mxu0
    %v6200 = vpop.f32.mrb[0].mxu0
    %6201 = vdwg.mxu0
    %6202 = vmatprep.subr.bf16.mxu0 0
    %6203 = vmatpush1.bf16.msra.mxu0 %v4426
    %6204 = vmatprep.subr.bf16.mxu0 0
    %6205 = vmatpush1.bf16.msra.mxu0 %v4427
    %6206 = vmatprep.subr.bf16.mxu0 0
    %6207 = vmatpush1.bf16.msra.mxu0 %v4428
    %6208 = vmatprep.subr.bf16.mxu0 0
    %6209 = vmatpush1.bf16.msra.mxu0 %v4429
    %6210 = vmatprep.subr.bf16.mxu0 0
    %6211 = vmatpush1.bf16.msra.mxu0 %v4430
    %6212 = vmatprep.subr.bf16.mxu0 0
    %6213 = vmatpush1.bf16.msra.mxu0 %v4431
    %6214 = vmatprep.subr.bf16.mxu0 0
    %6215 = vmatpush1.bf16.msra.mxu0 %v4432
    %6216 = vmatprep.subr.bf16.mxu0 0
    %6217 = vmatpush1.bf16.msra.mxu0 %v4433
    %6218 = vmatprep.subr.bf16.mxu0 0
    %6219 = vmatpush1.bf16.msra.mxu0 %v4434
    %6220 = vmatprep.subr.bf16.mxu0 0
    %6221 = vmatpush1.bf16.msra.mxu0 %v4435
    %6222 = vmatprep.subr.bf16.mxu0 0
    %6223 = vmatpush1.bf16.msra.mxu0 %v4436
    %6224 = vmatprep.subr.bf16.mxu0 0
    %6225 = vmatpush1.bf16.msra.mxu0 %v4437
    %6226 = vmatprep.subr.bf16.mxu0 0
    %6227 = vmatpush1.bf16.msra.mxu0 %v4438
    %6228 = vmatprep.subr.bf16.mxu0 0
    %6229 = vmatpush1.bf16.msra.mxu0 %v4439
    %6230 = vmatprep.subr.bf16.mxu0 0
    %6231 = vmatpush1.bf16.msra.mxu0 %v4440
    %6232 = vmatprep.subr.bf16.mxu0 0
    %6233 = vmatpush1.bf16.msra.mxu0 %v4441
    %6234 = vmatprep.mubr.bf16.mxu0 %v1531
    %6235 = vmatmul.mubr.bf16.gmra.mrb[0].mxu0 %v1517
    %v6236 = vpop.f32.mrb[0].mxu0
    %v6237 = vadd.f32 %v6197, %v6236
    %v6238 = vpop.f32.mrb[0].mxu0
    %v6239 = vpop.f32.mrb[0].mxu0
    %v6240 = vpop.f32.mrb[0].mxu0
    %6241 = vdwg.mxu0
    %6242 = vmatprep.subr.bf16.mxu0 0
    %6243 = vmatpush1.bf16.msra.mxu0 %v4442
    %6244 = vmatprep.subr.bf16.mxu0 0
    %6245 = vmatpush1.bf16.msra.mxu0 %v4443
    %6246 = vmatprep.subr.bf16.mxu0 0
    %6247 = vmatpush1.bf16.msra.mxu0 %v4444
    %6248 = vmatprep.subr.bf16.mxu0 0
    %6249 = vmatpush1.bf16.msra.mxu0 %v4445
    %6250 = vmatprep.subr.bf16.mxu0 0
    %6251 = vmatpush1.bf16.msra.mxu0 %v4446
    %6252 = vmatprep.subr.bf16.mxu0 0
    %6253 = vmatpush1.bf16.msra.mxu0 %v4447
    %6254 = vmatprep.subr.bf16.mxu0 0
    %6255 = vmatpush1.bf16.msra.mxu0 %v4448
    %6256 = vmatprep.subr.bf16.mxu0 0
    %6257 = vmatpush1.bf16.msra.mxu0 %v4449
    %6258 = vmatprep.subr.bf16.mxu0 0
    %6259 = vmatpush1.bf16.msra.mxu0 %v4450
    %6260 = vmatprep.subr.bf16.mxu0 0
    %6261 = vmatpush1.bf16.msra.mxu0 %v4451
    %6262 = vmatprep.subr.bf16.mxu0 0
    %6263 = vmatpush1.bf16.msra.mxu0 %v4452
    %6264 = vmatprep.subr.bf16.mxu0 0
    %6265 = vmatpush1.bf16.msra.mxu0 %v4453
    %6266 = vmatprep.subr.bf16.mxu0 0
    %6267 = vmatpush1.bf16.msra.mxu0 %v4454
    %6268 = vmatprep.subr.bf16.mxu0 0
    %6269 = vmatpush1.bf16.msra.mxu0 %v4455
    %6270 = vmatprep.subr.bf16.mxu0 0
    %6271 = vmatpush1.bf16.msra.mxu0 %v4456
    %6272 = vmatprep.subr.bf16.mxu0 0
    %6273 = vmatpush1.bf16.msra.mxu0 %v4457
    %6274 = vmatprep.mubr.bf16.mxu0 %v1535
    %6275 = vmatmul.mubr.bf16.gmra.mrb[0].mxu0 %v1533
    %v6276 = vpop.f32.mrb[0].mxu0
    %v6277 = vadd.f32 %v6237, %v6276
    %v6278 = vpop.f32.mrb[0].mxu0
    %v6279 = vpop.f32.mrb[0].mxu0
    %v6280 = vpop.f32.mrb[0].mxu0
    %6281 = vdwg.mxu0
    %6282 = vmatprep.subr.bf16.mxu0 0
    %6283 = vmatpush1.bf16.msra.mxu0 %v4458
    %6284 = vmatprep.subr.bf16.mxu0 0
    %6285 = vmatpush1.bf16.msra.mxu0 %v4459
    %6286 = vmatprep.subr.bf16.mxu0 0
    %6287 = vmatpush1.bf16.msra.mxu0 %v4460
    %6288 = vmatprep.subr.bf16.mxu0 0
    %6289 = vmatpush1.bf16.msra.mxu0 %v4461
    %6290 = vmatprep.subr.bf16.mxu0 0
    %6291 = vmatpush1.bf16.msra.mxu0 %v4462
    %6292 = vmatprep.subr.bf16.mxu0 0
    %6293 = vmatpush1.bf16.msra.mxu0 %v4463
    %6294 = vmatprep.subr.bf16.mxu0 0
    %6295 = vmatpush1.bf16.msra.mxu0 %v4464
    %6296 = vmatprep.subr.bf16.mxu0 0
    %6297 = vmatpush1.bf16.msra.mxu0 %v4465
    %6298 = vmatprep.subr.bf16.mxu0 0
    %6299 = vmatpush1.bf16.msra.mxu0 %v4466
    %6300 = vmatprep.subr.bf16.mxu0 0
    %6301 = vmatpush1.bf16.msra.mxu0 %v4467
    %6302 = vmatprep.subr.bf16.mxu0 0
    %6303 = vmatpush1.bf16.msra.mxu0 %v4468
    %6304 = vmatprep.subr.bf16.mxu0 0
    %6305 = vmatpush1.bf16.msra.mxu0 %v4469
    %6306 = vmatprep.subr.bf16.mxu0 0
    %6307 = vmatpush1.bf16.msra.mxu0 %v4470
    %6308 = vmatprep.subr.bf16.mxu0 0
    %6309 = vmatpush1.bf16.msra.mxu0 %v4471
    %6310 = vmatprep.subr.bf16.mxu0 0
    %6311 = vmatpush1.bf16.msra.mxu0 %v4472
    %6312 = vmatprep.subr.bf16.mxu0 0
    %6313 = vmatpush1.bf16.msra.mxu0 %v4473
    %6314 = vmatprep.mubr.bf16.mxu0 %v1573
    %6315 = vmatmul.mubr.bf16.gmra.mrb[0].mxu0 %v1559
    %v6316 = vpop.f32.mrb[0].mxu0
    %v6317 = vadd.f32 %v6277, %v6316
    %v6318 = vpop.f32.mrb[0].mxu0
    %v6319 = vpop.f32.mrb[0].mxu0
    %v6320 = vpop.f32.mrb[0].mxu0
    %6321 = vdwg.mxu0
    %6322 = vmatprep.subr.bf16.mxu0 0
    %6323 = vmatpush1.bf16.msra.mxu0 %v4474
    %6324 = vmatprep.subr.bf16.mxu0 0
    %6325 = vmatpush1.bf16.msra.mxu0 %v4475
    %6326 = vmatprep.subr.bf16.mxu0 0
    %6327 = vmatpush1.bf16.msra.mxu0 %v4476
    %6328 = vmatprep.subr.bf16.mxu0 0
    %6329 = vmatpush1.bf16.msra.mxu0 %v4477
    %6330 = vmatprep.subr.bf16.mxu0 0
    %6331 = vmatpush1.bf16.msra.mxu0 %v4478
    %6332 = vmatprep.subr.bf16.mxu0 0
    %6333 = vmatpush1.bf16.msra.mxu0 %v4479
    %6334 = vmatprep.subr.bf16.mxu0 0
    %6335 = vmatpush1.bf16.msra.mxu0 %v4480
    %6336 = vmatprep.subr.bf16.mxu0 0
    %6337 = vmatpush1.bf16.msra.mxu0 %v4481
    %6338 = vmatprep.subr.bf16.mxu0 0
    %6339 = vmatpush1.bf16.msra.mxu0 %v4482
    %6340 = vmatprep.subr.bf16.mxu0 0
    %6341 = vmatpush1.bf16.msra.mxu0 %v4483
    %6342 = vmatprep.subr.bf16.mxu0 0
    %6343 = vmatpush1.bf16.msra.mxu0 %v4484
    %6344 = vmatprep.subr.bf16.mxu0 0
    %6345 = vmatpush1.bf16.msra.mxu0 %v4485
    %6346 = vmatprep.subr.bf16.mxu0 0
    %6347 = vmatpush1.bf16.msra.mxu0 %v4486
    %6348 = vmatprep.subr.bf16.mxu0 0
    %6349 = vmatpush1.bf16.msra.mxu0 %v4487
    %6350 = vmatprep.subr.bf16.mxu0 0
    %6351 = vmatpush1.bf16.msra.mxu0 %v4488
    %6352 = vmatprep.subr.bf16.mxu0 0
    %6353 = vmatpush1.bf16.msra.mxu0 %v4489
    %6354 = vmatprep.mubr.bf16.mxu0 %v1583
    %6355 = vmatmul.mubr.bf16.gmra.mrb[0].mxu0 %v1581
    %v6356 = vpop.f32.mrb[0].mxu0
    %v6357 = vadd.f32 %v6317, %v6356
    %v6358 = vpop.f32.mrb[0].mxu0
    %v6359 = vpop.f32.mrb[0].mxu0
    %v6360 = vpop.f32.mrb[0].mxu0
    %6361 = vdwg.mxu0
    %6362 = vmatprep.subr.bf16.mxu0 0
    %6363 = vmatpush1.bf16.msra.mxu0 %v4490
    %6364 = vmatprep.subr.bf16.mxu0 0
    %6365 = vmatpush1.bf16.msra.mxu0 %v4491
    %6366 = vmatprep.subr.bf16.mxu0 0
    %6367 = vmatpush1.bf16.msra.mxu0 %v4492
    %6368 = vmatprep.subr.bf16.mxu0 0
    %6369 = vmatpush1.bf16.msra.mxu0 %v4493
    %6370 = vmatprep.subr.bf16.mxu0 0
    %6371 = vmatpush1.bf16.msra.mxu0 %v4494
    %6372 = vmatprep.subr.bf16.mxu0 0
    %6373 = vmatpush1.bf16.msra.mxu0 %v4495
    %6374 = vmatprep.subr.bf16.mxu0 0
    %6375 = vmatpush1.bf16.msra.mxu0 %v4496
    %6376 = vmatprep.subr.bf16.mxu0 0
    %6377 = vmatpush1.bf16.msra.mxu0 %v4497
    %6378 = vmatprep.subr.bf16.mxu0 0
    %6379 = vmatpush1.bf16.msra.mxu0 %v4498
    %6380 = vmatprep.subr.bf16.mxu0 0
    %6381 = vmatpush1.bf16.msra.mxu0 %v4499
    %6382 = vmatprep.subr.bf16.mxu0 0
    %6383 = vmatpush1.bf16.msra.mxu0 %v4500
    %6384 = vmatprep.subr.bf16.mxu0 0
    %6385 = vmatpush1.bf16.msra.mxu0 %v4501
    %6386 = vmatprep.subr.bf16.mxu0 0
    %6387 = vmatpush1.bf16.msra.mxu0 %v4502
    %6388 = vmatprep.subr.bf16.mxu0 0
    %6389 = vmatpush1.bf16.msra.mxu0 %v4503
    %6390 = vmatprep.subr.bf16.mxu0 0
    %6391 = vmatpush1.bf16.msra.mxu0 %v4504
    %6392 = vmatprep.subr.bf16.mxu0 0
    %6393 = vmatpush1.bf16.msra.mxu0 %v4505
    %6394 = vmatprep.mubr.bf16.mxu0 %v1580
    %6395 = vmatmul.mubr.bf16.gmra.mrb[0].mxu0 %v1566
    %v6396 = vpop.f32.mrb[0].mxu0
    %v6397 = vadd.f32 %v6357, %v6396
    %v6398 = vpop.f32.mrb[0].mxu0
    %v6399 = vpop.f32.mrb[0].mxu0
    %v6400 = vpop.f32.mrb[0].mxu0
    %6401 = vdwg.mxu0
    %6402 = vmatprep.subr.bf16.mxu0 0
    %6403 = vmatpush1.bf16.msra.mxu0 %v4506
    %6404 = vmatprep.subr.bf16.mxu0 0
    %6405 = vmatpush1.bf16.msra.mxu0 %v4507
    %6406 = vmatprep.subr.bf16.mxu0 0
    %6407 = vmatpush1.bf16.msra.mxu0 %v4508
    %6408 = vmatprep.subr.bf16.mxu0 0
    %6409 = vmatpush1.bf16.msra.mxu0 %v4509
    %6410 = vmatprep.subr.bf16.mxu0 0
    %6411 = vmatpush1.bf16.msra.mxu0 %v4510
    %6412 = vmatprep.subr.bf16.mxu0 0
    %6413 = vmatpush1.bf16.msra.mxu0 %v4511
    %6414 = vmatprep.subr.bf16.mxu0 0
    %6415 = vmatpush1.bf16.msra.mxu0 %v4512
    %6416 = vmatprep.subr.bf16.mxu0 0
    %6417 = vmatpush1.bf16.msra.mxu0 %v4513
    %6418 = vmatprep.subr.bf16.mxu0 0
    %6419 = vmatpush1.bf16.msra.mxu0 %v4514
    %6420 = vmatprep.subr.bf16.mxu0 0
    %6421 = vmatpush1.bf16.msra.mxu0 %v4515
    %6422 = vmatprep.subr.bf16.mxu0 0
    %6423 = vmatpush1.bf16.msra.mxu0 %v4516
    %6424 = vmatprep.subr.bf16.mxu0 0
    %6425 = vmatpush1.bf16.msra.mxu0 %v4517
    %6426 = vmatprep.subr.bf16.mxu0 0
    %6427 = vmatpush1.bf16.msra.mxu0 %v4518
    %6428 = vmatprep.subr.bf16.mxu0 0
    %6429 = vmatpush1.bf16.msra.mxu0 %v4519
    %6430 = vmatprep.subr.bf16.mxu0 0
    %6431 = vmatpush1.bf16.msra.mxu0 %v4520
    %6432 = vmatprep.subr.bf16.mxu0 0
    %6433 = vmatpush1.bf16.msra.mxu0 %v4521
    %6434 = vmatprep.mubr.bf16.mxu0 %v1584
    %6435 = vmatmul.mubr.bf16.gmra.mrb[0].mxu0 %v1582
    %v6436 = vpop.f32.mrb[0].mxu0
    %v6437 = vadd.f32 %v6397, %v6436
    %v6438 = vpop.f32.mrb[0].mxu0
    %v6439 = vpop.f32.mrb[0].mxu0
    %v6440 = vpop.f32.mrb[0].mxu0
    %6441 = vdwg.mxu0
    %6442 = vmatprep.subr.bf16.mxu0 0
    %6443 = vmatpush1.bf16.msra.mxu0 %v4522
    %6444 = vmatprep.subr.bf16.mxu0 0
    %6445 = vmatpush1.bf16.msra.mxu0 %v4523
    %6446 = vmatprep.subr.bf16.mxu0 0
    %6447 = vmatpush1.bf16.msra.mxu0 %v4524
    %6448 = vmatprep.subr.bf16.mxu0 0
    %6449 = vmatpush1.bf16.msra.mxu0 %v4525
    %6450 = vmatprep.subr.bf16.mxu0 0
    %6451 = vmatpush1.bf16.msra.mxu0 %v4526
    %6452 = vmatprep.subr.bf16.mxu0 0
    %6453 = vmatpush1.bf16.msra.mxu0 %v4527
    %6454 = vmatprep.subr.bf16.mxu0 0
    %6455 = vmatpush1.bf16.msra.mxu0 %v4528
    %6456 = vmatprep.subr.bf16.mxu0 0
    %6457 = vmatpush1.bf16.msra.mxu0 %v4529
    %6458 = vmatprep.subr.bf16.mxu0 0
    %6459 = vmatpush1.bf16.msra.mxu0 %v4530
    %6460 = vmatprep.subr.bf16.mxu0 0
    %6461 = vmatpush1.bf16.msra.mxu0 %v4531
    %6462 = vmatprep.subr.bf16.mxu0 0
    %6463 = vmatpush1.bf16.msra.mxu0 %v4532
    %6464 = vmatprep.subr.bf16.mxu0 0
    %6465 = vmatpush1.bf16.msra.mxu0 %v4533
    %6466 = vmatprep.subr.bf16.mxu0 0
    %6467 = vmatpush1.bf16.msra.mxu0 %v4534
    %6468 = vmatprep.subr.bf16.mxu0 0
    %6469 = vmatpush1.bf16.msra.mxu0 %v4535
    %6470 = vmatprep.subr.bf16.mxu0 0
    %6471 = vmatpush1.bf16.msra.mxu0 %v4536
    %6472 = vmatprep.subr.bf16.mxu0 0
    %6473 = vmatpush1.bf16.msra.mxu0 %v4537
    %6474 = vmatprep.mubr.bf16.mxu0 %v1622
    %6475 = vmatmul.mubr.bf16.gmra.mrb[0].mxu0 %v1608
    %v6476 = vpop.f32.mrb[0].mxu0
    %v6477 = vadd.f32 %v6437, %v6476
    %v6478 = vpop.f32.mrb[0].mxu0
    %v6479 = vpop.f32.mrb[0].mxu0
    %v6480 = vpop.f32.mrb[0].mxu0
    %6481 = vdwg.mxu0
    %6482 = vmatprep.subr.bf16.mxu0 0
    %6483 = vmatpush1.bf16.msra.mxu0 %v4538
    %6484 = vmatprep.subr.bf16.mxu0 0
    %6485 = vmatpush1.bf16.msra.mxu0 %v4539
    %6486 = vmatprep.subr.bf16.mxu0 0
    %6487 = vmatpush1.bf16.msra.mxu0 %v4540
    %6488 = vmatprep.subr.bf16.mxu0 0
    %6489 = vmatpush1.bf16.msra.mxu0 %v4541
    %6490 = vmatprep.subr.bf16.mxu0 0
    %6491 = vmatpush1.bf16.msra.mxu0 %v4542
    %6492 = vmatprep.subr.bf16.mxu0 0
    %6493 = vmatpush1.bf16.msra.mxu0 %v4543
    %6494 = vmatprep.subr.bf16.mxu0 0
    %6495 = vmatpush1.bf16.msra.mxu0 %v4544
    %6496 = vmatprep.subr.bf16.mxu0 0
    %6497 = vmatpush1.bf16.msra.mxu0 %v4545
    %6498 = vmatprep.subr.bf16.mxu0 0
    %6499 = vmatpush1.bf16.msra.mxu0 %v4546
    %6500 = vmatprep.subr.bf16.mxu0 0
    %6501 = vmatpush1.bf16.msra.mxu0 %v4547
    %6502 = vmatprep.subr.bf16.mxu0 0
    %6503 = vmatpush1.bf16.msra.mxu0 %v4548
    %6504 = vmatprep.subr.bf16.mxu0 0
    %6505 = vmatpush1.bf16.msra.mxu0 %v4549
    %6506 = vmatprep.subr.bf16.mxu0 0
    %6507 = vmatpush1.bf16.msra.mxu0 %v4550
    %6508 = vmatprep.subr.bf16.mxu0 0
    %6509 = vmatpush1.bf16.msra.mxu0 %v4551
    %6510 = vmatprep.subr.bf16.mxu0 0
    %6511 = vmatpush1.bf16.msra.mxu0 %v4552
    %6512 = vmatprep.subr.bf16.mxu0 0
    %6513 = vmatpush1.bf16.msra.mxu0 %v4553
    %6514 = vmatprep.mubr.bf16.mxu0 %v1632
    %6515 = vmatmul.mubr.bf16.gmra.mrb[0].mxu0 %v1630
    %v6516 = vpop.f32.mrb[0].mxu0
    %v6517 = vadd.f32 %v6477, %v6516
    %v6518 = vpop.f32.mrb[0].mxu0
    %v6519 = vpop.f32.mrb[0].mxu0
    %v6520 = vpop.f32.mrb[0].mxu0
    %6521 = vdwg.mxu0
    %6522 = vmatprep.subr.bf16.mxu0 0
    %6523 = vmatpush1.bf16.msra.mxu0 %v4554
    %6524 = vmatprep.subr.bf16.mxu0 0
    %6525 = vmatpush1.bf16.msra.mxu0 %v4555
    %6526 = vmatprep.subr.bf16.mxu0 0
    %6527 = vmatpush1.bf16.msra.mxu0 %v4556
    %6528 = vmatprep.subr.bf16.mxu0 0
    %6529 = vmatpush1.bf16.msra.mxu0 %v4557
    %6530 = vmatprep.subr.bf16.mxu0 0
    %6531 = vmatpush1.bf16.msra.mxu0 %v4558
    %6532 = vmatprep.subr.bf16.mxu0 0
    %6533 = vmatpush1.bf16.msra.mxu0 %v4559
    %6534 = vmatprep.subr.bf16.mxu0 0
    %6535 = vmatpush1.bf16.msra.mxu0 %v4560
    %6536 = vmatprep.subr.bf16.mxu0 0
    %6537 = vmatpush1.bf16.msra.mxu0 %v4561
    %6538 = vmatprep.subr.bf16.mxu0 0
    %6539 = vmatpush1.bf16.msra.mxu0 %v4562
    %6540 = vmatprep.subr.bf16.mxu0 0
    %6541 = vmatpush1.bf16.msra.mxu0 %v4563
    %6542 = vmatprep.subr.bf16.mxu0 0
    %6543 = vmatpush1.bf16.msra.mxu0 %v4564
    %6544 = vmatprep.subr.bf16.mxu0 0
    %6545 = vmatpush1.bf16.msra.mxu0 %v4565
    %6546 = vmatprep.subr.bf16.mxu0 0
    %6547 = vmatpush1.bf16.msra.mxu0 %v4566
    %6548 = vmatprep.subr.bf16.mxu0 0
    %6549 = vmatpush1.bf16.msra.mxu0 %v4567
    %6550 = vmatprep.subr.bf16.mxu0 0
    %6551 = vmatpush1.bf16.msra.mxu0 %v4568
    %6552 = vmatprep.subr.bf16.mxu0 0
    %6553 = vmatpush1.bf16.msra.mxu0 %v4569
    %6554 = vmatprep.mubr.bf16.mxu0 %v1629
    %6555 = vmatmul.mubr.bf16.gmra.mrb[0].mxu0 %v1615
    %v6556 = vpop.f32.mrb[0].mxu0
    %v6557 = vadd.f32 %v6517, %v6556
    %v6558 = vpop.f32.mrb[0].mxu0
    %v6559 = vpop.f32.mrb[0].mxu0
    %v6560 = vpop.f32.mrb[0].mxu0
    %6561 = vdwg.mxu0
    %6562 = vmatprep.subr.bf16.mxu0 0
    %6563 = vmatpush1.bf16.msra.mxu0 %v4570
    %6564 = vmatprep.subr.bf16.mxu0 0
    %6565 = vmatpush1.bf16.msra.mxu0 %v4571
    %6566 = vmatprep.subr.bf16.mxu0 0
    %6567 = vmatpush1.bf16.msra.mxu0 %v4572
    %6568 = vmatprep.subr.bf16.mxu0 0
    %6569 = vmatpush1.bf16.msra.mxu0 %v4573
    %6570 = vmatprep.subr.bf16.mxu0 0
    %6571 = vmatpush1.bf16.msra.mxu0 %v4574
    %6572 = vmatprep.subr.bf16.mxu0 0
    %6573 = vmatpush1.bf16.msra.mxu0 %v4575
    %6574 = vmatprep.subr.bf16.mxu0 0
    %6575 = vmatpush1.bf16.msra.mxu0 %v4576
    %6576 = vmatprep.subr.bf16.mxu0 0
    %6577 = vmatpush1.bf16.msra.mxu0 %v4577
    %6578 = vmatprep.subr.bf16.mxu0 0
    %6579 = vmatpush1.bf16.msra.mxu0 %v4578
    %6580 = vmatprep.subr.bf16.mxu0 0
    %6581 = vmatpush1.bf16.msra.mxu0 %v4579
    %6582 = vmatprep.subr.bf16.mxu0 0
    %6583 = vmatpush1.bf16.msra.mxu0 %v4580
    %6584 = vmatprep.subr.bf16.mxu0 0
    %6585 = vmatpush1.bf16.msra.mxu0 %v4581
    %6586 = vmatprep.subr.bf16.mxu0 0
    %6587 = vmatpush1.bf16.msra.mxu0 %v4582
    %6588 = vmatprep.subr.bf16.mxu0 0
    %6589 = vmatpush1.bf16.msra.mxu0 %v4583
    %6590 = vmatprep.subr.bf16.mxu0 0
    %6591 = vmatpush1.bf16.msra.mxu0 %v4584
    %6592 = vmatprep.subr.bf16.mxu0 0
    %6593 = vmatpush1.bf16.msra.mxu0 %v4585
    %6594 = vmatprep.mubr.bf16.mxu0 %v1633
    %6595 = vmatmul.mubr.bf16.gmra.mrb[0].mxu0 %v1631
    %v6596 = vpop.f32.mrb[0].mxu0
    %v6597 = vadd.f32 %v6557, %v6596
    %v6598 = vpop.f32.mrb[0].mxu0
    %v6599 = vpop.f32.mrb[0].mxu0
    %v6600 = vpop.f32.mrb[0].mxu0
    %6601 = vdwg.mxu0
    %6602 = vst [vmem:[#allocation2] sm:$0x3] %v6597
    // Predicated region
    $region14: #{ble_cnn_forward.5} parent=1 // pred_check
      _
    $region15: #{ble_cnn_forward.5} parent=1 // pred_check_branch
      %6604 = sbr.rel (0) target = $region17
    $region16: #{ble_cnn_forward.5} parent=1 // pred_region
      %s6606 = ssub.s32 32, 32
      %6607 = vsyncadd [#allocation3], %s6606
      %s6609 = sshll.u32 [#allocation2], 4
      %s6610 = int_to_ptr.vmem [resolvable:$true] %s6609
      %6612 = dma.vmem_to_hbm [thread:$0]  %s6610, 32, %s3, [#allocation3]
    $region17: #{ble_cnn_forward.5} parent=1 // pred_fallthru
      _
    // Predicated region
    $region18: #{ble_cnn_forward.5} parent=1 // pred_check
      _
    $region19: #{ble_cnn_forward.5} parent=1 // pred_check_branch
      %6614 = sbr.rel (0) target = $region21
    $region20: #{ble_cnn_forward.5} parent=1 // pred_region
      %6615 = dma.done [#allocation3], 32
    $region21: #{ble_cnn_forward.5} parent=1 // pred_fallthru
      _
    %6616 = vsyncpa [#allocation3], 1

</llo_original>
